<compile_context>
chip_gen: v7x
topology: tpu7x:2x2x1
jax: 0.10.0
libtpu: 0.0.40
codegen_flags: <defaults>
</compile_context>

<pallas_src>
import math
import numpy as np
import jax
import jax.numpy as jnp
from jax.experimental import pallas as pl
from jax.experimental.pallas import tpu as pltpu

BN_EPS = 1e-5          # nn.BatchNorm2d default eps
LEAKY_SLOPE = 0.01     # nn.LeakyReLU default negative_slope


def bilinear_matrix(size_in, size_out):
    """Interpolation matrix of torch UpsamplingBilinear2d (align_corners=True)."""
    A = np.zeros((size_out, size_in), dtype=np.float32)
    scale = (size_in - 1) / (size_out - 1)
    for d in range(size_out):
        src = d * scale
        i0 = min(int(math.floor(src)), size_in - 1)
        i1 = min(i0 + 1, size_in - 1)
        f = src - i0
        A[d, i0] += 1.0 - f
        A[d, i1] += f
    return A


def upsampling_layer_kernel(xp_ref, w_ref, b_ref, g_ref, bt_ref, erd_ref, ebc_ref,
                            ah_ref, o_ref, y0_ref, yt_ref, yc_ref):
    """Fused Conv3x3(pad=1) + BatchNorm2d(batch stats) + LeakyReLU + bilinear x2.

    xp_ref : (N, W+2, H+2, Cin)   zero-padded input, axis order (n, w, h, ci)
    w_ref  : (9, Cin, Cout)       conv taps, t = kh*3 + kw
    b_ref  : (1, N*W*Cout)        conv bias, tiled over (n, w) lane groups
    g_ref  : (1, N*W*Cout)        BN gamma, tiled
    bt_ref : (1, N*W*Cout)        BN beta, tiled
    erd_ref: (N*W*Cout, Cout)     0/1 per-channel reduce matrix
    ebc_ref: (Cout, N*W*Cout)     0/1 per-channel broadcast matrix
    ah_ref : (2H, H)              bilinear (align_corners) row-interp matrix
    o_ref  : (2H, N*2W*Cout)      output, element (p, (n*2W + q)*Cout + c)
    y0_ref : (N*W*H, Cout)        scratch: raw conv output, rows ordered (n, w, h)
    yt_ref : (H, N*W*Cout)        scratch: lane-dense conv/BN buffer
    yc_ref : (H, N*2W*Cout)       scratch: after W-direction interp
    """
    N, Wp2, Hp2, Cin = xp_ref.shape
    W, H = Wp2 - 2, Hp2 - 2
    Cout = w_ref.shape[-1]
    Q = 2 * W
    NW = N * W
    count = float(N * H * W)

    # ---- 1. Conv2d(3x3, pad=1): 9 im2col-style MXU matmuls, accumulated ----
    for t in range(9):
        kh, kw = t // 3, t % 3
        slab = xp_ref[:, kw:kw + W, kh:kh + H, :].reshape(N * W * H, Cin)
        contrib = jnp.dot(slab, w_ref[t], preferred_element_type=jnp.float32)
        if t == 0:
            y0_ref[...] = contrib
        else:
            y0_ref[...] += contrib

    # ---- 2. Relayout to lane-dense (H, N*W*Cout): lane = (n*W + w)*Cout + co ----
    for j in range(NW):
        yt_ref[:, j * Cout:(j + 1) * Cout] = y0_ref[j * H:(j + 1) * H, :]

    # ---- 3. Bias + BatchNorm2d (training-mode batch stats) + LeakyReLU, dense ----
    y = yt_ref[...] + b_ref[...]
    colsum = jnp.sum(y, axis=0, keepdims=True)                                  # (1, NW*C)
    ch_sum = jnp.dot(colsum, erd_ref[...], preferred_element_type=jnp.float32)  # (1, C)
    mean = jnp.dot(ch_sum, ebc_ref[...],
                   preferred_element_type=jnp.float32) * (1.0 / count)          # (1, NW*C)
    d = y - mean
    sqsum = jnp.sum(d * d, axis=0, keepdims=True)
    ch_sq = jnp.dot(sqsum, erd_ref[...], preferred_element_type=jnp.float32)
    var = jnp.dot(ch_sq, ebc_ref[...],
                  preferred_element_type=jnp.float32) * (1.0 / count)
    ynorm = d * jax.lax.rsqrt(var + BN_EPS) * g_ref[...] + bt_ref[...]
    yt_ref[...] = jnp.where(ynorm > 0, ynorm, LEAKY_SLOPE * ynorm)

    # ---- 4. Bilinear x2 along W: static 2-tap lerp on lane groups (VPU) ----
    scale_w = (W - 1) / (Q - 1)
    for n in range(N):
        sbase = n * W * Cout
        dbase = n * Q * Cout
        for q in range(Q):
            src = q * scale_w
            i0 = min(int(math.floor(src)), W - 1)
            i1 = min(i0 + 1, W - 1)
            f = float(src - i0)
            lo = yt_ref[:, sbase + i0 * Cout: sbase + (i0 + 1) * Cout]
            if f > 0.0:
                hi = yt_ref[:, sbase + i1 * Cout: sbase + (i1 + 1) * Cout]
                v = (1.0 - f) * lo + f * hi
            else:
                v = lo
            yc_ref[:, dbase + q * Cout: dbase + (q + 1) * Cout] = v

    # ---- 5. Bilinear x2 along H: one batched MXU matmul over all n ----
    o_ref[...] = jnp.dot(ah_ref[...], yc_ref[...], preferred_element_type=jnp.float32)


def upsampling_layer(x_nchw, w_oihw, b, gamma, beta):
    """PyTorch-equivalent forward. x: (N, Cin, H, W) -> (N, Cout, 2H, 2W)."""
    N, Cin, H, W = x_nchw.shape
    Cout = w_oihw.shape[0]
    P, Q = 2 * H, 2 * W
    Cin_p = max(8, ((Cin + 7) // 8) * 8)     # pad conv contraction to a full sublane tile

    # NCHW -> (N, W, H, Cin) so the im2col rows come out ordered (n, w, h)
    x_nwhc = jnp.transpose(x_nchw, (0, 3, 2, 1)).astype(jnp.float32)
    xp = jnp.pad(x_nwhc, ((0, 0), (1, 1), (1, 1), (0, Cin_p - Cin)))
    # TODO(synk): at large shapes move this halo into the kernel (BlockSpec halo /
    # masked boundary taps) to avoid a padded copy of the activation in HBM.

    # (Cout, Cin, kh, kw) -> (9, Cin_p, Cout), tap index t = kh*3 + kw
    w_taps = jnp.transpose(w_oihw.astype(jnp.float32), (2, 3, 1, 0)).reshape(9, Cin, Cout)
    w_taps = jnp.pad(w_taps, ((0, 0), (0, Cin_p - Cin), (0, 0)))

    # per-channel params pre-tiled to the lane-dense (1, N*W*Cout) layout
    def tile_lanes(v):
        return jnp.tile(v.astype(jnp.float32).reshape(1, Cout), (1, N * W))
    bias_t, gamma_t, beta_t = tile_lanes(b), tile_lanes(gamma), tile_lanes(beta)

    # 0/1 reduce / broadcast matrices for per-channel BN stats (linear size, exact)
    eye = np.eye(Cout, dtype=np.float32)
    e_bc = np.tile(eye, (1, N * W))           # (Cout, N*W*Cout)
    e_rd = np.ascontiguousarray(e_bc.T)       # (N*W*Cout, Cout)

    ah = jnp.asarray(bilinear_matrix(H, P))   # (2H, H)

    out = pl.pallas_call(
        upsampling_layer_kernel,
        out_shape=jax.ShapeDtypeStruct((P, N * Q * Cout), jnp.float32),
        in_specs=[pl.BlockSpec(memory_space=pltpu.MemorySpace.VMEM)] * 8,
        out_specs=pl.BlockSpec(memory_space=pltpu.MemorySpace.VMEM),
        scratch_shapes=[
            pltpu.VMEM((N * W * H, Cin_p // Cin_p * Cout), jnp.float32)
            if False else pltpu.VMEM((N * W * H, Cout), jnp.float32),  # conv output
            pltpu.VMEM((H, N * W * Cout), jnp.float32),                # lane-dense buffer
            pltpu.VMEM((H, N * Q * Cout), jnp.float32),                # after W-interp
        ],
    )(xp, w_taps, bias_t, gamma_t, beta_t,
      jnp.asarray(e_rd), jnp.asarray(e_bc), ah)

    # (2H, N*2W*C) -> (2H, N, 2W, C) -> NCHW
    return jnp.transpose(out.reshape(P, N, Q, Cout), (1, 3, 0, 2))


def reference(x_nchw, w_oihw, b, gamma, beta):
    """Pure-JAX reference matching the PyTorch module (training mode)."""
    hp = jax.lax.Precision.HIGHEST
    y = jax.lax.conv_general_dilated(
        x_nchw, w_oihw, (1, 1), 'SAME',
        dimension_numbers=('NCHW', 'OIHW', 'NCHW'), precision=hp)
    y = y + b[None, :, None, None]
    mean = jnp.mean(y, axis=(0, 2, 3), keepdims=True)
    var = jnp.mean(jnp.square(y - mean), axis=(0, 2, 3), keepdims=True)
    y = (y - mean) * jax.lax.rsqrt(var + BN_EPS) * gamma[None, :, None, None] \
        + beta[None, :, None, None]
    y = jnp.where(y > 0, y, LEAKY_SLOPE * y)
    N, C, H, W = y.shape
    ah = jnp.asarray(bilinear_matrix(H, 2 * H))
    aw = jnp.asarray(bilinear_matrix(W, 2 * W))
    z = jnp.einsum('ph,nchw->ncpw', ah, y, precision=hp)
    z = jnp.einsum('qw,ncpw->ncpq', aw, z, precision=hp)
    return z


if __name__ == "__main__":
    key = jax.random.PRNGKey(0)
    kx, kw, kb, kg, kbt = jax.random.split(key, 5)
    N, Cin, Cout, H, W = 2, 4, 8, 16, 16

    x = jax.random.normal(kx, (N, Cin, H, W), jnp.float32)
    w = jax.random.normal(kw, (Cout, Cin, 3, 3), jnp.float32) * 0.1   # Conv2d weight
    b = jax.random.normal(kb, (Cout,), jnp.float32) * 0.1             # Conv2d bias
    gamma = 1.0 + 0.1 * jax.random.normal(kg, (Cout,), jnp.float32)   # BN weight
    beta = 0.1 * jax.random.normal(kbt, (Cout,), jnp.float32)         # BN bias

    out = jax.block_until_ready(upsampling_layer(x, w, b, gamma, beta))
    ref = jax.block_until_ready(reference(x, w, b, gamma, beta))

    assert out.shape == (N, Cout, 2 * H, 2 * W), out.shape
    if not np.allclose(np.asarray(out), np.asarray(ref), rtol=2e-2, atol=2e-2):
        raise AssertionError(
            "mismatch: max abs diff = %g"
            % float(np.max(np.abs(np.asarray(out) - np.asarray(ref)))))
    print("KERNEL_OK")
</pallas_src>

<mosaic_0001>
module attributes {stable_mosaic.version = 11 : i64} {
  func.func @upsampling_layer_kernel(%arg0: memref<2x18x18x8xf32, #tpu.memory_space<vmem>>, %arg1: memref<9x8x8xf32, #tpu.memory_space<vmem>>, %arg2: memref<1x256xf32, #tpu.memory_space<vmem>>, %arg3: memref<1x256xf32, #tpu.memory_space<vmem>>, %arg4: memref<1x256xf32, #tpu.memory_space<vmem>>, %arg5: memref<256x8xf32, #tpu.memory_space<vmem>>, %arg6: memref<8x256xf32, #tpu.memory_space<vmem>>, %arg7: memref<32x16xf32, #tpu.memory_space<vmem>>, %arg8: memref<32x512xf32, #tpu.memory_space<vmem>>, %arg9: memref<512x8xf32, #tpu.memory_space<vmem>>, %arg10: memref<16x256xf32, #tpu.memory_space<vmem>>, %arg11: memref<16x512xf32, #tpu.memory_space<vmem>>) attributes {dimension_semantics = [], scalar_prefetch = 0 : i64, scratch_operands = 3 : i64, tpu.core_type = #tpu.core_type<tc>} {
    %c0 = arith.constant 0 : index
    %c0_0 = arith.constant 0 : index
    %c0_1 = arith.constant 0 : index
    %c0_2 = arith.constant 0 : index
    %0 = vector.load %arg0[%c0, %c0_0, %c0_1, %c0_2] : memref<2x18x18x8xf32, #tpu.memory_space<vmem>>, vector<2x16x16x8xf32>
    %1 = vector.shape_cast %0 : vector<2x16x16x8xf32> to vector<512x8xf32>
    %c0_3 = arith.constant 0 : index
    %c0_4 = arith.constant 0 : index
    %c0_5 = arith.constant 0 : index
    %2 = vector.load %arg1[%c0_3, %c0_4, %c0_5] : memref<9x8x8xf32, #tpu.memory_space<vmem>>, vector<1x8x8xf32>
    %3 = vector.shape_cast %2 : vector<1x8x8xf32> to vector<8x8xf32>
    %cst = arith.constant dense<0.000000e+00> : vector<512x8xf32>
    %4 = tpu.matmul %1, %3, %cst {dimension_numbers = #tpu.dot_dimension_numbers<[1], [0], [0], [1], [0, 0, 1, 1], [], []>} : vector<512x8xf32>, vector<8x8xf32>, vector<512x8xf32> -> vector<512x8xf32>
    %c0_6 = arith.constant 0 : index
    %c0_7 = arith.constant 0 : index
    %5 = vector.load %arg9[%c0_6, %c0_7] : memref<512x8xf32, #tpu.memory_space<vmem>>, vector<512x8xf32>
    tpu.vector_store %arg9[%c0_6, %c0_7], %4 {strides = array<i32>} : memref<512x8xf32, #tpu.memory_space<vmem>>, vector<512x8xf32>,
    %c0_8 = arith.constant 0 : index
    %c1 = arith.constant 1 : index
    %c0_9 = arith.constant 0 : index
    %c0_10 = arith.constant 0 : index
    %6 = vector.load %arg0[%c0_8, %c1, %c0_9, %c0_10] : memref<2x18x18x8xf32, #tpu.memory_space<vmem>>, vector<2x16x16x8xf32>
    %7 = vector.shape_cast %6 : vector<2x16x16x8xf32> to vector<512x8xf32>
    %c1_11 = arith.constant 1 : index
    %c0_12 = arith.constant 0 : index
    %c0_13 = arith.constant 0 : index
    %8 = vector.load %arg1[%c1_11, %c0_12, %c0_13] : memref<9x8x8xf32, #tpu.memory_space<vmem>>, vector<1x8x8xf32>
    %9 = vector.shape_cast %8 : vector<1x8x8xf32> to vector<8x8xf32>
    %cst_14 = arith.constant dense<0.000000e+00> : vector<512x8xf32>
    %10 = tpu.matmul %7, %9, %cst_14 {dimension_numbers = #tpu.dot_dimension_numbers<[1], [0], [0], [1], [0, 0, 1, 1], [], []>} : vector<512x8xf32>, vector<8x8xf32>, vector<512x8xf32> -> vector<512x8xf32>
    %c0_15 = arith.constant 0 : index
    %c0_16 = arith.constant 0 : index
    %11 = vector.load %arg9[%c0_15, %c0_16] : memref<512x8xf32, #tpu.memory_space<vmem>>, vector<512x8xf32>
    %12 = arith.addf %11, %10 : vector<512x8xf32>
    %c0_17 = arith.constant 0 : index
    %c0_18 = arith.constant 0 : index
    %13 = vector.load %arg9[%c0_17, %c0_18] : memref<512x8xf32, #tpu.memory_space<vmem>>, vector<512x8xf32>
    tpu.vector_store %arg9[%c0_17, %c0_18], %12 {strides = array<i32>} : memref<512x8xf32, #tpu.memory_space<vmem>>, vector<512x8xf32>,
    %c0_19 = arith.constant 0 : index
    %c2 = arith.constant 2 : index
    %c0_20 = arith.constant 0 : index
    %c0_21 = arith.constant 0 : index
    %14 = vector.load %arg0[%c0_19, %c2, %c0_20, %c0_21] : memref<2x18x18x8xf32, #tpu.memory_space<vmem>>, vector<2x16x16x8xf32>
    %15 = vector.shape_cast %14 : vector<2x16x16x8xf32> to vector<512x8xf32>
    %c2_22 = arith.constant 2 : index
    %c0_23 = arith.constant 0 : index
    %c0_24 = arith.constant 0 : index
    %16 = vector.load %arg1[%c2_22, %c0_23, %c0_24] : memref<9x8x8xf32, #tpu.memory_space<vmem>>, vector<1x8x8xf32>
    %17 = vector.shape_cast %16 : vector<1x8x8xf32> to vector<8x8xf32>
    %cst_25 = arith.constant dense<0.000000e+00> : vector<512x8xf32>
    %18 = tpu.matmul %15, %17, %cst_25 {dimension_numbers = #tpu.dot_dimension_numbers<[1], [0], [0], [1], [0, 0, 1, 1], [], []>} : vector<512x8xf32>, vector<8x8xf32>, vector<512x8xf32> -> vector<512x8xf32>
    %c0_26 = arith.constant 0 : index
    %c0_27 = arith.constant 0 : index
    %19 = vector.load %arg9[%c0_26, %c0_27] : memref<512x8xf32, #tpu.memory_space<vmem>>, vector<512x8xf32>
    %20 = arith.addf %19, %18 : vector<512x8xf32>
    %c0_28 = arith.constant 0 : index
    %c0_29 = arith.constant 0 : index
    %21 = vector.load %arg9[%c0_28, %c0_29] : memref<512x8xf32, #tpu.memory_space<vmem>>, vector<512x8xf32>
    tpu.vector_store %arg9[%c0_28, %c0_29], %20 {strides = array<i32>} : memref<512x8xf32, #tpu.memory_space<vmem>>, vector<512x8xf32>,
    %c0_30 = arith.constant 0 : index
    %c0_31 = arith.constant 0 : index
    %c1_32 = arith.constant 1 : index
    %c0_33 = arith.constant 0 : index
    %22 = vector.load %arg0[%c0_30, %c0_31, %c1_32, %c0_33] : memref<2x18x18x8xf32, #tpu.memory_space<vmem>>, vector<2x16x16x8xf32>
    %23 = vector.shape_cast %22 : vector<2x16x16x8xf32> to vector<512x8xf32>
    %c3 = arith.constant 3 : index
    %c0_34 = arith.constant 0 : index
    %c0_35 = arith.constant 0 : index
    %24 = vector.load %arg1[%c3, %c0_34, %c0_35] : memref<9x8x8xf32, #tpu.memory_space<vmem>>, vector<1x8x8xf32>
    %25 = vector.shape_cast %24 : vector<1x8x8xf32> to vector<8x8xf32>
    %cst_36 = arith.constant dense<0.000000e+00> : vector<512x8xf32>
    %26 = tpu.matmul %23, %25, %cst_36 {dimension_numbers = #tpu.dot_dimension_numbers<[1], [0], [0], [1], [0, 0, 1, 1], [], []>} : vector<512x8xf32>, vector<8x8xf32>, vector<512x8xf32> -> vector<512x8xf32>
    %c0_37 = arith.constant 0 : index
    %c0_38 = arith.constant 0 : index
    %27 = vector.load %arg9[%c0_37, %c0_38] : memref<512x8xf32, #tpu.memory_space<vmem>>, vector<512x8xf32>
    %28 = arith.addf %27, %26 : vector<512x8xf32>
    %c0_39 = arith.constant 0 : index
    %c0_40 = arith.constant 0 : index
    %29 = vector.load %arg9[%c0_39, %c0_40] : memref<512x8xf32, #tpu.memory_space<vmem>>, vector<512x8xf32>
    tpu.vector_store %arg9[%c0_39, %c0_40], %28 {strides = array<i32>} : memref<512x8xf32, #tpu.memory_space<vmem>>, vector<512x8xf32>,
    %c0_41 = arith.constant 0 : index
    %c1_42 = arith.constant 1 : index
    %c1_43 = arith.constant 1 : index
    %c0_44 = arith.constant 0 : index
    %30 = vector.load %arg0[%c0_41, %c1_42, %c1_43, %c0_44] : memref<2x18x18x8xf32, #tpu.memory_space<vmem>>, vector<2x16x16x8xf32>
    %31 = vector.shape_cast %30 : vector<2x16x16x8xf32> to vector<512x8xf32>
    %c4 = arith.constant 4 : index
    %c0_45 = arith.constant 0 : index
    %c0_46 = arith.constant 0 : index
    %32 = vector.load %arg1[%c4, %c0_45, %c0_46] : memref<9x8x8xf32, #tpu.memory_space<vmem>>, vector<1x8x8xf32>
    %33 = vector.shape_cast %32 : vector<1x8x8xf32> to vector<8x8xf32>
    %cst_47 = arith.constant dense<0.000000e+00> : vector<512x8xf32>
    %34 = tpu.matmul %31, %33, %cst_47 {dimension_numbers = #tpu.dot_dimension_numbers<[1], [0], [0], [1], [0, 0, 1, 1], [], []>} : vector<512x8xf32>, vector<8x8xf32>, vector<512x8xf32> -> vector<512x8xf32>
    %c0_48 = arith.constant 0 : index
    %c0_49 = arith.constant 0 : index
    %35 = vector.load %arg9[%c0_48, %c0_49] : memref<512x8xf32, #tpu.memory_space<vmem>>, vector<512x8xf32>
    %36 = arith.addf %35, %34 : vector<512x8xf32>
    %c0_50 = arith.constant 0 : index
    %c0_51 = arith.constant 0 : index
    %37 = vector.load %arg9[%c0_50, %c0_51] : memref<512x8xf32, #tpu.memory_space<vmem>>, vector<512x8xf32>
    tpu.vector_store %arg9[%c0_50, %c0_51], %36 {strides = array<i32>} : memref<512x8xf32, #tpu.memory_space<vmem>>, vector<512x8xf32>,
    %c0_52 = arith.constant 0 : index
    %c2_53 = arith.constant 2 : index
    %c1_54 = arith.constant 1 : index
    %c0_55 = arith.constant 0 : index
    %38 = vector.load %arg0[%c0_52, %c2_53, %c1_54, %c0_55] : memref<2x18x18x8xf32, #tpu.memory_space<vmem>>, vector<2x16x16x8xf32>
    %39 = vector.shape_cast %38 : vector<2x16x16x8xf32> to vector<512x8xf32>
    %c5 = arith.constant 5 : index
    %c0_56 = arith.constant 0 : index
    %c0_57 = arith.constant 0 : index
    %40 = vector.load %arg1[%c5, %c0_56, %c0_57] : memref<9x8x8xf32, #tpu.memory_space<vmem>>, vector<1x8x8xf32>
    %41 = vector.shape_cast %40 : vector<1x8x8xf32> to vector<8x8xf32>
    %cst_58 = arith.constant dense<0.000000e+00> : vector<512x8xf32>
    %42 = tpu.matmul %39, %41, %cst_58 {dimension_numbers = #tpu.dot_dimension_numbers<[1], [0], [0], [1], [0, 0, 1, 1], [], []>} : vector<512x8xf32>, vector<8x8xf32>, vector<512x8xf32> -> vector<512x8xf32>
    %c0_59 = arith.constant 0 : index
    %c0_60 = arith.constant 0 : index
    %43 = vector.load %arg9[%c0_59, %c0_60] : memref<512x8xf32, #tpu.memory_space<vmem>>, vector<512x8xf32>
    %44 = arith.addf %43, %42 : vector<512x8xf32>
    %c0_61 = arith.constant 0 : index
    %c0_62 = arith.constant 0 : index
    %45 = vector.load %arg9[%c0_61, %c0_62] : memref<512x8xf32, #tpu.memory_space<vmem>>, vector<512x8xf32>
    tpu.vector_store %arg9[%c0_61, %c0_62], %44 {strides = array<i32>} : memref<512x8xf32, #tpu.memory_space<vmem>>, vector<512x8xf32>,
    %c0_63 = arith.constant 0 : index
    %c0_64 = arith.constant 0 : index
    %c2_65 = arith.constant 2 : index
    %c0_66 = arith.constant 0 : index
    %46 = vector.load %arg0[%c0_63, %c0_64, %c2_65, %c0_66] : memref<2x18x18x8xf32, #tpu.memory_space<vmem>>, vector<2x16x16x8xf32>
    %47 = vector.shape_cast %46 : vector<2x16x16x8xf32> to vector<512x8xf32>
    %c6 = arith.constant 6 : index
    %c0_67 = arith.constant 0 : index
    %c0_68 = arith.constant 0 : index
    %48 = vector.load %arg1[%c6, %c0_67, %c0_68] : memref<9x8x8xf32, #tpu.memory_space<vmem>>, vector<1x8x8xf32>
    %49 = vector.shape_cast %48 : vector<1x8x8xf32> to vector<8x8xf32>
    %cst_69 = arith.constant dense<0.000000e+00> : vector<512x8xf32>
    %50 = tpu.matmul %47, %49, %cst_69 {dimension_numbers = #tpu.dot_dimension_numbers<[1], [0], [0], [1], [0, 0, 1, 1], [], []>} : vector<512x8xf32>, vector<8x8xf32>, vector<512x8xf32> -> vector<512x8xf32>
    %c0_70 = arith.constant 0 : index
    %c0_71 = arith.constant 0 : index
    %51 = vector.load %arg9[%c0_70, %c0_71] : memref<512x8xf32, #tpu.memory_space<vmem>>, vector<512x8xf32>
    %52 = arith.addf %51, %50 : vector<512x8xf32>
    %c0_72 = arith.constant 0 : index
    %c0_73 = arith.constant 0 : index
    %53 = vector.load %arg9[%c0_72, %c0_73] : memref<512x8xf32, #tpu.memory_space<vmem>>, vector<512x8xf32>
    tpu.vector_store %arg9[%c0_72, %c0_73], %52 {strides = array<i32>} : memref<512x8xf32, #tpu.memory_space<vmem>>, vector<512x8xf32>,
    %c0_74 = arith.constant 0 : index
    %c1_75 = arith.constant 1 : index
    %c2_76 = arith.constant 2 : index
    %c0_77 = arith.constant 0 : index
    %54 = vector.load %arg0[%c0_74, %c1_75, %c2_76, %c0_77] : memref<2x18x18x8xf32, #tpu.memory_space<vmem>>, vector<2x16x16x8xf32>
    %55 = vector.shape_cast %54 : vector<2x16x16x8xf32> to vector<512x8xf32>
    %c7 = arith.constant 7 : index
    %c0_78 = arith.constant 0 : index
    %c0_79 = arith.constant 0 : index
    %56 = vector.load %arg1[%c7, %c0_78, %c0_79] : memref<9x8x8xf32, #tpu.memory_space<vmem>>, vector<1x8x8xf32>
    %57 = vector.shape_cast %56 : vector<1x8x8xf32> to vector<8x8xf32>
    %cst_80 = arith.constant dense<0.000000e+00> : vector<512x8xf32>
    %58 = tpu.matmul %55, %57, %cst_80 {dimension_numbers = #tpu.dot_dimension_numbers<[1], [0], [0], [1], [0, 0, 1, 1], [], []>} : vector<512x8xf32>, vector<8x8xf32>, vector<512x8xf32> -> vector<512x8xf32>
    %c0_81 = arith.constant 0 : index
    %c0_82 = arith.constant 0 : index
    %59 = vector.load %arg9[%c0_81, %c0_82] : memref<512x8xf32, #tpu.memory_space<vmem>>, vector<512x8xf32>
    %60 = arith.addf %59, %58 : vector<512x8xf32>
    %c0_83 = arith.constant 0 : index
    %c0_84 = arith.constant 0 : index
    %61 = vector.load %arg9[%c0_83, %c0_84] : memref<512x8xf32, #tpu.memory_space<vmem>>, vector<512x8xf32>
    tpu.vector_store %arg9[%c0_83, %c0_84], %60 {strides = array<i32>} : memref<512x8xf32, #tpu.memory_space<vmem>>, vector<512x8xf32>,
    %c0_85 = arith.constant 0 : index
    %c2_86 = arith.constant 2 : index
    %c2_87 = arith.constant 2 : index
    %c0_88 = arith.constant 0 : index
    %62 = vector.load %arg0[%c0_85, %c2_86, %c2_87, %c0_88] : memref<2x18x18x8xf32, #tpu.memory_space<vmem>>, vector<2x16x16x8xf32>
    %63 = vector.shape_cast %62 : vector<2x16x16x8xf32> to vector<512x8xf32>
    %c8 = arith.constant 8 : index
    %c0_89 = arith.constant 0 : index
    %c0_90 = arith.constant 0 : index
    %64 = vector.load %arg1[%c8, %c0_89, %c0_90] : memref<9x8x8xf32, #tpu.memory_space<vmem>>, vector<1x8x8xf32>
    %65 = vector.shape_cast %64 : vector<1x8x8xf32> to vector<8x8xf32>
    %cst_91 = arith.constant dense<0.000000e+00> : vector<512x8xf32>
    %66 = tpu.matmul %63, %65, %cst_91 {dimension_numbers = #tpu.dot_dimension_numbers<[1], [0], [0], [1], [0, 0, 1, 1], [], []>} : vector<512x8xf32>, vector<8x8xf32>, vector<512x8xf32> -> vector<512x8xf32>
    %c0_92 = arith.constant 0 : index
    %c0_93 = arith.constant 0 : index
    %67 = vector.load %arg9[%c0_92, %c0_93] : memref<512x8xf32, #tpu.memory_space<vmem>>, vector<512x8xf32>
    %68 = arith.addf %67, %66 : vector<512x8xf32>
    %c0_94 = arith.constant 0 : index
    %c0_95 = arith.constant 0 : index
    %69 = vector.load %arg9[%c0_94, %c0_95] : memref<512x8xf32, #tpu.memory_space<vmem>>, vector<512x8xf32>
    tpu.vector_store %arg9[%c0_94, %c0_95], %68 {strides = array<i32>} : memref<512x8xf32, #tpu.memory_space<vmem>>, vector<512x8xf32>,
    %c0_96 = arith.constant 0 : index
    %c0_97 = arith.constant 0 : index
    %70 = vector.load %arg9[%c0_96, %c0_97] : memref<512x8xf32, #tpu.memory_space<vmem>>, vector<16x8xf32>
    %c0_98 = arith.constant 0 : index
    %c0_99 = arith.constant 0 : index
    %71 = vector.load %arg10[%c0_98, %c0_99] : memref<16x256xf32, #tpu.memory_space<vmem>>, vector<16x8xf32>
    tpu.vector_store %arg10[%c0_98, %c0_99], %70 {strides = array<i32>} : memref<16x256xf32, #tpu.memory_space<vmem>>, vector<16x8xf32>,
    %c16 = arith.constant 16 : index
    %c0_100 = arith.constant 0 : index
    %72 = vector.load %arg9[%c16, %c0_100] : memref<512x8xf32, #tpu.memory_space<vmem>>, vector<16x8xf32>
    %c0_101 = arith.constant 0 : index
    %c8_102 = arith.constant 8 : index
    %73 = vector.load %arg10[%c0_101, %c8_102] : memref<16x256xf32, #tpu.memory_space<vmem>>, vector<16x8xf32>
    tpu.vector_store %arg10[%c0_101, %c8_102], %72 {strides = array<i32>} : memref<16x256xf32, #tpu.memory_space<vmem>>, vector<16x8xf32>,
    %c32 = arith.constant 32 : index
    %c0_103 = arith.constant 0 : index
    %74 = vector.load %arg9[%c32, %c0_103] : memref<512x8xf32, #tpu.memory_space<vmem>>, vector<16x8xf32>
    %c0_104 = arith.constant 0 : index
    %c16_105 = arith.constant 16 : index
    %75 = vector.load %arg10[%c0_104, %c16_105] : memref<16x256xf32, #tpu.memory_space<vmem>>, vector<16x8xf32>
    tpu.vector_store %arg10[%c0_104, %c16_105], %74 {strides = array<i32>} : memref<16x256xf32, #tpu.memory_space<vmem>>, vector<16x8xf32>,
    %c48 = arith.constant 48 : index
    %c0_106 = arith.constant 0 : index
    %76 = vector.load %arg9[%c48, %c0_106] : memref<512x8xf32, #tpu.memory_space<vmem>>, vector<16x8xf32>
    %c0_107 = arith.constant 0 : index
    %c24 = arith.constant 24 : index
    %77 = vector.load %arg10[%c0_107, %c24] : memref<16x256xf32, #tpu.memory_space<vmem>>, vector<16x8xf32>
    tpu.vector_store %arg10[%c0_107, %c24], %76 {strides = array<i32>} : memref<16x256xf32, #tpu.memory_space<vmem>>, vector<16x8xf32>,
    %c64 = arith.constant 64 : index
    %c0_108 = arith.constant 0 : index
    %78 = vector.load %arg9[%c64, %c0_108] : memref<512x8xf32, #tpu.memory_space<vmem>>, vector<16x8xf32>
    %c0_109 = arith.constant 0 : index
    %c32_110 = arith.constant 32 : index
    %79 = vector.load %arg10[%c0_109, %c32_110] : memref<16x256xf32, #tpu.memory_space<vmem>>, vector<16x8xf32>
    tpu.vector_store %arg10[%c0_109, %c32_110], %78 {strides = array<i32>} : memref<16x256xf32, #tpu.memory_space<vmem>>, vector<16x8xf32>,
    %c80 = arith.constant 80 : index
    %c0_111 = arith.constant 0 : index
    %80 = vector.load %arg9[%c80, %c0_111] : memref<512x8xf32, #tpu.memory_space<vmem>>, vector<16x8xf32>
    %c0_112 = arith.constant 0 : index
    %c40 = arith.constant 40 : index
    %81 = vector.load %arg10[%c0_112, %c40] : memref<16x256xf32, #tpu.memory_space<vmem>>, vector<16x8xf32>
    tpu.vector_store %arg10[%c0_112, %c40], %80 {strides = array<i32>} : memref<16x256xf32, #tpu.memory_space<vmem>>, vector<16x8xf32>,
    %c96 = arith.constant 96 : index
    %c0_113 = arith.constant 0 : index
    %82 = vector.load %arg9[%c96, %c0_113] : memref<512x8xf32, #tpu.memory_space<vmem>>, vector<16x8xf32>
    %c0_114 = arith.constant 0 : index
    %c48_115 = arith.constant 48 : index
    %83 = vector.load %arg10[%c0_114, %c48_115] : memref<16x256xf32, #tpu.memory_space<vmem>>, vector<16x8xf32>
    tpu.vector_store %arg10[%c0_114, %c48_115], %82 {strides = array<i32>} : memref<16x256xf32, #tpu.memory_space<vmem>>, vector<16x8xf32>,
    %c112 = arith.constant 112 : index
    %c0_116 = arith.constant 0 : index
    %84 = vector.load %arg9[%c112, %c0_116] : memref<512x8xf32, #tpu.memory_space<vmem>>, vector<16x8xf32>
    %c0_117 = arith.constant 0 : index
    %c56 = arith.constant 56 : index
    %85 = vector.load %arg10[%c0_117, %c56] : memref<16x256xf32, #tpu.memory_space<vmem>>, vector<16x8xf32>
    tpu.vector_store %arg10[%c0_117, %c56], %84 {strides = array<i32>} : memref<16x256xf32, #tpu.memory_space<vmem>>, vector<16x8xf32>,
    %c128 = arith.constant 128 : index
    %c0_118 = arith.constant 0 : index
    %86 = vector.load %arg9[%c128, %c0_118] : memref<512x8xf32, #tpu.memory_space<vmem>>, vector<16x8xf32>
    %c0_119 = arith.constant 0 : index
    %c64_120 = arith.constant 64 : index
    %87 = vector.load %arg10[%c0_119, %c64_120] : memref<16x256xf32, #tpu.memory_space<vmem>>, vector<16x8xf32>
    tpu.vector_store %arg10[%c0_119, %c64_120], %86 {strides = array<i32>} : memref<16x256xf32, #tpu.memory_space<vmem>>, vector<16x8xf32>,
    %c144 = arith.constant 144 : index
    %c0_121 = arith.constant 0 : index
    %88 = vector.load %arg9[%c144, %c0_121] : memref<512x8xf32, #tpu.memory_space<vmem>>, vector<16x8xf32>
    %c0_122 = arith.constant 0 : index
    %c72 = arith.constant 72 : index
    %89 = vector.load %arg10[%c0_122, %c72] : memref<16x256xf32, #tpu.memory_space<vmem>>, vector<16x8xf32>
    tpu.vector_store %arg10[%c0_122, %c72], %88 {strides = array<i32>} : memref<16x256xf32, #tpu.memory_space<vmem>>, vector<16x8xf32>,
    %c160 = arith.constant 160 : index
    %c0_123 = arith.constant 0 : index
    %90 = vector.load %arg9[%c160, %c0_123] : memref<512x8xf32, #tpu.memory_space<vmem>>, vector<16x8xf32>
    %c0_124 = arith.constant 0 : index
    %c80_125 = arith.constant 80 : index
    %91 = vector.load %arg10[%c0_124, %c80_125] : memref<16x256xf32, #tpu.memory_space<vmem>>, vector<16x8xf32>
    tpu.vector_store %arg10[%c0_124, %c80_125], %90 {strides = array<i32>} : memref<16x256xf32, #tpu.memory_space<vmem>>, vector<16x8xf32>,
    %c176 = arith.constant 176 : index
    %c0_126 = arith.constant 0 : index
    %92 = vector.load %arg9[%c176, %c0_126] : memref<512x8xf32, #tpu.memory_space<vmem>>, vector<16x8xf32>
    %c0_127 = arith.constant 0 : index
    %c88 = arith.constant 88 : index
    %93 = vector.load %arg10[%c0_127, %c88] : memref<16x256xf32, #tpu.memory_space<vmem>>, vector<16x8xf32>
    tpu.vector_store %arg10[%c0_127, %c88], %92 {strides = array<i32>} : memref<16x256xf32, #tpu.memory_space<vmem>>, vector<16x8xf32>,
    %c192 = arith.constant 192 : index
    %c0_128 = arith.constant 0 : index
    %94 = vector.load %arg9[%c192, %c0_128] : memref<512x8xf32, #tpu.memory_space<vmem>>, vector<16x8xf32>
    %c0_129 = arith.constant 0 : index
    %c96_130 = arith.constant 96 : index
    %95 = vector.load %arg10[%c0_129, %c96_130] : memref<16x256xf32, #tpu.memory_space<vmem>>, vector<16x8xf32>
    tpu.vector_store %arg10[%c0_129, %c96_130], %94 {strides = array<i32>} : memref<16x256xf32, #tpu.memory_space<vmem>>, vector<16x8xf32>,
    %c208 = arith.constant 208 : index
    %c0_131 = arith.constant 0 : index
    %96 = vector.load %arg9[%c208, %c0_131] : memref<512x8xf32, #tpu.memory_space<vmem>>, vector<16x8xf32>
    %c0_132 = arith.constant 0 : index
    %c104 = arith.constant 104 : index
    %97 = vector.load %arg10[%c0_132, %c104] : memref<16x256xf32, #tpu.memory_space<vmem>>, vector<16x8xf32>
    tpu.vector_store %arg10[%c0_132, %c104], %96 {strides = array<i32>} : memref<16x256xf32, #tpu.memory_space<vmem>>, vector<16x8xf32>,
    %c224 = arith.constant 224 : index
    %c0_133 = arith.constant 0 : index
    %98 = vector.load %arg9[%c224, %c0_133] : memref<512x8xf32, #tpu.memory_space<vmem>>, vector<16x8xf32>
    %c0_134 = arith.constant 0 : index
    %c112_135 = arith.constant 112 : index
    %99 = vector.load %arg10[%c0_134, %c112_135] : memref<16x256xf32, #tpu.memory_space<vmem>>, vector<16x8xf32>
    tpu.vector_store %arg10[%c0_134, %c112_135], %98 {strides = array<i32>} : memref<16x256xf32, #tpu.memory_space<vmem>>, vector<16x8xf32>,
    %c240 = arith.constant 240 : index
    %c0_136 = arith.constant 0 : index
    %100 = vector.load %arg9[%c240, %c0_136] : memref<512x8xf32, #tpu.memory_space<vmem>>, vector<16x8xf32>
    %c0_137 = arith.constant 0 : index
    %c120 = arith.constant 120 : index
    %101 = vector.load %arg10[%c0_137, %c120] : memref<16x256xf32, #tpu.memory_space<vmem>>, vector<16x8xf32>
    tpu.vector_store %arg10[%c0_137, %c120], %100 {strides = array<i32>} : memref<16x256xf32, #tpu.memory_space<vmem>>, vector<16x8xf32>,
    %c256 = arith.constant 256 : index
    %c0_138 = arith.constant 0 : index
    %102 = vector.load %arg9[%c256, %c0_138] : memref<512x8xf32, #tpu.memory_space<vmem>>, vector<16x8xf32>
    %c0_139 = arith.constant 0 : index
    %c128_140 = arith.constant 128 : index
    %103 = vector.load %arg10[%c0_139, %c128_140] : memref<16x256xf32, #tpu.memory_space<vmem>>, vector<16x8xf32>
    tpu.vector_store %arg10[%c0_139, %c128_140], %102 {strides = array<i32>} : memref<16x256xf32, #tpu.memory_space<vmem>>, vector<16x8xf32>,
    %c272 = arith.constant 272 : index
    %c0_141 = arith.constant 0 : index
    %104 = vector.load %arg9[%c272, %c0_141] : memref<512x8xf32, #tpu.memory_space<vmem>>, vector<16x8xf32>
    %c0_142 = arith.constant 0 : index
    %c136 = arith.constant 136 : index
    %105 = vector.load %arg10[%c0_142, %c136] : memref<16x256xf32, #tpu.memory_space<vmem>>, vector<16x8xf32>
    tpu.vector_store %arg10[%c0_142, %c136], %104 {strides = array<i32>} : memref<16x256xf32, #tpu.memory_space<vmem>>, vector<16x8xf32>,
    %c288 = arith.constant 288 : index
    %c0_143 = arith.constant 0 : index
    %106 = vector.load %arg9[%c288, %c0_143] : memref<512x8xf32, #tpu.memory_space<vmem>>, vector<16x8xf32>
    %c0_144 = arith.constant 0 : index
    %c144_145 = arith.constant 144 : index
    %107 = vector.load %arg10[%c0_144, %c144_145] : memref<16x256xf32, #tpu.memory_space<vmem>>, vector<16x8xf32>
    tpu.vector_store %arg10[%c0_144, %c144_145], %106 {strides = array<i32>} : memref<16x256xf32, #tpu.memory_space<vmem>>, vector<16x8xf32>,
    %c304 = arith.constant 304 : index
    %c0_146 = arith.constant 0 : index
    %108 = vector.load %arg9[%c304, %c0_146] : memref<512x8xf32, #tpu.memory_space<vmem>>, vector<16x8xf32>
    %c0_147 = arith.constant 0 : index
    %c152 = arith.constant 152 : index
    %109 = vector.load %arg10[%c0_147, %c152] : memref<16x256xf32, #tpu.memory_space<vmem>>, vector<16x8xf32>
    tpu.vector_store %arg10[%c0_147, %c152], %108 {strides = array<i32>} : memref<16x256xf32, #tpu.memory_space<vmem>>, vector<16x8xf32>,
    %c320 = arith.constant 320 : index
    %c0_148 = arith.constant 0 : index
    %110 = vector.load %arg9[%c320, %c0_148] : memref<512x8xf32, #tpu.memory_space<vmem>>, vector<16x8xf32>
    %c0_149 = arith.constant 0 : index
    %c160_150 = arith.constant 160 : index
    %111 = vector.load %arg10[%c0_149, %c160_150] : memref<16x256xf32, #tpu.memory_space<vmem>>, vector<16x8xf32>
    tpu.vector_store %arg10[%c0_149, %c160_150], %110 {strides = array<i32>} : memref<16x256xf32, #tpu.memory_space<vmem>>, vector<16x8xf32>,
    %c336 = arith.constant 336 : index
    %c0_151 = arith.constant 0 : index
    %112 = vector.load %arg9[%c336, %c0_151] : memref<512x8xf32, #tpu.memory_space<vmem>>, vector<16x8xf32>
    %c0_152 = arith.constant 0 : index
    %c168 = arith.constant 168 : index
    %113 = vector.load %arg10[%c0_152, %c168] : memref<16x256xf32, #tpu.memory_space<vmem>>, vector<16x8xf32>
    tpu.vector_store %arg10[%c0_152, %c168], %112 {strides = array<i32>} : memref<16x256xf32, #tpu.memory_space<vmem>>, vector<16x8xf32>,
    %c352 = arith.constant 352 : index
    %c0_153 = arith.constant 0 : index
    %114 = vector.load %arg9[%c352, %c0_153] : memref<512x8xf32, #tpu.memory_space<vmem>>, vector<16x8xf32>
    %c0_154 = arith.constant 0 : index
    %c176_155 = arith.constant 176 : index
    %115 = vector.load %arg10[%c0_154, %c176_155] : memref<16x256xf32, #tpu.memory_space<vmem>>, vector<16x8xf32>
    tpu.vector_store %arg10[%c0_154, %c176_155], %114 {strides = array<i32>} : memref<16x256xf32, #tpu.memory_space<vmem>>, vector<16x8xf32>,
    %c368 = arith.constant 368 : index
    %c0_156 = arith.constant 0 : index
    %116 = vector.load %arg9[%c368, %c0_156] : memref<512x8xf32, #tpu.memory_space<vmem>>, vector<16x8xf32>
    %c0_157 = arith.constant 0 : index
    %c184 = arith.constant 184 : index
    %117 = vector.load %arg10[%c0_157, %c184] : memref<16x256xf32, #tpu.memory_space<vmem>>, vector<16x8xf32>
    tpu.vector_store %arg10[%c0_157, %c184], %116 {strides = array<i32>} : memref<16x256xf32, #tpu.memory_space<vmem>>, vector<16x8xf32>,
    %c384 = arith.constant 384 : index
    %c0_158 = arith.constant 0 : index
    %118 = vector.load %arg9[%c384, %c0_158] : memref<512x8xf32, #tpu.memory_space<vmem>>, vector<16x8xf32>
    %c0_159 = arith.constant 0 : index
    %c192_160 = arith.constant 192 : index
    %119 = vector.load %arg10[%c0_159, %c192_160] : memref<16x256xf32, #tpu.memory_space<vmem>>, vector<16x8xf32>
    tpu.vector_store %arg10[%c0_159, %c192_160], %118 {strides = array<i32>} : memref<16x256xf32, #tpu.memory_space<vmem>>, vector<16x8xf32>,
    %c400 = arith.constant 400 : index
    %c0_161 = arith.constant 0 : index
    %120 = vector.load %arg9[%c400, %c0_161] : memref<512x8xf32, #tpu.memory_space<vmem>>, vector<16x8xf32>
    %c0_162 = arith.constant 0 : index
    %c200 = arith.constant 200 : index
    %121 = vector.load %arg10[%c0_162, %c200] : memref<16x256xf32, #tpu.memory_space<vmem>>, vector<16x8xf32>
    tpu.vector_store %arg10[%c0_162, %c200], %120 {strides = array<i32>} : memref<16x256xf32, #tpu.memory_space<vmem>>, vector<16x8xf32>,
    %c416 = arith.constant 416 : index
    %c0_163 = arith.constant 0 : index
    %122 = vector.load %arg9[%c416, %c0_163] : memref<512x8xf32, #tpu.memory_space<vmem>>, vector<16x8xf32>
    %c0_164 = arith.constant 0 : index
    %c208_165 = arith.constant 208 : index
    %123 = vector.load %arg10[%c0_164, %c208_165] : memref<16x256xf32, #tpu.memory_space<vmem>>, vector<16x8xf32>
    tpu.vector_store %arg10[%c0_164, %c208_165], %122 {strides = array<i32>} : memref<16x256xf32, #tpu.memory_space<vmem>>, vector<16x8xf32>,
    %c432 = arith.constant 432 : index
    %c0_166 = arith.constant 0 : index
    %124 = vector.load %arg9[%c432, %c0_166] : memref<512x8xf32, #tpu.memory_space<vmem>>, vector<16x8xf32>
    %c0_167 = arith.constant 0 : index
    %c216 = arith.constant 216 : index
    %125 = vector.load %arg10[%c0_167, %c216] : memref<16x256xf32, #tpu.memory_space<vmem>>, vector<16x8xf32>
    tpu.vector_store %arg10[%c0_167, %c216], %124 {strides = array<i32>} : memref<16x256xf32, #tpu.memory_space<vmem>>, vector<16x8xf32>,
    %c448 = arith.constant 448 : index
    %c0_168 = arith.constant 0 : index
    %126 = vector.load %arg9[%c448, %c0_168] : memref<512x8xf32, #tpu.memory_space<vmem>>, vector<16x8xf32>
    %c0_169 = arith.constant 0 : index
    %c224_170 = arith.constant 224 : index
    %127 = vector.load %arg10[%c0_169, %c224_170] : memref<16x256xf32, #tpu.memory_space<vmem>>, vector<16x8xf32>
    tpu.vector_store %arg10[%c0_169, %c224_170], %126 {strides = array<i32>} : memref<16x256xf32, #tpu.memory_space<vmem>>, vector<16x8xf32>,
    %c464 = arith.constant 464 : index
    %c0_171 = arith.constant 0 : index
    %128 = vector.load %arg9[%c464, %c0_171] : memref<512x8xf32, #tpu.memory_space<vmem>>, vector<16x8xf32>
    %c0_172 = arith.constant 0 : index
    %c232 = arith.constant 232 : index
    %129 = vector.load %arg10[%c0_172, %c232] : memref<16x256xf32, #tpu.memory_space<vmem>>, vector<16x8xf32>
    tpu.vector_store %arg10[%c0_172, %c232], %128 {strides = array<i32>} : memref<16x256xf32, #tpu.memory_space<vmem>>, vector<16x8xf32>,
    %c480 = arith.constant 480 : index
    %c0_173 = arith.constant 0 : index
    %130 = vector.load %arg9[%c480, %c0_173] : memref<512x8xf32, #tpu.memory_space<vmem>>, vector<16x8xf32>
    %c0_174 = arith.constant 0 : index
    %c240_175 = arith.constant 240 : index
    %131 = vector.load %arg10[%c0_174, %c240_175] : memref<16x256xf32, #tpu.memory_space<vmem>>, vector<16x8xf32>
    tpu.vector_store %arg10[%c0_174, %c240_175], %130 {strides = array<i32>} : memref<16x256xf32, #tpu.memory_space<vmem>>, vector<16x8xf32>,
    %c496 = arith.constant 496 : index
    %c0_176 = arith.constant 0 : index
    %132 = vector.load %arg9[%c496, %c0_176] : memref<512x8xf32, #tpu.memory_space<vmem>>, vector<16x8xf32>
    %c0_177 = arith.constant 0 : index
    %c248 = arith.constant 248 : index
    %133 = vector.load %arg10[%c0_177, %c248] : memref<16x256xf32, #tpu.memory_space<vmem>>, vector<16x8xf32>
    tpu.vector_store %arg10[%c0_177, %c248], %132 {strides = array<i32>} : memref<16x256xf32, #tpu.memory_space<vmem>>, vector<16x8xf32>,
    %c0_178 = arith.constant 0 : index
    %c0_179 = arith.constant 0 : index
    %134 = vector.load %arg10[%c0_178, %c0_179] : memref<16x256xf32, #tpu.memory_space<vmem>>, vector<16x256xf32>
    %c0_180 = arith.constant 0 : index
    %c0_181 = arith.constant 0 : index
    %135 = vector.load %arg2[%c0_180, %c0_181] : memref<1x256xf32, #tpu.memory_space<vmem>>, vector<1x256xf32>
    %136 = vector.broadcast %135 : vector<1x256xf32> to vector<16x256xf32>
    %137 = arith.addf %134, %136 : vector<16x256xf32>
    %cst_182 = arith.constant dense<0.000000e+00> : vector<256xf32>
    %138 = vector.multi_reduction <add>, %137, %cst_182 [0] : vector<16x256xf32> to vector<256xf32>
    %139 = vector.shape_cast %138 : vector<256xf32> to vector<1x256xf32>
    %c0_183 = arith.constant 0 : index
    %c0_184 = arith.constant 0 : index
    %140 = vector.load %arg5[%c0_183, %c0_184] : memref<256x8xf32, #tpu.memory_space<vmem>>, vector<256x8xf32>
    %cst_185 = arith.constant dense<0.000000e+00> : vector<1x8xf32>
    %141 = tpu.matmul %139, %140, %cst_185 {dimension_numbers = #tpu.dot_dimension_numbers<[1], [0], [0], [1], [0, 0, 1, 1], [], []>} : vector<1x256xf32>, vector<256x8xf32>, vector<1x8xf32> -> vector<1x8xf32>
    %c0_186 = arith.constant 0 : index
    %c0_187 = arith.constant 0 : index
    %142 = vector.load %arg6[%c0_186, %c0_187] : memref<8x256xf32, #tpu.memory_space<vmem>>, vector<8x256xf32>
    %cst_188 = arith.constant dense<0.000000e+00> : vector<1x256xf32>
    %143 = tpu.matmul %141, %142, %cst_188 {dimension_numbers = #tpu.dot_dimension_numbers<[1], [0], [0], [1], [0, 0, 1, 1], [], []>} : vector<1x8xf32>, vector<8x256xf32>, vector<1x256xf32> -> vector<1x256xf32>
    %cst_189 = arith.constant 0.001953125 : f32
    %144 = vector.broadcast %cst_189 : f32 to vector<1x256xf32>
    %145 = arith.mulf %143, %144 : vector<1x256xf32>
    %146 = vector.broadcast %145 : vector<1x256xf32> to vector<16x256xf32>
    %147 = arith.subf %137, %146 : vector<16x256xf32>
    %148 = arith.mulf %147, %147 : vector<16x256xf32>
    %cst_190 = arith.constant dense<0.000000e+00> : vector<256xf32>
    %149 = vector.multi_reduction <add>, %148, %cst_190 [0] : vector<16x256xf32> to vector<256xf32>
    %150 = vector.shape_cast %149 : vector<256xf32> to vector<1x256xf32>
    %c0_191 = arith.constant 0 : index
    %c0_192 = arith.constant 0 : index
    %151 = vector.load %arg5[%c0_191, %c0_192] : memref<256x8xf32, #tpu.memory_space<vmem>>, vector<256x8xf32>
    %cst_193 = arith.constant dense<0.000000e+00> : vector<1x8xf32>
    %152 = tpu.matmul %150, %151, %cst_193 {dimension_numbers = #tpu.dot_dimension_numbers<[1], [0], [0], [1], [0, 0, 1, 1], [], []>} : vector<1x256xf32>, vector<256x8xf32>, vector<1x8xf32> -> vector<1x8xf32>
    %c0_194 = arith.constant 0 : index
    %c0_195 = arith.constant 0 : index
    %153 = vector.load %arg6[%c0_194, %c0_195] : memref<8x256xf32, #tpu.memory_space<vmem>>, vector<8x256xf32>
    %cst_196 = arith.constant dense<0.000000e+00> : vector<1x256xf32>
    %154 = tpu.matmul %152, %153, %cst_196 {dimension_numbers = #tpu.dot_dimension_numbers<[1], [0], [0], [1], [0, 0, 1, 1], [], []>} : vector<1x8xf32>, vector<8x256xf32>, vector<1x256xf32> -> vector<1x256xf32>
    %cst_197 = arith.constant 0.001953125 : f32
    %155 = vector.broadcast %cst_197 : f32 to vector<1x256xf32>
    %156 = arith.mulf %154, %155 : vector<1x256xf32>
    %cst_198 = arith.constant 9.99999974E-6 : f32
    %157 = vector.broadcast %cst_198 : f32 to vector<1x256xf32>
    %158 = arith.addf %156, %157 : vector<1x256xf32>
    %159 = math.rsqrt %158 : vector<1x256xf32>
    %160 = vector.broadcast %159 : vector<1x256xf32> to vector<16x256xf32>
    %161 = arith.mulf %147, %160 : vector<16x256xf32>
    %c0_199 = arith.constant 0 : index
    %c0_200 = arith.constant 0 : index
    %162 = vector.load %arg3[%c0_199, %c0_200] : memref<1x256xf32, #tpu.memory_space<vmem>>, vector<1x256xf32>
    %163 = vector.broadcast %162 : vector<1x256xf32> to vector<16x256xf32>
    %164 = arith.mulf %161, %163 : vector<16x256xf32>
    %c0_201 = arith.constant 0 : index
    %c0_202 = arith.constant 0 : index
    %165 = vector.load %arg4[%c0_201, %c0_202] : memref<1x256xf32, #tpu.memory_space<vmem>>, vector<1x256xf32>
    %166 = vector.broadcast %165 : vector<1x256xf32> to vector<16x256xf32>
    %167 = arith.addf %164, %166 : vector<16x256xf32>
    %cst_203 = arith.constant 0.000000e+00 : f32
    %168 = vector.broadcast %cst_203 : f32 to vector<16x256xf32>
    %169 = arith.cmpf ogt, %167, %168 : vector<16x256xf32>
    %cst_204 = arith.constant 0.00999999977 : f32
    %170 = vector.broadcast %cst_204 : f32 to vector<16x256xf32>
    %171 = arith.mulf %170, %167 : vector<16x256xf32>
    %172 = arith.select %169, %167, %171 : vector<16x256xi1>, vector<16x256xf32>
    %c0_205 = arith.constant 0 : index
    %c0_206 = arith.constant 0 : index
    %173 = vector.load %arg10[%c0_205, %c0_206] : memref<16x256xf32, #tpu.memory_space<vmem>>, vector<16x256xf32>
    tpu.vector_store %arg10[%c0_205, %c0_206], %172 {strides = array<i32>} : memref<16x256xf32, #tpu.memory_space<vmem>>, vector<16x256xf32>,
    %c0_207 = arith.constant 0 : index
    %c0_208 = arith.constant 0 : index
    %174 = vector.load %arg10[%c0_207, %c0_208] : memref<16x256xf32, #tpu.memory_space<vmem>>, vector<16x8xf32>
    %c0_209 = arith.constant 0 : index
    %c0_210 = arith.constant 0 : index
    %175 = vector.load %arg11[%c0_209, %c0_210] : memref<16x512xf32, #tpu.memory_space<vmem>>, vector<16x8xf32>
    tpu.vector_store %arg11[%c0_209, %c0_210], %174 {strides = array<i32>} : memref<16x512xf32, #tpu.memory_space<vmem>>, vector<16x8xf32>,
    %c0_211 = arith.constant 0 : index
    %c0_212 = arith.constant 0 : index
    %176 = vector.load %arg10[%c0_211, %c0_212] : memref<16x256xf32, #tpu.memory_space<vmem>>, vector<16x8xf32>
    %c0_213 = arith.constant 0 : index
    %c8_214 = arith.constant 8 : index
    %177 = vector.load %arg10[%c0_213, %c8_214] : memref<16x256xf32, #tpu.memory_space<vmem>>, vector<16x8xf32>
    %cst_215 = arith.constant 5.161290e-01 : f32
    %178 = vector.broadcast %cst_215 : f32 to vector<16x8xf32>
    %179 = arith.mulf %178, %176 : vector<16x8xf32>
    %cst_216 = arith.constant 0.483870953 : f32
    %180 = vector.broadcast %cst_216 : f32 to vector<16x8xf32>
    %181 = arith.mulf %180, %177 : vector<16x8xf32>
    %182 = arith.addf %179, %181 : vector<16x8xf32>
    %c0_217 = arith.constant 0 : index
    %c8_218 = arith.constant 8 : index
    %183 = vector.load %arg11[%c0_217, %c8_218] : memref<16x512xf32, #tpu.memory_space<vmem>>, vector<16x8xf32>
    tpu.vector_store %arg11[%c0_217, %c8_218], %182 {strides = array<i32>} : memref<16x512xf32, #tpu.memory_space<vmem>>, vector<16x8xf32>,
    %c0_219 = arith.constant 0 : index
    %c0_220 = arith.constant 0 : index
    %184 = vector.load %arg10[%c0_219, %c0_220] : memref<16x256xf32, #tpu.memory_space<vmem>>, vector<16x8xf32>
    %c0_221 = arith.constant 0 : index
    %c8_222 = arith.constant 8 : index
    %185 = vector.load %arg10[%c0_221, %c8_222] : memref<16x256xf32, #tpu.memory_space<vmem>>, vector<16x8xf32>
    %cst_223 = arith.constant 0.0322580636 : f32
    %186 = vector.broadcast %cst_223 : f32 to vector<16x8xf32>
    %187 = arith.mulf %186, %184 : vector<16x8xf32>
    %cst_224 = arith.constant 0.967741906 : f32
    %188 = vector.broadcast %cst_224 : f32 to vector<16x8xf32>
    %189 = arith.mulf %188, %185 : vector<16x8xf32>
    %190 = arith.addf %187, %189 : vector<16x8xf32>
    %c0_225 = arith.constant 0 : index
    %c16_226 = arith.constant 16 : index
    %191 = vector.load %arg11[%c0_225, %c16_226] : memref<16x512xf32, #tpu.memory_space<vmem>>, vector<16x8xf32>
    tpu.vector_store %arg11[%c0_225, %c16_226], %190 {strides = array<i32>} : memref<16x512xf32, #tpu.memory_space<vmem>>, vector<16x8xf32>,
    %c0_227 = arith.constant 0 : index
    %c8_228 = arith.constant 8 : index
    %192 = vector.load %arg10[%c0_227, %c8_228] : memref<16x256xf32, #tpu.memory_space<vmem>>, vector<16x8xf32>
    %c0_229 = arith.constant 0 : index
    %c16_230 = arith.constant 16 : index
    %193 = vector.load %arg10[%c0_229, %c16_230] : memref<16x256xf32, #tpu.memory_space<vmem>>, vector<16x8xf32>
    %cst_231 = arith.constant 0.54838711 : f32
    %194 = vector.broadcast %cst_231 : f32 to vector<16x8xf32>
    %195 = arith.mulf %194, %192 : vector<16x8xf32>
    %cst_232 = arith.constant 0.45161289 : f32
    %196 = vector.broadcast %cst_232 : f32 to vector<16x8xf32>
    %197 = arith.mulf %196, %193 : vector<16x8xf32>
    %198 = arith.addf %195, %197 : vector<16x8xf32>
    %c0_233 = arith.constant 0 : index
    %c24_234 = arith.constant 24 : index
    %199 = vector.load %arg11[%c0_233, %c24_234] : memref<16x512xf32, #tpu.memory_space<vmem>>, vector<16x8xf32>
    tpu.vector_store %arg11[%c0_233, %c24_234], %198 {strides = array<i32>} : memref<16x512xf32, #tpu.memory_space<vmem>>, vector<16x8xf32>,
    %c0_235 = arith.constant 0 : index
    %c8_236 = arith.constant 8 : index
    %200 = vector.load %arg10[%c0_235, %c8_236] : memref<16x256xf32, #tpu.memory_space<vmem>>, vector<16x8xf32>
    %c0_237 = arith.constant 0 : index
    %c16_238 = arith.constant 16 : index
    %201 = vector.load %arg10[%c0_237, %c16_238] : memref<16x256xf32, #tpu.memory_space<vmem>>, vector<16x8xf32>
    %cst_239 = arith.constant 0.0645161271 : f32
    %202 = vector.broadcast %cst_239 : f32 to vector<16x8xf32>
    %203 = arith.mulf %202, %200 : vector<16x8xf32>
    %cst_240 = arith.constant 0.935483872 : f32
    %204 = vector.broadcast %cst_240 : f32 to vector<16x8xf32>
    %205 = arith.mulf %204, %201 : vector<16x8xf32>
    %206 = arith.addf %203, %205 : vector<16x8xf32>
    %c0_241 = arith.constant 0 : index
    %c32_242 = arith.constant 32 : index
    %207 = vector.load %arg11[%c0_241, %c32_242] : memref<16x512xf32, #tpu.memory_space<vmem>>, vector<16x8xf32>
    tpu.vector_store %arg11[%c0_241, %c32_242], %206 {strides = array<i32>} : memref<16x512xf32, #tpu.memory_space<vmem>>, vector<16x8xf32>,
    %c0_243 = arith.constant 0 : index
    %c16_244 = arith.constant 16 : index
    %208 = vector.load %arg10[%c0_243, %c16_244] : memref<16x256xf32, #tpu.memory_space<vmem>>, vector<16x8xf32>
    %c0_245 = arith.constant 0 : index
    %c24_246 = arith.constant 24 : index
    %209 = vector.load %arg10[%c0_245, %c24_246] : memref<16x256xf32, #tpu.memory_space<vmem>>, vector<16x8xf32>
    %cst_247 = arith.constant 0.580645144 : f32
    %210 = vector.broadcast %cst_247 : f32 to vector<16x8xf32>
    %211 = arith.mulf %210, %208 : vector<16x8xf32>
    %cst_248 = arith.constant 0.419354826 : f32
    %212 = vector.broadcast %cst_248 : f32 to vector<16x8xf32>
    %213 = arith.mulf %212, %209 : vector<16x8xf32>
    %214 = arith.addf %211, %213 : vector<16x8xf32>
    %c0_249 = arith.constant 0 : index
    %c40_250 = arith.constant 40 : index
    %215 = vector.load %arg11[%c0_249, %c40_250] : memref<16x512xf32, #tpu.memory_space<vmem>>, vector<16x8xf32>
    tpu.vector_store %arg11[%c0_249, %c40_250], %214 {strides = array<i32>} : memref<16x512xf32, #tpu.memory_space<vmem>>, vector<16x8xf32>,
    %c0_251 = arith.constant 0 : index
    %c16_252 = arith.constant 16 : index
    %216 = vector.load %arg10[%c0_251, %c16_252] : memref<16x256xf32, #tpu.memory_space<vmem>>, vector<16x8xf32>
    %c0_253 = arith.constant 0 : index
    %c24_254 = arith.constant 24 : index
    %217 = vector.load %arg10[%c0_253, %c24_254] : memref<16x256xf32, #tpu.memory_space<vmem>>, vector<16x8xf32>
    %cst_255 = arith.constant 0.0967741906 : f32
    %218 = vector.broadcast %cst_255 : f32 to vector<16x8xf32>
    %219 = arith.mulf %218, %216 : vector<16x8xf32>
    %cst_256 = arith.constant 0.903225779 : f32
    %220 = vector.broadcast %cst_256 : f32 to vector<16x8xf32>
    %221 = arith.mulf %220, %217 : vector<16x8xf32>
    %222 = arith.addf %219, %221 : vector<16x8xf32>
    %c0_257 = arith.constant 0 : index
    %c48_258 = arith.constant 48 : index
    %223 = vector.load %arg11[%c0_257, %c48_258] : memref<16x512xf32, #tpu.memory_space<vmem>>, vector<16x8xf32>
    tpu.vector_store %arg11[%c0_257, %c48_258], %222 {strides = array<i32>} : memref<16x512xf32, #tpu.memory_space<vmem>>, vector<16x8xf32>,
    %c0_259 = arith.constant 0 : index
    %c24_260 = arith.constant 24 : index
    %224 = vector.load %arg10[%c0_259, %c24_260] : memref<16x256xf32, #tpu.memory_space<vmem>>, vector<16x8xf32>
    %c0_261 = arith.constant 0 : index
    %c32_262 = arith.constant 32 : index
    %225 = vector.load %arg10[%c0_261, %c32_262] : memref<16x256xf32, #tpu.memory_space<vmem>>, vector<16x8xf32>
    %cst_263 = arith.constant 0.612903237 : f32
    %226 = vector.broadcast %cst_263 : f32 to vector<16x8xf32>
    %227 = arith.mulf %226, %224 : vector<16x8xf32>
    %cst_264 = arith.constant 0.387096763 : f32
    %228 = vector.broadcast %cst_264 : f32 to vector<16x8xf32>
    %229 = arith.mulf %228, %225 : vector<16x8xf32>
    %230 = arith.addf %227, %229 : vector<16x8xf32>
    %c0_265 = arith.constant 0 : index
    %c56_266 = arith.constant 56 : index
    %231 = vector.load %arg11[%c0_265, %c56_266] : memref<16x512xf32, #tpu.memory_space<vmem>>, vector<16x8xf32>
    tpu.vector_store %arg11[%c0_265, %c56_266], %230 {strides = array<i32>} : memref<16x512xf32, #tpu.memory_space<vmem>>, vector<16x8xf32>,
    %c0_267 = arith.constant 0 : index
    %c24_268 = arith.constant 24 : index
    %232 = vector.load %arg10[%c0_267, %c24_268] : memref<16x256xf32, #tpu.memory_space<vmem>>, vector<16x8xf32>
    %c0_269 = arith.constant 0 : index
    %c32_270 = arith.constant 32 : index
    %233 = vector.load %arg10[%c0_269, %c32_270] : memref<16x256xf32, #tpu.memory_space<vmem>>, vector<16x8xf32>
    %cst_271 = arith.constant 0.129032254 : f32
    %234 = vector.broadcast %cst_271 : f32 to vector<16x8xf32>
    %235 = arith.mulf %234, %232 : vector<16x8xf32>
    %cst_272 = arith.constant 0.870967745 : f32
    %236 = vector.broadcast %cst_272 : f32 to vector<16x8xf32>
    %237 = arith.mulf %236, %233 : vector<16x8xf32>
    %238 = arith.addf %235, %237 : vector<16x8xf32>
    %c0_273 = arith.constant 0 : index
    %c64_274 = arith.constant 64 : index
    %239 = vector.load %arg11[%c0_273, %c64_274] : memref<16x512xf32, #tpu.memory_space<vmem>>, vector<16x8xf32>
    tpu.vector_store %arg11[%c0_273, %c64_274], %238 {strides = array<i32>} : memref<16x512xf32, #tpu.memory_space<vmem>>, vector<16x8xf32>,
    %c0_275 = arith.constant 0 : index
    %c32_276 = arith.constant 32 : index
    %240 = vector.load %arg10[%c0_275, %c32_276] : memref<16x256xf32, #tpu.memory_space<vmem>>, vector<16x8xf32>
    %c0_277 = arith.constant 0 : index
    %c40_278 = arith.constant 40 : index
    %241 = vector.load %arg10[%c0_277, %c40_278] : memref<16x256xf32, #tpu.memory_space<vmem>>, vector<16x8xf32>
    %cst_279 = arith.constant 0.645161271 : f32
    %242 = vector.broadcast %cst_279 : f32 to vector<16x8xf32>
    %243 = arith.mulf %242, %240 : vector<16x8xf32>
    %cst_280 = arith.constant 0.354838699 : f32
    %244 = vector.broadcast %cst_280 : f32 to vector<16x8xf32>
    %245 = arith.mulf %244, %241 : vector<16x8xf32>
    %246 = arith.addf %243, %245 : vector<16x8xf32>
    %c0_281 = arith.constant 0 : index
    %c72_282 = arith.constant 72 : index
    %247 = vector.load %arg11[%c0_281, %c72_282] : memref<16x512xf32, #tpu.memory_space<vmem>>, vector<16x8xf32>
    tpu.vector_store %arg11[%c0_281, %c72_282], %246 {strides = array<i32>} : memref<16x512xf32, #tpu.memory_space<vmem>>, vector<16x8xf32>,
    %c0_283 = arith.constant 0 : index
    %c32_284 = arith.constant 32 : index
    %248 = vector.load %arg10[%c0_283, %c32_284] : memref<16x256xf32, #tpu.memory_space<vmem>>, vector<16x8xf32>
    %c0_285 = arith.constant 0 : index
    %c40_286 = arith.constant 40 : index
    %249 = vector.load %arg10[%c0_285, %c40_286] : memref<16x256xf32, #tpu.memory_space<vmem>>, vector<16x8xf32>
    %cst_287 = arith.constant 0.161290318 : f32
    %250 = vector.broadcast %cst_287 : f32 to vector<16x8xf32>
    %251 = arith.mulf %250, %248 : vector<16x8xf32>
    %cst_288 = arith.constant 0.838709652 : f32
    %252 = vector.broadcast %cst_288 : f32 to vector<16x8xf32>
    %253 = arith.mulf %252, %249 : vector<16x8xf32>
    %254 = arith.addf %251, %253 : vector<16x8xf32>
    %c0_289 = arith.constant 0 : index
    %c80_290 = arith.constant 80 : index
    %255 = vector.load %arg11[%c0_289, %c80_290] : memref<16x512xf32, #tpu.memory_space<vmem>>, vector<16x8xf32>
    tpu.vector_store %arg11[%c0_289, %c80_290], %254 {strides = array<i32>} : memref<16x512xf32, #tpu.memory_space<vmem>>, vector<16x8xf32>,
    %c0_291 = arith.constant 0 : index
    %c40_292 = arith.constant 40 : index
    %256 = vector.load %arg10[%c0_291, %c40_292] : memref<16x256xf32, #tpu.memory_space<vmem>>, vector<16x8xf32>
    %c0_293 = arith.constant 0 : index
    %c48_294 = arith.constant 48 : index
    %257 = vector.load %arg10[%c0_293, %c48_294] : memref<16x256xf32, #tpu.memory_space<vmem>>, vector<16x8xf32>
    %cst_295 = arith.constant 0.677419364 : f32
    %258 = vector.broadcast %cst_295 : f32 to vector<16x8xf32>
    %259 = arith.mulf %258, %256 : vector<16x8xf32>
    %cst_296 = arith.constant 0.322580636 : f32
    %260 = vector.broadcast %cst_296 : f32 to vector<16x8xf32>
    %261 = arith.mulf %260, %257 : vector<16x8xf32>
    %262 = arith.addf %259, %261 : vector<16x8xf32>
    %c0_297 = arith.constant 0 : index
    %c88_298 = arith.constant 88 : index
    %263 = vector.load %arg11[%c0_297, %c88_298] : memref<16x512xf32, #tpu.memory_space<vmem>>, vector<16x8xf32>
    tpu.vector_store %arg11[%c0_297, %c88_298], %262 {strides = array<i32>} : memref<16x512xf32, #tpu.memory_space<vmem>>, vector<16x8xf32>,
    %c0_299 = arith.constant 0 : index
    %c40_300 = arith.constant 40 : index
    %264 = vector.load %arg10[%c0_299, %c40_300] : memref<16x256xf32, #tpu.memory_space<vmem>>, vector<16x8xf32>
    %c0_301 = arith.constant 0 : index
    %c48_302 = arith.constant 48 : index
    %265 = vector.load %arg10[%c0_301, %c48_302] : memref<16x256xf32, #tpu.memory_space<vmem>>, vector<16x8xf32>
    %cst_303 = arith.constant 0.193548381 : f32
    %266 = vector.broadcast %cst_303 : f32 to vector<16x8xf32>
    %267 = arith.mulf %266, %264 : vector<16x8xf32>
    %cst_304 = arith.constant 0.806451618 : f32
    %268 = vector.broadcast %cst_304 : f32 to vector<16x8xf32>
    %269 = arith.mulf %268, %265 : vector<16x8xf32>
    %270 = arith.addf %267, %269 : vector<16x8xf32>
    %c0_305 = arith.constant 0 : index
    %c96_306 = arith.constant 96 : index
    %271 = vector.load %arg11[%c0_305, %c96_306] : memref<16x512xf32, #tpu.memory_space<vmem>>, vector<16x8xf32>
    tpu.vector_store %arg11[%c0_305, %c96_306], %270 {strides = array<i32>} : memref<16x512xf32, #tpu.memory_space<vmem>>, vector<16x8xf32>,
    %c0_307 = arith.constant 0 : index
    %c48_308 = arith.constant 48 : index
    %272 = vector.load %arg10[%c0_307, %c48_308] : memref<16x256xf32, #tpu.memory_space<vmem>>, vector<16x8xf32>
    %c0_309 = arith.constant 0 : index
    %c56_310 = arith.constant 56 : index
    %273 = vector.load %arg10[%c0_309, %c56_310] : memref<16x256xf32, #tpu.memory_space<vmem>>, vector<16x8xf32>
    %cst_311 = arith.constant 0.709677398 : f32
    %274 = vector.broadcast %cst_311 : f32 to vector<16x8xf32>
    %275 = arith.mulf %274, %272 : vector<16x8xf32>
    %cst_312 = arith.constant 0.290322572 : f32
    %276 = vector.broadcast %cst_312 : f32 to vector<16x8xf32>
    %277 = arith.mulf %276, %273 : vector<16x8xf32>
    %278 = arith.addf %275, %277 : vector<16x8xf32>
    %c0_313 = arith.constant 0 : index
    %c104_314 = arith.constant 104 : index
    %279 = vector.load %arg11[%c0_313, %c104_314] : memref<16x512xf32, #tpu.memory_space<vmem>>, vector<16x8xf32>
    tpu.vector_store %arg11[%c0_313, %c104_314], %278 {strides = array<i32>} : memref<16x512xf32, #tpu.memory_space<vmem>>, vector<16x8xf32>,
    %c0_315 = arith.constant 0 : index
    %c48_316 = arith.constant 48 : index
    %280 = vector.load %arg10[%c0_315, %c48_316] : memref<16x256xf32, #tpu.memory_space<vmem>>, vector<16x8xf32>
    %c0_317 = arith.constant 0 : index
    %c56_318 = arith.constant 56 : index
    %281 = vector.load %arg10[%c0_317, %c56_318] : memref<16x256xf32, #tpu.memory_space<vmem>>, vector<16x8xf32>
    %cst_319 = arith.constant 0.225806445 : f32
    %282 = vector.broadcast %cst_319 : f32 to vector<16x8xf32>
    %283 = arith.mulf %282, %280 : vector<16x8xf32>
    %cst_320 = arith.constant 0.774193525 : f32
    %284 = vector.broadcast %cst_320 : f32 to vector<16x8xf32>
    %285 = arith.mulf %284, %281 : vector<16x8xf32>
    %286 = arith.addf %283, %285 : vector<16x8xf32>
    %c0_321 = arith.constant 0 : index
    %c112_322 = arith.constant 112 : index
    %287 = vector.load %arg11[%c0_321, %c112_322] : memref<16x512xf32, #tpu.memory_space<vmem>>, vector<16x8xf32>
    tpu.vector_store %arg11[%c0_321, %c112_322], %286 {strides = array<i32>} : memref<16x512xf32, #tpu.memory_space<vmem>>, vector<16x8xf32>,
    %c0_323 = arith.constant 0 : index
    %c56_324 = arith.constant 56 : index
    %288 = vector.load %arg10[%c0_323, %c56_324] : memref<16x256xf32, #tpu.memory_space<vmem>>, vector<16x8xf32>
    %c0_325 = arith.constant 0 : index
    %c64_326 = arith.constant 64 : index
    %289 = vector.load %arg10[%c0_325, %c64_326] : memref<16x256xf32, #tpu.memory_space<vmem>>, vector<16x8xf32>
    %cst_327 = arith.constant 0.741935492 : f32
    %290 = vector.broadcast %cst_327 : f32 to vector<16x8xf32>
    %291 = arith.mulf %290, %288 : vector<16x8xf32>
    %cst_328 = arith.constant 0.258064508 : f32
    %292 = vector.broadcast %cst_328 : f32 to vector<16x8xf32>
    %293 = arith.mulf %292, %289 : vector<16x8xf32>
    %294 = arith.addf %291, %293 : vector<16x8xf32>
    %c0_329 = arith.constant 0 : index
    %c120_330 = arith.constant 120 : index
    %295 = vector.load %arg11[%c0_329, %c120_330] : memref<16x512xf32, #tpu.memory_space<vmem>>, vector<16x8xf32>
    tpu.vector_store %arg11[%c0_329, %c120_330], %294 {strides = array<i32>} : memref<16x512xf32, #tpu.memory_space<vmem>>, vector<16x8xf32>,
    %c0_331 = arith.constant 0 : index
    %c56_332 = arith.constant 56 : index
    %296 = vector.load %arg10[%c0_331, %c56_332] : memref<16x256xf32, #tpu.memory_space<vmem>>, vector<16x8xf32>
    %c0_333 = arith.constant 0 : index
    %c64_334 = arith.constant 64 : index
    %297 = vector.load %arg10[%c0_333, %c64_334] : memref<16x256xf32, #tpu.memory_space<vmem>>, vector<16x8xf32>
    %cst_335 = arith.constant 0.258064508 : f32
    %298 = vector.broadcast %cst_335 : f32 to vector<16x8xf32>
    %299 = arith.mulf %298, %296 : vector<16x8xf32>
    %cst_336 = arith.constant 0.741935492 : f32
    %300 = vector.broadcast %cst_336 : f32 to vector<16x8xf32>
    %301 = arith.mulf %300, %297 : vector<16x8xf32>
    %302 = arith.addf %299, %301 : vector<16x8xf32>
    %c0_337 = arith.constant 0 : index
    %c128_338 = arith.constant 128 : index
    %303 = vector.load %arg11[%c0_337, %c128_338] : memref<16x512xf32, #tpu.memory_space<vmem>>, vector<16x8xf32>
    tpu.vector_store %arg11[%c0_337, %c128_338], %302 {strides = array<i32>} : memref<16x512xf32, #tpu.memory_space<vmem>>, vector<16x8xf32>,
    %c0_339 = arith.constant 0 : index
    %c64_340 = arith.constant 64 : index
    %304 = vector.load %arg10[%c0_339, %c64_340] : memref<16x256xf32, #tpu.memory_space<vmem>>, vector<16x8xf32>
    %c0_341 = arith.constant 0 : index
    %c72_342 = arith.constant 72 : index
    %305 = vector.load %arg10[%c0_341, %c72_342] : memref<16x256xf32, #tpu.memory_space<vmem>>, vector<16x8xf32>
    %cst_343 = arith.constant 0.774193525 : f32
    %306 = vector.broadcast %cst_343 : f32 to vector<16x8xf32>
    %307 = arith.mulf %306, %304 : vector<16x8xf32>
    %cst_344 = arith.constant 0.225806445 : f32
    %308 = vector.broadcast %cst_344 : f32 to vector<16x8xf32>
    %309 = arith.mulf %308, %305 : vector<16x8xf32>
    %310 = arith.addf %307, %309 : vector<16x8xf32>
    %c0_345 = arith.constant 0 : index
    %c136_346 = arith.constant 136 : index
    %311 = vector.load %arg11[%c0_345, %c136_346] : memref<16x512xf32, #tpu.memory_space<vmem>>, vector<16x8xf32>
    tpu.vector_store %arg11[%c0_345, %c136_346], %310 {strides = array<i32>} : memref<16x512xf32, #tpu.memory_space<vmem>>, vector<16x8xf32>,
    %c0_347 = arith.constant 0 : index
    %c64_348 = arith.constant 64 : index
    %312 = vector.load %arg10[%c0_347, %c64_348] : memref<16x256xf32, #tpu.memory_space<vmem>>, vector<16x8xf32>
    %c0_349 = arith.constant 0 : index
    %c72_350 = arith.constant 72 : index
    %313 = vector.load %arg10[%c0_349, %c72_350] : memref<16x256xf32, #tpu.memory_space<vmem>>, vector<16x8xf32>
    %cst_351 = arith.constant 0.290322572 : f32
    %314 = vector.broadcast %cst_351 : f32 to vector<16x8xf32>
    %315 = arith.mulf %314, %312 : vector<16x8xf32>
    %cst_352 = arith.constant 0.709677398 : f32
    %316 = vector.broadcast %cst_352 : f32 to vector<16x8xf32>
    %317 = arith.mulf %316, %313 : vector<16x8xf32>
    %318 = arith.addf %315, %317 : vector<16x8xf32>
    %c0_353 = arith.constant 0 : index
    %c144_354 = arith.constant 144 : index
    %319 = vector.load %arg11[%c0_353, %c144_354] : memref<16x512xf32, #tpu.memory_space<vmem>>, vector<16x8xf32>
    tpu.vector_store %arg11[%c0_353, %c144_354], %318 {strides = array<i32>} : memref<16x512xf32, #tpu.memory_space<vmem>>, vector<16x8xf32>,
    %c0_355 = arith.constant 0 : index
    %c72_356 = arith.constant 72 : index
    %320 = vector.load %arg10[%c0_355, %c72_356] : memref<16x256xf32, #tpu.memory_space<vmem>>, vector<16x8xf32>
    %c0_357 = arith.constant 0 : index
    %c80_358 = arith.constant 80 : index
    %321 = vector.load %arg10[%c0_357, %c80_358] : memref<16x256xf32, #tpu.memory_space<vmem>>, vector<16x8xf32>
    %cst_359 = arith.constant 0.806451618 : f32
    %322 = vector.broadcast %cst_359 : f32 to vector<16x8xf32>
    %323 = arith.mulf %322, %320 : vector<16x8xf32>
    %cst_360 = arith.constant 0.193548381 : f32
    %324 = vector.broadcast %cst_360 : f32 to vector<16x8xf32>
    %325 = arith.mulf %324, %321 : vector<16x8xf32>
    %326 = arith.addf %323, %325 : vector<16x8xf32>
    %c0_361 = arith.constant 0 : index
    %c152_362 = arith.constant 152 : index
    %327 = vector.load %arg11[%c0_361, %c152_362] : memref<16x512xf32, #tpu.memory_space<vmem>>, vector<16x8xf32>
    tpu.vector_store %arg11[%c0_361, %c152_362], %326 {strides = array<i32>} : memref<16x512xf32, #tpu.memory_space<vmem>>, vector<16x8xf32>,
    %c0_363 = arith.constant 0 : index
    %c72_364 = arith.constant 72 : index
    %328 = vector.load %arg10[%c0_363, %c72_364] : memref<16x256xf32, #tpu.memory_space<vmem>>, vector<16x8xf32>
    %c0_365 = arith.constant 0 : index
    %c80_366 = arith.constant 80 : index
    %329 = vector.load %arg10[%c0_365, %c80_366] : memref<16x256xf32, #tpu.memory_space<vmem>>, vector<16x8xf32>
    %cst_367 = arith.constant 0.322580636 : f32
    %330 = vector.broadcast %cst_367 : f32 to vector<16x8xf32>
    %331 = arith.mulf %330, %328 : vector<16x8xf32>
    %cst_368 = arith.constant 0.677419364 : f32
    %332 = vector.broadcast %cst_368 : f32 to vector<16x8xf32>
    %333 = arith.mulf %332, %329 : vector<16x8xf32>
    %334 = arith.addf %331, %333 : vector<16x8xf32>
    %c0_369 = arith.constant 0 : index
    %c160_370 = arith.constant 160 : index
    %335 = vector.load %arg11[%c0_369, %c160_370] : memref<16x512xf32, #tpu.memory_space<vmem>>, vector<16x8xf32>
    tpu.vector_store %arg11[%c0_369, %c160_370], %334 {strides = array<i32>} : memref<16x512xf32, #tpu.memory_space<vmem>>, vector<16x8xf32>,
    %c0_371 = arith.constant 0 : index
    %c80_372 = arith.constant 80 : index
    %336 = vector.load %arg10[%c0_371, %c80_372] : memref<16x256xf32, #tpu.memory_space<vmem>>, vector<16x8xf32>
    %c0_373 = arith.constant 0 : index
    %c88_374 = arith.constant 88 : index
    %337 = vector.load %arg10[%c0_373, %c88_374] : memref<16x256xf32, #tpu.memory_space<vmem>>, vector<16x8xf32>
    %cst_375 = arith.constant 0.838709652 : f32
    %338 = vector.broadcast %cst_375 : f32 to vector<16x8xf32>
    %339 = arith.mulf %338, %336 : vector<16x8xf32>
    %cst_376 = arith.constant 0.161290318 : f32
    %340 = vector.broadcast %cst_376 : f32 to vector<16x8xf32>
    %341 = arith.mulf %340, %337 : vector<16x8xf32>
    %342 = arith.addf %339, %341 : vector<16x8xf32>
    %c0_377 = arith.constant 0 : index
    %c168_378 = arith.constant 168 : index
    %343 = vector.load %arg11[%c0_377, %c168_378] : memref<16x512xf32, #tpu.memory_space<vmem>>, vector<16x8xf32>
    tpu.vector_store %arg11[%c0_377, %c168_378], %342 {strides = array<i32>} : memref<16x512xf32, #tpu.memory_space<vmem>>, vector<16x8xf32>,
    %c0_379 = arith.constant 0 : index
    %c80_380 = arith.constant 80 : index
    %344 = vector.load %arg10[%c0_379, %c80_380] : memref<16x256xf32, #tpu.memory_space<vmem>>, vector<16x8xf32>
    %c0_381 = arith.constant 0 : index
    %c88_382 = arith.constant 88 : index
    %345 = vector.load %arg10[%c0_381, %c88_382] : memref<16x256xf32, #tpu.memory_space<vmem>>, vector<16x8xf32>
    %cst_383 = arith.constant 0.354838699 : f32
    %346 = vector.broadcast %cst_383 : f32 to vector<16x8xf32>
    %347 = arith.mulf %346, %344 : vector<16x8xf32>
    %cst_384 = arith.constant 0.645161271 : f32
    %348 = vector.broadcast %cst_384 : f32 to vector<16x8xf32>
    %349 = arith.mulf %348, %345 : vector<16x8xf32>
    %350 = arith.addf %347, %349 : vector<16x8xf32>
    %c0_385 = arith.constant 0 : index
    %c176_386 = arith.constant 176 : index
    %351 = vector.load %arg11[%c0_385, %c176_386] : memref<16x512xf32, #tpu.memory_space<vmem>>, vector<16x8xf32>
    tpu.vector_store %arg11[%c0_385, %c176_386], %350 {strides = array<i32>} : memref<16x512xf32, #tpu.memory_space<vmem>>, vector<16x8xf32>,
    %c0_387 = arith.constant 0 : index
    %c88_388 = arith.constant 88 : index
    %352 = vector.load %arg10[%c0_387, %c88_388] : memref<16x256xf32, #tpu.memory_space<vmem>>, vector<16x8xf32>
    %c0_389 = arith.constant 0 : index
    %c96_390 = arith.constant 96 : index
    %353 = vector.load %arg10[%c0_389, %c96_390] : memref<16x256xf32, #tpu.memory_space<vmem>>, vector<16x8xf32>
    %cst_391 = arith.constant 0.870967745 : f32
    %354 = vector.broadcast %cst_391 : f32 to vector<16x8xf32>
    %355 = arith.mulf %354, %352 : vector<16x8xf32>
    %cst_392 = arith.constant 0.129032254 : f32
    %356 = vector.broadcast %cst_392 : f32 to vector<16x8xf32>
    %357 = arith.mulf %356, %353 : vector<16x8xf32>
    %358 = arith.addf %355, %357 : vector<16x8xf32>
    %c0_393 = arith.constant 0 : index
    %c184_394 = arith.constant 184 : index
    %359 = vector.load %arg11[%c0_393, %c184_394] : memref<16x512xf32, #tpu.memory_space<vmem>>, vector<16x8xf32>
    tpu.vector_store %arg11[%c0_393, %c184_394], %358 {strides = array<i32>} : memref<16x512xf32, #tpu.memory_space<vmem>>, vector<16x8xf32>,
    %c0_395 = arith.constant 0 : index
    %c88_396 = arith.constant 88 : index
    %360 = vector.load %arg10[%c0_395, %c88_396] : memref<16x256xf32, #tpu.memory_space<vmem>>, vector<16x8xf32>
    %c0_397 = arith.constant 0 : index
    %c96_398 = arith.constant 96 : index
    %361 = vector.load %arg10[%c0_397, %c96_398] : memref<16x256xf32, #tpu.memory_space<vmem>>, vector<16x8xf32>
    %cst_399 = arith.constant 0.387096763 : f32
    %362 = vector.broadcast %cst_399 : f32 to vector<16x8xf32>
    %363 = arith.mulf %362, %360 : vector<16x8xf32>
    %cst_400 = arith.constant 0.612903237 : f32
    %364 = vector.broadcast %cst_400 : f32 to vector<16x8xf32>
    %365 = arith.mulf %364, %361 : vector<16x8xf32>
    %366 = arith.addf %363, %365 : vector<16x8xf32>
    %c0_401 = arith.constant 0 : index
    %c192_402 = arith.constant 192 : index
    %367 = vector.load %arg11[%c0_401, %c192_402] : memref<16x512xf32, #tpu.memory_space<vmem>>, vector<16x8xf32>
    tpu.vector_store %arg11[%c0_401, %c192_402], %366 {strides = array<i32>} : memref<16x512xf32, #tpu.memory_space<vmem>>, vector<16x8xf32>,
    %c0_403 = arith.constant 0 : index
    %c96_404 = arith.constant 96 : index
    %368 = vector.load %arg10[%c0_403, %c96_404] : memref<16x256xf32, #tpu.memory_space<vmem>>, vector<16x8xf32>
    %c0_405 = arith.constant 0 : index
    %c104_406 = arith.constant 104 : index
    %369 = vector.load %arg10[%c0_405, %c104_406] : memref<16x256xf32, #tpu.memory_space<vmem>>, vector<16x8xf32>
    %cst_407 = arith.constant 0.903225779 : f32
    %370 = vector.broadcast %cst_407 : f32 to vector<16x8xf32>
    %371 = arith.mulf %370, %368 : vector<16x8xf32>
    %cst_408 = arith.constant 0.0967741906 : f32
    %372 = vector.broadcast %cst_408 : f32 to vector<16x8xf32>
    %373 = arith.mulf %372, %369 : vector<16x8xf32>
    %374 = arith.addf %371, %373 : vector<16x8xf32>
    %c0_409 = arith.constant 0 : index
    %c200_410 = arith.constant 200 : index
    %375 = vector.load %arg11[%c0_409, %c200_410] : memref<16x512xf32, #tpu.memory_space<vmem>>, vector<16x8xf32>
    tpu.vector_store %arg11[%c0_409, %c200_410], %374 {strides = array<i32>} : memref<16x512xf32, #tpu.memory_space<vmem>>, vector<16x8xf32>,
    %c0_411 = arith.constant 0 : index
    %c96_412 = arith.constant 96 : index
    %376 = vector.load %arg10[%c0_411, %c96_412] : memref<16x256xf32, #tpu.memory_space<vmem>>, vector<16x8xf32>
    %c0_413 = arith.constant 0 : index
    %c104_414 = arith.constant 104 : index
    %377 = vector.load %arg10[%c0_413, %c104_414] : memref<16x256xf32, #tpu.memory_space<vmem>>, vector<16x8xf32>
    %cst_415 = arith.constant 0.419354826 : f32
    %378 = vector.broadcast %cst_415 : f32 to vector<16x8xf32>
    %379 = arith.mulf %378, %376 : vector<16x8xf32>
    %cst_416 = arith.constant 0.580645144 : f32
    %380 = vector.broadcast %cst_416 : f32 to vector<16x8xf32>
    %381 = arith.mulf %380, %377 : vector<16x8xf32>
    %382 = arith.addf %379, %381 : vector<16x8xf32>
    %c0_417 = arith.constant 0 : index
    %c208_418 = arith.constant 208 : index
    %383 = vector.load %arg11[%c0_417, %c208_418] : memref<16x512xf32, #tpu.memory_space<vmem>>, vector<16x8xf32>
    tpu.vector_store %arg11[%c0_417, %c208_418], %382 {strides = array<i32>} : memref<16x512xf32, #tpu.memory_space<vmem>>, vector<16x8xf32>,
    %c0_419 = arith.constant 0 : index
    %c104_420 = arith.constant 104 : index
    %384 = vector.load %arg10[%c0_419, %c104_420] : memref<16x256xf32, #tpu.memory_space<vmem>>, vector<16x8xf32>
    %c0_421 = arith.constant 0 : index
    %c112_422 = arith.constant 112 : index
    %385 = vector.load %arg10[%c0_421, %c112_422] : memref<16x256xf32, #tpu.memory_space<vmem>>, vector<16x8xf32>
    %cst_423 = arith.constant 0.935483872 : f32
    %386 = vector.broadcast %cst_423 : f32 to vector<16x8xf32>
    %387 = arith.mulf %386, %384 : vector<16x8xf32>
    %cst_424 = arith.constant 0.0645161271 : f32
    %388 = vector.broadcast %cst_424 : f32 to vector<16x8xf32>
    %389 = arith.mulf %388, %385 : vector<16x8xf32>
    %390 = arith.addf %387, %389 : vector<16x8xf32>
    %c0_425 = arith.constant 0 : index
    %c216_426 = arith.constant 216 : index
    %391 = vector.load %arg11[%c0_425, %c216_426] : memref<16x512xf32, #tpu.memory_space<vmem>>, vector<16x8xf32>
    tpu.vector_store %arg11[%c0_425, %c216_426], %390 {strides = array<i32>} : memref<16x512xf32, #tpu.memory_space<vmem>>, vector<16x8xf32>,
    %c0_427 = arith.constant 0 : index
    %c104_428 = arith.constant 104 : index
    %392 = vector.load %arg10[%c0_427, %c104_428] : memref<16x256xf32, #tpu.memory_space<vmem>>, vector<16x8xf32>
    %c0_429 = arith.constant 0 : index
    %c112_430 = arith.constant 112 : index
    %393 = vector.load %arg10[%c0_429, %c112_430] : memref<16x256xf32, #tpu.memory_space<vmem>>, vector<16x8xf32>
    %cst_431 = arith.constant 0.45161289 : f32
    %394 = vector.broadcast %cst_431 : f32 to vector<16x8xf32>
    %395 = arith.mulf %394, %392 : vector<16x8xf32>
    %cst_432 = arith.constant 0.54838711 : f32
    %396 = vector.broadcast %cst_432 : f32 to vector<16x8xf32>
    %397 = arith.mulf %396, %393 : vector<16x8xf32>
    %398 = arith.addf %395, %397 : vector<16x8xf32>
    %c0_433 = arith.constant 0 : index
    %c224_434 = arith.constant 224 : index
    %399 = vector.load %arg11[%c0_433, %c224_434] : memref<16x512xf32, #tpu.memory_space<vmem>>, vector<16x8xf32>
    tpu.vector_store %arg11[%c0_433, %c224_434], %398 {strides = array<i32>} : memref<16x512xf32, #tpu.memory_space<vmem>>, vector<16x8xf32>,
    %c0_435 = arith.constant 0 : index
    %c112_436 = arith.constant 112 : index
    %400 = vector.load %arg10[%c0_435, %c112_436] : memref<16x256xf32, #tpu.memory_space<vmem>>, vector<16x8xf32>
    %c0_437 = arith.constant 0 : index
    %c120_438 = arith.constant 120 : index
    %401 = vector.load %arg10[%c0_437, %c120_438] : memref<16x256xf32, #tpu.memory_space<vmem>>, vector<16x8xf32>
    %cst_439 = arith.constant 0.967741906 : f32
    %402 = vector.broadcast %cst_439 : f32 to vector<16x8xf32>
    %403 = arith.mulf %402, %400 : vector<16x8xf32>
    %cst_440 = arith.constant 0.0322580636 : f32
    %404 = vector.broadcast %cst_440 : f32 to vector<16x8xf32>
    %405 = arith.mulf %404, %401 : vector<16x8xf32>
    %406 = arith.addf %403, %405 : vector<16x8xf32>
    %c0_441 = arith.constant 0 : index
    %c232_442 = arith.constant 232 : index
    %407 = vector.load %arg11[%c0_441, %c232_442] : memref<16x512xf32, #tpu.memory_space<vmem>>, vector<16x8xf32>
    tpu.vector_store %arg11[%c0_441, %c232_442], %406 {strides = array<i32>} : memref<16x512xf32, #tpu.memory_space<vmem>>, vector<16x8xf32>,
    %c0_443 = arith.constant 0 : index
    %c112_444 = arith.constant 112 : index
    %408 = vector.load %arg10[%c0_443, %c112_444] : memref<16x256xf32, #tpu.memory_space<vmem>>, vector<16x8xf32>
    %c0_445 = arith.constant 0 : index
    %c120_446 = arith.constant 120 : index
    %409 = vector.load %arg10[%c0_445, %c120_446] : memref<16x256xf32, #tpu.memory_space<vmem>>, vector<16x8xf32>
    %cst_447 = arith.constant 0.483870953 : f32
    %410 = vector.broadcast %cst_447 : f32 to vector<16x8xf32>
    %411 = arith.mulf %410, %408 : vector<16x8xf32>
    %cst_448 = arith.constant 5.161290e-01 : f32
    %412 = vector.broadcast %cst_448 : f32 to vector<16x8xf32>
    %413 = arith.mulf %412, %409 : vector<16x8xf32>
    %414 = arith.addf %411, %413 : vector<16x8xf32>
    %c0_449 = arith.constant 0 : index
    %c240_450 = arith.constant 240 : index
    %415 = vector.load %arg11[%c0_449, %c240_450] : memref<16x512xf32, #tpu.memory_space<vmem>>, vector<16x8xf32>
    tpu.vector_store %arg11[%c0_449, %c240_450], %414 {strides = array<i32>} : memref<16x512xf32, #tpu.memory_space<vmem>>, vector<16x8xf32>,
    %c0_451 = arith.constant 0 : index
    %c120_452 = arith.constant 120 : index
    %416 = vector.load %arg10[%c0_451, %c120_452] : memref<16x256xf32, #tpu.memory_space<vmem>>, vector<16x8xf32>
    %c0_453 = arith.constant 0 : index
    %c248_454 = arith.constant 248 : index
    %417 = vector.load %arg11[%c0_453, %c248_454] : memref<16x512xf32, #tpu.memory_space<vmem>>, vector<16x8xf32>
    tpu.vector_store %arg11[%c0_453, %c248_454], %416 {strides = array<i32>} : memref<16x512xf32, #tpu.memory_space<vmem>>, vector<16x8xf32>,
    %c0_455 = arith.constant 0 : index
    %c128_456 = arith.constant 128 : index
    %418 = vector.load %arg10[%c0_455, %c128_456] : memref<16x256xf32, #tpu.memory_space<vmem>>, vector<16x8xf32>
    %c0_457 = arith.constant 0 : index
    %c256_458 = arith.constant 256 : index
    %419 = vector.load %arg11[%c0_457, %c256_458] : memref<16x512xf32, #tpu.memory_space<vmem>>, vector<16x8xf32>
    tpu.vector_store %arg11[%c0_457, %c256_458], %418 {strides = array<i32>} : memref<16x512xf32, #tpu.memory_space<vmem>>, vector<16x8xf32>,
    %c0_459 = arith.constant 0 : index
    %c128_460 = arith.constant 128 : index
    %420 = vector.load %arg10[%c0_459, %c128_460] : memref<16x256xf32, #tpu.memory_space<vmem>>, vector<16x8xf32>
    %c0_461 = arith.constant 0 : index
    %c136_462 = arith.constant 136 : index
    %421 = vector.load %arg10[%c0_461, %c136_462] : memref<16x256xf32, #tpu.memory_space<vmem>>, vector<16x8xf32>
    %cst_463 = arith.constant 5.161290e-01 : f32
    %422 = vector.broadcast %cst_463 : f32 to vector<16x8xf32>
    %423 = arith.mulf %422, %420 : vector<16x8xf32>
    %cst_464 = arith.constant 0.483870953 : f32
    %424 = vector.broadcast %cst_464 : f32 to vector<16x8xf32>
    %425 = arith.mulf %424, %421 : vector<16x8xf32>
    %426 = arith.addf %423, %425 : vector<16x8xf32>
    %c0_465 = arith.constant 0 : index
    %c264 = arith.constant 264 : index
    %427 = vector.load %arg11[%c0_465, %c264] : memref<16x512xf32, #tpu.memory_space<vmem>>, vector<16x8xf32>
    tpu.vector_store %arg11[%c0_465, %c264], %426 {strides = array<i32>} : memref<16x512xf32, #tpu.memory_space<vmem>>, vector<16x8xf32>,
    %c0_466 = arith.constant 0 : index
    %c128_467 = arith.constant 128 : index
    %428 = vector.load %arg10[%c0_466, %c128_467] : memref<16x256xf32, #tpu.memory_space<vmem>>, vector<16x8xf32>
    %c0_468 = arith.constant 0 : index
    %c136_469 = arith.constant 136 : index
    %429 = vector.load %arg10[%c0_468, %c136_469] : memref<16x256xf32, #tpu.memory_space<vmem>>, vector<16x8xf32>
    %cst_470 = arith.constant 0.0322580636 : f32
    %430 = vector.broadcast %cst_470 : f32 to vector<16x8xf32>
    %431 = arith.mulf %430, %428 : vector<16x8xf32>
    %cst_471 = arith.constant 0.967741906 : f32
    %432 = vector.broadcast %cst_471 : f32 to vector<16x8xf32>
    %433 = arith.mulf %432, %429 : vector<16x8xf32>
    %434 = arith.addf %431, %433 : vector<16x8xf32>
    %c0_472 = arith.constant 0 : index
    %c272_473 = arith.constant 272 : index
    %435 = vector.load %arg11[%c0_472, %c272_473] : memref<16x512xf32, #tpu.memory_space<vmem>>, vector<16x8xf32>
    tpu.vector_store %arg11[%c0_472, %c272_473], %434 {strides = array<i32>} : memref<16x512xf32, #tpu.memory_space<vmem>>, vector<16x8xf32>,
    %c0_474 = arith.constant 0 : index
    %c136_475 = arith.constant 136 : index
    %436 = vector.load %arg10[%c0_474, %c136_475] : memref<16x256xf32, #tpu.memory_space<vmem>>, vector<16x8xf32>
    %c0_476 = arith.constant 0 : index
    %c144_477 = arith.constant 144 : index
    %437 = vector.load %arg10[%c0_476, %c144_477] : memref<16x256xf32, #tpu.memory_space<vmem>>, vector<16x8xf32>
    %cst_478 = arith.constant 0.54838711 : f32
    %438 = vector.broadcast %cst_478 : f32 to vector<16x8xf32>
    %439 = arith.mulf %438, %436 : vector<16x8xf32>
    %cst_479 = arith.constant 0.45161289 : f32
    %440 = vector.broadcast %cst_479 : f32 to vector<16x8xf32>
    %441 = arith.mulf %440, %437 : vector<16x8xf32>
    %442 = arith.addf %439, %441 : vector<16x8xf32>
    %c0_480 = arith.constant 0 : index
    %c280 = arith.constant 280 : index
    %443 = vector.load %arg11[%c0_480, %c280] : memref<16x512xf32, #tpu.memory_space<vmem>>, vector<16x8xf32>
    tpu.vector_store %arg11[%c0_480, %c280], %442 {strides = array<i32>} : memref<16x512xf32, #tpu.memory_space<vmem>>, vector<16x8xf32>,
    %c0_481 = arith.constant 0 : index
    %c136_482 = arith.constant 136 : index
    %444 = vector.load %arg10[%c0_481, %c136_482] : memref<16x256xf32, #tpu.memory_space<vmem>>, vector<16x8xf32>
    %c0_483 = arith.constant 0 : index
    %c144_484 = arith.constant 144 : index
    %445 = vector.load %arg10[%c0_483, %c144_484] : memref<16x256xf32, #tpu.memory_space<vmem>>, vector<16x8xf32>
    %cst_485 = arith.constant 0.0645161271 : f32
    %446 = vector.broadcast %cst_485 : f32 to vector<16x8xf32>
    %447 = arith.mulf %446, %444 : vector<16x8xf32>
    %cst_486 = arith.constant 0.935483872 : f32
    %448 = vector.broadcast %cst_486 : f32 to vector<16x8xf32>
    %449 = arith.mulf %448, %445 : vector<16x8xf32>
    %450 = arith.addf %447, %449 : vector<16x8xf32>
    %c0_487 = arith.constant 0 : index
    %c288_488 = arith.constant 288 : index
    %451 = vector.load %arg11[%c0_487, %c288_488] : memref<16x512xf32, #tpu.memory_space<vmem>>, vector<16x8xf32>
    tpu.vector_store %arg11[%c0_487, %c288_488], %450 {strides = array<i32>} : memref<16x512xf32, #tpu.memory_space<vmem>>, vector<16x8xf32>,
    %c0_489 = arith.constant 0 : index
    %c144_490 = arith.constant 144 : index
    %452 = vector.load %arg10[%c0_489, %c144_490] : memref<16x256xf32, #tpu.memory_space<vmem>>, vector<16x8xf32>
    %c0_491 = arith.constant 0 : index
    %c152_492 = arith.constant 152 : index
    %453 = vector.load %arg10[%c0_491, %c152_492] : memref<16x256xf32, #tpu.memory_space<vmem>>, vector<16x8xf32>
    %cst_493 = arith.constant 0.580645144 : f32
    %454 = vector.broadcast %cst_493 : f32 to vector<16x8xf32>
    %455 = arith.mulf %454, %452 : vector<16x8xf32>
    %cst_494 = arith.constant 0.419354826 : f32
    %456 = vector.broadcast %cst_494 : f32 to vector<16x8xf32>
    %457 = arith.mulf %456, %453 : vector<16x8xf32>
    %458 = arith.addf %455, %457 : vector<16x8xf32>
    %c0_495 = arith.constant 0 : index
    %c296 = arith.constant 296 : index
    %459 = vector.load %arg11[%c0_495, %c296] : memref<16x512xf32, #tpu.memory_space<vmem>>, vector<16x8xf32>
    tpu.vector_store %arg11[%c0_495, %c296], %458 {strides = array<i32>} : memref<16x512xf32, #tpu.memory_space<vmem>>, vector<16x8xf32>,
    %c0_496 = arith.constant 0 : index
    %c144_497 = arith.constant 144 : index
    %460 = vector.load %arg10[%c0_496, %c144_497] : memref<16x256xf32, #tpu.memory_space<vmem>>, vector<16x8xf32>
    %c0_498 = arith.constant 0 : index
    %c152_499 = arith.constant 152 : index
    %461 = vector.load %arg10[%c0_498, %c152_499] : memref<16x256xf32, #tpu.memory_space<vmem>>, vector<16x8xf32>
    %cst_500 = arith.constant 0.0967741906 : f32
    %462 = vector.broadcast %cst_500 : f32 to vector<16x8xf32>
    %463 = arith.mulf %462, %460 : vector<16x8xf32>
    %cst_501 = arith.constant 0.903225779 : f32
    %464 = vector.broadcast %cst_501 : f32 to vector<16x8xf32>
    %465 = arith.mulf %464, %461 : vector<16x8xf32>
    %466 = arith.addf %463, %465 : vector<16x8xf32>
    %c0_502 = arith.constant 0 : index
    %c304_503 = arith.constant 304 : index
    %467 = vector.load %arg11[%c0_502, %c304_503] : memref<16x512xf32, #tpu.memory_space<vmem>>, vector<16x8xf32>
    tpu.vector_store %arg11[%c0_502, %c304_503], %466 {strides = array<i32>} : memref<16x512xf32, #tpu.memory_space<vmem>>, vector<16x8xf32>,
    %c0_504 = arith.constant 0 : index
    %c152_505 = arith.constant 152 : index
    %468 = vector.load %arg10[%c0_504, %c152_505] : memref<16x256xf32, #tpu.memory_space<vmem>>, vector<16x8xf32>
    %c0_506 = arith.constant 0 : index
    %c160_507 = arith.constant 160 : index
    %469 = vector.load %arg10[%c0_506, %c160_507] : memref<16x256xf32, #tpu.memory_space<vmem>>, vector<16x8xf32>
    %cst_508 = arith.constant 0.612903237 : f32
    %470 = vector.broadcast %cst_508 : f32 to vector<16x8xf32>
    %471 = arith.mulf %470, %468 : vector<16x8xf32>
    %cst_509 = arith.constant 0.387096763 : f32
    %472 = vector.broadcast %cst_509 : f32 to vector<16x8xf32>
    %473 = arith.mulf %472, %469 : vector<16x8xf32>
    %474 = arith.addf %471, %473 : vector<16x8xf32>
    %c0_510 = arith.constant 0 : index
    %c312 = arith.constant 312 : index
    %475 = vector.load %arg11[%c0_510, %c312] : memref<16x512xf32, #tpu.memory_space<vmem>>, vector<16x8xf32>
    tpu.vector_store %arg11[%c0_510, %c312], %474 {strides = array<i32>} : memref<16x512xf32, #tpu.memory_space<vmem>>, vector<16x8xf32>,
    %c0_511 = arith.constant 0 : index
    %c152_512 = arith.constant 152 : index
    %476 = vector.load %arg10[%c0_511, %c152_512] : memref<16x256xf32, #tpu.memory_space<vmem>>, vector<16x8xf32>
    %c0_513 = arith.constant 0 : index
    %c160_514 = arith.constant 160 : index
    %477 = vector.load %arg10[%c0_513, %c160_514] : memref<16x256xf32, #tpu.memory_space<vmem>>, vector<16x8xf32>
    %cst_515 = arith.constant 0.129032254 : f32
    %478 = vector.broadcast %cst_515 : f32 to vector<16x8xf32>
    %479 = arith.mulf %478, %476 : vector<16x8xf32>
    %cst_516 = arith.constant 0.870967745 : f32
    %480 = vector.broadcast %cst_516 : f32 to vector<16x8xf32>
    %481 = arith.mulf %480, %477 : vector<16x8xf32>
    %482 = arith.addf %479, %481 : vector<16x8xf32>
    %c0_517 = arith.constant 0 : index
    %c320_518 = arith.constant 320 : index
    %483 = vector.load %arg11[%c0_517, %c320_518] : memref<16x512xf32, #tpu.memory_space<vmem>>, vector<16x8xf32>
    tpu.vector_store %arg11[%c0_517, %c320_518], %482 {strides = array<i32>} : memref<16x512xf32, #tpu.memory_space<vmem>>, vector<16x8xf32>,
    %c0_519 = arith.constant 0 : index
    %c160_520 = arith.constant 160 : index
    %484 = vector.load %arg10[%c0_519, %c160_520] : memref<16x256xf32, #tpu.memory_space<vmem>>, vector<16x8xf32>
    %c0_521 = arith.constant 0 : index
    %c168_522 = arith.constant 168 : index
    %485 = vector.load %arg10[%c0_521, %c168_522] : memref<16x256xf32, #tpu.memory_space<vmem>>, vector<16x8xf32>
    %cst_523 = arith.constant 0.645161271 : f32
    %486 = vector.broadcast %cst_523 : f32 to vector<16x8xf32>
    %487 = arith.mulf %486, %484 : vector<16x8xf32>
    %cst_524 = arith.constant 0.354838699 : f32
    %488 = vector.broadcast %cst_524 : f32 to vector<16x8xf32>
    %489 = arith.mulf %488, %485 : vector<16x8xf32>
    %490 = arith.addf %487, %489 : vector<16x8xf32>
    %c0_525 = arith.constant 0 : index
    %c328 = arith.constant 328 : index
    %491 = vector.load %arg11[%c0_525, %c328] : memref<16x512xf32, #tpu.memory_space<vmem>>, vector<16x8xf32>
    tpu.vector_store %arg11[%c0_525, %c328], %490 {strides = array<i32>} : memref<16x512xf32, #tpu.memory_space<vmem>>, vector<16x8xf32>,
    %c0_526 = arith.constant 0 : index
    %c160_527 = arith.constant 160 : index
    %492 = vector.load %arg10[%c0_526, %c160_527] : memref<16x256xf32, #tpu.memory_space<vmem>>, vector<16x8xf32>
    %c0_528 = arith.constant 0 : index
    %c168_529 = arith.constant 168 : index
    %493 = vector.load %arg10[%c0_528, %c168_529] : memref<16x256xf32, #tpu.memory_space<vmem>>, vector<16x8xf32>
    %cst_530 = arith.constant 0.161290318 : f32
    %494 = vector.broadcast %cst_530 : f32 to vector<16x8xf32>
    %495 = arith.mulf %494, %492 : vector<16x8xf32>
    %cst_531 = arith.constant 0.838709652 : f32
    %496 = vector.broadcast %cst_531 : f32 to vector<16x8xf32>
    %497 = arith.mulf %496, %493 : vector<16x8xf32>
    %498 = arith.addf %495, %497 : vector<16x8xf32>
    %c0_532 = arith.constant 0 : index
    %c336_533 = arith.constant 336 : index
    %499 = vector.load %arg11[%c0_532, %c336_533] : memref<16x512xf32, #tpu.memory_space<vmem>>, vector<16x8xf32>
    tpu.vector_store %arg11[%c0_532, %c336_533], %498 {strides = array<i32>} : memref<16x512xf32, #tpu.memory_space<vmem>>, vector<16x8xf32>,
    %c0_534 = arith.constant 0 : index
    %c168_535 = arith.constant 168 : index
    %500 = vector.load %arg10[%c0_534, %c168_535] : memref<16x256xf32, #tpu.memory_space<vmem>>, vector<16x8xf32>
    %c0_536 = arith.constant 0 : index
    %c176_537 = arith.constant 176 : index
    %501 = vector.load %arg10[%c0_536, %c176_537] : memref<16x256xf32, #tpu.memory_space<vmem>>, vector<16x8xf32>
    %cst_538 = arith.constant 0.677419364 : f32
    %502 = vector.broadcast %cst_538 : f32 to vector<16x8xf32>
    %503 = arith.mulf %502, %500 : vector<16x8xf32>
    %cst_539 = arith.constant 0.322580636 : f32
    %504 = vector.broadcast %cst_539 : f32 to vector<16x8xf32>
    %505 = arith.mulf %504, %501 : vector<16x8xf32>
    %506 = arith.addf %503, %505 : vector<16x8xf32>
    %c0_540 = arith.constant 0 : index
    %c344 = arith.constant 344 : index
    %507 = vector.load %arg11[%c0_540, %c344] : memref<16x512xf32, #tpu.memory_space<vmem>>, vector<16x8xf32>
    tpu.vector_store %arg11[%c0_540, %c344], %506 {strides = array<i32>} : memref<16x512xf32, #tpu.memory_space<vmem>>, vector<16x8xf32>,
    %c0_541 = arith.constant 0 : index
    %c168_542 = arith.constant 168 : index
    %508 = vector.load %arg10[%c0_541, %c168_542] : memref<16x256xf32, #tpu.memory_space<vmem>>, vector<16x8xf32>
    %c0_543 = arith.constant 0 : index
    %c176_544 = arith.constant 176 : index
    %509 = vector.load %arg10[%c0_543, %c176_544] : memref<16x256xf32, #tpu.memory_space<vmem>>, vector<16x8xf32>
    %cst_545 = arith.constant 0.193548381 : f32
    %510 = vector.broadcast %cst_545 : f32 to vector<16x8xf32>
    %511 = arith.mulf %510, %508 : vector<16x8xf32>
    %cst_546 = arith.constant 0.806451618 : f32
    %512 = vector.broadcast %cst_546 : f32 to vector<16x8xf32>
    %513 = arith.mulf %512, %509 : vector<16x8xf32>
    %514 = arith.addf %511, %513 : vector<16x8xf32>
    %c0_547 = arith.constant 0 : index
    %c352_548 = arith.constant 352 : index
    %515 = vector.load %arg11[%c0_547, %c352_548] : memref<16x512xf32, #tpu.memory_space<vmem>>, vector<16x8xf32>
    tpu.vector_store %arg11[%c0_547, %c352_548], %514 {strides = array<i32>} : memref<16x512xf32, #tpu.memory_space<vmem>>, vector<16x8xf32>,
    %c0_549 = arith.constant 0 : index
    %c176_550 = arith.constant 176 : index
    %516 = vector.load %arg10[%c0_549, %c176_550] : memref<16x256xf32, #tpu.memory_space<vmem>>, vector<16x8xf32>
    %c0_551 = arith.constant 0 : index
    %c184_552 = arith.constant 184 : index
    %517 = vector.load %arg10[%c0_551, %c184_552] : memref<16x256xf32, #tpu.memory_space<vmem>>, vector<16x8xf32>
    %cst_553 = arith.constant 0.709677398 : f32
    %518 = vector.broadcast %cst_553 : f32 to vector<16x8xf32>
    %519 = arith.mulf %518, %516 : vector<16x8xf32>
    %cst_554 = arith.constant 0.290322572 : f32
    %520 = vector.broadcast %cst_554 : f32 to vector<16x8xf32>
    %521 = arith.mulf %520, %517 : vector<16x8xf32>
    %522 = arith.addf %519, %521 : vector<16x8xf32>
    %c0_555 = arith.constant 0 : index
    %c360 = arith.constant 360 : index
    %523 = vector.load %arg11[%c0_555, %c360] : memref<16x512xf32, #tpu.memory_space<vmem>>, vector<16x8xf32>
    tpu.vector_store %arg11[%c0_555, %c360], %522 {strides = array<i32>} : memref<16x512xf32, #tpu.memory_space<vmem>>, vector<16x8xf32>,
    %c0_556 = arith.constant 0 : index
    %c176_557 = arith.constant 176 : index
    %524 = vector.load %arg10[%c0_556, %c176_557] : memref<16x256xf32, #tpu.memory_space<vmem>>, vector<16x8xf32>
    %c0_558 = arith.constant 0 : index
    %c184_559 = arith.constant 184 : index
    %525 = vector.load %arg10[%c0_558, %c184_559] : memref<16x256xf32, #tpu.memory_space<vmem>>, vector<16x8xf32>
    %cst_560 = arith.constant 0.225806445 : f32
    %526 = vector.broadcast %cst_560 : f32 to vector<16x8xf32>
    %527 = arith.mulf %526, %524 : vector<16x8xf32>
    %cst_561 = arith.constant 0.774193525 : f32
    %528 = vector.broadcast %cst_561 : f32 to vector<16x8xf32>
    %529 = arith.mulf %528, %525 : vector<16x8xf32>
    %530 = arith.addf %527, %529 : vector<16x8xf32>
    %c0_562 = arith.constant 0 : index
    %c368_563 = arith.constant 368 : index
    %531 = vector.load %arg11[%c0_562, %c368_563] : memref<16x512xf32, #tpu.memory_space<vmem>>, vector<16x8xf32>
    tpu.vector_store %arg11[%c0_562, %c368_563], %530 {strides = array<i32>} : memref<16x512xf32, #tpu.memory_space<vmem>>, vector<16x8xf32>,
    %c0_564 = arith.constant 0 : index
    %c184_565 = arith.constant 184 : index
    %532 = vector.load %arg10[%c0_564, %c184_565] : memref<16x256xf32, #tpu.memory_space<vmem>>, vector<16x8xf32>
    %c0_566 = arith.constant 0 : index
    %c192_567 = arith.constant 192 : index
    %533 = vector.load %arg10[%c0_566, %c192_567] : memref<16x256xf32, #tpu.memory_space<vmem>>, vector<16x8xf32>
    %cst_568 = arith.constant 0.741935492 : f32
    %534 = vector.broadcast %cst_568 : f32 to vector<16x8xf32>
    %535 = arith.mulf %534, %532 : vector<16x8xf32>
    %cst_569 = arith.constant 0.258064508 : f32
    %536 = vector.broadcast %cst_569 : f32 to vector<16x8xf32>
    %537 = arith.mulf %536, %533 : vector<16x8xf32>
    %538 = arith.addf %535, %537 : vector<16x8xf32>
    %c0_570 = arith.constant 0 : index
    %c376 = arith.constant 376 : index
    %539 = vector.load %arg11[%c0_570, %c376] : memref<16x512xf32, #tpu.memory_space<vmem>>, vector<16x8xf32>
    tpu.vector_store %arg11[%c0_570, %c376], %538 {strides = array<i32>} : memref<16x512xf32, #tpu.memory_space<vmem>>, vector<16x8xf32>,
    %c0_571 = arith.constant 0 : index
    %c184_572 = arith.constant 184 : index
    %540 = vector.load %arg10[%c0_571, %c184_572] : memref<16x256xf32, #tpu.memory_space<vmem>>, vector<16x8xf32>
    %c0_573 = arith.constant 0 : index
    %c192_574 = arith.constant 192 : index
    %541 = vector.load %arg10[%c0_573, %c192_574] : memref<16x256xf32, #tpu.memory_space<vmem>>, vector<16x8xf32>
    %cst_575 = arith.constant 0.258064508 : f32
    %542 = vector.broadcast %cst_575 : f32 to vector<16x8xf32>
    %543 = arith.mulf %542, %540 : vector<16x8xf32>
    %cst_576 = arith.constant 0.741935492 : f32
    %544 = vector.broadcast %cst_576 : f32 to vector<16x8xf32>
    %545 = arith.mulf %544, %541 : vector<16x8xf32>
    %546 = arith.addf %543, %545 : vector<16x8xf32>
    %c0_577 = arith.constant 0 : index
    %c384_578 = arith.constant 384 : index
    %547 = vector.load %arg11[%c0_577, %c384_578] : memref<16x512xf32, #tpu.memory_space<vmem>>, vector<16x8xf32>
    tpu.vector_store %arg11[%c0_577, %c384_578], %546 {strides = array<i32>} : memref<16x512xf32, #tpu.memory_space<vmem>>, vector<16x8xf32>,
    %c0_579 = arith.constant 0 : index
    %c192_580 = arith.constant 192 : index
    %548 = vector.load %arg10[%c0_579, %c192_580] : memref<16x256xf32, #tpu.memory_space<vmem>>, vector<16x8xf32>
    %c0_581 = arith.constant 0 : index
    %c200_582 = arith.constant 200 : index
    %549 = vector.load %arg10[%c0_581, %c200_582] : memref<16x256xf32, #tpu.memory_space<vmem>>, vector<16x8xf32>
    %cst_583 = arith.constant 0.774193525 : f32
    %550 = vector.broadcast %cst_583 : f32 to vector<16x8xf32>
    %551 = arith.mulf %550, %548 : vector<16x8xf32>
    %cst_584 = arith.constant 0.225806445 : f32
    %552 = vector.broadcast %cst_584 : f32 to vector<16x8xf32>
    %553 = arith.mulf %552, %549 : vector<16x8xf32>
    %554 = arith.addf %551, %553 : vector<16x8xf32>
    %c0_585 = arith.constant 0 : index
    %c392 = arith.constant 392 : index
    %555 = vector.load %arg11[%c0_585, %c392] : memref<16x512xf32, #tpu.memory_space<vmem>>, vector<16x8xf32>
    tpu.vector_store %arg11[%c0_585, %c392], %554 {strides = array<i32>} : memref<16x512xf32, #tpu.memory_space<vmem>>, vector<16x8xf32>,
    %c0_586 = arith.constant 0 : index
    %c192_587 = arith.constant 192 : index
    %556 = vector.load %arg10[%c0_586, %c192_587] : memref<16x256xf32, #tpu.memory_space<vmem>>, vector<16x8xf32>
    %c0_588 = arith.constant 0 : index
    %c200_589 = arith.constant 200 : index
    %557 = vector.load %arg10[%c0_588, %c200_589] : memref<16x256xf32, #tpu.memory_space<vmem>>, vector<16x8xf32>
    %cst_590 = arith.constant 0.290322572 : f32
    %558 = vector.broadcast %cst_590 : f32 to vector<16x8xf32>
    %559 = arith.mulf %558, %556 : vector<16x8xf32>
    %cst_591 = arith.constant 0.709677398 : f32
    %560 = vector.broadcast %cst_591 : f32 to vector<16x8xf32>
    %561 = arith.mulf %560, %557 : vector<16x8xf32>
    %562 = arith.addf %559, %561 : vector<16x8xf32>
    %c0_592 = arith.constant 0 : index
    %c400_593 = arith.constant 400 : index
    %563 = vector.load %arg11[%c0_592, %c400_593] : memref<16x512xf32, #tpu.memory_space<vmem>>, vector<16x8xf32>
    tpu.vector_store %arg11[%c0_592, %c400_593], %562 {strides = array<i32>} : memref<16x512xf32, #tpu.memory_space<vmem>>, vector<16x8xf32>,
    %c0_594 = arith.constant 0 : index
    %c200_595 = arith.constant 200 : index
    %564 = vector.load %arg10[%c0_594, %c200_595] : memref<16x256xf32, #tpu.memory_space<vmem>>, vector<16x8xf32>
    %c0_596 = arith.constant 0 : index
    %c208_597 = arith.constant 208 : index
    %565 = vector.load %arg10[%c0_596, %c208_597] : memref<16x256xf32, #tpu.memory_space<vmem>>, vector<16x8xf32>
    %cst_598 = arith.constant 0.806451618 : f32
    %566 = vector.broadcast %cst_598 : f32 to vector<16x8xf32>
    %567 = arith.mulf %566, %564 : vector<16x8xf32>
    %cst_599 = arith.constant 0.193548381 : f32
    %568 = vector.broadcast %cst_599 : f32 to vector<16x8xf32>
    %569 = arith.mulf %568, %565 : vector<16x8xf32>
    %570 = arith.addf %567, %569 : vector<16x8xf32>
    %c0_600 = arith.constant 0 : index
    %c408 = arith.constant 408 : index
    %571 = vector.load %arg11[%c0_600, %c408] : memref<16x512xf32, #tpu.memory_space<vmem>>, vector<16x8xf32>
    tpu.vector_store %arg11[%c0_600, %c408], %570 {strides = array<i32>} : memref<16x512xf32, #tpu.memory_space<vmem>>, vector<16x8xf32>,
    %c0_601 = arith.constant 0 : index
    %c200_602 = arith.constant 200 : index
    %572 = vector.load %arg10[%c0_601, %c200_602] : memref<16x256xf32, #tpu.memory_space<vmem>>, vector<16x8xf32>
    %c0_603 = arith.constant 0 : index
    %c208_604 = arith.constant 208 : index
    %573 = vector.load %arg10[%c0_603, %c208_604] : memref<16x256xf32, #tpu.memory_space<vmem>>, vector<16x8xf32>
    %cst_605 = arith.constant 0.322580636 : f32
    %574 = vector.broadcast %cst_605 : f32 to vector<16x8xf32>
    %575 = arith.mulf %574, %572 : vector<16x8xf32>
    %cst_606 = arith.constant 0.677419364 : f32
    %576 = vector.broadcast %cst_606 : f32 to vector<16x8xf32>
    %577 = arith.mulf %576, %573 : vector<16x8xf32>
    %578 = arith.addf %575, %577 : vector<16x8xf32>
    %c0_607 = arith.constant 0 : index
    %c416_608 = arith.constant 416 : index
    %579 = vector.load %arg11[%c0_607, %c416_608] : memref<16x512xf32, #tpu.memory_space<vmem>>, vector<16x8xf32>
    tpu.vector_store %arg11[%c0_607, %c416_608], %578 {strides = array<i32>} : memref<16x512xf32, #tpu.memory_space<vmem>>, vector<16x8xf32>,
    %c0_609 = arith.constant 0 : index
    %c208_610 = arith.constant 208 : index
    %580 = vector.load %arg10[%c0_609, %c208_610] : memref<16x256xf32, #tpu.memory_space<vmem>>, vector<16x8xf32>
    %c0_611 = arith.constant 0 : index
    %c216_612 = arith.constant 216 : index
    %581 = vector.load %arg10[%c0_611, %c216_612] : memref<16x256xf32, #tpu.memory_space<vmem>>, vector<16x8xf32>
    %cst_613 = arith.constant 0.838709652 : f32
    %582 = vector.broadcast %cst_613 : f32 to vector<16x8xf32>
    %583 = arith.mulf %582, %580 : vector<16x8xf32>
    %cst_614 = arith.constant 0.161290318 : f32
    %584 = vector.broadcast %cst_614 : f32 to vector<16x8xf32>
    %585 = arith.mulf %584, %581 : vector<16x8xf32>
    %586 = arith.addf %583, %585 : vector<16x8xf32>
    %c0_615 = arith.constant 0 : index
    %c424 = arith.constant 424 : index
    %587 = vector.load %arg11[%c0_615, %c424] : memref<16x512xf32, #tpu.memory_space<vmem>>, vector<16x8xf32>
    tpu.vector_store %arg11[%c0_615, %c424], %586 {strides = array<i32>} : memref<16x512xf32, #tpu.memory_space<vmem>>, vector<16x8xf32>,
    %c0_616 = arith.constant 0 : index
    %c208_617 = arith.constant 208 : index
    %588 = vector.load %arg10[%c0_616, %c208_617] : memref<16x256xf32, #tpu.memory_space<vmem>>, vector<16x8xf32>
    %c0_618 = arith.constant 0 : index
    %c216_619 = arith.constant 216 : index
    %589 = vector.load %arg10[%c0_618, %c216_619] : memref<16x256xf32, #tpu.memory_space<vmem>>, vector<16x8xf32>
    %cst_620 = arith.constant 0.354838699 : f32
    %590 = vector.broadcast %cst_620 : f32 to vector<16x8xf32>
    %591 = arith.mulf %590, %588 : vector<16x8xf32>
    %cst_621 = arith.constant 0.645161271 : f32
    %592 = vector.broadcast %cst_621 : f32 to vector<16x8xf32>
    %593 = arith.mulf %592, %589 : vector<16x8xf32>
    %594 = arith.addf %591, %593 : vector<16x8xf32>
    %c0_622 = arith.constant 0 : index
    %c432_623 = arith.constant 432 : index
    %595 = vector.load %arg11[%c0_622, %c432_623] : memref<16x512xf32, #tpu.memory_space<vmem>>, vector<16x8xf32>
    tpu.vector_store %arg11[%c0_622, %c432_623], %594 {strides = array<i32>} : memref<16x512xf32, #tpu.memory_space<vmem>>, vector<16x8xf32>,
    %c0_624 = arith.constant 0 : index
    %c216_625 = arith.constant 216 : index
    %596 = vector.load %arg10[%c0_624, %c216_625] : memref<16x256xf32, #tpu.memory_space<vmem>>, vector<16x8xf32>
    %c0_626 = arith.constant 0 : index
    %c224_627 = arith.constant 224 : index
    %597 = vector.load %arg10[%c0_626, %c224_627] : memref<16x256xf32, #tpu.memory_space<vmem>>, vector<16x8xf32>
    %cst_628 = arith.constant 0.870967745 : f32
    %598 = vector.broadcast %cst_628 : f32 to vector<16x8xf32>
    %599 = arith.mulf %598, %596 : vector<16x8xf32>
    %cst_629 = arith.constant 0.129032254 : f32
    %600 = vector.broadcast %cst_629 : f32 to vector<16x8xf32>
    %601 = arith.mulf %600, %597 : vector<16x8xf32>
    %602 = arith.addf %599, %601 : vector<16x8xf32>
    %c0_630 = arith.constant 0 : index
    %c440 = arith.constant 440 : index
    %603 = vector.load %arg11[%c0_630, %c440] : memref<16x512xf32, #tpu.memory_space<vmem>>, vector<16x8xf32>
    tpu.vector_store %arg11[%c0_630, %c440], %602 {strides = array<i32>} : memref<16x512xf32, #tpu.memory_space<vmem>>, vector<16x8xf32>,
    %c0_631 = arith.constant 0 : index
    %c216_632 = arith.constant 216 : index
    %604 = vector.load %arg10[%c0_631, %c216_632] : memref<16x256xf32, #tpu.memory_space<vmem>>, vector<16x8xf32>
    %c0_633 = arith.constant 0 : index
    %c224_634 = arith.constant 224 : index
    %605 = vector.load %arg10[%c0_633, %c224_634] : memref<16x256xf32, #tpu.memory_space<vmem>>, vector<16x8xf32>
    %cst_635 = arith.constant 0.387096763 : f32
    %606 = vector.broadcast %cst_635 : f32 to vector<16x8xf32>
    %607 = arith.mulf %606, %604 : vector<16x8xf32>
    %cst_636 = arith.constant 0.612903237 : f32
    %608 = vector.broadcast %cst_636 : f32 to vector<16x8xf32>
    %609 = arith.mulf %608, %605 : vector<16x8xf32>
    %610 = arith.addf %607, %609 : vector<16x8xf32>
    %c0_637 = arith.constant 0 : index
    %c448_638 = arith.constant 448 : index
    %611 = vector.load %arg11[%c0_637, %c448_638] : memref<16x512xf32, #tpu.memory_space<vmem>>, vector<16x8xf32>
    tpu.vector_store %arg11[%c0_637, %c448_638], %610 {strides = array<i32>} : memref<16x512xf32, #tpu.memory_space<vmem>>, vector<16x8xf32>,
    %c0_639 = arith.constant 0 : index
    %c224_640 = arith.constant 224 : index
    %612 = vector.load %arg10[%c0_639, %c224_640] : memref<16x256xf32, #tpu.memory_space<vmem>>, vector<16x8xf32>
    %c0_641 = arith.constant 0 : index
    %c232_642 = arith.constant 232 : index
    %613 = vector.load %arg10[%c0_641, %c232_642] : memref<16x256xf32, #tpu.memory_space<vmem>>, vector<16x8xf32>
    %cst_643 = arith.constant 0.903225779 : f32
    %614 = vector.broadcast %cst_643 : f32 to vector<16x8xf32>
    %615 = arith.mulf %614, %612 : vector<16x8xf32>
    %cst_644 = arith.constant 0.0967741906 : f32
    %616 = vector.broadcast %cst_644 : f32 to vector<16x8xf32>
    %617 = arith.mulf %616, %613 : vector<16x8xf32>
    %618 = arith.addf %615, %617 : vector<16x8xf32>
    %c0_645 = arith.constant 0 : index
    %c456 = arith.constant 456 : index
    %619 = vector.load %arg11[%c0_645, %c456] : memref<16x512xf32, #tpu.memory_space<vmem>>, vector<16x8xf32>
    tpu.vector_store %arg11[%c0_645, %c456], %618 {strides = array<i32>} : memref<16x512xf32, #tpu.memory_space<vmem>>, vector<16x8xf32>,
    %c0_646 = arith.constant 0 : index
    %c224_647 = arith.constant 224 : index
    %620 = vector.load %arg10[%c0_646, %c224_647] : memref<16x256xf32, #tpu.memory_space<vmem>>, vector<16x8xf32>
    %c0_648 = arith.constant 0 : index
    %c232_649 = arith.constant 232 : index
    %621 = vector.load %arg10[%c0_648, %c232_649] : memref<16x256xf32, #tpu.memory_space<vmem>>, vector<16x8xf32>
    %cst_650 = arith.constant 0.419354826 : f32
    %622 = vector.broadcast %cst_650 : f32 to vector<16x8xf32>
    %623 = arith.mulf %622, %620 : vector<16x8xf32>
    %cst_651 = arith.constant 0.580645144 : f32
    %624 = vector.broadcast %cst_651 : f32 to vector<16x8xf32>
    %625 = arith.mulf %624, %621 : vector<16x8xf32>
    %626 = arith.addf %623, %625 : vector<16x8xf32>
    %c0_652 = arith.constant 0 : index
    %c464_653 = arith.constant 464 : index
    %627 = vector.load %arg11[%c0_652, %c464_653] : memref<16x512xf32, #tpu.memory_space<vmem>>, vector<16x8xf32>
    tpu.vector_store %arg11[%c0_652, %c464_653], %626 {strides = array<i32>} : memref<16x512xf32, #tpu.memory_space<vmem>>, vector<16x8xf32>,
    %c0_654 = arith.constant 0 : index
    %c232_655 = arith.constant 232 : index
    %628 = vector.load %arg10[%c0_654, %c232_655] : memref<16x256xf32, #tpu.memory_space<vmem>>, vector<16x8xf32>
    %c0_656 = arith.constant 0 : index
    %c240_657 = arith.constant 240 : index
    %629 = vector.load %arg10[%c0_656, %c240_657] : memref<16x256xf32, #tpu.memory_space<vmem>>, vector<16x8xf32>
    %cst_658 = arith.constant 0.935483872 : f32
    %630 = vector.broadcast %cst_658 : f32 to vector<16x8xf32>
    %631 = arith.mulf %630, %628 : vector<16x8xf32>
    %cst_659 = arith.constant 0.0645161271 : f32
    %632 = vector.broadcast %cst_659 : f32 to vector<16x8xf32>
    %633 = arith.mulf %632, %629 : vector<16x8xf32>
    %634 = arith.addf %631, %633 : vector<16x8xf32>
    %c0_660 = arith.constant 0 : index
    %c472 = arith.constant 472 : index
    %635 = vector.load %arg11[%c0_660, %c472] : memref<16x512xf32, #tpu.memory_space<vmem>>, vector<16x8xf32>
    tpu.vector_store %arg11[%c0_660, %c472], %634 {strides = array<i32>} : memref<16x512xf32, #tpu.memory_space<vmem>>, vector<16x8xf32>,
    %c0_661 = arith.constant 0 : index
    %c232_662 = arith.constant 232 : index
    %636 = vector.load %arg10[%c0_661, %c232_662] : memref<16x256xf32, #tpu.memory_space<vmem>>, vector<16x8xf32>
    %c0_663 = arith.constant 0 : index
    %c240_664 = arith.constant 240 : index
    %637 = vector.load %arg10[%c0_663, %c240_664] : memref<16x256xf32, #tpu.memory_space<vmem>>, vector<16x8xf32>
    %cst_665 = arith.constant 0.45161289 : f32
    %638 = vector.broadcast %cst_665 : f32 to vector<16x8xf32>
    %639 = arith.mulf %638, %636 : vector<16x8xf32>
    %cst_666 = arith.constant 0.54838711 : f32
    %640 = vector.broadcast %cst_666 : f32 to vector<16x8xf32>
    %641 = arith.mulf %640, %637 : vector<16x8xf32>
    %642 = arith.addf %639, %641 : vector<16x8xf32>
    %c0_667 = arith.constant 0 : index
    %c480_668 = arith.constant 480 : index
    %643 = vector.load %arg11[%c0_667, %c480_668] : memref<16x512xf32, #tpu.memory_space<vmem>>, vector<16x8xf32>
    tpu.vector_store %arg11[%c0_667, %c480_668], %642 {strides = array<i32>} : memref<16x512xf32, #tpu.memory_space<vmem>>, vector<16x8xf32>,
    %c0_669 = arith.constant 0 : index
    %c240_670 = arith.constant 240 : index
    %644 = vector.load %arg10[%c0_669, %c240_670] : memref<16x256xf32, #tpu.memory_space<vmem>>, vector<16x8xf32>
    %c0_671 = arith.constant 0 : index
    %c248_672 = arith.constant 248 : index
    %645 = vector.load %arg10[%c0_671, %c248_672] : memref<16x256xf32, #tpu.memory_space<vmem>>, vector<16x8xf32>
    %cst_673 = arith.constant 0.967741906 : f32
    %646 = vector.broadcast %cst_673 : f32 to vector<16x8xf32>
    %647 = arith.mulf %646, %644 : vector<16x8xf32>
    %cst_674 = arith.constant 0.0322580636 : f32
    %648 = vector.broadcast %cst_674 : f32 to vector<16x8xf32>
    %649 = arith.mulf %648, %645 : vector<16x8xf32>
    %650 = arith.addf %647, %649 : vector<16x8xf32>
    %c0_675 = arith.constant 0 : index
    %c488 = arith.constant 488 : index
    %651 = vector.load %arg11[%c0_675, %c488] : memref<16x512xf32, #tpu.memory_space<vmem>>, vector<16x8xf32>
    tpu.vector_store %arg11[%c0_675, %c488], %650 {strides = array<i32>} : memref<16x512xf32, #tpu.memory_space<vmem>>, vector<16x8xf32>,
    %c0_676 = arith.constant 0 : index
    %c240_677 = arith.constant 240 : index
    %652 = vector.load %arg10[%c0_676, %c240_677] : memref<16x256xf32, #tpu.memory_space<vmem>>, vector<16x8xf32>
    %c0_678 = arith.constant 0 : index
    %c248_679 = arith.constant 248 : index
    %653 = vector.load %arg10[%c0_678, %c248_679] : memref<16x256xf32, #tpu.memory_space<vmem>>, vector<16x8xf32>
    %cst_680 = arith.constant 0.483870953 : f32
    %654 = vector.broadcast %cst_680 : f32 to vector<16x8xf32>
    %655 = arith.mulf %654, %652 : vector<16x8xf32>
    %cst_681 = arith.constant 5.161290e-01 : f32
    %656 = vector.broadcast %cst_681 : f32 to vector<16x8xf32>
    %657 = arith.mulf %656, %653 : vector<16x8xf32>
    %658 = arith.addf %655, %657 : vector<16x8xf32>
    %c0_682 = arith.constant 0 : index
    %c496_683 = arith.constant 496 : index
    %659 = vector.load %arg11[%c0_682, %c496_683] : memref<16x512xf32, #tpu.memory_space<vmem>>, vector<16x8xf32>
    tpu.vector_store %arg11[%c0_682, %c496_683], %658 {strides = array<i32>} : memref<16x512xf32, #tpu.memory_space<vmem>>, vector<16x8xf32>,
    %c0_684 = arith.constant 0 : index
    %c248_685 = arith.constant 248 : index
    %660 = vector.load %arg10[%c0_684, %c248_685] : memref<16x256xf32, #tpu.memory_space<vmem>>, vector<16x8xf32>
    %c0_686 = arith.constant 0 : index
    %c504 = arith.constant 504 : index
    %661 = vector.load %arg11[%c0_686, %c504] : memref<16x512xf32, #tpu.memory_space<vmem>>, vector<16x8xf32>
    tpu.vector_store %arg11[%c0_686, %c504], %660 {strides = array<i32>} : memref<16x512xf32, #tpu.memory_space<vmem>>, vector<16x8xf32>,
    %c0_687 = arith.constant 0 : index
    %c0_688 = arith.constant 0 : index
    %662 = vector.load %arg7[%c0_687, %c0_688] : memref<32x16xf32, #tpu.memory_space<vmem>>, vector<32x16xf32>
    %c0_689 = arith.constant 0 : index
    %c0_690 = arith.constant 0 : index
    %663 = vector.load %arg11[%c0_689, %c0_690] : memref<16x512xf32, #tpu.memory_space<vmem>>, vector<16x512xf32>
    %cst_691 = arith.constant dense<0.000000e+00> : vector<32x512xf32>
    %664 = tpu.matmul %662, %663, %cst_691 {dimension_numbers = #tpu.dot_dimension_numbers<[1], [0], [0], [1], [0, 0, 1, 1], [], []>} : vector<32x16xf32>, vector<16x512xf32>, vector<32x512xf32> -> vector<32x512xf32>
    %c0_692 = arith.constant 0 : index
    %c0_693 = arith.constant 0 : index
    %665 = vector.load %arg8[%c0_692, %c0_693] : memref<32x512xf32, #tpu.memory_space<vmem>>, vector<32x512xf32>
    tpu.vector_store %arg8[%c0_692, %c0_693], %664 {strides = array<i32>} : memref<32x512xf32, #tpu.memory_space<vmem>>, vector<32x512xf32>,
    return
  }
}

</mosaic_0001>

<llo_original>
// kernel: tpu_custom_call.1
$region0: #{tpu_custom_call.1}
  #allocation0 [shape = 'u32[]', space=smem, size = 0x4, offset = 0x4, fixed_abs, tag = 'smem constant byte address 0x4 - core index']
  #allocation1 [shape = 'u32[144,128]{1,0:T(1,128)}', space=vmem, size = 0x12000, scoped, tag = 'internal scratch']
  #allocation2 [shape = 'f32[512,8]{1,0:T(8,128)}', space=vmem, size = 0x40000, scoped, tag = 'scratch operand']
  #allocation3 [shape = 'f32[16,256]{1,0:T(8,128)}', space=vmem, size = 0x4000, scoped, tag = 'scratch operand']
  #allocation4 [shape = 'f32[16,512]{1,0:T(8,128)}', space=vmem, size = 0x8000, scoped, tag = 'scratch operand']
  %s0 = inlined_call_operand.vmem [shape: f32[2,18,18,8], index: 0, kind: input, shape index: {}]
  %s1 = inlined_call_operand.vmem [shape: f32[9,8,8], index: 1, kind: input, shape index: {}]
  %s2 = inlined_call_operand.vmem [shape: f32[1,256], index: 2, kind: input, shape index: {}]
  %s3 = inlined_call_operand.vmem [shape: f32[1,256], index: 3, kind: input, shape index: {}]
  %s4 = inlined_call_operand.vmem [shape: f32[1,256], index: 4, kind: input, shape index: {}]
  %s5 = inlined_call_operand.vmem [shape: f32[256,8], index: 5, kind: input, shape index: {}]
  %s6 = inlined_call_operand.vmem [shape: f32[8,256], index: 6, kind: input, shape index: {}]
  %s7 = inlined_call_operand.vmem [shape: f32[32,16], index: 7, kind: input, shape index: {}]
  %s8 = inlined_call_operand.hbm [shape: f32[32,512], index: 8, kind: output, shape index: {}]
  %s9 = sld [smem:[#allocation0]]
  $region42: #{tpu_custom_call.1} parent=0
    _
  %s11 = ssub.s32 1, %s9
  %s12 = scalar_select 0, %s11, %s9
  $region1: #{tpu_custom_call.1} parent=0
    #allocation5 [shape = 'u8[65536]{0}', space=vmem, size = 0x10000, scoped, tag = 'output window, operand 0, single buffered']
    #allocation6 [shape = 's32[1]{0}', space=sflag, size = 0x4, scoped, tag = 'scoped memory for tpu_custom_call.1']
    %13 = vsyncpa [#allocation6], 0
    // Predicated region
    $region2: #{tpu_custom_call.1} parent=1 // pred_check
      _
    $region3: #{tpu_custom_call.1} parent=1 // pred_check_branch
      %15 = sbr.rel (0) target = $region5
    $region4: #{tpu_custom_call.1} parent=1 // pred_region
      _
    $region5: #{tpu_custom_call.1} parent=1 // pred_fallthru
      _
    // Predicated region
    $region6: #{tpu_custom_call.1} parent=1 // pred_check
      _
    $region7: #{tpu_custom_call.1} parent=1 // pred_check_branch
      %17 = sbr.rel (0) target = $region9
    $region8: #{tpu_custom_call.1} parent=1 // pred_region
      _
    $region9: #{tpu_custom_call.1} parent=1 // pred_fallthru
      _
    // Predicated region
    $region10: #{tpu_custom_call.1} parent=1 // pred_check
      _
    $region11: #{tpu_custom_call.1} parent=1 // pred_check_branch
      %19 = sbr.rel (0) target = $region13
    $region12: #{tpu_custom_call.1} parent=1 // pred_region
      _
    $region13: #{tpu_custom_call.1} parent=1 // pred_fallthru
      _
    // Predicated region
    $region14: #{tpu_custom_call.1} parent=1 // pred_check
      _
    $region15: #{tpu_custom_call.1} parent=1 // pred_check_branch
      %21 = sbr.rel (0) target = $region17
    $region16: #{tpu_custom_call.1} parent=1 // pred_region
      _
    $region17: #{tpu_custom_call.1} parent=1 // pred_fallthru
      _
    // Predicated region
    $region18: #{tpu_custom_call.1} parent=1 // pred_check
      _
    $region19: #{tpu_custom_call.1} parent=1 // pred_check_branch
      %23 = sbr.rel (0) target = $region21
    $region20: #{tpu_custom_call.1} parent=1 // pred_region
      _
    $region21: #{tpu_custom_call.1} parent=1 // pred_fallthru
      _
    // Predicated region
    $region22: #{tpu_custom_call.1} parent=1 // pred_check
      _
    $region23: #{tpu_custom_call.1} parent=1 // pred_check_branch
      %25 = sbr.rel (0) target = $region25
    $region24: #{tpu_custom_call.1} parent=1 // pred_region
      _
    $region25: #{tpu_custom_call.1} parent=1 // pred_fallthru
      _
    // Predicated region
    $region26: #{tpu_custom_call.1} parent=1 // pred_check
      _
    $region27: #{tpu_custom_call.1} parent=1 // pred_check_branch
      %27 = sbr.rel (0) target = $region29
    $region28: #{tpu_custom_call.1} parent=1 // pred_region
      _
    $region29: #{tpu_custom_call.1} parent=1 // pred_fallthru
      _
    // Predicated region
    $region30: #{tpu_custom_call.1} parent=1 // pred_check
      _
    $region31: #{tpu_custom_call.1} parent=1 // pred_check_branch
      %29 = sbr.rel (0) target = $region33
    $region32: #{tpu_custom_call.1} parent=1 // pred_region
      _
    $region33: #{tpu_custom_call.1} parent=1 // pred_fallthru
      _
    %v30 = vld [vmem:[%s0] sm:$0xff]
    %v31 = vld [vmem:[%s0 + $0x8] sm:$0xff]
    %v32 = vld [vmem:[%s0 + $0x18] sm:$0xff]
    %v33 = vld [vmem:[%s0 + $0x20] sm:$0xff]
    %v34 = vld [vmem:[%s0 + $0x30] sm:$0xff]
    %v35 = vld [vmem:[%s0 + $0x38] sm:$0xff]
    %v36 = vld [vmem:[%s0 + $0x48] sm:$0xff]
    %v37 = vld [vmem:[%s0 + $0x50] sm:$0xff]
    %v38 = vld [vmem:[%s0 + $0x60] sm:$0xff]
    %v39 = vld [vmem:[%s0 + $0x68] sm:$0xff]
    %v40 = vld [vmem:[%s0 + $0x78] sm:$0xff]
    %v41 = vld [vmem:[%s0 + $0x80] sm:$0xff]
    %v42 = vld [vmem:[%s0 + $0x90] sm:$0xff]
    %v43 = vld [vmem:[%s0 + $0x98] sm:$0xff]
    %v44 = vld [vmem:[%s0 + $0xa8] sm:$0xff]
    %v45 = vld [vmem:[%s0 + $0xb0] sm:$0xff]
    %v46 = vld [vmem:[%s0 + $0xc0] sm:$0xff]
    %v47 = vld [vmem:[%s0 + $0xc8] sm:$0xff]
    %v48 = vld [vmem:[%s0 + $0xd8] sm:$0xff]
    %v49 = vld [vmem:[%s0 + $0xe0] sm:$0xff]
    %v50 = vld [vmem:[%s0 + $0xf0] sm:$0xff]
    %v51 = vld [vmem:[%s0 + $0xf8] sm:$0xff]
    %v52 = vld [vmem:[%s0 + $0x108] sm:$0xff]
    %v53 = vld [vmem:[%s0 + $0x110] sm:$0xff]
    %v54 = vld [vmem:[%s0 + $0x120] sm:$0xff]
    %v55 = vld [vmem:[%s0 + $0x128] sm:$0xff]
    %v56 = vld [vmem:[%s0 + $0x138] sm:$0xff]
    %v57 = vld [vmem:[%s0 + $0x140] sm:$0xff]
    %v58 = vld [vmem:[%s0 + $0x150] sm:$0xff]
    %v59 = vld [vmem:[%s0 + $0x158] sm:$0xff]
    %v60 = vld [vmem:[%s0 + $0x168] sm:$0xff]
    %v61 = vld [vmem:[%s0 + $0x170] sm:$0xff]
    %v62 = vld [vmem:[%s0 + $0x1b0] sm:$0xff]
    %v63 = vld [vmem:[%s0 + $0x1b8] sm:$0xff]
    %v64 = vld [vmem:[%s0 + $0x1c8] sm:$0xff]
    %v65 = vld [vmem:[%s0 + $0x1d0] sm:$0xff]
    %v66 = vld [vmem:[%s0 + $0x1e0] sm:$0xff]
    %v67 = vld [vmem:[%s0 + $0x1e8] sm:$0xff]
    %v68 = vld [vmem:[%s0 + $0x1f8] sm:$0xff]
    %v69 = vld [vmem:[%s0 + $0x200] sm:$0xff]
    %v70 = vld [vmem:[%s0 + $0x210] sm:$0xff]
    %v71 = vld [vmem:[%s0 + $0x218] sm:$0xff]
    %v72 = vld [vmem:[%s0 + $0x228] sm:$0xff]
    %v73 = vld [vmem:[%s0 + $0x230] sm:$0xff]
    %v74 = vld [vmem:[%s0 + $0x240] sm:$0xff]
    %v75 = vld [vmem:[%s0 + $0x248] sm:$0xff]
    %v76 = vld [vmem:[%s0 + $0x258] sm:$0xff]
    %v77 = vld [vmem:[%s0 + $0x260] sm:$0xff]
    %v78 = vld [vmem:[%s0 + $0x270] sm:$0xff]
    %v79 = vld [vmem:[%s0 + $0x278] sm:$0xff]
    %v80 = vld [vmem:[%s0 + $0x288] sm:$0xff]
    %v81 = vld [vmem:[%s0 + $0x290] sm:$0xff]
    %v82 = vld [vmem:[%s0 + $0x2a0] sm:$0xff]
    %v83 = vld [vmem:[%s0 + $0x2a8] sm:$0xff]
    %v84 = vld [vmem:[%s0 + $0x2b8] sm:$0xff]
    %v85 = vld [vmem:[%s0 + $0x2c0] sm:$0xff]
    %v86 = vld [vmem:[%s0 + $0x2d0] sm:$0xff]
    %v87 = vld [vmem:[%s0 + $0x2d8] sm:$0xff]
    %v88 = vld [vmem:[%s0 + $0x2e8] sm:$0xff]
    %v89 = vld [vmem:[%s0 + $0x2f0] sm:$0xff]
    %v90 = vld [vmem:[%s0 + $0x300] sm:$0xff]
    %v91 = vld [vmem:[%s0 + $0x308] sm:$0xff]
    %v92 = vld [vmem:[%s0 + $0x318] sm:$0xff]
    %v93 = vld [vmem:[%s0 + $0x320] sm:$0xff]
    %v94 = vld [vmem:[%s1] sm:$0xff]
    %vm95 = vcmask 64512
    %v97 = vsel %vm95, %v30, 0
    %v100 = vsel %vm95, %v31, 0
    %v103 = vsel %vm95, %v32, 0
    %v106 = vsel %vm95, %v33, 0
    %v109 = vsel %vm95, %v34, 0
    %v112 = vsel %vm95, %v35, 0
    %v115 = vsel %vm95, %v36, 0
    %v118 = vsel %vm95, %v37, 0
    %v121 = vsel %vm95, %v38, 0
    %v124 = vsel %vm95, %v39, 0
    %v127 = vsel %vm95, %v40, 0
    %v130 = vsel %vm95, %v41, 0
    %v133 = vsel %vm95, %v42, 0
    %v136 = vsel %vm95, %v43, 0
    %v139 = vsel %vm95, %v44, 0
    %v142 = vsel %vm95, %v45, 0
    %v145 = vsel %vm95, %v46, 0
    %v148 = vsel %vm95, %v47, 0
    %v151 = vsel %vm95, %v48, 0
    %v154 = vsel %vm95, %v49, 0
    %v157 = vsel %vm95, %v50, 0
    %v160 = vsel %vm95, %v51, 0
    %v163 = vsel %vm95, %v52, 0
    %v166 = vsel %vm95, %v53, 0
    %v169 = vsel %vm95, %v54, 0
    %v172 = vsel %vm95, %v55, 0
    %v175 = vsel %vm95, %v56, 0
    %v178 = vsel %vm95, %v57, 0
    %v181 = vsel %vm95, %v58, 0
    %v184 = vsel %vm95, %v59, 0
    %v187 = vsel %vm95, %v60, 0
    %v190 = vsel %vm95, %v61, 0
    %v193 = vsel %vm95, %v62, 0
    %v196 = vsel %vm95, %v63, 0
    %v199 = vsel %vm95, %v64, 0
    %v202 = vsel %vm95, %v65, 0
    %v205 = vsel %vm95, %v66, 0
    %v208 = vsel %vm95, %v67, 0
    %v211 = vsel %vm95, %v68, 0
    %v214 = vsel %vm95, %v69, 0
    %v217 = vsel %vm95, %v70, 0
    %v220 = vsel %vm95, %v71, 0
    %v223 = vsel %vm95, %v72, 0
    %v226 = vsel %vm95, %v73, 0
    %v229 = vsel %vm95, %v74, 0
    %v232 = vsel %vm95, %v75, 0
    %v235 = vsel %vm95, %v76, 0
    %v238 = vsel %vm95, %v77, 0
    %v241 = vsel %vm95, %v78, 0
    %v244 = vsel %vm95, %v79, 0
    %v247 = vsel %vm95, %v80, 0
    %v250 = vsel %vm95, %v81, 0
    %v253 = vsel %vm95, %v82, 0
    %v256 = vsel %vm95, %v83, 0
    %v259 = vsel %vm95, %v84, 0
    %v262 = vsel %vm95, %v85, 0
    %v265 = vsel %vm95, %v86, 0
    %v268 = vsel %vm95, %v87, 0
    %v271 = vsel %vm95, %v88, 0
    %v274 = vsel %vm95, %v89, 0
    %v277 = vsel %vm95, %v90, 0
    %v280 = vsel %vm95, %v91, 0
    %v283 = vsel %vm95, %v92, 0
    %v286 = vsel %vm95, %v93, 0
    %288 = vmatprep.subr.mxu0 0.0
    %289 = vmatpush1.msra.mxu0 %v94
    %290 = vmatprep.subr.mxu0 0.0
    %291 = vmatpush1.msra.mxu0 0.0
    %292 = vmatprep.subr.mxu0 0.0
    %293 = vmatpush1.msra.mxu0 0.0
    %294 = vmatprep.subr.mxu0 0.0
    %295 = vmatpush1.msra.mxu0 0.0
    %296 = vmatprep.subr.mxu0 0.0
    %297 = vmatpush1.msra.mxu0 0.0
    %298 = vmatprep.subr.mxu0 0.0
    %299 = vmatpush1.msra.mxu0 0.0
    %300 = vmatprep.subr.mxu0 0.0
    %301 = vmatpush1.msra.mxu0 0.0
    %302 = vmatprep.subr.mxu0 0.0
    %303 = vmatpush1.msra.mxu0 0.0
    %304 = vmatprep.subr.mxu0 0.0
    %305 = vmatpush1.msra.mxu0 0.0
    %306 = vmatprep.subr.mxu0 0.0
    %307 = vmatpush1.msra.mxu0 0.0
    %308 = vmatprep.subr.mxu0 0.0
    %309 = vmatpush1.msra.mxu0 0.0
    %310 = vmatprep.subr.mxu0 0.0
    %311 = vmatpush1.msra.mxu0 0.0
    %312 = vmatprep.subr.mxu0 0.0
    %313 = vmatpush1.msra.mxu0 0.0
    %314 = vmatprep.subr.mxu0 0.0
    %315 = vmatpush1.msra.mxu0 0.0
    %316 = vmatprep.subr.mxu0 0.0
    %317 = vmatpush1.msra.mxu0 0.0
    %318 = vmatprep.subr.mxu0 0.0
    %319 = vmatpush1.msra.mxu0 0.0
    %320 = vmatprep.subr.mxu0 0.0
    %321 = vmatpush1.msra.mxu0 0.0
    %322 = vmatprep.subr.mxu0 0.0
    %323 = vmatpush1.msra.mxu0 0.0
    %324 = vmatprep.subr.mxu0 0.0
    %325 = vmatpush1.msra.mxu0 0.0
    %326 = vmatprep.subr.mxu0 0.0
    %327 = vmatpush1.msra.mxu0 0.0
    %328 = vmatprep.subr.mxu0 0.0
    %329 = vmatpush1.msra.mxu0 0.0
    %330 = vmatprep.subr.mxu0 0.0
    %331 = vmatpush1.msra.mxu0 0.0
    %332 = vmatprep.subr.mxu0 0.0
    %333 = vmatpush1.msra.mxu0 0.0
    %334 = vmatprep.subr.mxu0 0.0
    %335 = vmatpush1.msra.mxu0 0.0
    %336 = vmatprep.subr.mxu0 0.0
    %337 = vmatpush1.msra.mxu0 0.0
    %338 = vmatprep.subr.mxu0 0.0
    %339 = vmatpush1.msra.mxu0 0.0
    %340 = vmatprep.subr.mxu0 0.0
    %341 = vmatpush1.msra.mxu0 0.0
    %342 = vmatprep.subr.mxu0 0.0
    %343 = vmatpush1.msra.mxu0 0.0
    %344 = vmatprep.subr.mxu0 0.0
    %345 = vmatpush1.msra.mxu0 0.0
    %346 = vmatprep.subr.mxu0 0.0
    %347 = vmatpush1.msra.mxu0 0.0
    %348 = vmatprep.subr.mxu0 0.0
    %349 = vmatpush1.msra.mxu0 0.0
    %350 = vmatprep.subr.mxu0 0.0
    %351 = vmatpush1.msra.mxu0 0.0
    %352 = vmatprep.mubr.f32.mxu0 0.0
    %353 = vmatmul.mubr.f32.gmra.mrb[0].mxu0 %v97
    %v354 = vpop.f32.mrb[0].mxu0
    %v355 = vadd.f32 0.0, %v354
    %v356 = vpop.f32.mrb[0].mxu0
    %357 = vmatprep.mubr.f32.mxu0 0.0
    %358 = vmatmul.mubr.f32.gmra.mrb[0].mxu0 %v100
    %v359 = vpop.f32.mrb[0].mxu0
    %v360 = vadd.f32 0.0, %v359
    %v361 = vpop.f32.mrb[0].mxu0
    %362 = vmatprep.mubr.f32.mxu0 0.0
    %363 = vmatmul.mubr.f32.gmra.mrb[0].mxu0 %v103
    %v364 = vpop.f32.mrb[0].mxu0
    %v365 = vadd.f32 0.0, %v364
    %v366 = vpop.f32.mrb[0].mxu0
    %367 = vmatprep.mubr.f32.mxu0 0.0
    %368 = vmatmul.mubr.f32.gmra.mrb[0].mxu0 %v106
    %v369 = vpop.f32.mrb[0].mxu0
    %v370 = vadd.f32 0.0, %v369
    %v371 = vpop.f32.mrb[0].mxu0
    %372 = vmatprep.mubr.f32.mxu0 0.0
    %373 = vmatmul.mubr.f32.gmra.mrb[0].mxu0 %v109
    %v374 = vpop.f32.mrb[0].mxu0
    %v375 = vadd.f32 0.0, %v374
    %v376 = vpop.f32.mrb[0].mxu0
    %377 = vmatprep.mubr.f32.mxu0 0.0
    %378 = vmatmul.mubr.f32.gmra.mrb[0].mxu0 %v112
    %v379 = vpop.f32.mrb[0].mxu0
    %v380 = vadd.f32 0.0, %v379
    %v381 = vpop.f32.mrb[0].mxu0
    %382 = vmatprep.mubr.f32.mxu0 0.0
    %383 = vmatmul.mubr.f32.gmra.mrb[0].mxu0 %v115
    %v384 = vpop.f32.mrb[0].mxu0
    %v385 = vadd.f32 0.0, %v384
    %v386 = vpop.f32.mrb[0].mxu0
    %387 = vmatprep.mubr.f32.mxu0 0.0
    %388 = vmatmul.mubr.f32.gmra.mrb[0].mxu0 %v118
    %v389 = vpop.f32.mrb[0].mxu0
    %v390 = vadd.f32 0.0, %v389
    %v391 = vpop.f32.mrb[0].mxu0
    %392 = vmatprep.mubr.f32.mxu0 0.0
    %393 = vmatmul.mubr.f32.gmra.mrb[0].mxu0 %v121
    %v394 = vpop.f32.mrb[0].mxu0
    %v395 = vadd.f32 0.0, %v394
    %v396 = vpop.f32.mrb[0].mxu0
    %397 = vmatprep.mubr.f32.mxu0 0.0
    %398 = vmatmul.mubr.f32.gmra.mrb[0].mxu0 %v124
    %v399 = vpop.f32.mrb[0].mxu0
    %v400 = vadd.f32 0.0, %v399
    %v401 = vpop.f32.mrb[0].mxu0
    %402 = vmatprep.mubr.f32.mxu0 0.0
    %403 = vmatmul.mubr.f32.gmra.mrb[0].mxu0 %v127
    %v404 = vpop.f32.mrb[0].mxu0
    %v405 = vadd.f32 0.0, %v404
    %v406 = vpop.f32.mrb[0].mxu0
    %407 = vmatprep.mubr.f32.mxu0 0.0
    %408 = vmatmul.mubr.f32.gmra.mrb[0].mxu0 %v130
    %v409 = vpop.f32.mrb[0].mxu0
    %v410 = vadd.f32 0.0, %v409
    %v411 = vpop.f32.mrb[0].mxu0
    %412 = vmatprep.mubr.f32.mxu0 0.0
    %413 = vmatmul.mubr.f32.gmra.mrb[0].mxu0 %v133
    %v414 = vpop.f32.mrb[0].mxu0
    %v415 = vadd.f32 0.0, %v414
    %v416 = vpop.f32.mrb[0].mxu0
    %417 = vmatprep.mubr.f32.mxu0 0.0
    %418 = vmatmul.mubr.f32.gmra.mrb[0].mxu0 %v136
    %v419 = vpop.f32.mrb[0].mxu0
    %v420 = vadd.f32 0.0, %v419
    %v421 = vpop.f32.mrb[0].mxu0
    %422 = vmatprep.mubr.f32.mxu0 0.0
    %423 = vmatmul.mubr.f32.gmra.mrb[0].mxu0 %v139
    %v424 = vpop.f32.mrb[0].mxu0
    %v425 = vadd.f32 0.0, %v424
    %v426 = vpop.f32.mrb[0].mxu0
    %427 = vmatprep.mubr.f32.mxu0 0.0
    %428 = vmatmul.mubr.f32.gmra.mrb[0].mxu0 %v142
    %v429 = vpop.f32.mrb[0].mxu0
    %v430 = vadd.f32 0.0, %v429
    %v431 = vpop.f32.mrb[0].mxu0
    %432 = vmatprep.mubr.f32.mxu0 0.0
    %433 = vmatmul.mubr.f32.gmra.mrb[0].mxu0 %v145
    %v434 = vpop.f32.mrb[0].mxu0
    %v435 = vadd.f32 0.0, %v434
    %v436 = vpop.f32.mrb[0].mxu0
    %437 = vmatprep.mubr.f32.mxu0 0.0
    %438 = vmatmul.mubr.f32.gmra.mrb[0].mxu0 %v148
    %v439 = vpop.f32.mrb[0].mxu0
    %v440 = vadd.f32 0.0, %v439
    %v441 = vpop.f32.mrb[0].mxu0
    %442 = vmatprep.mubr.f32.mxu0 0.0
    %443 = vmatmul.mubr.f32.gmra.mrb[0].mxu0 %v151
    %v444 = vpop.f32.mrb[0].mxu0
    %v445 = vadd.f32 0.0, %v444
    %v446 = vpop.f32.mrb[0].mxu0
    %447 = vmatprep.mubr.f32.mxu0 0.0
    %448 = vmatmul.mubr.f32.gmra.mrb[0].mxu0 %v154
    %v449 = vpop.f32.mrb[0].mxu0
    %v450 = vadd.f32 0.0, %v449
    %v451 = vpop.f32.mrb[0].mxu0
    %452 = vmatprep.mubr.f32.mxu0 0.0
    %453 = vmatmul.mubr.f32.gmra.mrb[0].mxu0 %v157
    %v454 = vpop.f32.mrb[0].mxu0
    %v455 = vadd.f32 0.0, %v454
    %v456 = vpop.f32.mrb[0].mxu0
    %457 = vmatprep.mubr.f32.mxu0 0.0
    %458 = vmatmul.mubr.f32.gmra.mrb[0].mxu0 %v160
    %v459 = vpop.f32.mrb[0].mxu0
    %v460 = vadd.f32 0.0, %v459
    %v461 = vpop.f32.mrb[0].mxu0
    %462 = vmatprep.mubr.f32.mxu0 0.0
    %463 = vmatmul.mubr.f32.gmra.mrb[0].mxu0 %v163
    %v464 = vpop.f32.mrb[0].mxu0
    %v465 = vadd.f32 0.0, %v464
    %v466 = vpop.f32.mrb[0].mxu0
    %467 = vmatprep.mubr.f32.mxu0 0.0
    %468 = vmatmul.mubr.f32.gmra.mrb[0].mxu0 %v166
    %v469 = vpop.f32.mrb[0].mxu0
    %v470 = vadd.f32 0.0, %v469
    %v471 = vpop.f32.mrb[0].mxu0
    %472 = vmatprep.mubr.f32.mxu0 0.0
    %473 = vmatmul.mubr.f32.gmra.mrb[0].mxu0 %v169
    %v474 = vpop.f32.mrb[0].mxu0
    %v475 = vadd.f32 0.0, %v474
    %v476 = vpop.f32.mrb[0].mxu0
    %477 = vmatprep.mubr.f32.mxu0 0.0
    %478 = vmatmul.mubr.f32.gmra.mrb[0].mxu0 %v172
    %v479 = vpop.f32.mrb[0].mxu0
    %v480 = vadd.f32 0.0, %v479
    %v481 = vpop.f32.mrb[0].mxu0
    %482 = vmatprep.mubr.f32.mxu0 0.0
    %483 = vmatmul.mubr.f32.gmra.mrb[0].mxu0 %v175
    %v484 = vpop.f32.mrb[0].mxu0
    %v485 = vadd.f32 0.0, %v484
    %v486 = vpop.f32.mrb[0].mxu0
    %487 = vmatprep.mubr.f32.mxu0 0.0
    %488 = vmatmul.mubr.f32.gmra.mrb[0].mxu0 %v178
    %v489 = vpop.f32.mrb[0].mxu0
    %v490 = vadd.f32 0.0, %v489
    %v491 = vpop.f32.mrb[0].mxu0
    %492 = vmatprep.mubr.f32.mxu0 0.0
    %493 = vmatmul.mubr.f32.gmra.mrb[0].mxu0 %v181
    %v494 = vpop.f32.mrb[0].mxu0
    %v495 = vadd.f32 0.0, %v494
    %v496 = vpop.f32.mrb[0].mxu0
    %497 = vmatprep.mubr.f32.mxu0 0.0
    %498 = vmatmul.mubr.f32.gmra.mrb[0].mxu0 %v184
    %v499 = vpop.f32.mrb[0].mxu0
    %v500 = vadd.f32 0.0, %v499
    %v501 = vpop.f32.mrb[0].mxu0
    %502 = vmatprep.mubr.f32.mxu0 0.0
    %503 = vmatmul.mubr.f32.gmra.mrb[0].mxu0 %v187
    %v504 = vpop.f32.mrb[0].mxu0
    %v505 = vadd.f32 0.0, %v504
    %v506 = vpop.f32.mrb[0].mxu0
    %507 = vmatprep.mubr.f32.mxu0 0.0
    %508 = vmatmul.mubr.f32.gmra.mrb[0].mxu0 %v190
    %v509 = vpop.f32.mrb[0].mxu0
    %v510 = vadd.f32 0.0, %v509
    %v511 = vpop.f32.mrb[0].mxu0
    %512 = vmatprep.mubr.f32.mxu0 0.0
    %513 = vmatmul.mubr.f32.gmra.mrb[0].mxu0 %v193
    %v514 = vpop.f32.mrb[0].mxu0
    %v515 = vadd.f32 0.0, %v514
    %v516 = vpop.f32.mrb[0].mxu0
    %517 = vmatprep.mubr.f32.mxu0 0.0
    %518 = vmatmul.mubr.f32.gmra.mrb[0].mxu0 %v196
    %v519 = vpop.f32.mrb[0].mxu0
    %v520 = vadd.f32 0.0, %v519
    %v521 = vpop.f32.mrb[0].mxu0
    %522 = vmatprep.mubr.f32.mxu0 0.0
    %523 = vmatmul.mubr.f32.gmra.mrb[0].mxu0 %v199
    %v524 = vpop.f32.mrb[0].mxu0
    %v525 = vadd.f32 0.0, %v524
    %v526 = vpop.f32.mrb[0].mxu0
    %527 = vmatprep.mubr.f32.mxu0 0.0
    %528 = vmatmul.mubr.f32.gmra.mrb[0].mxu0 %v202
    %v529 = vpop.f32.mrb[0].mxu0
    %v530 = vadd.f32 0.0, %v529
    %v531 = vpop.f32.mrb[0].mxu0
    %532 = vmatprep.mubr.f32.mxu0 0.0
    %533 = vmatmul.mubr.f32.gmra.mrb[0].mxu0 %v205
    %v534 = vpop.f32.mrb[0].mxu0
    %v535 = vadd.f32 0.0, %v534
    %v536 = vpop.f32.mrb[0].mxu0
    %537 = vmatprep.mubr.f32.mxu0 0.0
    %538 = vmatmul.mubr.f32.gmra.mrb[0].mxu0 %v208
    %v539 = vpop.f32.mrb[0].mxu0
    %v540 = vadd.f32 0.0, %v539
    %v541 = vpop.f32.mrb[0].mxu0
    %542 = vmatprep.mubr.f32.mxu0 0.0
    %543 = vmatmul.mubr.f32.gmra.mrb[0].mxu0 %v211
    %v544 = vpop.f32.mrb[0].mxu0
    %v545 = vadd.f32 0.0, %v544
    %v546 = vpop.f32.mrb[0].mxu0
    %547 = vmatprep.mubr.f32.mxu0 0.0
    %548 = vmatmul.mubr.f32.gmra.mrb[0].mxu0 %v214
    %v549 = vpop.f32.mrb[0].mxu0
    %v550 = vadd.f32 0.0, %v549
    %v551 = vpop.f32.mrb[0].mxu0
    %552 = vmatprep.mubr.f32.mxu0 0.0
    %553 = vmatmul.mubr.f32.gmra.mrb[0].mxu0 %v217
    %v554 = vpop.f32.mrb[0].mxu0
    %v555 = vadd.f32 0.0, %v554
    %v556 = vpop.f32.mrb[0].mxu0
    %557 = vmatprep.mubr.f32.mxu0 0.0
    %558 = vmatmul.mubr.f32.gmra.mrb[0].mxu0 %v220
    %v559 = vpop.f32.mrb[0].mxu0
    %v560 = vadd.f32 0.0, %v559
    %v561 = vpop.f32.mrb[0].mxu0
    %562 = vmatprep.mubr.f32.mxu0 0.0
    %563 = vmatmul.mubr.f32.gmra.mrb[0].mxu0 %v223
    %v564 = vpop.f32.mrb[0].mxu0
    %v565 = vadd.f32 0.0, %v564
    %v566 = vpop.f32.mrb[0].mxu0
    %567 = vmatprep.mubr.f32.mxu0 0.0
    %568 = vmatmul.mubr.f32.gmra.mrb[0].mxu0 %v226
    %v569 = vpop.f32.mrb[0].mxu0
    %v570 = vadd.f32 0.0, %v569
    %v571 = vpop.f32.mrb[0].mxu0
    %572 = vmatprep.mubr.f32.mxu0 0.0
    %573 = vmatmul.mubr.f32.gmra.mrb[0].mxu0 %v229
    %v574 = vpop.f32.mrb[0].mxu0
    %v575 = vadd.f32 0.0, %v574
    %v576 = vpop.f32.mrb[0].mxu0
    %577 = vmatprep.mubr.f32.mxu0 0.0
    %578 = vmatmul.mubr.f32.gmra.mrb[0].mxu0 %v232
    %v579 = vpop.f32.mrb[0].mxu0
    %v580 = vadd.f32 0.0, %v579
    %v581 = vpop.f32.mrb[0].mxu0
    %582 = vmatprep.mubr.f32.mxu0 0.0
    %583 = vmatmul.mubr.f32.gmra.mrb[0].mxu0 %v235
    %v584 = vpop.f32.mrb[0].mxu0
    %v585 = vadd.f32 0.0, %v584
    %v586 = vpop.f32.mrb[0].mxu0
    %587 = vmatprep.mubr.f32.mxu0 0.0
    %588 = vmatmul.mubr.f32.gmra.mrb[0].mxu0 %v238
    %v589 = vpop.f32.mrb[0].mxu0
    %v590 = vadd.f32 0.0, %v589
    %v591 = vpop.f32.mrb[0].mxu0
    %592 = vmatprep.mubr.f32.mxu0 0.0
    %593 = vmatmul.mubr.f32.gmra.mrb[0].mxu0 %v241
    %v594 = vpop.f32.mrb[0].mxu0
    %v595 = vadd.f32 0.0, %v594
    %v596 = vpop.f32.mrb[0].mxu0
    %597 = vmatprep.mubr.f32.mxu0 0.0
    %598 = vmatmul.mubr.f32.gmra.mrb[0].mxu0 %v244
    %v599 = vpop.f32.mrb[0].mxu0
    %v600 = vadd.f32 0.0, %v599
    %v601 = vpop.f32.mrb[0].mxu0
    %602 = vmatprep.mubr.f32.mxu0 0.0
    %603 = vmatmul.mubr.f32.gmra.mrb[0].mxu0 %v247
    %v604 = vpop.f32.mrb[0].mxu0
    %v605 = vadd.f32 0.0, %v604
    %v606 = vpop.f32.mrb[0].mxu0
    %607 = vmatprep.mubr.f32.mxu0 0.0
    %608 = vmatmul.mubr.f32.gmra.mrb[0].mxu0 %v250
    %v609 = vpop.f32.mrb[0].mxu0
    %v610 = vadd.f32 0.0, %v609
    %v611 = vpop.f32.mrb[0].mxu0
    %612 = vmatprep.mubr.f32.mxu0 0.0
    %613 = vmatmul.mubr.f32.gmra.mrb[0].mxu0 %v253
    %v614 = vpop.f32.mrb[0].mxu0
    %v615 = vadd.f32 0.0, %v614
    %v616 = vpop.f32.mrb[0].mxu0
    %617 = vmatprep.mubr.f32.mxu0 0.0
    %618 = vmatmul.mubr.f32.gmra.mrb[0].mxu0 %v256
    %v619 = vpop.f32.mrb[0].mxu0
    %v620 = vadd.f32 0.0, %v619
    %v621 = vpop.f32.mrb[0].mxu0
    %622 = vmatprep.mubr.f32.mxu0 0.0
    %623 = vmatmul.mubr.f32.gmra.mrb[0].mxu0 %v259
    %v624 = vpop.f32.mrb[0].mxu0
    %v625 = vadd.f32 0.0, %v624
    %v626 = vpop.f32.mrb[0].mxu0
    %627 = vmatprep.mubr.f32.mxu0 0.0
    %628 = vmatmul.mubr.f32.gmra.mrb[0].mxu0 %v262
    %v629 = vpop.f32.mrb[0].mxu0
    %v630 = vadd.f32 0.0, %v629
    %v631 = vpop.f32.mrb[0].mxu0
    %632 = vmatprep.mubr.f32.mxu0 0.0
    %633 = vmatmul.mubr.f32.gmra.mrb[0].mxu0 %v265
    %v634 = vpop.f32.mrb[0].mxu0
    %v635 = vadd.f32 0.0, %v634
    %v636 = vpop.f32.mrb[0].mxu0
    %637 = vmatprep.mubr.f32.mxu0 0.0
    %638 = vmatmul.mubr.f32.gmra.mrb[0].mxu0 %v268
    %v639 = vpop.f32.mrb[0].mxu0
    %v640 = vadd.f32 0.0, %v639
    %v641 = vpop.f32.mrb[0].mxu0
    %642 = vmatprep.mubr.f32.mxu0 0.0
    %643 = vmatmul.mubr.f32.gmra.mrb[0].mxu0 %v271
    %v644 = vpop.f32.mrb[0].mxu0
    %v645 = vadd.f32 0.0, %v644
    %v646 = vpop.f32.mrb[0].mxu0
    %647 = vmatprep.mubr.f32.mxu0 0.0
    %648 = vmatmul.mubr.f32.gmra.mrb[0].mxu0 %v274
    %v649 = vpop.f32.mrb[0].mxu0
    %v650 = vadd.f32 0.0, %v649
    %v651 = vpop.f32.mrb[0].mxu0
    %652 = vmatprep.mubr.f32.mxu0 0.0
    %653 = vmatmul.mubr.f32.gmra.mrb[0].mxu0 %v277
    %v654 = vpop.f32.mrb[0].mxu0
    %v655 = vadd.f32 0.0, %v654
    %v656 = vpop.f32.mrb[0].mxu0
    %657 = vmatprep.mubr.f32.mxu0 0.0
    %658 = vmatmul.mubr.f32.gmra.mrb[0].mxu0 %v280
    %v659 = vpop.f32.mrb[0].mxu0
    %v660 = vadd.f32 0.0, %v659
    %v661 = vpop.f32.mrb[0].mxu0
    %662 = vmatprep.mubr.f32.mxu0 0.0
    %663 = vmatmul.mubr.f32.gmra.mrb[0].mxu0 %v283
    %v664 = vpop.f32.mrb[0].mxu0
    %v665 = vadd.f32 0.0, %v664
    %v666 = vpop.f32.mrb[0].mxu0
    %667 = vmatprep.mubr.f32.mxu0 0.0
    %668 = vmatmul.mubr.f32.gmra.mrb[0].mxu0 %v286
    %v669 = vpop.f32.mrb[0].mxu0
    %v670 = vadd.f32 0.0, %v669
    %v671 = vpop.f32.mrb[0].mxu0
    %672 = vdwg.mxu0
    %673 = vst.msk [vmem:[#allocation2] sm:$0xff] %vm95, %v355
    %674 = vst.msk [vmem:[#allocation2 + $0x8] sm:$0xff] %vm95, %v360
    %675 = vst.msk [vmem:[#allocation2 + $0x10] sm:$0xff] %vm95, %v365
    %676 = vst.msk [vmem:[#allocation2 + $0x18] sm:$0xff] %vm95, %v370
    %677 = vst.msk [vmem:[#allocation2 + $0x20] sm:$0xff] %vm95, %v375
    %678 = vst.msk [vmem:[#allocation2 + $0x28] sm:$0xff] %vm95, %v380
    %679 = vst.msk [vmem:[#allocation2 + $0x30] sm:$0xff] %vm95, %v385
    %680 = vst.msk [vmem:[#allocation2 + $0x38] sm:$0xff] %vm95, %v390
    %681 = vst.msk [vmem:[#allocation2 + $0x40] sm:$0xff] %vm95, %v395
    %682 = vst.msk [vmem:[#allocation2 + $0x48] sm:$0xff] %vm95, %v400
    %683 = vst.msk [vmem:[#allocation2 + $0x50] sm:$0xff] %vm95, %v405
    %684 = vst.msk [vmem:[#allocation2 + $0x58] sm:$0xff] %vm95, %v410
    %685 = vst.msk [vmem:[#allocation2 + $0x60] sm:$0xff] %vm95, %v415
    %686 = vst.msk [vmem:[#allocation2 + $0x68] sm:$0xff] %vm95, %v420
    %687 = vst.msk [vmem:[#allocation2 + $0x70] sm:$0xff] %vm95, %v425
    %688 = vst.msk [vmem:[#allocation2 + $0x78] sm:$0xff] %vm95, %v430
    %689 = vst.msk [vmem:[#allocation2 + $0x80] sm:$0xff] %vm95, %v435
    %690 = vst.msk [vmem:[#allocation2 + $0x88] sm:$0xff] %vm95, %v440
    %691 = vst.msk [vmem:[#allocation2 + $0x90] sm:$0xff] %vm95, %v445
    %692 = vst.msk [vmem:[#allocation2 + $0x98] sm:$0xff] %vm95, %v450
    %693 = vst.msk [vmem:[#allocation2 + $0xa0] sm:$0xff] %vm95, %v455
    %694 = vst.msk [vmem:[#allocation2 + $0xa8] sm:$0xff] %vm95, %v460
    %695 = vst.msk [vmem:[#allocation2 + $0xb0] sm:$0xff] %vm95, %v465
    %696 = vst.msk [vmem:[#allocation2 + $0xb8] sm:$0xff] %vm95, %v470
    %697 = vst.msk [vmem:[#allocation2 + $0xc0] sm:$0xff] %vm95, %v475
    %698 = vst.msk [vmem:[#allocation2 + $0xc8] sm:$0xff] %vm95, %v480
    %699 = vst.msk [vmem:[#allocation2 + $0xd0] sm:$0xff] %vm95, %v485
    %700 = vst.msk [vmem:[#allocation2 + $0xd8] sm:$0xff] %vm95, %v490
    %701 = vst.msk [vmem:[#allocation2 + $0xe0] sm:$0xff] %vm95, %v495
    %702 = vst.msk [vmem:[#allocation2 + $0xe8] sm:$0xff] %vm95, %v500
    %703 = vst.msk [vmem:[#allocation2 + $0xf0] sm:$0xff] %vm95, %v505
    %704 = vst.msk [vmem:[#allocation2 + $0xf8] sm:$0xff] %vm95, %v510
    %705 = vst.msk [vmem:[#allocation2 + $0x100] sm:$0xff] %vm95, %v515
    %706 = vst.msk [vmem:[#allocation2 + $0x108] sm:$0xff] %vm95, %v520
    %707 = vst.msk [vmem:[#allocation2 + $0x110] sm:$0xff] %vm95, %v525
    %708 = vst.msk [vmem:[#allocation2 + $0x118] sm:$0xff] %vm95, %v530
    %709 = vst.msk [vmem:[#allocation2 + $0x120] sm:$0xff] %vm95, %v535
    %710 = vst.msk [vmem:[#allocation2 + $0x128] sm:$0xff] %vm95, %v540
    %711 = vst.msk [vmem:[#allocation2 + $0x130] sm:$0xff] %vm95, %v545
    %712 = vst.msk [vmem:[#allocation2 + $0x138] sm:$0xff] %vm95, %v550
    %713 = vst.msk [vmem:[#allocation2 + $0x140] sm:$0xff] %vm95, %v555
    %714 = vst.msk [vmem:[#allocation2 + $0x148] sm:$0xff] %vm95, %v560
    %715 = vst.msk [vmem:[#allocation2 + $0x150] sm:$0xff] %vm95, %v565
    %716 = vst.msk [vmem:[#allocation2 + $0x158] sm:$0xff] %vm95, %v570
    %717 = vst.msk [vmem:[#allocation2 + $0x160] sm:$0xff] %vm95, %v575
    %718 = vst.msk [vmem:[#allocation2 + $0x168] sm:$0xff] %vm95, %v580
    %719 = vst.msk [vmem:[#allocation2 + $0x170] sm:$0xff] %vm95, %v585
    %720 = vst.msk [vmem:[#allocation2 + $0x178] sm:$0xff] %vm95, %v590
    %721 = vst.msk [vmem:[#allocation2 + $0x180] sm:$0xff] %vm95, %v595
    %722 = vst.msk [vmem:[#allocation2 + $0x188] sm:$0xff] %vm95, %v600
    %723 = vst.msk [vmem:[#allocation2 + $0x190] sm:$0xff] %vm95, %v605
    %724 = vst.msk [vmem:[#allocation2 + $0x198] sm:$0xff] %vm95, %v610
    %725 = vst.msk [vmem:[#allocation2 + $0x1a0] sm:$0xff] %vm95, %v615
    %726 = vst.msk [vmem:[#allocation2 + $0x1a8] sm:$0xff] %vm95, %v620
    %727 = vst.msk [vmem:[#allocation2 + $0x1b0] sm:$0xff] %vm95, %v625
    %728 = vst.msk [vmem:[#allocation2 + $0x1b8] sm:$0xff] %vm95, %v630
    %729 = vst.msk [vmem:[#allocation2 + $0x1c0] sm:$0xff] %vm95, %v635
    %730 = vst.msk [vmem:[#allocation2 + $0x1c8] sm:$0xff] %vm95, %v640
    %731 = vst.msk [vmem:[#allocation2 + $0x1d0] sm:$0xff] %vm95, %v645
    %732 = vst.msk [vmem:[#allocation2 + $0x1d8] sm:$0xff] %vm95, %v650
    %733 = vst.msk [vmem:[#allocation2 + $0x1e0] sm:$0xff] %vm95, %v655
    %734 = vst.msk [vmem:[#allocation2 + $0x1e8] sm:$0xff] %vm95, %v660
    %735 = vst.msk [vmem:[#allocation2 + $0x1f0] sm:$0xff] %vm95, %v665
    %736 = vst.msk [vmem:[#allocation2 + $0x1f8] sm:$0xff] %vm95, %v670
    %s737 = scalar_lea.vmem %s0, 24
    %v738 = vld [vmem:[%s737] sm:$0xff]
    %v739 = vld [vmem:[%s737 + $0x8] sm:$0xff]
    %v740 = vld [vmem:[%s737 + $0x18] sm:$0xff]
    %v741 = vld [vmem:[%s737 + $0x20] sm:$0xff]
    %v742 = vld [vmem:[%s737 + $0x30] sm:$0xff]
    %v743 = vld [vmem:[%s737 + $0x38] sm:$0xff]
    %v744 = vld [vmem:[%s737 + $0x48] sm:$0xff]
    %v745 = vld [vmem:[%s737 + $0x50] sm:$0xff]
    %v746 = vld [vmem:[%s737 + $0x60] sm:$0xff]
    %v747 = vld [vmem:[%s737 + $0x68] sm:$0xff]
    %v748 = vld [vmem:[%s737 + $0x78] sm:$0xff]
    %v749 = vld [vmem:[%s737 + $0x80] sm:$0xff]
    %v750 = vld [vmem:[%s737 + $0x90] sm:$0xff]
    %v751 = vld [vmem:[%s737 + $0x98] sm:$0xff]
    %v752 = vld [vmem:[%s737 + $0xa8] sm:$0xff]
    %v753 = vld [vmem:[%s737 + $0xb0] sm:$0xff]
    %v754 = vld [vmem:[%s737 + $0xc0] sm:$0xff]
    %v755 = vld [vmem:[%s737 + $0xc8] sm:$0xff]
    %v756 = vld [vmem:[%s737 + $0xd8] sm:$0xff]
    %v757 = vld [vmem:[%s737 + $0xe0] sm:$0xff]
    %v758 = vld [vmem:[%s737 + $0xf0] sm:$0xff]
    %v759 = vld [vmem:[%s737 + $0xf8] sm:$0xff]
    %v760 = vld [vmem:[%s737 + $0x108] sm:$0xff]
    %v761 = vld [vmem:[%s737 + $0x110] sm:$0xff]
    %v762 = vld [vmem:[%s737 + $0x120] sm:$0xff]
    %v763 = vld [vmem:[%s737 + $0x128] sm:$0xff]
    %v764 = vld [vmem:[%s737 + $0x138] sm:$0xff]
    %v765 = vld [vmem:[%s737 + $0x140] sm:$0xff]
    %v766 = vld [vmem:[%s737 + $0x150] sm:$0xff]
    %v767 = vld [vmem:[%s737 + $0x158] sm:$0xff]
    %v768 = vld [vmem:[%s737 + $0x168] sm:$0xff]
    %v769 = vld [vmem:[%s737 + $0x170] sm:$0xff]
    %v770 = vld [vmem:[%s737 + $0x1b0] sm:$0xff]
    %v771 = vld [vmem:[%s737 + $0x1b8] sm:$0xff]
    %v772 = vld [vmem:[%s737 + $0x1c8] sm:$0xff]
    %v773 = vld [vmem:[%s737 + $0x1d0] sm:$0xff]
    %v774 = vld [vmem:[%s737 + $0x1e0] sm:$0xff]
    %v775 = vld [vmem:[%s737 + $0x1e8] sm:$0xff]
    %v776 = vld [vmem:[%s737 + $0x1f8] sm:$0xff]
    %v777 = vld [vmem:[%s737 + $0x200] sm:$0xff]
    %v778 = vld [vmem:[%s737 + $0x210] sm:$0xff]
    %v779 = vld [vmem:[%s737 + $0x218] sm:$0xff]
    %v780 = vld [vmem:[%s737 + $0x228] sm:$0xff]
    %v781 = vld [vmem:[%s737 + $0x230] sm:$0xff]
    %v782 = vld [vmem:[%s737 + $0x240] sm:$0xff]
    %v783 = vld [vmem:[%s737 + $0x248] sm:$0xff]
    %v784 = vld [vmem:[%s737 + $0x258] sm:$0xff]
    %v785 = vld [vmem:[%s737 + $0x260] sm:$0xff]
    %v786 = vld [vmem:[%s737 + $0x270] sm:$0xff]
    %v787 = vld [vmem:[%s737 + $0x278] sm:$0xff]
    %v788 = vld [vmem:[%s737 + $0x288] sm:$0xff]
    %v789 = vld [vmem:[%s737 + $0x290] sm:$0xff]
    %v790 = vld [vmem:[%s737 + $0x2a0] sm:$0xff]
    %v791 = vld [vmem:[%s737 + $0x2a8] sm:$0xff]
    %v792 = vld [vmem:[%s737 + $0x2b8] sm:$0xff]
    %v793 = vld [vmem:[%s737 + $0x2c0] sm:$0xff]
    %v794 = vld [vmem:[%s737 + $0x2d0] sm:$0xff]
    %v795 = vld [vmem:[%s737 + $0x2d8] sm:$0xff]
    %v796 = vld [vmem:[%s737 + $0x2e8] sm:$0xff]
    %v797 = vld [vmem:[%s737 + $0x2f0] sm:$0xff]
    %v798 = vld [vmem:[%s737 + $0x300] sm:$0xff]
    %v799 = vld [vmem:[%s737 + $0x308] sm:$0xff]
    %v800 = vld [vmem:[%s737 + $0x318] sm:$0xff]
    %v801 = vld [vmem:[%s737 + $0x320] sm:$0xff]
    %s802 = scalar_lea.vmem %s1, 8
    %v803 = vld [vmem:[%s802] sm:$0xff]
    %v805 = vsel %vm95, %v738, 0
    %v808 = vsel %vm95, %v739, 0
    %v811 = vsel %vm95, %v740, 0
    %v814 = vsel %vm95, %v741, 0
    %v817 = vsel %vm95, %v742, 0
    %v820 = vsel %vm95, %v743, 0
    %v823 = vsel %vm95, %v744, 0
    %v826 = vsel %vm95, %v745, 0
    %v829 = vsel %vm95, %v746, 0
    %v832 = vsel %vm95, %v747, 0
    %v835 = vsel %vm95, %v748, 0
    %v838 = vsel %vm95, %v749, 0
    %v841 = vsel %vm95, %v750, 0
    %v844 = vsel %vm95, %v751, 0
    %v847 = vsel %vm95, %v752, 0
    %v850 = vsel %vm95, %v753, 0
    %v853 = vsel %vm95, %v754, 0
    %v856 = vsel %vm95, %v755, 0
    %v859 = vsel %vm95, %v756, 0
    %v862 = vsel %vm95, %v757, 0
    %v865 = vsel %vm95, %v758, 0
    %v868 = vsel %vm95, %v759, 0
    %v871 = vsel %vm95, %v760, 0
    %v874 = vsel %vm95, %v761, 0
    %v877 = vsel %vm95, %v762, 0
    %v880 = vsel %vm95, %v763, 0
    %v883 = vsel %vm95, %v764, 0
    %v886 = vsel %vm95, %v765, 0
    %v889 = vsel %vm95, %v766, 0
    %v892 = vsel %vm95, %v767, 0
    %v895 = vsel %vm95, %v768, 0
    %v898 = vsel %vm95, %v769, 0
    %v901 = vsel %vm95, %v770, 0
    %v904 = vsel %vm95, %v771, 0
    %v907 = vsel %vm95, %v772, 0
    %v910 = vsel %vm95, %v773, 0
    %v913 = vsel %vm95, %v774, 0
    %v916 = vsel %vm95, %v775, 0
    %v919 = vsel %vm95, %v776, 0
    %v922 = vsel %vm95, %v777, 0
    %v925 = vsel %vm95, %v778, 0
    %v928 = vsel %vm95, %v779, 0
    %v931 = vsel %vm95, %v780, 0
    %v934 = vsel %vm95, %v781, 0
    %v937 = vsel %vm95, %v782, 0
    %v940 = vsel %vm95, %v783, 0
    %v943 = vsel %vm95, %v784, 0
    %v946 = vsel %vm95, %v785, 0
    %v949 = vsel %vm95, %v786, 0
    %v952 = vsel %vm95, %v787, 0
    %v955 = vsel %vm95, %v788, 0
    %v958 = vsel %vm95, %v789, 0
    %v961 = vsel %vm95, %v790, 0
    %v964 = vsel %vm95, %v791, 0
    %v967 = vsel %vm95, %v792, 0
    %v970 = vsel %vm95, %v793, 0
    %v973 = vsel %vm95, %v794, 0
    %v976 = vsel %vm95, %v795, 0
    %v979 = vsel %vm95, %v796, 0
    %v982 = vsel %vm95, %v797, 0
    %v985 = vsel %vm95, %v798, 0
    %v988 = vsel %vm95, %v799, 0
    %v991 = vsel %vm95, %v800, 0
    %v994 = vsel %vm95, %v801, 0
    %996 = vmatprep.subr.mxu0 0.0
    %997 = vmatpush1.msra.mxu0 %v803
    %998 = vmatprep.subr.mxu0 0.0
    %999 = vmatpush1.msra.mxu0 0.0
    %1000 = vmatprep.subr.mxu0 0.0
    %1001 = vmatpush1.msra.mxu0 0.0
    %1002 = vmatprep.subr.mxu0 0.0
    %1003 = vmatpush1.msra.mxu0 0.0
    %1004 = vmatprep.subr.mxu0 0.0
    %1005 = vmatpush1.msra.mxu0 0.0
    %1006 = vmatprep.subr.mxu0 0.0
    %1007 = vmatpush1.msra.mxu0 0.0
    %1008 = vmatprep.subr.mxu0 0.0
    %1009 = vmatpush1.msra.mxu0 0.0
    %1010 = vmatprep.subr.mxu0 0.0
    %1011 = vmatpush1.msra.mxu0 0.0
    %1012 = vmatprep.subr.mxu0 0.0
    %1013 = vmatpush1.msra.mxu0 0.0
    %1014 = vmatprep.subr.mxu0 0.0
    %1015 = vmatpush1.msra.mxu0 0.0
    %1016 = vmatprep.subr.mxu0 0.0
    %1017 = vmatpush1.msra.mxu0 0.0
    %1018 = vmatprep.subr.mxu0 0.0
    %1019 = vmatpush1.msra.mxu0 0.0
    %1020 = vmatprep.subr.mxu0 0.0
    %1021 = vmatpush1.msra.mxu0 0.0
    %1022 = vmatprep.subr.mxu0 0.0
    %1023 = vmatpush1.msra.mxu0 0.0
    %1024 = vmatprep.subr.mxu0 0.0
    %1025 = vmatpush1.msra.mxu0 0.0
    %1026 = vmatprep.subr.mxu0 0.0
    %1027 = vmatpush1.msra.mxu0 0.0
    %1028 = vmatprep.subr.mxu0 0.0
    %1029 = vmatpush1.msra.mxu0 0.0
    %1030 = vmatprep.subr.mxu0 0.0
    %1031 = vmatpush1.msra.mxu0 0.0
    %1032 = vmatprep.subr.mxu0 0.0
    %1033 = vmatpush1.msra.mxu0 0.0
    %1034 = vmatprep.subr.mxu0 0.0
    %1035 = vmatpush1.msra.mxu0 0.0
    %1036 = vmatprep.subr.mxu0 0.0
    %1037 = vmatpush1.msra.mxu0 0.0
    %1038 = vmatprep.subr.mxu0 0.0
    %1039 = vmatpush1.msra.mxu0 0.0
    %1040 = vmatprep.subr.mxu0 0.0
    %1041 = vmatpush1.msra.mxu0 0.0
    %1042 = vmatprep.subr.mxu0 0.0
    %1043 = vmatpush1.msra.mxu0 0.0
    %1044 = vmatprep.subr.mxu0 0.0
    %1045 = vmatpush1.msra.mxu0 0.0
    %1046 = vmatprep.subr.mxu0 0.0
    %1047 = vmatpush1.msra.mxu0 0.0
    %1048 = vmatprep.subr.mxu0 0.0
    %1049 = vmatpush1.msra.mxu0 0.0
    %1050 = vmatprep.subr.mxu0 0.0
    %1051 = vmatpush1.msra.mxu0 0.0
    %1052 = vmatprep.subr.mxu0 0.0
    %1053 = vmatpush1.msra.mxu0 0.0
    %1054 = vmatprep.subr.mxu0 0.0
    %1055 = vmatpush1.msra.mxu0 0.0
    %1056 = vmatprep.subr.mxu0 0.0
    %1057 = vmatpush1.msra.mxu0 0.0
    %1058 = vmatprep.subr.mxu0 0.0
    %1059 = vmatpush1.msra.mxu0 0.0
    %1060 = vmatprep.mubr.f32.mxu0 0.0
    %1061 = vmatmul.mubr.f32.gmra.mrb[0].mxu0 %v805
    %v1062 = vpop.f32.mrb[0].mxu0
    %v1063 = vadd.f32 0.0, %v1062
    %v1064 = vpop.f32.mrb[0].mxu0
    %1065 = vmatprep.mubr.f32.mxu0 0.0
    %1066 = vmatmul.mubr.f32.gmra.mrb[0].mxu0 %v808
    %v1067 = vpop.f32.mrb[0].mxu0
    %v1068 = vadd.f32 0.0, %v1067
    %v1069 = vpop.f32.mrb[0].mxu0
    %1070 = vmatprep.mubr.f32.mxu0 0.0
    %1071 = vmatmul.mubr.f32.gmra.mrb[0].mxu0 %v811
    %v1072 = vpop.f32.mrb[0].mxu0
    %v1073 = vadd.f32 0.0, %v1072
    %v1074 = vpop.f32.mrb[0].mxu0
    %1075 = vmatprep.mubr.f32.mxu0 0.0
    %1076 = vmatmul.mubr.f32.gmra.mrb[0].mxu0 %v814
    %v1077 = vpop.f32.mrb[0].mxu0
    %v1078 = vadd.f32 0.0, %v1077
    %v1079 = vpop.f32.mrb[0].mxu0
    %1080 = vmatprep.mubr.f32.mxu0 0.0
    %1081 = vmatmul.mubr.f32.gmra.mrb[0].mxu0 %v817
    %v1082 = vpop.f32.mrb[0].mxu0
    %v1083 = vadd.f32 0.0, %v1082
    %v1084 = vpop.f32.mrb[0].mxu0
    %1085 = vmatprep.mubr.f32.mxu0 0.0
    %1086 = vmatmul.mubr.f32.gmra.mrb[0].mxu0 %v820
    %v1087 = vpop.f32.mrb[0].mxu0
    %v1088 = vadd.f32 0.0, %v1087
    %v1089 = vpop.f32.mrb[0].mxu0
    %1090 = vmatprep.mubr.f32.mxu0 0.0
    %1091 = vmatmul.mubr.f32.gmra.mrb[0].mxu0 %v823
    %v1092 = vpop.f32.mrb[0].mxu0
    %v1093 = vadd.f32 0.0, %v1092
    %v1094 = vpop.f32.mrb[0].mxu0
    %1095 = vmatprep.mubr.f32.mxu0 0.0
    %1096 = vmatmul.mubr.f32.gmra.mrb[0].mxu0 %v826
    %v1097 = vpop.f32.mrb[0].mxu0
    %v1098 = vadd.f32 0.0, %v1097
    %v1099 = vpop.f32.mrb[0].mxu0
    %1100 = vmatprep.mubr.f32.mxu0 0.0
    %1101 = vmatmul.mubr.f32.gmra.mrb[0].mxu0 %v829
    %v1102 = vpop.f32.mrb[0].mxu0
    %v1103 = vadd.f32 0.0, %v1102
    %v1104 = vpop.f32.mrb[0].mxu0
    %1105 = vmatprep.mubr.f32.mxu0 0.0
    %1106 = vmatmul.mubr.f32.gmra.mrb[0].mxu0 %v832
    %v1107 = vpop.f32.mrb[0].mxu0
    %v1108 = vadd.f32 0.0, %v1107
    %v1109 = vpop.f32.mrb[0].mxu0
    %1110 = vmatprep.mubr.f32.mxu0 0.0
    %1111 = vmatmul.mubr.f32.gmra.mrb[0].mxu0 %v835
    %v1112 = vpop.f32.mrb[0].mxu0
    %v1113 = vadd.f32 0.0, %v1112
    %v1114 = vpop.f32.mrb[0].mxu0
    %1115 = vmatprep.mubr.f32.mxu0 0.0
    %1116 = vmatmul.mubr.f32.gmra.mrb[0].mxu0 %v838
    %v1117 = vpop.f32.mrb[0].mxu0
    %v1118 = vadd.f32 0.0, %v1117
    %v1119 = vpop.f32.mrb[0].mxu0
    %1120 = vmatprep.mubr.f32.mxu0 0.0
    %1121 = vmatmul.mubr.f32.gmra.mrb[0].mxu0 %v841
    %v1122 = vpop.f32.mrb[0].mxu0
    %v1123 = vadd.f32 0.0, %v1122
    %v1124 = vpop.f32.mrb[0].mxu0
    %1125 = vmatprep.mubr.f32.mxu0 0.0
    %1126 = vmatmul.mubr.f32.gmra.mrb[0].mxu0 %v844
    %v1127 = vpop.f32.mrb[0].mxu0
    %v1128 = vadd.f32 0.0, %v1127
    %v1129 = vpop.f32.mrb[0].mxu0
    %1130 = vmatprep.mubr.f32.mxu0 0.0
    %1131 = vmatmul.mubr.f32.gmra.mrb[0].mxu0 %v847
    %v1132 = vpop.f32.mrb[0].mxu0
    %v1133 = vadd.f32 0.0, %v1132
    %v1134 = vpop.f32.mrb[0].mxu0
    %1135 = vmatprep.mubr.f32.mxu0 0.0
    %1136 = vmatmul.mubr.f32.gmra.mrb[0].mxu0 %v850
    %v1137 = vpop.f32.mrb[0].mxu0
    %v1138 = vadd.f32 0.0, %v1137
    %v1139 = vpop.f32.mrb[0].mxu0
    %1140 = vmatprep.mubr.f32.mxu0 0.0
    %1141 = vmatmul.mubr.f32.gmra.mrb[0].mxu0 %v853
    %v1142 = vpop.f32.mrb[0].mxu0
    %v1143 = vadd.f32 0.0, %v1142
    %v1144 = vpop.f32.mrb[0].mxu0
    %1145 = vmatprep.mubr.f32.mxu0 0.0
    %1146 = vmatmul.mubr.f32.gmra.mrb[0].mxu0 %v856
    %v1147 = vpop.f32.mrb[0].mxu0
    %v1148 = vadd.f32 0.0, %v1147
    %v1149 = vpop.f32.mrb[0].mxu0
    %1150 = vmatprep.mubr.f32.mxu0 0.0
    %1151 = vmatmul.mubr.f32.gmra.mrb[0].mxu0 %v859
    %v1152 = vpop.f32.mrb[0].mxu0
    %v1153 = vadd.f32 0.0, %v1152
    %v1154 = vpop.f32.mrb[0].mxu0
    %1155 = vmatprep.mubr.f32.mxu0 0.0
    %1156 = vmatmul.mubr.f32.gmra.mrb[0].mxu0 %v862
    %v1157 = vpop.f32.mrb[0].mxu0
    %v1158 = vadd.f32 0.0, %v1157
    %v1159 = vpop.f32.mrb[0].mxu0
    %1160 = vmatprep.mubr.f32.mxu0 0.0
    %1161 = vmatmul.mubr.f32.gmra.mrb[0].mxu0 %v865
    %v1162 = vpop.f32.mrb[0].mxu0
    %v1163 = vadd.f32 0.0, %v1162
    %v1164 = vpop.f32.mrb[0].mxu0
    %1165 = vmatprep.mubr.f32.mxu0 0.0
    %1166 = vmatmul.mubr.f32.gmra.mrb[0].mxu0 %v868
    %v1167 = vpop.f32.mrb[0].mxu0
    %v1168 = vadd.f32 0.0, %v1167
    %v1169 = vpop.f32.mrb[0].mxu0
    %1170 = vmatprep.mubr.f32.mxu0 0.0
    %1171 = vmatmul.mubr.f32.gmra.mrb[0].mxu0 %v871
    %v1172 = vpop.f32.mrb[0].mxu0
    %v1173 = vadd.f32 0.0, %v1172
    %v1174 = vpop.f32.mrb[0].mxu0
    %1175 = vmatprep.mubr.f32.mxu0 0.0
    %1176 = vmatmul.mubr.f32.gmra.mrb[0].mxu0 %v874
    %v1177 = vpop.f32.mrb[0].mxu0
    %v1178 = vadd.f32 0.0, %v1177
    %v1179 = vpop.f32.mrb[0].mxu0
    %1180 = vmatprep.mubr.f32.mxu0 0.0
    %1181 = vmatmul.mubr.f32.gmra.mrb[0].mxu0 %v877
    %v1182 = vpop.f32.mrb[0].mxu0
    %v1183 = vadd.f32 0.0, %v1182
    %v1184 = vpop.f32.mrb[0].mxu0
    %1185 = vmatprep.mubr.f32.mxu0 0.0
    %1186 = vmatmul.mubr.f32.gmra.mrb[0].mxu0 %v880
    %v1187 = vpop.f32.mrb[0].mxu0
    %v1188 = vadd.f32 0.0, %v1187
    %v1189 = vpop.f32.mrb[0].mxu0
    %1190 = vmatprep.mubr.f32.mxu0 0.0
    %1191 = vmatmul.mubr.f32.gmra.mrb[0].mxu0 %v883
    %v1192 = vpop.f32.mrb[0].mxu0
    %v1193 = vadd.f32 0.0, %v1192
    %v1194 = vpop.f32.mrb[0].mxu0
    %1195 = vmatprep.mubr.f32.mxu0 0.0
    %1196 = vmatmul.mubr.f32.gmra.mrb[0].mxu0 %v886
    %v1197 = vpop.f32.mrb[0].mxu0
    %v1198 = vadd.f32 0.0, %v1197
    %v1199 = vpop.f32.mrb[0].mxu0
    %1200 = vmatprep.mubr.f32.mxu0 0.0
    %1201 = vmatmul.mubr.f32.gmra.mrb[0].mxu0 %v889
    %v1202 = vpop.f32.mrb[0].mxu0
    %v1203 = vadd.f32 0.0, %v1202
    %v1204 = vpop.f32.mrb[0].mxu0
    %1205 = vmatprep.mubr.f32.mxu0 0.0
    %1206 = vmatmul.mubr.f32.gmra.mrb[0].mxu0 %v892
    %v1207 = vpop.f32.mrb[0].mxu0
    %v1208 = vadd.f32 0.0, %v1207
    %v1209 = vpop.f32.mrb[0].mxu0
    %1210 = vmatprep.mubr.f32.mxu0 0.0
    %1211 = vmatmul.mubr.f32.gmra.mrb[0].mxu0 %v895
    %v1212 = vpop.f32.mrb[0].mxu0
    %v1213 = vadd.f32 0.0, %v1212
    %v1214 = vpop.f32.mrb[0].mxu0
    %1215 = vmatprep.mubr.f32.mxu0 0.0
    %1216 = vmatmul.mubr.f32.gmra.mrb[0].mxu0 %v898
    %v1217 = vpop.f32.mrb[0].mxu0
    %v1218 = vadd.f32 0.0, %v1217
    %v1219 = vpop.f32.mrb[0].mxu0
    %1220 = vmatprep.mubr.f32.mxu0 0.0
    %1221 = vmatmul.mubr.f32.gmra.mrb[0].mxu0 %v901
    %v1222 = vpop.f32.mrb[0].mxu0
    %v1223 = vadd.f32 0.0, %v1222
    %v1224 = vpop.f32.mrb[0].mxu0
    %1225 = vmatprep.mubr.f32.mxu0 0.0
    %1226 = vmatmul.mubr.f32.gmra.mrb[0].mxu0 %v904
    %v1227 = vpop.f32.mrb[0].mxu0
    %v1228 = vadd.f32 0.0, %v1227
    %v1229 = vpop.f32.mrb[0].mxu0
    %1230 = vmatprep.mubr.f32.mxu0 0.0
    %1231 = vmatmul.mubr.f32.gmra.mrb[0].mxu0 %v907
    %v1232 = vpop.f32.mrb[0].mxu0
    %v1233 = vadd.f32 0.0, %v1232
    %v1234 = vpop.f32.mrb[0].mxu0
    %1235 = vmatprep.mubr.f32.mxu0 0.0
    %1236 = vmatmul.mubr.f32.gmra.mrb[0].mxu0 %v910
    %v1237 = vpop.f32.mrb[0].mxu0
    %v1238 = vadd.f32 0.0, %v1237
    %v1239 = vpop.f32.mrb[0].mxu0
    %1240 = vmatprep.mubr.f32.mxu0 0.0
    %1241 = vmatmul.mubr.f32.gmra.mrb[0].mxu0 %v913
    %v1242 = vpop.f32.mrb[0].mxu0
    %v1243 = vadd.f32 0.0, %v1242
    %v1244 = vpop.f32.mrb[0].mxu0
    %1245 = vmatprep.mubr.f32.mxu0 0.0
    %1246 = vmatmul.mubr.f32.gmra.mrb[0].mxu0 %v916
    %v1247 = vpop.f32.mrb[0].mxu0
    %v1248 = vadd.f32 0.0, %v1247
    %v1249 = vpop.f32.mrb[0].mxu0
    %1250 = vmatprep.mubr.f32.mxu0 0.0
    %1251 = vmatmul.mubr.f32.gmra.mrb[0].mxu0 %v919
    %v1252 = vpop.f32.mrb[0].mxu0
    %v1253 = vadd.f32 0.0, %v1252
    %v1254 = vpop.f32.mrb[0].mxu0
    %1255 = vmatprep.mubr.f32.mxu0 0.0
    %1256 = vmatmul.mubr.f32.gmra.mrb[0].mxu0 %v922
    %v1257 = vpop.f32.mrb[0].mxu0
    %v1258 = vadd.f32 0.0, %v1257
    %v1259 = vpop.f32.mrb[0].mxu0
    %1260 = vmatprep.mubr.f32.mxu0 0.0
    %1261 = vmatmul.mubr.f32.gmra.mrb[0].mxu0 %v925
    %v1262 = vpop.f32.mrb[0].mxu0
    %v1263 = vadd.f32 0.0, %v1262
    %v1264 = vpop.f32.mrb[0].mxu0
    %1265 = vmatprep.mubr.f32.mxu0 0.0
    %1266 = vmatmul.mubr.f32.gmra.mrb[0].mxu0 %v928
    %v1267 = vpop.f32.mrb[0].mxu0
    %v1268 = vadd.f32 0.0, %v1267
    %v1269 = vpop.f32.mrb[0].mxu0
    %1270 = vmatprep.mubr.f32.mxu0 0.0
    %1271 = vmatmul.mubr.f32.gmra.mrb[0].mxu0 %v931
    %v1272 = vpop.f32.mrb[0].mxu0
    %v1273 = vadd.f32 0.0, %v1272
    %v1274 = vpop.f32.mrb[0].mxu0
    %1275 = vmatprep.mubr.f32.mxu0 0.0
    %1276 = vmatmul.mubr.f32.gmra.mrb[0].mxu0 %v934
    %v1277 = vpop.f32.mrb[0].mxu0
    %v1278 = vadd.f32 0.0, %v1277
    %v1279 = vpop.f32.mrb[0].mxu0
    %1280 = vmatprep.mubr.f32.mxu0 0.0
    %1281 = vmatmul.mubr.f32.gmra.mrb[0].mxu0 %v937
    %v1282 = vpop.f32.mrb[0].mxu0
    %v1283 = vadd.f32 0.0, %v1282
    %v1284 = vpop.f32.mrb[0].mxu0
    %1285 = vmatprep.mubr.f32.mxu0 0.0
    %1286 = vmatmul.mubr.f32.gmra.mrb[0].mxu0 %v940
    %v1287 = vpop.f32.mrb[0].mxu0
    %v1288 = vadd.f32 0.0, %v1287
    %v1289 = vpop.f32.mrb[0].mxu0
    %1290 = vmatprep.mubr.f32.mxu0 0.0
    %1291 = vmatmul.mubr.f32.gmra.mrb[0].mxu0 %v943
    %v1292 = vpop.f32.mrb[0].mxu0
    %v1293 = vadd.f32 0.0, %v1292
    %v1294 = vpop.f32.mrb[0].mxu0
    %1295 = vmatprep.mubr.f32.mxu0 0.0
    %1296 = vmatmul.mubr.f32.gmra.mrb[0].mxu0 %v946
    %v1297 = vpop.f32.mrb[0].mxu0
    %v1298 = vadd.f32 0.0, %v1297
    %v1299 = vpop.f32.mrb[0].mxu0
    %1300 = vmatprep.mubr.f32.mxu0 0.0
    %1301 = vmatmul.mubr.f32.gmra.mrb[0].mxu0 %v949
    %v1302 = vpop.f32.mrb[0].mxu0
    %v1303 = vadd.f32 0.0, %v1302
    %v1304 = vpop.f32.mrb[0].mxu0
    %1305 = vmatprep.mubr.f32.mxu0 0.0
    %1306 = vmatmul.mubr.f32.gmra.mrb[0].mxu0 %v952
    %v1307 = vpop.f32.mrb[0].mxu0
    %v1308 = vadd.f32 0.0, %v1307
    %v1309 = vpop.f32.mrb[0].mxu0
    %1310 = vmatprep.mubr.f32.mxu0 0.0
    %1311 = vmatmul.mubr.f32.gmra.mrb[0].mxu0 %v955
    %v1312 = vpop.f32.mrb[0].mxu0
    %v1313 = vadd.f32 0.0, %v1312
    %v1314 = vpop.f32.mrb[0].mxu0
    %1315 = vmatprep.mubr.f32.mxu0 0.0
    %1316 = vmatmul.mubr.f32.gmra.mrb[0].mxu0 %v958
    %v1317 = vpop.f32.mrb[0].mxu0
    %v1318 = vadd.f32 0.0, %v1317
    %v1319 = vpop.f32.mrb[0].mxu0
    %1320 = vmatprep.mubr.f32.mxu0 0.0
    %1321 = vmatmul.mubr.f32.gmra.mrb[0].mxu0 %v961
    %v1322 = vpop.f32.mrb[0].mxu0
    %v1323 = vadd.f32 0.0, %v1322
    %v1324 = vpop.f32.mrb[0].mxu0
    %1325 = vmatprep.mubr.f32.mxu0 0.0
    %1326 = vmatmul.mubr.f32.gmra.mrb[0].mxu0 %v964
    %v1327 = vpop.f32.mrb[0].mxu0
    %v1328 = vadd.f32 0.0, %v1327
    %v1329 = vpop.f32.mrb[0].mxu0
    %1330 = vmatprep.mubr.f32.mxu0 0.0
    %1331 = vmatmul.mubr.f32.gmra.mrb[0].mxu0 %v967
    %v1332 = vpop.f32.mrb[0].mxu0
    %v1333 = vadd.f32 0.0, %v1332
    %v1334 = vpop.f32.mrb[0].mxu0
    %1335 = vmatprep.mubr.f32.mxu0 0.0
    %1336 = vmatmul.mubr.f32.gmra.mrb[0].mxu0 %v970
    %v1337 = vpop.f32.mrb[0].mxu0
    %v1338 = vadd.f32 0.0, %v1337
    %v1339 = vpop.f32.mrb[0].mxu0
    %1340 = vmatprep.mubr.f32.mxu0 0.0
    %1341 = vmatmul.mubr.f32.gmra.mrb[0].mxu0 %v973
    %v1342 = vpop.f32.mrb[0].mxu0
    %v1343 = vadd.f32 0.0, %v1342
    %v1344 = vpop.f32.mrb[0].mxu0
    %1345 = vmatprep.mubr.f32.mxu0 0.0
    %1346 = vmatmul.mubr.f32.gmra.mrb[0].mxu0 %v976
    %v1347 = vpop.f32.mrb[0].mxu0
    %v1348 = vadd.f32 0.0, %v1347
    %v1349 = vpop.f32.mrb[0].mxu0
    %1350 = vmatprep.mubr.f32.mxu0 0.0
    %1351 = vmatmul.mubr.f32.gmra.mrb[0].mxu0 %v979
    %v1352 = vpop.f32.mrb[0].mxu0
    %v1353 = vadd.f32 0.0, %v1352
    %v1354 = vpop.f32.mrb[0].mxu0
    %1355 = vmatprep.mubr.f32.mxu0 0.0
    %1356 = vmatmul.mubr.f32.gmra.mrb[0].mxu0 %v982
    %v1357 = vpop.f32.mrb[0].mxu0
    %v1358 = vadd.f32 0.0, %v1357
    %v1359 = vpop.f32.mrb[0].mxu0
    %1360 = vmatprep.mubr.f32.mxu0 0.0
    %1361 = vmatmul.mubr.f32.gmra.mrb[0].mxu0 %v985
    %v1362 = vpop.f32.mrb[0].mxu0
    %v1363 = vadd.f32 0.0, %v1362
    %v1364 = vpop.f32.mrb[0].mxu0
    %1365 = vmatprep.mubr.f32.mxu0 0.0
    %1366 = vmatmul.mubr.f32.gmra.mrb[0].mxu0 %v988
    %v1367 = vpop.f32.mrb[0].mxu0
    %v1368 = vadd.f32 0.0, %v1367
    %v1369 = vpop.f32.mrb[0].mxu0
    %1370 = vmatprep.mubr.f32.mxu0 0.0
    %1371 = vmatmul.mubr.f32.gmra.mrb[0].mxu0 %v991
    %v1372 = vpop.f32.mrb[0].mxu0
    %v1373 = vadd.f32 0.0, %v1372
    %v1374 = vpop.f32.mrb[0].mxu0
    %1375 = vmatprep.mubr.f32.mxu0 0.0
    %1376 = vmatmul.mubr.f32.gmra.mrb[0].mxu0 %v994
    %v1377 = vpop.f32.mrb[0].mxu0
    %v1378 = vadd.f32 0.0, %v1377
    %v1379 = vpop.f32.mrb[0].mxu0
    %1380 = vdwg.mxu0
    %v1381 = vld [vmem:[#allocation2] sm:$0xff]
    %v1382 = vld [vmem:[#allocation2 + $0x8] sm:$0xff]
    %v1383 = vld [vmem:[#allocation2 + $0x10] sm:$0xff]
    %v1384 = vld [vmem:[#allocation2 + $0x18] sm:$0xff]
    %v1385 = vld [vmem:[#allocation2 + $0x20] sm:$0xff]
    %v1386 = vld [vmem:[#allocation2 + $0x28] sm:$0xff]
    %v1387 = vld [vmem:[#allocation2 + $0x30] sm:$0xff]
    %v1388 = vld [vmem:[#allocation2 + $0x38] sm:$0xff]
    %v1389 = vld [vmem:[#allocation2 + $0x40] sm:$0xff]
    %v1390 = vld [vmem:[#allocation2 + $0x48] sm:$0xff]
    %v1391 = vld [vmem:[#allocation2 + $0x50] sm:$0xff]
    %v1392 = vld [vmem:[#allocation2 + $0x58] sm:$0xff]
    %v1393 = vld [vmem:[#allocation2 + $0x60] sm:$0xff]
    %v1394 = vld [vmem:[#allocation2 + $0x68] sm:$0xff]
    %v1395 = vld [vmem:[#allocation2 + $0x70] sm:$0xff]
    %v1396 = vld [vmem:[#allocation2 + $0x78] sm:$0xff]
    %v1397 = vld [vmem:[#allocation2 + $0x80] sm:$0xff]
    %v1398 = vld [vmem:[#allocation2 + $0x88] sm:$0xff]
    %v1399 = vld [vmem:[#allocation2 + $0x90] sm:$0xff]
    %v1400 = vld [vmem:[#allocation2 + $0x98] sm:$0xff]
    %v1401 = vld [vmem:[#allocation2 + $0xa0] sm:$0xff]
    %v1402 = vld [vmem:[#allocation2 + $0xa8] sm:$0xff]
    %v1403 = vld [vmem:[#allocation2 + $0xb0] sm:$0xff]
    %v1404 = vld [vmem:[#allocation2 + $0xb8] sm:$0xff]
    %v1405 = vld [vmem:[#allocation2 + $0xc0] sm:$0xff]
    %v1406 = vld [vmem:[#allocation2 + $0xc8] sm:$0xff]
    %v1407 = vld [vmem:[#allocation2 + $0xd0] sm:$0xff]
    %v1408 = vld [vmem:[#allocation2 + $0xd8] sm:$0xff]
    %v1409 = vld [vmem:[#allocation2 + $0xe0] sm:$0xff]
    %v1410 = vld [vmem:[#allocation2 + $0xe8] sm:$0xff]
    %v1411 = vld [vmem:[#allocation2 + $0xf0] sm:$0xff]
    %v1412 = vld [vmem:[#allocation2 + $0xf8] sm:$0xff]
    %v1413 = vld [vmem:[#allocation2 + $0x100] sm:$0xff]
    %v1414 = vld [vmem:[#allocation2 + $0x108] sm:$0xff]
    %v1415 = vld [vmem:[#allocation2 + $0x110] sm:$0xff]
    %v1416 = vld [vmem:[#allocation2 + $0x118] sm:$0xff]
    %v1417 = vld [vmem:[#allocation2 + $0x120] sm:$0xff]
    %v1418 = vld [vmem:[#allocation2 + $0x128] sm:$0xff]
    %v1419 = vld [vmem:[#allocation2 + $0x130] sm:$0xff]
    %v1420 = vld [vmem:[#allocation2 + $0x138] sm:$0xff]
    %v1421 = vld [vmem:[#allocation2 + $0x140] sm:$0xff]
    %v1422 = vld [vmem:[#allocation2 + $0x148] sm:$0xff]
    %v1423 = vld [vmem:[#allocation2 + $0x150] sm:$0xff]
    %v1424 = vld [vmem:[#allocation2 + $0x158] sm:$0xff]
    %v1425 = vld [vmem:[#allocation2 + $0x160] sm:$0xff]
    %v1426 = vld [vmem:[#allocation2 + $0x168] sm:$0xff]
    %v1427 = vld [vmem:[#allocation2 + $0x170] sm:$0xff]
    %v1428 = vld [vmem:[#allocation2 + $0x178] sm:$0xff]
    %v1429 = vld [vmem:[#allocation2 + $0x180] sm:$0xff]
    %v1430 = vld [vmem:[#allocation2 + $0x188] sm:$0xff]
    %v1431 = vld [vmem:[#allocation2 + $0x190] sm:$0xff]
    %v1432 = vld [vmem:[#allocation2 + $0x198] sm:$0xff]
    %v1433 = vld [vmem:[#allocation2 + $0x1a0] sm:$0xff]
    %v1434 = vld [vmem:[#allocation2 + $0x1a8] sm:$0xff]
    %v1435 = vld [vmem:[#allocation2 + $0x1b0] sm:$0xff]
    %v1436 = vld [vmem:[#allocation2 + $0x1b8] sm:$0xff]
    %v1437 = vld [vmem:[#allocation2 + $0x1c0] sm:$0xff]
    %v1438 = vld [vmem:[#allocation2 + $0x1c8] sm:$0xff]
    %v1439 = vld [vmem:[#allocation2 + $0x1d0] sm:$0xff]
    %v1440 = vld [vmem:[#allocation2 + $0x1d8] sm:$0xff]
    %v1441 = vld [vmem:[#allocation2 + $0x1e0] sm:$0xff]
    %v1442 = vld [vmem:[#allocation2 + $0x1e8] sm:$0xff]
    %v1443 = vld [vmem:[#allocation2 + $0x1f0] sm:$0xff]
    %v1444 = vld [vmem:[#allocation2 + $0x1f8] sm:$0xff]
    %v1445 = vadd.f32 %v1381, %v1063
    %v1446 = vadd.f32 %v1382, %v1068
    %v1447 = vadd.f32 %v1383, %v1073
    %v1448 = vadd.f32 %v1384, %v1078
    %v1449 = vadd.f32 %v1385, %v1083
    %v1450 = vadd.f32 %v1386, %v1088
    %v1451 = vadd.f32 %v1387, %v1093
    %v1452 = vadd.f32 %v1388, %v1098
    %v1453 = vadd.f32 %v1389, %v1103
    %v1454 = vadd.f32 %v1390, %v1108
    %v1455 = vadd.f32 %v1391, %v1113
    %v1456 = vadd.f32 %v1392, %v1118
    %v1457 = vadd.f32 %v1393, %v1123
    %v1458 = vadd.f32 %v1394, %v1128
    %v1459 = vadd.f32 %v1395, %v1133
    %v1460 = vadd.f32 %v1396, %v1138
    %v1461 = vadd.f32 %v1397, %v1143
    %v1462 = vadd.f32 %v1398, %v1148
    %v1463 = vadd.f32 %v1399, %v1153
    %v1464 = vadd.f32 %v1400, %v1158
    %v1465 = vadd.f32 %v1401, %v1163
    %v1466 = vadd.f32 %v1402, %v1168
    %v1467 = vadd.f32 %v1403, %v1173
    %v1468 = vadd.f32 %v1404, %v1178
    %v1469 = vadd.f32 %v1405, %v1183
    %v1470 = vadd.f32 %v1406, %v1188
    %v1471 = vadd.f32 %v1407, %v1193
    %v1472 = vadd.f32 %v1408, %v1198
    %v1473 = vadd.f32 %v1409, %v1203
    %v1474 = vadd.f32 %v1410, %v1208
    %v1475 = vadd.f32 %v1411, %v1213
    %v1476 = vadd.f32 %v1412, %v1218
    %v1477 = vadd.f32 %v1413, %v1223
    %v1478 = vadd.f32 %v1414, %v1228
    %v1479 = vadd.f32 %v1415, %v1233
    %v1480 = vadd.f32 %v1416, %v1238
    %v1481 = vadd.f32 %v1417, %v1243
    %v1482 = vadd.f32 %v1418, %v1248
    %v1483 = vadd.f32 %v1419, %v1253
    %v1484 = vadd.f32 %v1420, %v1258
    %v1485 = vadd.f32 %v1421, %v1263
    %v1486 = vadd.f32 %v1422, %v1268
    %v1487 = vadd.f32 %v1423, %v1273
    %v1488 = vadd.f32 %v1424, %v1278
    %v1489 = vadd.f32 %v1425, %v1283
    %v1490 = vadd.f32 %v1426, %v1288
    %v1491 = vadd.f32 %v1427, %v1293
    %v1492 = vadd.f32 %v1428, %v1298
    %v1493 = vadd.f32 %v1429, %v1303
    %v1494 = vadd.f32 %v1430, %v1308
    %v1495 = vadd.f32 %v1431, %v1313
    %v1496 = vadd.f32 %v1432, %v1318
    %v1497 = vadd.f32 %v1433, %v1323
    %v1498 = vadd.f32 %v1434, %v1328
    %v1499 = vadd.f32 %v1435, %v1333
    %v1500 = vadd.f32 %v1436, %v1338
    %v1501 = vadd.f32 %v1437, %v1343
    %v1502 = vadd.f32 %v1438, %v1348
    %v1503 = vadd.f32 %v1439, %v1353
    %v1504 = vadd.f32 %v1440, %v1358
    %v1505 = vadd.f32 %v1441, %v1363
    %v1506 = vadd.f32 %v1442, %v1368
    %v1507 = vadd.f32 %v1443, %v1373
    %v1508 = vadd.f32 %v1444, %v1378
    %1509 = vst.msk [vmem:[#allocation2] sm:$0xff] %vm95, %v1445
    %1510 = vst.msk [vmem:[#allocation2 + $0x8] sm:$0xff] %vm95, %v1446
    %1511 = vst.msk [vmem:[#allocation2 + $0x10] sm:$0xff] %vm95, %v1447
    %1512 = vst.msk [vmem:[#allocation2 + $0x18] sm:$0xff] %vm95, %v1448
    %1513 = vst.msk [vmem:[#allocation2 + $0x20] sm:$0xff] %vm95, %v1449
    %1514 = vst.msk [vmem:[#allocation2 + $0x28] sm:$0xff] %vm95, %v1450
    %1515 = vst.msk [vmem:[#allocation2 + $0x30] sm:$0xff] %vm95, %v1451
    %1516 = vst.msk [vmem:[#allocation2 + $0x38] sm:$0xff] %vm95, %v1452
    %1517 = vst.msk [vmem:[#allocation2 + $0x40] sm:$0xff] %vm95, %v1453
    %1518 = vst.msk [vmem:[#allocation2 + $0x48] sm:$0xff] %vm95, %v1454
    %1519 = vst.msk [vmem:[#allocation2 + $0x50] sm:$0xff] %vm95, %v1455
    %1520 = vst.msk [vmem:[#allocation2 + $0x58] sm:$0xff] %vm95, %v1456
    %1521 = vst.msk [vmem:[#allocation2 + $0x60] sm:$0xff] %vm95, %v1457
    %1522 = vst.msk [vmem:[#allocation2 + $0x68] sm:$0xff] %vm95, %v1458
    %1523 = vst.msk [vmem:[#allocation2 + $0x70] sm:$0xff] %vm95, %v1459
    %1524 = vst.msk [vmem:[#allocation2 + $0x78] sm:$0xff] %vm95, %v1460
    %1525 = vst.msk [vmem:[#allocation2 + $0x80] sm:$0xff] %vm95, %v1461
    %1526 = vst.msk [vmem:[#allocation2 + $0x88] sm:$0xff] %vm95, %v1462
    %1527 = vst.msk [vmem:[#allocation2 + $0x90] sm:$0xff] %vm95, %v1463
    %1528 = vst.msk [vmem:[#allocation2 + $0x98] sm:$0xff] %vm95, %v1464
    %1529 = vst.msk [vmem:[#allocation2 + $0xa0] sm:$0xff] %vm95, %v1465
    %1530 = vst.msk [vmem:[#allocation2 + $0xa8] sm:$0xff] %vm95, %v1466
    %1531 = vst.msk [vmem:[#allocation2 + $0xb0] sm:$0xff] %vm95, %v1467
    %1532 = vst.msk [vmem:[#allocation2 + $0xb8] sm:$0xff] %vm95, %v1468
    %1533 = vst.msk [vmem:[#allocation2 + $0xc0] sm:$0xff] %vm95, %v1469
    %1534 = vst.msk [vmem:[#allocation2 + $0xc8] sm:$0xff] %vm95, %v1470
    %1535 = vst.msk [vmem:[#allocation2 + $0xd0] sm:$0xff] %vm95, %v1471
    %1536 = vst.msk [vmem:[#allocation2 + $0xd8] sm:$0xff] %vm95, %v1472
    %1537 = vst.msk [vmem:[#allocation2 + $0xe0] sm:$0xff] %vm95, %v1473
    %1538 = vst.msk [vmem:[#allocation2 + $0xe8] sm:$0xff] %vm95, %v1474
    %1539 = vst.msk [vmem:[#allocation2 + $0xf0] sm:$0xff] %vm95, %v1475
    %1540 = vst.msk [vmem:[#allocation2 + $0xf8] sm:$0xff] %vm95, %v1476
    %1541 = vst.msk [vmem:[#allocation2 + $0x100] sm:$0xff] %vm95, %v1477
    %1542 = vst.msk [vmem:[#allocation2 + $0x108] sm:$0xff] %vm95, %v1478
    %1543 = vst.msk [vmem:[#allocation2 + $0x110] sm:$0xff] %vm95, %v1479
    %1544 = vst.msk [vmem:[#allocation2 + $0x118] sm:$0xff] %vm95, %v1480
    %1545 = vst.msk [vmem:[#allocation2 + $0x120] sm:$0xff] %vm95, %v1481
    %1546 = vst.msk [vmem:[#allocation2 + $0x128] sm:$0xff] %vm95, %v1482
    %1547 = vst.msk [vmem:[#allocation2 + $0x130] sm:$0xff] %vm95, %v1483
    %1548 = vst.msk [vmem:[#allocation2 + $0x138] sm:$0xff] %vm95, %v1484
    %1549 = vst.msk [vmem:[#allocation2 + $0x140] sm:$0xff] %vm95, %v1485
    %1550 = vst.msk [vmem:[#allocation2 + $0x148] sm:$0xff] %vm95, %v1486
    %1551 = vst.msk [vmem:[#allocation2 + $0x150] sm:$0xff] %vm95, %v1487
    %1552 = vst.msk [vmem:[#allocation2 + $0x158] sm:$0xff] %vm95, %v1488
    %1553 = vst.msk [vmem:[#allocation2 + $0x160] sm:$0xff] %vm95, %v1489
    %1554 = vst.msk [vmem:[#allocation2 + $0x168] sm:$0xff] %vm95, %v1490
    %1555 = vst.msk [vmem:[#allocation2 + $0x170] sm:$0xff] %vm95, %v1491
    %1556 = vst.msk [vmem:[#allocation2 + $0x178] sm:$0xff] %vm95, %v1492
    %1557 = vst.msk [vmem:[#allocation2 + $0x180] sm:$0xff] %vm95, %v1493
    %1558 = vst.msk [vmem:[#allocation2 + $0x188] sm:$0xff] %vm95, %v1494
    %1559 = vst.msk [vmem:[#allocation2 + $0x190] sm:$0xff] %vm95, %v1495
    %1560 = vst.msk [vmem:[#allocation2 + $0x198] sm:$0xff] %vm95, %v1496
    %1561 = vst.msk [vmem:[#allocation2 + $0x1a0] sm:$0xff] %vm95, %v1497
    %1562 = vst.msk [vmem:[#allocation2 + $0x1a8] sm:$0xff] %vm95, %v1498
    %1563 = vst.msk [vmem:[#allocation2 + $0x1b0] sm:$0xff] %vm95, %v1499
    %1564 = vst.msk [vmem:[#allocation2 + $0x1b8] sm:$0xff] %vm95, %v1500
    %1565 = vst.msk [vmem:[#allocation2 + $0x1c0] sm:$0xff] %vm95, %v1501
    %1566 = vst.msk [vmem:[#allocation2 + $0x1c8] sm:$0xff] %vm95, %v1502
    %1567 = vst.msk [vmem:[#allocation2 + $0x1d0] sm:$0xff] %vm95, %v1503
    %1568 = vst.msk [vmem:[#allocation2 + $0x1d8] sm:$0xff] %vm95, %v1504
    %1569 = vst.msk [vmem:[#allocation2 + $0x1e0] sm:$0xff] %vm95, %v1505
    %1570 = vst.msk [vmem:[#allocation2 + $0x1e8] sm:$0xff] %vm95, %v1506
    %1571 = vst.msk [vmem:[#allocation2 + $0x1f0] sm:$0xff] %vm95, %v1507
    %1572 = vst.msk [vmem:[#allocation2 + $0x1f8] sm:$0xff] %vm95, %v1508
    %s1573 = scalar_lea.vmem %s0, 48
    %v1574 = vld [vmem:[%s1573] sm:$0xff]
    %v1575 = vld [vmem:[%s1573 + $0x8] sm:$0xff]
    %v1576 = vld [vmem:[%s1573 + $0x18] sm:$0xff]
    %v1577 = vld [vmem:[%s1573 + $0x20] sm:$0xff]
    %v1578 = vld [vmem:[%s1573 + $0x30] sm:$0xff]
    %v1579 = vld [vmem:[%s1573 + $0x38] sm:$0xff]
    %v1580 = vld [vmem:[%s1573 + $0x48] sm:$0xff]
    %v1581 = vld [vmem:[%s1573 + $0x50] sm:$0xff]
    %v1582 = vld [vmem:[%s1573 + $0x60] sm:$0xff]
    %v1583 = vld [vmem:[%s1573 + $0x68] sm:$0xff]
    %v1584 = vld [vmem:[%s1573 + $0x78] sm:$0xff]
    %v1585 = vld [vmem:[%s1573 + $0x80] sm:$0xff]
    %v1586 = vld [vmem:[%s1573 + $0x90] sm:$0xff]
    %v1587 = vld [vmem:[%s1573 + $0x98] sm:$0xff]
    %v1588 = vld [vmem:[%s1573 + $0xa8] sm:$0xff]
    %v1589 = vld [vmem:[%s1573 + $0xb0] sm:$0xff]
    %v1590 = vld [vmem:[%s1573 + $0xc0] sm:$0xff]
    %v1591 = vld [vmem:[%s1573 + $0xc8] sm:$0xff]
    %v1592 = vld [vmem:[%s1573 + $0xd8] sm:$0xff]
    %v1593 = vld [vmem:[%s1573 + $0xe0] sm:$0xff]
    %v1594 = vld [vmem:[%s1573 + $0xf0] sm:$0xff]
    %v1595 = vld [vmem:[%s1573 + $0xf8] sm:$0xff]
    %v1596 = vld [vmem:[%s1573 + $0x108] sm:$0xff]
    %v1597 = vld [vmem:[%s1573 + $0x110] sm:$0xff]
    %v1598 = vld [vmem:[%s1573 + $0x120] sm:$0xff]
    %v1599 = vld [vmem:[%s1573 + $0x128] sm:$0xff]
    %v1600 = vld [vmem:[%s1573 + $0x138] sm:$0xff]
    %v1601 = vld [vmem:[%s1573 + $0x140] sm:$0xff]
    %v1602 = vld [vmem:[%s1573 + $0x150] sm:$0xff]
    %v1603 = vld [vmem:[%s1573 + $0x158] sm:$0xff]
    %v1604 = vld [vmem:[%s1573 + $0x168] sm:$0xff]
    %v1605 = vld [vmem:[%s1573 + $0x170] sm:$0xff]
    %v1606 = vld [vmem:[%s1573 + $0x1b0] sm:$0xff]
    %v1607 = vld [vmem:[%s1573 + $0x1b8] sm:$0xff]
    %v1608 = vld [vmem:[%s1573 + $0x1c8] sm:$0xff]
    %v1609 = vld [vmem:[%s1573 + $0x1d0] sm:$0xff]
    %v1610 = vld [vmem:[%s1573 + $0x1e0] sm:$0xff]
    %v1611 = vld [vmem:[%s1573 + $0x1e8] sm:$0xff]
    %v1612 = vld [vmem:[%s1573 + $0x1f8] sm:$0xff]
    %v1613 = vld [vmem:[%s1573 + $0x200] sm:$0xff]
    %v1614 = vld [vmem:[%s1573 + $0x210] sm:$0xff]
    %v1615 = vld [vmem:[%s1573 + $0x218] sm:$0xff]
    %v1616 = vld [vmem:[%s1573 + $0x228] sm:$0xff]
    %v1617 = vld [vmem:[%s1573 + $0x230] sm:$0xff]
    %v1618 = vld [vmem:[%s1573 + $0x240] sm:$0xff]
    %v1619 = vld [vmem:[%s1573 + $0x248] sm:$0xff]
    %v1620 = vld [vmem:[%s1573 + $0x258] sm:$0xff]
    %v1621 = vld [vmem:[%s1573 + $0x260] sm:$0xff]
    %v1622 = vld [vmem:[%s1573 + $0x270] sm:$0xff]
    %v1623 = vld [vmem:[%s1573 + $0x278] sm:$0xff]
    %v1624 = vld [vmem:[%s1573 + $0x288] sm:$0xff]
    %v1625 = vld [vmem:[%s1573 + $0x290] sm:$0xff]
    %v1626 = vld [vmem:[%s1573 + $0x2a0] sm:$0xff]
    %v1627 = vld [vmem:[%s1573 + $0x2a8] sm:$0xff]
    %v1628 = vld [vmem:[%s1573 + $0x2b8] sm:$0xff]
    %v1629 = vld [vmem:[%s1573 + $0x2c0] sm:$0xff]
    %v1630 = vld [vmem:[%s1573 + $0x2d0] sm:$0xff]
    %v1631 = vld [vmem:[%s1573 + $0x2d8] sm:$0xff]
    %v1632 = vld [vmem:[%s1573 + $0x2e8] sm:$0xff]
    %v1633 = vld [vmem:[%s1573 + $0x2f0] sm:$0xff]
    %v1634 = vld [vmem:[%s1573 + $0x300] sm:$0xff]
    %v1635 = vld [vmem:[%s1573 + $0x308] sm:$0xff]
    %v1636 = vld [vmem:[%s1573 + $0x318] sm:$0xff]
    %v1637 = vld [vmem:[%s1573 + $0x320] sm:$0xff]
    %s1638 = scalar_lea.vmem %s1, 16
    %v1639 = vld [vmem:[%s1638] sm:$0xff]
    %v1641 = vsel %vm95, %v1574, 0
    %v1644 = vsel %vm95, %v1575, 0
    %v1647 = vsel %vm95, %v1576, 0
    %v1650 = vsel %vm95, %v1577, 0
    %v1653 = vsel %vm95, %v1578, 0
    %v1656 = vsel %vm95, %v1579, 0
    %v1659 = vsel %vm95, %v1580, 0
    %v1662 = vsel %vm95, %v1581, 0
    %v1665 = vsel %vm95, %v1582, 0
    %v1668 = vsel %vm95, %v1583, 0
    %v1671 = vsel %vm95, %v1584, 0
    %v1674 = vsel %vm95, %v1585, 0
    %v1677 = vsel %vm95, %v1586, 0
    %v1680 = vsel %vm95, %v1587, 0
    %v1683 = vsel %vm95, %v1588, 0
    %v1686 = vsel %vm95, %v1589, 0
    %v1689 = vsel %vm95, %v1590, 0
    %v1692 = vsel %vm95, %v1591, 0
    %v1695 = vsel %vm95, %v1592, 0
    %v1698 = vsel %vm95, %v1593, 0
    %v1701 = vsel %vm95, %v1594, 0
    %v1704 = vsel %vm95, %v1595, 0
    %v1707 = vsel %vm95, %v1596, 0
    %v1710 = vsel %vm95, %v1597, 0
    %v1713 = vsel %vm95, %v1598, 0
    %v1716 = vsel %vm95, %v1599, 0
    %v1719 = vsel %vm95, %v1600, 0
    %v1722 = vsel %vm95, %v1601, 0
    %v1725 = vsel %vm95, %v1602, 0
    %v1728 = vsel %vm95, %v1603, 0
    %v1731 = vsel %vm95, %v1604, 0
    %v1734 = vsel %vm95, %v1605, 0
    %v1737 = vsel %vm95, %v1606, 0
    %v1740 = vsel %vm95, %v1607, 0
    %v1743 = vsel %vm95, %v1608, 0
    %v1746 = vsel %vm95, %v1609, 0
    %v1749 = vsel %vm95, %v1610, 0
    %v1752 = vsel %vm95, %v1611, 0
    %v1755 = vsel %vm95, %v1612, 0
    %v1758 = vsel %vm95, %v1613, 0
    %v1761 = vsel %vm95, %v1614, 0
    %v1764 = vsel %vm95, %v1615, 0
    %v1767 = vsel %vm95, %v1616, 0
    %v1770 = vsel %vm95, %v1617, 0
    %v1773 = vsel %vm95, %v1618, 0
    %v1776 = vsel %vm95, %v1619, 0
    %v1779 = vsel %vm95, %v1620, 0
    %v1782 = vsel %vm95, %v1621, 0
    %v1785 = vsel %vm95, %v1622, 0
    %v1788 = vsel %vm95, %v1623, 0
    %v1791 = vsel %vm95, %v1624, 0
    %v1794 = vsel %vm95, %v1625, 0
    %v1797 = vsel %vm95, %v1626, 0
    %v1800 = vsel %vm95, %v1627, 0
    %v1803 = vsel %vm95, %v1628, 0
    %v1806 = vsel %vm95, %v1629, 0
    %v1809 = vsel %vm95, %v1630, 0
    %v1812 = vsel %vm95, %v1631, 0
    %v1815 = vsel %vm95, %v1632, 0
    %v1818 = vsel %vm95, %v1633, 0
    %v1821 = vsel %vm95, %v1634, 0
    %v1824 = vsel %vm95, %v1635, 0
    %v1827 = vsel %vm95, %v1636, 0
    %v1830 = vsel %vm95, %v1637, 0
    %1832 = vmatprep.subr.mxu0 0.0
    %1833 = vmatpush1.msra.mxu0 %v1639
    %1834 = vmatprep.subr.mxu0 0.0
    %1835 = vmatpush1.msra.mxu0 0.0
    %1836 = vmatprep.subr.mxu0 0.0
    %1837 = vmatpush1.msra.mxu0 0.0
    %1838 = vmatprep.subr.mxu0 0.0
    %1839 = vmatpush1.msra.mxu0 0.0
    %1840 = vmatprep.subr.mxu0 0.0
    %1841 = vmatpush1.msra.mxu0 0.0
    %1842 = vmatprep.subr.mxu0 0.0
    %1843 = vmatpush1.msra.mxu0 0.0
    %1844 = vmatprep.subr.mxu0 0.0
    %1845 = vmatpush1.msra.mxu0 0.0
    %1846 = vmatprep.subr.mxu0 0.0
    %1847 = vmatpush1.msra.mxu0 0.0
    %1848 = vmatprep.subr.mxu0 0.0
    %1849 = vmatpush1.msra.mxu0 0.0
    %1850 = vmatprep.subr.mxu0 0.0
    %1851 = vmatpush1.msra.mxu0 0.0
    %1852 = vmatprep.subr.mxu0 0.0
    %1853 = vmatpush1.msra.mxu0 0.0
    %1854 = vmatprep.subr.mxu0 0.0
    %1855 = vmatpush1.msra.mxu0 0.0
    %1856 = vmatprep.subr.mxu0 0.0
    %1857 = vmatpush1.msra.mxu0 0.0
    %1858 = vmatprep.subr.mxu0 0.0
    %1859 = vmatpush1.msra.mxu0 0.0
    %1860 = vmatprep.subr.mxu0 0.0
    %1861 = vmatpush1.msra.mxu0 0.0
    %1862 = vmatprep.subr.mxu0 0.0
    %1863 = vmatpush1.msra.mxu0 0.0
    %1864 = vmatprep.subr.mxu0 0.0
    %1865 = vmatpush1.msra.mxu0 0.0
    %1866 = vmatprep.subr.mxu0 0.0
    %1867 = vmatpush1.msra.mxu0 0.0
    %1868 = vmatprep.subr.mxu0 0.0
    %1869 = vmatpush1.msra.mxu0 0.0
    %1870 = vmatprep.subr.mxu0 0.0
    %1871 = vmatpush1.msra.mxu0 0.0
    %1872 = vmatprep.subr.mxu0 0.0
    %1873 = vmatpush1.msra.mxu0 0.0
    %1874 = vmatprep.subr.mxu0 0.0
    %1875 = vmatpush1.msra.mxu0 0.0
    %1876 = vmatprep.subr.mxu0 0.0
    %1877 = vmatpush1.msra.mxu0 0.0
    %1878 = vmatprep.subr.mxu0 0.0
    %1879 = vmatpush1.msra.mxu0 0.0
    %1880 = vmatprep.subr.mxu0 0.0
    %1881 = vmatpush1.msra.mxu0 0.0
    %1882 = vmatprep.subr.mxu0 0.0
    %1883 = vmatpush1.msra.mxu0 0.0
    %1884 = vmatprep.subr.mxu0 0.0
    %1885 = vmatpush1.msra.mxu0 0.0
    %1886 = vmatprep.subr.mxu0 0.0
    %1887 = vmatpush1.msra.mxu0 0.0
    %1888 = vmatprep.subr.mxu0 0.0
    %1889 = vmatpush1.msra.mxu0 0.0
    %1890 = vmatprep.subr.mxu0 0.0
    %1891 = vmatpush1.msra.mxu0 0.0
    %1892 = vmatprep.subr.mxu0 0.0
    %1893 = vmatpush1.msra.mxu0 0.0
    %1894 = vmatprep.subr.mxu0 0.0
    %1895 = vmatpush1.msra.mxu0 0.0
    %1896 = vmatprep.mubr.f32.mxu0 0.0
    %1897 = vmatmul.mubr.f32.gmra.mrb[0].mxu0 %v1641
    %v1898 = vpop.f32.mrb[0].mxu0
    %v1899 = vadd.f32 0.0, %v1898
    %v1900 = vpop.f32.mrb[0].mxu0
    %1901 = vmatprep.mubr.f32.mxu0 0.0
    %1902 = vmatmul.mubr.f32.gmra.mrb[0].mxu0 %v1644
    %v1903 = vpop.f32.mrb[0].mxu0
    %v1904 = vadd.f32 0.0, %v1903
    %v1905 = vpop.f32.mrb[0].mxu0
    %1906 = vmatprep.mubr.f32.mxu0 0.0
    %1907 = vmatmul.mubr.f32.gmra.mrb[0].mxu0 %v1647
    %v1908 = vpop.f32.mrb[0].mxu0
    %v1909 = vadd.f32 0.0, %v1908
    %v1910 = vpop.f32.mrb[0].mxu0
    %1911 = vmatprep.mubr.f32.mxu0 0.0
    %1912 = vmatmul.mubr.f32.gmra.mrb[0].mxu0 %v1650
    %v1913 = vpop.f32.mrb[0].mxu0
    %v1914 = vadd.f32 0.0, %v1913
    %v1915 = vpop.f32.mrb[0].mxu0
    %1916 = vmatprep.mubr.f32.mxu0 0.0
    %1917 = vmatmul.mubr.f32.gmra.mrb[0].mxu0 %v1653
    %v1918 = vpop.f32.mrb[0].mxu0
    %v1919 = vadd.f32 0.0, %v1918
    %v1920 = vpop.f32.mrb[0].mxu0
    %1921 = vmatprep.mubr.f32.mxu0 0.0
    %1922 = vmatmul.mubr.f32.gmra.mrb[0].mxu0 %v1656
    %v1923 = vpop.f32.mrb[0].mxu0
    %v1924 = vadd.f32 0.0, %v1923
    %v1925 = vpop.f32.mrb[0].mxu0
    %1926 = vmatprep.mubr.f32.mxu0 0.0
    %1927 = vmatmul.mubr.f32.gmra.mrb[0].mxu0 %v1659
    %v1928 = vpop.f32.mrb[0].mxu0
    %v1929 = vadd.f32 0.0, %v1928
    %v1930 = vpop.f32.mrb[0].mxu0
    %1931 = vmatprep.mubr.f32.mxu0 0.0
    %1932 = vmatmul.mubr.f32.gmra.mrb[0].mxu0 %v1662
    %v1933 = vpop.f32.mrb[0].mxu0
    %v1934 = vadd.f32 0.0, %v1933
    %v1935 = vpop.f32.mrb[0].mxu0
    %1936 = vmatprep.mubr.f32.mxu0 0.0
    %1937 = vmatmul.mubr.f32.gmra.mrb[0].mxu0 %v1665
    %v1938 = vpop.f32.mrb[0].mxu0
    %v1939 = vadd.f32 0.0, %v1938
    %v1940 = vpop.f32.mrb[0].mxu0
    %1941 = vmatprep.mubr.f32.mxu0 0.0
    %1942 = vmatmul.mubr.f32.gmra.mrb[0].mxu0 %v1668
    %v1943 = vpop.f32.mrb[0].mxu0
    %v1944 = vadd.f32 0.0, %v1943
    %v1945 = vpop.f32.mrb[0].mxu0
    %1946 = vmatprep.mubr.f32.mxu0 0.0
    %1947 = vmatmul.mubr.f32.gmra.mrb[0].mxu0 %v1671
    %v1948 = vpop.f32.mrb[0].mxu0
    %v1949 = vadd.f32 0.0, %v1948
    %v1950 = vpop.f32.mrb[0].mxu0
    %1951 = vmatprep.mubr.f32.mxu0 0.0
    %1952 = vmatmul.mubr.f32.gmra.mrb[0].mxu0 %v1674
    %v1953 = vpop.f32.mrb[0].mxu0
    %v1954 = vadd.f32 0.0, %v1953
    %v1955 = vpop.f32.mrb[0].mxu0
    %1956 = vmatprep.mubr.f32.mxu0 0.0
    %1957 = vmatmul.mubr.f32.gmra.mrb[0].mxu0 %v1677
    %v1958 = vpop.f32.mrb[0].mxu0
    %v1959 = vadd.f32 0.0, %v1958
    %v1960 = vpop.f32.mrb[0].mxu0
    %1961 = vmatprep.mubr.f32.mxu0 0.0
    %1962 = vmatmul.mubr.f32.gmra.mrb[0].mxu0 %v1680
    %v1963 = vpop.f32.mrb[0].mxu0
    %v1964 = vadd.f32 0.0, %v1963
    %v1965 = vpop.f32.mrb[0].mxu0
    %1966 = vmatprep.mubr.f32.mxu0 0.0
    %1967 = vmatmul.mubr.f32.gmra.mrb[0].mxu0 %v1683
    %v1968 = vpop.f32.mrb[0].mxu0
    %v1969 = vadd.f32 0.0, %v1968
    %v1970 = vpop.f32.mrb[0].mxu0
    %1971 = vmatprep.mubr.f32.mxu0 0.0
    %1972 = vmatmul.mubr.f32.gmra.mrb[0].mxu0 %v1686
    %v1973 = vpop.f32.mrb[0].mxu0
    %v1974 = vadd.f32 0.0, %v1973
    %v1975 = vpop.f32.mrb[0].mxu0
    %1976 = vmatprep.mubr.f32.mxu0 0.0
    %1977 = vmatmul.mubr.f32.gmra.mrb[0].mxu0 %v1689
    %v1978 = vpop.f32.mrb[0].mxu0
    %v1979 = vadd.f32 0.0, %v1978
    %v1980 = vpop.f32.mrb[0].mxu0
    %1981 = vmatprep.mubr.f32.mxu0 0.0
    %1982 = vmatmul.mubr.f32.gmra.mrb[0].mxu0 %v1692
    %v1983 = vpop.f32.mrb[0].mxu0
    %v1984 = vadd.f32 0.0, %v1983
    %v1985 = vpop.f32.mrb[0].mxu0
    %1986 = vmatprep.mubr.f32.mxu0 0.0
    %1987 = vmatmul.mubr.f32.gmra.mrb[0].mxu0 %v1695
    %v1988 = vpop.f32.mrb[0].mxu0
    %v1989 = vadd.f32 0.0, %v1988
    %v1990 = vpop.f32.mrb[0].mxu0
    %1991 = vmatprep.mubr.f32.mxu0 0.0
    %1992 = vmatmul.mubr.f32.gmra.mrb[0].mxu0 %v1698
    %v1993 = vpop.f32.mrb[0].mxu0
    %v1994 = vadd.f32 0.0, %v1993
    %v1995 = vpop.f32.mrb[0].mxu0
    %1996 = vmatprep.mubr.f32.mxu0 0.0
    %1997 = vmatmul.mubr.f32.gmra.mrb[0].mxu0 %v1701
    %v1998 = vpop.f32.mrb[0].mxu0
    %v1999 = vadd.f32 0.0, %v1998
    %v2000 = vpop.f32.mrb[0].mxu0
    %2001 = vmatprep.mubr.f32.mxu0 0.0
    %2002 = vmatmul.mubr.f32.gmra.mrb[0].mxu0 %v1704
    %v2003 = vpop.f32.mrb[0].mxu0
    %v2004 = vadd.f32 0.0, %v2003
    %v2005 = vpop.f32.mrb[0].mxu0
    %2006 = vmatprep.mubr.f32.mxu0 0.0
    %2007 = vmatmul.mubr.f32.gmra.mrb[0].mxu0 %v1707
    %v2008 = vpop.f32.mrb[0].mxu0
    %v2009 = vadd.f32 0.0, %v2008
    %v2010 = vpop.f32.mrb[0].mxu0
    %2011 = vmatprep.mubr.f32.mxu0 0.0
    %2012 = vmatmul.mubr.f32.gmra.mrb[0].mxu0 %v1710
    %v2013 = vpop.f32.mrb[0].mxu0
    %v2014 = vadd.f32 0.0, %v2013
    %v2015 = vpop.f32.mrb[0].mxu0
    %2016 = vmatprep.mubr.f32.mxu0 0.0
    %2017 = vmatmul.mubr.f32.gmra.mrb[0].mxu0 %v1713
    %v2018 = vpop.f32.mrb[0].mxu0
    %v2019 = vadd.f32 0.0, %v2018
    %v2020 = vpop.f32.mrb[0].mxu0
    %2021 = vmatprep.mubr.f32.mxu0 0.0
    %2022 = vmatmul.mubr.f32.gmra.mrb[0].mxu0 %v1716
    %v2023 = vpop.f32.mrb[0].mxu0
    %v2024 = vadd.f32 0.0, %v2023
    %v2025 = vpop.f32.mrb[0].mxu0
    %2026 = vmatprep.mubr.f32.mxu0 0.0
    %2027 = vmatmul.mubr.f32.gmra.mrb[0].mxu0 %v1719
    %v2028 = vpop.f32.mrb[0].mxu0
    %v2029 = vadd.f32 0.0, %v2028
    %v2030 = vpop.f32.mrb[0].mxu0
    %2031 = vmatprep.mubr.f32.mxu0 0.0
    %2032 = vmatmul.mubr.f32.gmra.mrb[0].mxu0 %v1722
    %v2033 = vpop.f32.mrb[0].mxu0
    %v2034 = vadd.f32 0.0, %v2033
    %v2035 = vpop.f32.mrb[0].mxu0
    %2036 = vmatprep.mubr.f32.mxu0 0.0
    %2037 = vmatmul.mubr.f32.gmra.mrb[0].mxu0 %v1725
    %v2038 = vpop.f32.mrb[0].mxu0
    %v2039 = vadd.f32 0.0, %v2038
    %v2040 = vpop.f32.mrb[0].mxu0
    %2041 = vmatprep.mubr.f32.mxu0 0.0
    %2042 = vmatmul.mubr.f32.gmra.mrb[0].mxu0 %v1728
    %v2043 = vpop.f32.mrb[0].mxu0
    %v2044 = vadd.f32 0.0, %v2043
    %v2045 = vpop.f32.mrb[0].mxu0
    %2046 = vmatprep.mubr.f32.mxu0 0.0
    %2047 = vmatmul.mubr.f32.gmra.mrb[0].mxu0 %v1731
    %v2048 = vpop.f32.mrb[0].mxu0
    %v2049 = vadd.f32 0.0, %v2048
    %v2050 = vpop.f32.mrb[0].mxu0
    %2051 = vmatprep.mubr.f32.mxu0 0.0
    %2052 = vmatmul.mubr.f32.gmra.mrb[0].mxu0 %v1734
    %v2053 = vpop.f32.mrb[0].mxu0
    %v2054 = vadd.f32 0.0, %v2053
    %v2055 = vpop.f32.mrb[0].mxu0
    %2056 = vmatprep.mubr.f32.mxu0 0.0
    %2057 = vmatmul.mubr.f32.gmra.mrb[0].mxu0 %v1737
    %v2058 = vpop.f32.mrb[0].mxu0
    %v2059 = vadd.f32 0.0, %v2058
    %v2060 = vpop.f32.mrb[0].mxu0
    %2061 = vmatprep.mubr.f32.mxu0 0.0
    %2062 = vmatmul.mubr.f32.gmra.mrb[0].mxu0 %v1740
    %v2063 = vpop.f32.mrb[0].mxu0
    %v2064 = vadd.f32 0.0, %v2063
    %v2065 = vpop.f32.mrb[0].mxu0
    %2066 = vmatprep.mubr.f32.mxu0 0.0
    %2067 = vmatmul.mubr.f32.gmra.mrb[0].mxu0 %v1743
    %v2068 = vpop.f32.mrb[0].mxu0
    %v2069 = vadd.f32 0.0, %v2068
    %v2070 = vpop.f32.mrb[0].mxu0
    %2071 = vmatprep.mubr.f32.mxu0 0.0
    %2072 = vmatmul.mubr.f32.gmra.mrb[0].mxu0 %v1746
    %v2073 = vpop.f32.mrb[0].mxu0
    %v2074 = vadd.f32 0.0, %v2073
    %v2075 = vpop.f32.mrb[0].mxu0
    %2076 = vmatprep.mubr.f32.mxu0 0.0
    %2077 = vmatmul.mubr.f32.gmra.mrb[0].mxu0 %v1749
    %v2078 = vpop.f32.mrb[0].mxu0
    %v2079 = vadd.f32 0.0, %v2078
    %v2080 = vpop.f32.mrb[0].mxu0
    %2081 = vmatprep.mubr.f32.mxu0 0.0
    %2082 = vmatmul.mubr.f32.gmra.mrb[0].mxu0 %v1752
    %v2083 = vpop.f32.mrb[0].mxu0
    %v2084 = vadd.f32 0.0, %v2083
    %v2085 = vpop.f32.mrb[0].mxu0
    %2086 = vmatprep.mubr.f32.mxu0 0.0
    %2087 = vmatmul.mubr.f32.gmra.mrb[0].mxu0 %v1755
    %v2088 = vpop.f32.mrb[0].mxu0
    %v2089 = vadd.f32 0.0, %v2088
    %v2090 = vpop.f32.mrb[0].mxu0
    %2091 = vmatprep.mubr.f32.mxu0 0.0
    %2092 = vmatmul.mubr.f32.gmra.mrb[0].mxu0 %v1758
    %v2093 = vpop.f32.mrb[0].mxu0
    %v2094 = vadd.f32 0.0, %v2093
    %v2095 = vpop.f32.mrb[0].mxu0
    %2096 = vmatprep.mubr.f32.mxu0 0.0
    %2097 = vmatmul.mubr.f32.gmra.mrb[0].mxu0 %v1761
    %v2098 = vpop.f32.mrb[0].mxu0
    %v2099 = vadd.f32 0.0, %v2098
    %v2100 = vpop.f32.mrb[0].mxu0
    %2101 = vmatprep.mubr.f32.mxu0 0.0
    %2102 = vmatmul.mubr.f32.gmra.mrb[0].mxu0 %v1764
    %v2103 = vpop.f32.mrb[0].mxu0
    %v2104 = vadd.f32 0.0, %v2103
    %v2105 = vpop.f32.mrb[0].mxu0
    %2106 = vmatprep.mubr.f32.mxu0 0.0
    %2107 = vmatmul.mubr.f32.gmra.mrb[0].mxu0 %v1767
    %v2108 = vpop.f32.mrb[0].mxu0
    %v2109 = vadd.f32 0.0, %v2108
    %v2110 = vpop.f32.mrb[0].mxu0
    %2111 = vmatprep.mubr.f32.mxu0 0.0
    %2112 = vmatmul.mubr.f32.gmra.mrb[0].mxu0 %v1770
    %v2113 = vpop.f32.mrb[0].mxu0
    %v2114 = vadd.f32 0.0, %v2113
    %v2115 = vpop.f32.mrb[0].mxu0
    %2116 = vmatprep.mubr.f32.mxu0 0.0
    %2117 = vmatmul.mubr.f32.gmra.mrb[0].mxu0 %v1773
    %v2118 = vpop.f32.mrb[0].mxu0
    %v2119 = vadd.f32 0.0, %v2118
    %v2120 = vpop.f32.mrb[0].mxu0
    %2121 = vmatprep.mubr.f32.mxu0 0.0
    %2122 = vmatmul.mubr.f32.gmra.mrb[0].mxu0 %v1776
    %v2123 = vpop.f32.mrb[0].mxu0
    %v2124 = vadd.f32 0.0, %v2123
    %v2125 = vpop.f32.mrb[0].mxu0
    %2126 = vmatprep.mubr.f32.mxu0 0.0
    %2127 = vmatmul.mubr.f32.gmra.mrb[0].mxu0 %v1779
    %v2128 = vpop.f32.mrb[0].mxu0
    %v2129 = vadd.f32 0.0, %v2128
    %v2130 = vpop.f32.mrb[0].mxu0
    %2131 = vmatprep.mubr.f32.mxu0 0.0
    %2132 = vmatmul.mubr.f32.gmra.mrb[0].mxu0 %v1782
    %v2133 = vpop.f32.mrb[0].mxu0
    %v2134 = vadd.f32 0.0, %v2133
    %v2135 = vpop.f32.mrb[0].mxu0
    %2136 = vmatprep.mubr.f32.mxu0 0.0
    %2137 = vmatmul.mubr.f32.gmra.mrb[0].mxu0 %v1785
    %v2138 = vpop.f32.mrb[0].mxu0
    %v2139 = vadd.f32 0.0, %v2138
    %v2140 = vpop.f32.mrb[0].mxu0
    %2141 = vmatprep.mubr.f32.mxu0 0.0
    %2142 = vmatmul.mubr.f32.gmra.mrb[0].mxu0 %v1788
    %v2143 = vpop.f32.mrb[0].mxu0
    %v2144 = vadd.f32 0.0, %v2143
    %v2145 = vpop.f32.mrb[0].mxu0
    %2146 = vmatprep.mubr.f32.mxu0 0.0
    %2147 = vmatmul.mubr.f32.gmra.mrb[0].mxu0 %v1791
    %v2148 = vpop.f32.mrb[0].mxu0
    %v2149 = vadd.f32 0.0, %v2148
    %v2150 = vpop.f32.mrb[0].mxu0
    %2151 = vmatprep.mubr.f32.mxu0 0.0
    %2152 = vmatmul.mubr.f32.gmra.mrb[0].mxu0 %v1794
    %v2153 = vpop.f32.mrb[0].mxu0
    %v2154 = vadd.f32 0.0, %v2153
    %v2155 = vpop.f32.mrb[0].mxu0
    %2156 = vmatprep.mubr.f32.mxu0 0.0
    %2157 = vmatmul.mubr.f32.gmra.mrb[0].mxu0 %v1797
    %v2158 = vpop.f32.mrb[0].mxu0
    %v2159 = vadd.f32 0.0, %v2158
    %v2160 = vpop.f32.mrb[0].mxu0
    %2161 = vmatprep.mubr.f32.mxu0 0.0
    %2162 = vmatmul.mubr.f32.gmra.mrb[0].mxu0 %v1800
    %v2163 = vpop.f32.mrb[0].mxu0
    %v2164 = vadd.f32 0.0, %v2163
    %v2165 = vpop.f32.mrb[0].mxu0
    %2166 = vmatprep.mubr.f32.mxu0 0.0
    %2167 = vmatmul.mubr.f32.gmra.mrb[0].mxu0 %v1803
    %v2168 = vpop.f32.mrb[0].mxu0
    %v2169 = vadd.f32 0.0, %v2168
    %v2170 = vpop.f32.mrb[0].mxu0
    %2171 = vmatprep.mubr.f32.mxu0 0.0
    %2172 = vmatmul.mubr.f32.gmra.mrb[0].mxu0 %v1806
    %v2173 = vpop.f32.mrb[0].mxu0
    %v2174 = vadd.f32 0.0, %v2173
    %v2175 = vpop.f32.mrb[0].mxu0
    %2176 = vmatprep.mubr.f32.mxu0 0.0
    %2177 = vmatmul.mubr.f32.gmra.mrb[0].mxu0 %v1809
    %v2178 = vpop.f32.mrb[0].mxu0
    %v2179 = vadd.f32 0.0, %v2178
    %v2180 = vpop.f32.mrb[0].mxu0
    %2181 = vmatprep.mubr.f32.mxu0 0.0
    %2182 = vmatmul.mubr.f32.gmra.mrb[0].mxu0 %v1812
    %v2183 = vpop.f32.mrb[0].mxu0
    %v2184 = vadd.f32 0.0, %v2183
    %v2185 = vpop.f32.mrb[0].mxu0
    %2186 = vmatprep.mubr.f32.mxu0 0.0
    %2187 = vmatmul.mubr.f32.gmra.mrb[0].mxu0 %v1815
    %v2188 = vpop.f32.mrb[0].mxu0
    %v2189 = vadd.f32 0.0, %v2188
    %v2190 = vpop.f32.mrb[0].mxu0
    %2191 = vmatprep.mubr.f32.mxu0 0.0
    %2192 = vmatmul.mubr.f32.gmra.mrb[0].mxu0 %v1818
    %v2193 = vpop.f32.mrb[0].mxu0
    %v2194 = vadd.f32 0.0, %v2193
    %v2195 = vpop.f32.mrb[0].mxu0
    %2196 = vmatprep.mubr.f32.mxu0 0.0
    %2197 = vmatmul.mubr.f32.gmra.mrb[0].mxu0 %v1821
    %v2198 = vpop.f32.mrb[0].mxu0
    %v2199 = vadd.f32 0.0, %v2198
    %v2200 = vpop.f32.mrb[0].mxu0
    %2201 = vmatprep.mubr.f32.mxu0 0.0
    %2202 = vmatmul.mubr.f32.gmra.mrb[0].mxu0 %v1824
    %v2203 = vpop.f32.mrb[0].mxu0
    %v2204 = vadd.f32 0.0, %v2203
    %v2205 = vpop.f32.mrb[0].mxu0
    %2206 = vmatprep.mubr.f32.mxu0 0.0
    %2207 = vmatmul.mubr.f32.gmra.mrb[0].mxu0 %v1827
    %v2208 = vpop.f32.mrb[0].mxu0
    %v2209 = vadd.f32 0.0, %v2208
    %v2210 = vpop.f32.mrb[0].mxu0
    %2211 = vmatprep.mubr.f32.mxu0 0.0
    %2212 = vmatmul.mubr.f32.gmra.mrb[0].mxu0 %v1830
    %v2213 = vpop.f32.mrb[0].mxu0
    %v2214 = vadd.f32 0.0, %v2213
    %v2215 = vpop.f32.mrb[0].mxu0
    %2216 = vdwg.mxu0
    %v2217 = vld [vmem:[#allocation2] sm:$0xff]
    %v2218 = vld [vmem:[#allocation2 + $0x8] sm:$0xff]
    %v2219 = vld [vmem:[#allocation2 + $0x10] sm:$0xff]
    %v2220 = vld [vmem:[#allocation2 + $0x18] sm:$0xff]
    %v2221 = vld [vmem:[#allocation2 + $0x20] sm:$0xff]
    %v2222 = vld [vmem:[#allocation2 + $0x28] sm:$0xff]
    %v2223 = vld [vmem:[#allocation2 + $0x30] sm:$0xff]
    %v2224 = vld [vmem:[#allocation2 + $0x38] sm:$0xff]
    %v2225 = vld [vmem:[#allocation2 + $0x40] sm:$0xff]
    %v2226 = vld [vmem:[#allocation2 + $0x48] sm:$0xff]
    %v2227 = vld [vmem:[#allocation2 + $0x50] sm:$0xff]
    %v2228 = vld [vmem:[#allocation2 + $0x58] sm:$0xff]
    %v2229 = vld [vmem:[#allocation2 + $0x60] sm:$0xff]
    %v2230 = vld [vmem:[#allocation2 + $0x68] sm:$0xff]
    %v2231 = vld [vmem:[#allocation2 + $0x70] sm:$0xff]
    %v2232 = vld [vmem:[#allocation2 + $0x78] sm:$0xff]
    %v2233 = vld [vmem:[#allocation2 + $0x80] sm:$0xff]
    %v2234 = vld [vmem:[#allocation2 + $0x88] sm:$0xff]
    %v2235 = vld [vmem:[#allocation2 + $0x90] sm:$0xff]
    %v2236 = vld [vmem:[#allocation2 + $0x98] sm:$0xff]
    %v2237 = vld [vmem:[#allocation2 + $0xa0] sm:$0xff]
    %v2238 = vld [vmem:[#allocation2 + $0xa8] sm:$0xff]
    %v2239 = vld [vmem:[#allocation2 + $0xb0] sm:$0xff]
    %v2240 = vld [vmem:[#allocation2 + $0xb8] sm:$0xff]
    %v2241 = vld [vmem:[#allocation2 + $0xc0] sm:$0xff]
    %v2242 = vld [vmem:[#allocation2 + $0xc8] sm:$0xff]
    %v2243 = vld [vmem:[#allocation2 + $0xd0] sm:$0xff]
    %v2244 = vld [vmem:[#allocation2 + $0xd8] sm:$0xff]
    %v2245 = vld [vmem:[#allocation2 + $0xe0] sm:$0xff]
    %v2246 = vld [vmem:[#allocation2 + $0xe8] sm:$0xff]
    %v2247 = vld [vmem:[#allocation2 + $0xf0] sm:$0xff]
    %v2248 = vld [vmem:[#allocation2 + $0xf8] sm:$0xff]
    %v2249 = vld [vmem:[#allocation2 + $0x100] sm:$0xff]
    %v2250 = vld [vmem:[#allocation2 + $0x108] sm:$0xff]
    %v2251 = vld [vmem:[#allocation2 + $0x110] sm:$0xff]
    %v2252 = vld [vmem:[#allocation2 + $0x118] sm:$0xff]
    %v2253 = vld [vmem:[#allocation2 + $0x120] sm:$0xff]
    %v2254 = vld [vmem:[#allocation2 + $0x128] sm:$0xff]
    %v2255 = vld [vmem:[#allocation2 + $0x130] sm:$0xff]
    %v2256 = vld [vmem:[#allocation2 + $0x138] sm:$0xff]
    %v2257 = vld [vmem:[#allocation2 + $0x140] sm:$0xff]
    %v2258 = vld [vmem:[#allocation2 + $0x148] sm:$0xff]
    %v2259 = vld [vmem:[#allocation2 + $0x150] sm:$0xff]
    %v2260 = vld [vmem:[#allocation2 + $0x158] sm:$0xff]
    %v2261 = vld [vmem:[#allocation2 + $0x160] sm:$0xff]
    %v2262 = vld [vmem:[#allocation2 + $0x168] sm:$0xff]
    %v2263 = vld [vmem:[#allocation2 + $0x170] sm:$0xff]
    %v2264 = vld [vmem:[#allocation2 + $0x178] sm:$0xff]
    %v2265 = vld [vmem:[#allocation2 + $0x180] sm:$0xff]
    %v2266 = vld [vmem:[#allocation2 + $0x188] sm:$0xff]
    %v2267 = vld [vmem:[#allocation2 + $0x190] sm:$0xff]
    %v2268 = vld [vmem:[#allocation2 + $0x198] sm:$0xff]
    %v2269 = vld [vmem:[#allocation2 + $0x1a0] sm:$0xff]
    %v2270 = vld [vmem:[#allocation2 + $0x1a8] sm:$0xff]
    %v2271 = vld [vmem:[#allocation2 + $0x1b0] sm:$0xff]
    %v2272 = vld [vmem:[#allocation2 + $0x1b8] sm:$0xff]
    %v2273 = vld [vmem:[#allocation2 + $0x1c0] sm:$0xff]
    %v2274 = vld [vmem:[#allocation2 + $0x1c8] sm:$0xff]
    %v2275 = vld [vmem:[#allocation2 + $0x1d0] sm:$0xff]
    %v2276 = vld [vmem:[#allocation2 + $0x1d8] sm:$0xff]
    %v2277 = vld [vmem:[#allocation2 + $0x1e0] sm:$0xff]
    %v2278 = vld [vmem:[#allocation2 + $0x1e8] sm:$0xff]
    %v2279 = vld [vmem:[#allocation2 + $0x1f0] sm:$0xff]
    %v2280 = vld [vmem:[#allocation2 + $0x1f8] sm:$0xff]
    %v2281 = vadd.f32 %v2217, %v1899
    %v2282 = vadd.f32 %v2218, %v1904
    %v2283 = vadd.f32 %v2219, %v1909
    %v2284 = vadd.f32 %v2220, %v1914
    %v2285 = vadd.f32 %v2221, %v1919
    %v2286 = vadd.f32 %v2222, %v1924
    %v2287 = vadd.f32 %v2223, %v1929
    %v2288 = vadd.f32 %v2224, %v1934
    %v2289 = vadd.f32 %v2225, %v1939
    %v2290 = vadd.f32 %v2226, %v1944
    %v2291 = vadd.f32 %v2227, %v1949
    %v2292 = vadd.f32 %v2228, %v1954
    %v2293 = vadd.f32 %v2229, %v1959
    %v2294 = vadd.f32 %v2230, %v1964
    %v2295 = vadd.f32 %v2231, %v1969
    %v2296 = vadd.f32 %v2232, %v1974
    %v2297 = vadd.f32 %v2233, %v1979
    %v2298 = vadd.f32 %v2234, %v1984
    %v2299 = vadd.f32 %v2235, %v1989
    %v2300 = vadd.f32 %v2236, %v1994
    %v2301 = vadd.f32 %v2237, %v1999
    %v2302 = vadd.f32 %v2238, %v2004
    %v2303 = vadd.f32 %v2239, %v2009
    %v2304 = vadd.f32 %v2240, %v2014
    %v2305 = vadd.f32 %v2241, %v2019
    %v2306 = vadd.f32 %v2242, %v2024
    %v2307 = vadd.f32 %v2243, %v2029
    %v2308 = vadd.f32 %v2244, %v2034
    %v2309 = vadd.f32 %v2245, %v2039
    %v2310 = vadd.f32 %v2246, %v2044
    %v2311 = vadd.f32 %v2247, %v2049
    %v2312 = vadd.f32 %v2248, %v2054
    %v2313 = vadd.f32 %v2249, %v2059
    %v2314 = vadd.f32 %v2250, %v2064
    %v2315 = vadd.f32 %v2251, %v2069
    %v2316 = vadd.f32 %v2252, %v2074
    %v2317 = vadd.f32 %v2253, %v2079
    %v2318 = vadd.f32 %v2254, %v2084
    %v2319 = vadd.f32 %v2255, %v2089
    %v2320 = vadd.f32 %v2256, %v2094
    %v2321 = vadd.f32 %v2257, %v2099
    %v2322 = vadd.f32 %v2258, %v2104
    %v2323 = vadd.f32 %v2259, %v2109
    %v2324 = vadd.f32 %v2260, %v2114
    %v2325 = vadd.f32 %v2261, %v2119
    %v2326 = vadd.f32 %v2262, %v2124
    %v2327 = vadd.f32 %v2263, %v2129
    %v2328 = vadd.f32 %v2264, %v2134
    %v2329 = vadd.f32 %v2265, %v2139
    %v2330 = vadd.f32 %v2266, %v2144
    %v2331 = vadd.f32 %v2267, %v2149
    %v2332 = vadd.f32 %v2268, %v2154
    %v2333 = vadd.f32 %v2269, %v2159
    %v2334 = vadd.f32 %v2270, %v2164
    %v2335 = vadd.f32 %v2271, %v2169
    %v2336 = vadd.f32 %v2272, %v2174
    %v2337 = vadd.f32 %v2273, %v2179
    %v2338 = vadd.f32 %v2274, %v2184
    %v2339 = vadd.f32 %v2275, %v2189
    %v2340 = vadd.f32 %v2276, %v2194
    %v2341 = vadd.f32 %v2277, %v2199
    %v2342 = vadd.f32 %v2278, %v2204
    %v2343 = vadd.f32 %v2279, %v2209
    %v2344 = vadd.f32 %v2280, %v2214
    %2345 = vst.msk [vmem:[#allocation2] sm:$0xff] %vm95, %v2281
    %2346 = vst.msk [vmem:[#allocation2 + $0x8] sm:$0xff] %vm95, %v2282
    %2347 = vst.msk [vmem:[#allocation2 + $0x10] sm:$0xff] %vm95, %v2283
    %2348 = vst.msk [vmem:[#allocation2 + $0x18] sm:$0xff] %vm95, %v2284
    %2349 = vst.msk [vmem:[#allocation2 + $0x20] sm:$0xff] %vm95, %v2285
    %2350 = vst.msk [vmem:[#allocation2 + $0x28] sm:$0xff] %vm95, %v2286
    %2351 = vst.msk [vmem:[#allocation2 + $0x30] sm:$0xff] %vm95, %v2287
    %2352 = vst.msk [vmem:[#allocation2 + $0x38] sm:$0xff] %vm95, %v2288
    %2353 = vst.msk [vmem:[#allocation2 + $0x40] sm:$0xff] %vm95, %v2289
    %2354 = vst.msk [vmem:[#allocation2 + $0x48] sm:$0xff] %vm95, %v2290
    %2355 = vst.msk [vmem:[#allocation2 + $0x50] sm:$0xff] %vm95, %v2291
    %2356 = vst.msk [vmem:[#allocation2 + $0x58] sm:$0xff] %vm95, %v2292
    %2357 = vst.msk [vmem:[#allocation2 + $0x60] sm:$0xff] %vm95, %v2293
    %2358 = vst.msk [vmem:[#allocation2 + $0x68] sm:$0xff] %vm95, %v2294
    %2359 = vst.msk [vmem:[#allocation2 + $0x70] sm:$0xff] %vm95, %v2295
    %2360 = vst.msk [vmem:[#allocation2 + $0x78] sm:$0xff] %vm95, %v2296
    %2361 = vst.msk [vmem:[#allocation2 + $0x80] sm:$0xff] %vm95, %v2297
    %2362 = vst.msk [vmem:[#allocation2 + $0x88] sm:$0xff] %vm95, %v2298
    %2363 = vst.msk [vmem:[#allocation2 + $0x90] sm:$0xff] %vm95, %v2299
    %2364 = vst.msk [vmem:[#allocation2 + $0x98] sm:$0xff] %vm95, %v2300
    %2365 = vst.msk [vmem:[#allocation2 + $0xa0] sm:$0xff] %vm95, %v2301
    %2366 = vst.msk [vmem:[#allocation2 + $0xa8] sm:$0xff] %vm95, %v2302
    %2367 = vst.msk [vmem:[#allocation2 + $0xb0] sm:$0xff] %vm95, %v2303
    %2368 = vst.msk [vmem:[#allocation2 + $0xb8] sm:$0xff] %vm95, %v2304
    %2369 = vst.msk [vmem:[#allocation2 + $0xc0] sm:$0xff] %vm95, %v2305
    %2370 = vst.msk [vmem:[#allocation2 + $0xc8] sm:$0xff] %vm95, %v2306
    %2371 = vst.msk [vmem:[#allocation2 + $0xd0] sm:$0xff] %vm95, %v2307
    %2372 = vst.msk [vmem:[#allocation2 + $0xd8] sm:$0xff] %vm95, %v2308
    %2373 = vst.msk [vmem:[#allocation2 + $0xe0] sm:$0xff] %vm95, %v2309
    %2374 = vst.msk [vmem:[#allocation2 + $0xe8] sm:$0xff] %vm95, %v2310
    %2375 = vst.msk [vmem:[#allocation2 + $0xf0] sm:$0xff] %vm95, %v2311
    %2376 = vst.msk [vmem:[#allocation2 + $0xf8] sm:$0xff] %vm95, %v2312
    %2377 = vst.msk [vmem:[#allocation2 + $0x100] sm:$0xff] %vm95, %v2313
    %2378 = vst.msk [vmem:[#allocation2 + $0x108] sm:$0xff] %vm95, %v2314
    %2379 = vst.msk [vmem:[#allocation2 + $0x110] sm:$0xff] %vm95, %v2315
    %2380 = vst.msk [vmem:[#allocation2 + $0x118] sm:$0xff] %vm95, %v2316
    %2381 = vst.msk [vmem:[#allocation2 + $0x120] sm:$0xff] %vm95, %v2317
    %2382 = vst.msk [vmem:[#allocation2 + $0x128] sm:$0xff] %vm95, %v2318
    %2383 = vst.msk [vmem:[#allocation2 + $0x130] sm:$0xff] %vm95, %v2319
    %2384 = vst.msk [vmem:[#allocation2 + $0x138] sm:$0xff] %vm95, %v2320
    %2385 = vst.msk [vmem:[#allocation2 + $0x140] sm:$0xff] %vm95, %v2321
    %2386 = vst.msk [vmem:[#allocation2 + $0x148] sm:$0xff] %vm95, %v2322
    %2387 = vst.msk [vmem:[#allocation2 + $0x150] sm:$0xff] %vm95, %v2323
    %2388 = vst.msk [vmem:[#allocation2 + $0x158] sm:$0xff] %vm95, %v2324
    %2389 = vst.msk [vmem:[#allocation2 + $0x160] sm:$0xff] %vm95, %v2325
    %2390 = vst.msk [vmem:[#allocation2 + $0x168] sm:$0xff] %vm95, %v2326
    %2391 = vst.msk [vmem:[#allocation2 + $0x170] sm:$0xff] %vm95, %v2327
    %2392 = vst.msk [vmem:[#allocation2 + $0x178] sm:$0xff] %vm95, %v2328
    %2393 = vst.msk [vmem:[#allocation2 + $0x180] sm:$0xff] %vm95, %v2329
    %2394 = vst.msk [vmem:[#allocation2 + $0x188] sm:$0xff] %vm95, %v2330
    %2395 = vst.msk [vmem:[#allocation2 + $0x190] sm:$0xff] %vm95, %v2331
    %2396 = vst.msk [vmem:[#allocation2 + $0x198] sm:$0xff] %vm95, %v2332
    %2397 = vst.msk [vmem:[#allocation2 + $0x1a0] sm:$0xff] %vm95, %v2333
    %2398 = vst.msk [vmem:[#allocation2 + $0x1a8] sm:$0xff] %vm95, %v2334
    %2399 = vst.msk [vmem:[#allocation2 + $0x1b0] sm:$0xff] %vm95, %v2335
    %2400 = vst.msk [vmem:[#allocation2 + $0x1b8] sm:$0xff] %vm95, %v2336
    %2401 = vst.msk [vmem:[#allocation2 + $0x1c0] sm:$0xff] %vm95, %v2337
    %2402 = vst.msk [vmem:[#allocation2 + $0x1c8] sm:$0xff] %vm95, %v2338
    %2403 = vst.msk [vmem:[#allocation2 + $0x1d0] sm:$0xff] %vm95, %v2339
    %2404 = vst.msk [vmem:[#allocation2 + $0x1d8] sm:$0xff] %vm95, %v2340
    %2405 = vst.msk [vmem:[#allocation2 + $0x1e0] sm:$0xff] %vm95, %v2341
    %2406 = vst.msk [vmem:[#allocation2 + $0x1e8] sm:$0xff] %vm95, %v2342
    %2407 = vst.msk [vmem:[#allocation2 + $0x1f0] sm:$0xff] %vm95, %v2343
    %2408 = vst.msk [vmem:[#allocation2 + $0x1f8] sm:$0xff] %vm95, %v2344
    %v2409 = vld [vmem:[%s0 + $0x1] sm:$0xff]
    %v2410 = vld [vmem:[%s0 + $0x9] sm:$0xff]
    %v2411 = vld [vmem:[%s0 + $0x19] sm:$0xff]
    %v2412 = vld [vmem:[%s0 + $0x21] sm:$0xff]
    %v2413 = vld [vmem:[%s0 + $0x31] sm:$0xff]
    %v2414 = vld [vmem:[%s0 + $0x39] sm:$0xff]
    %v2415 = vld [vmem:[%s0 + $0x49] sm:$0xff]
    %v2416 = vld [vmem:[%s0 + $0x51] sm:$0xff]
    %v2417 = vld [vmem:[%s0 + $0x61] sm:$0xff]
    %v2418 = vld [vmem:[%s0 + $0x69] sm:$0xff]
    %v2419 = vld [vmem:[%s0 + $0x79] sm:$0xff]
    %v2420 = vld [vmem:[%s0 + $0x81] sm:$0xff]
    %v2421 = vld [vmem:[%s0 + $0x91] sm:$0xff]
    %v2422 = vld [vmem:[%s0 + $0x99] sm:$0xff]
    %v2423 = vld [vmem:[%s0 + $0xa9] sm:$0xff]
    %v2424 = vld [vmem:[%s0 + $0xb1] sm:$0xff]
    %v2425 = vld [vmem:[%s0 + $0xc1] sm:$0xff]
    %v2426 = vld [vmem:[%s0 + $0xc9] sm:$0xff]
    %v2427 = vld [vmem:[%s0 + $0xd9] sm:$0xff]
    %v2428 = vld [vmem:[%s0 + $0xe1] sm:$0xff]
    %v2429 = vld [vmem:[%s0 + $0xf1] sm:$0xff]
    %v2430 = vld [vmem:[%s0 + $0xf9] sm:$0xff]
    %v2431 = vld [vmem:[%s0 + $0x109] sm:$0xff]
    %v2432 = vld [vmem:[%s0 + $0x111] sm:$0xff]
    %v2433 = vld [vmem:[%s0 + $0x121] sm:$0xff]
    %v2434 = vld [vmem:[%s0 + $0x129] sm:$0xff]
    %v2435 = vld [vmem:[%s0 + $0x139] sm:$0xff]
    %v2436 = vld [vmem:[%s0 + $0x141] sm:$0xff]
    %v2437 = vld [vmem:[%s0 + $0x151] sm:$0xff]
    %v2438 = vld [vmem:[%s0 + $0x159] sm:$0xff]
    %v2439 = vld [vmem:[%s0 + $0x169] sm:$0xff]
    %v2440 = vld [vmem:[%s0 + $0x171] sm:$0xff]
    %v2441 = vld [vmem:[%s0 + $0x1b1] sm:$0xff]
    %v2442 = vld [vmem:[%s0 + $0x1b9] sm:$0xff]
    %v2443 = vld [vmem:[%s0 + $0x1c9] sm:$0xff]
    %v2444 = vld [vmem:[%s0 + $0x1d1] sm:$0xff]
    %v2445 = vld [vmem:[%s0 + $0x1e1] sm:$0xff]
    %v2446 = vld [vmem:[%s0 + $0x1e9] sm:$0xff]
    %v2447 = vld [vmem:[%s0 + $0x1f9] sm:$0xff]
    %v2448 = vld [vmem:[%s0 + $0x201] sm:$0xff]
    %v2449 = vld [vmem:[%s0 + $0x211] sm:$0xff]
    %v2450 = vld [vmem:[%s0 + $0x219] sm:$0xff]
    %v2451 = vld [vmem:[%s0 + $0x229] sm:$0xff]
    %v2452 = vld [vmem:[%s0 + $0x231] sm:$0xff]
    %v2453 = vld [vmem:[%s0 + $0x241] sm:$0xff]
    %v2454 = vld [vmem:[%s0 + $0x249] sm:$0xff]
    %v2455 = vld [vmem:[%s0 + $0x259] sm:$0xff]
    %v2456 = vld [vmem:[%s0 + $0x261] sm:$0xff]
    %v2457 = vld [vmem:[%s0 + $0x271] sm:$0xff]
    %v2458 = vld [vmem:[%s0 + $0x279] sm:$0xff]
    %v2459 = vld [vmem:[%s0 + $0x289] sm:$0xff]
    %v2460 = vld [vmem:[%s0 + $0x291] sm:$0xff]
    %v2461 = vld [vmem:[%s0 + $0x2a1] sm:$0xff]
    %v2462 = vld [vmem:[%s0 + $0x2a9] sm:$0xff]
    %v2463 = vld [vmem:[%s0 + $0x2b9] sm:$0xff]
    %v2464 = vld [vmem:[%s0 + $0x2c1] sm:$0xff]
    %v2465 = vld [vmem:[%s0 + $0x2d1] sm:$0xff]
    %v2466 = vld [vmem:[%s0 + $0x2d9] sm:$0xff]
    %v2467 = vld [vmem:[%s0 + $0x2e9] sm:$0xff]
    %v2468 = vld [vmem:[%s0 + $0x2f1] sm:$0xff]
    %v2469 = vld [vmem:[%s0 + $0x301] sm:$0xff]
    %v2470 = vld [vmem:[%s0 + $0x309] sm:$0xff]
    %v2471 = vld [vmem:[%s0 + $0x319] sm:$0xff]
    %v2472 = vld [vmem:[%s0 + $0x321] sm:$0xff]
    %s2473 = scalar_lea.vmem %s1, 24
    %v2474 = vld [vmem:[%s2473] sm:$0xff]
    %v2476 = vsel %vm95, %v2409, 0
    %v2479 = vsel %vm95, %v2410, 0
    %v2482 = vsel %vm95, %v2411, 0
    %v2485 = vsel %vm95, %v2412, 0
    %v2488 = vsel %vm95, %v2413, 0
    %v2491 = vsel %vm95, %v2414, 0
    %v2494 = vsel %vm95, %v2415, 0
    %v2497 = vsel %vm95, %v2416, 0
    %v2500 = vsel %vm95, %v2417, 0
    %v2503 = vsel %vm95, %v2418, 0
    %v2506 = vsel %vm95, %v2419, 0
    %v2509 = vsel %vm95, %v2420, 0
    %v2512 = vsel %vm95, %v2421, 0
    %v2515 = vsel %vm95, %v2422, 0
    %v2518 = vsel %vm95, %v2423, 0
    %v2521 = vsel %vm95, %v2424, 0
    %v2524 = vsel %vm95, %v2425, 0
    %v2527 = vsel %vm95, %v2426, 0
    %v2530 = vsel %vm95, %v2427, 0
    %v2533 = vsel %vm95, %v2428, 0
    %v2536 = vsel %vm95, %v2429, 0
    %v2539 = vsel %vm95, %v2430, 0
    %v2542 = vsel %vm95, %v2431, 0
    %v2545 = vsel %vm95, %v2432, 0
    %v2548 = vsel %vm95, %v2433, 0
    %v2551 = vsel %vm95, %v2434, 0
    %v2554 = vsel %vm95, %v2435, 0
    %v2557 = vsel %vm95, %v2436, 0
    %v2560 = vsel %vm95, %v2437, 0
    %v2563 = vsel %vm95, %v2438, 0
    %v2566 = vsel %vm95, %v2439, 0
    %v2569 = vsel %vm95, %v2440, 0
    %v2572 = vsel %vm95, %v2441, 0
    %v2575 = vsel %vm95, %v2442, 0
    %v2578 = vsel %vm95, %v2443, 0
    %v2581 = vsel %vm95, %v2444, 0
    %v2584 = vsel %vm95, %v2445, 0
    %v2587 = vsel %vm95, %v2446, 0
    %v2590 = vsel %vm95, %v2447, 0
    %v2593 = vsel %vm95, %v2448, 0
    %v2596 = vsel %vm95, %v2449, 0
    %v2599 = vsel %vm95, %v2450, 0
    %v2602 = vsel %vm95, %v2451, 0
    %v2605 = vsel %vm95, %v2452, 0
    %v2608 = vsel %vm95, %v2453, 0
    %v2611 = vsel %vm95, %v2454, 0
    %v2614 = vsel %vm95, %v2455, 0
    %v2617 = vsel %vm95, %v2456, 0
    %v2620 = vsel %vm95, %v2457, 0
    %v2623 = vsel %vm95, %v2458, 0
    %v2626 = vsel %vm95, %v2459, 0
    %v2629 = vsel %vm95, %v2460, 0
    %v2632 = vsel %vm95, %v2461, 0
    %v2635 = vsel %vm95, %v2462, 0
    %v2638 = vsel %vm95, %v2463, 0
    %v2641 = vsel %vm95, %v2464, 0
    %v2644 = vsel %vm95, %v2465, 0
    %v2647 = vsel %vm95, %v2466, 0
    %v2650 = vsel %vm95, %v2467, 0
    %v2653 = vsel %vm95, %v2468, 0
    %v2656 = vsel %vm95, %v2469, 0
    %v2659 = vsel %vm95, %v2470, 0
    %v2662 = vsel %vm95, %v2471, 0
    %v2665 = vsel %vm95, %v2472, 0
    %2667 = vmatprep.subr.mxu0 0.0
    %2668 = vmatpush1.msra.mxu0 %v2474
    %2669 = vmatprep.subr.mxu0 0.0
    %2670 = vmatpush1.msra.mxu0 0.0
    %2671 = vmatprep.subr.mxu0 0.0
    %2672 = vmatpush1.msra.mxu0 0.0
    %2673 = vmatprep.subr.mxu0 0.0
    %2674 = vmatpush1.msra.mxu0 0.0
    %2675 = vmatprep.subr.mxu0 0.0
    %2676 = vmatpush1.msra.mxu0 0.0
    %2677 = vmatprep.subr.mxu0 0.0
    %2678 = vmatpush1.msra.mxu0 0.0
    %2679 = vmatprep.subr.mxu0 0.0
    %2680 = vmatpush1.msra.mxu0 0.0
    %2681 = vmatprep.subr.mxu0 0.0
    %2682 = vmatpush1.msra.mxu0 0.0
    %2683 = vmatprep.subr.mxu0 0.0
    %2684 = vmatpush1.msra.mxu0 0.0
    %2685 = vmatprep.subr.mxu0 0.0
    %2686 = vmatpush1.msra.mxu0 0.0
    %2687 = vmatprep.subr.mxu0 0.0
    %2688 = vmatpush1.msra.mxu0 0.0
    %2689 = vmatprep.subr.mxu0 0.0
    %2690 = vmatpush1.msra.mxu0 0.0
    %2691 = vmatprep.subr.mxu0 0.0
    %2692 = vmatpush1.msra.mxu0 0.0
    %2693 = vmatprep.subr.mxu0 0.0
    %2694 = vmatpush1.msra.mxu0 0.0
    %2695 = vmatprep.subr.mxu0 0.0
    %2696 = vmatpush1.msra.mxu0 0.0
    %2697 = vmatprep.subr.mxu0 0.0
    %2698 = vmatpush1.msra.mxu0 0.0
    %2699 = vmatprep.subr.mxu0 0.0
    %2700 = vmatpush1.msra.mxu0 0.0
    %2701 = vmatprep.subr.mxu0 0.0
    %2702 = vmatpush1.msra.mxu0 0.0
    %2703 = vmatprep.subr.mxu0 0.0
    %2704 = vmatpush1.msra.mxu0 0.0
    %2705 = vmatprep.subr.mxu0 0.0
    %2706 = vmatpush1.msra.mxu0 0.0
    %2707 = vmatprep.subr.mxu0 0.0
    %2708 = vmatpush1.msra.mxu0 0.0
    %2709 = vmatprep.subr.mxu0 0.0
    %2710 = vmatpush1.msra.mxu0 0.0
    %2711 = vmatprep.subr.mxu0 0.0
    %2712 = vmatpush1.msra.mxu0 0.0
    %2713 = vmatprep.subr.mxu0 0.0
    %2714 = vmatpush1.msra.mxu0 0.0
    %2715 = vmatprep.subr.mxu0 0.0
    %2716 = vmatpush1.msra.mxu0 0.0
    %2717 = vmatprep.subr.mxu0 0.0
    %2718 = vmatpush1.msra.mxu0 0.0
    %2719 = vmatprep.subr.mxu0 0.0
    %2720 = vmatpush1.msra.mxu0 0.0
    %2721 = vmatprep.subr.mxu0 0.0
    %2722 = vmatpush1.msra.mxu0 0.0
    %2723 = vmatprep.subr.mxu0 0.0
    %2724 = vmatpush1.msra.mxu0 0.0
    %2725 = vmatprep.subr.mxu0 0.0
    %2726 = vmatpush1.msra.mxu0 0.0
    %2727 = vmatprep.subr.mxu0 0.0
    %2728 = vmatpush1.msra.mxu0 0.0
    %2729 = vmatprep.subr.mxu0 0.0
    %2730 = vmatpush1.msra.mxu0 0.0
    %2731 = vmatprep.mubr.f32.mxu0 0.0
    %2732 = vmatmul.mubr.f32.gmra.mrb[0].mxu0 %v2476
    %v2733 = vpop.f32.mrb[0].mxu0
    %v2734 = vadd.f32 0.0, %v2733
    %v2735 = vpop.f32.mrb[0].mxu0
    %2736 = vmatprep.mubr.f32.mxu0 0.0
    %2737 = vmatmul.mubr.f32.gmra.mrb[0].mxu0 %v2479
    %v2738 = vpop.f32.mrb[0].mxu0
    %v2739 = vadd.f32 0.0, %v2738
    %v2740 = vpop.f32.mrb[0].mxu0
    %2741 = vmatprep.mubr.f32.mxu0 0.0
    %2742 = vmatmul.mubr.f32.gmra.mrb[0].mxu0 %v2482
    %v2743 = vpop.f32.mrb[0].mxu0
    %v2744 = vadd.f32 0.0, %v2743
    %v2745 = vpop.f32.mrb[0].mxu0
    %2746 = vmatprep.mubr.f32.mxu0 0.0
    %2747 = vmatmul.mubr.f32.gmra.mrb[0].mxu0 %v2485
    %v2748 = vpop.f32.mrb[0].mxu0
    %v2749 = vadd.f32 0.0, %v2748
    %v2750 = vpop.f32.mrb[0].mxu0
    %2751 = vmatprep.mubr.f32.mxu0 0.0
    %2752 = vmatmul.mubr.f32.gmra.mrb[0].mxu0 %v2488
    %v2753 = vpop.f32.mrb[0].mxu0
    %v2754 = vadd.f32 0.0, %v2753
    %v2755 = vpop.f32.mrb[0].mxu0
    %2756 = vmatprep.mubr.f32.mxu0 0.0
    %2757 = vmatmul.mubr.f32.gmra.mrb[0].mxu0 %v2491
    %v2758 = vpop.f32.mrb[0].mxu0
    %v2759 = vadd.f32 0.0, %v2758
    %v2760 = vpop.f32.mrb[0].mxu0
    %2761 = vmatprep.mubr.f32.mxu0 0.0
    %2762 = vmatmul.mubr.f32.gmra.mrb[0].mxu0 %v2494
    %v2763 = vpop.f32.mrb[0].mxu0
    %v2764 = vadd.f32 0.0, %v2763
    %v2765 = vpop.f32.mrb[0].mxu0
    %2766 = vmatprep.mubr.f32.mxu0 0.0
    %2767 = vmatmul.mubr.f32.gmra.mrb[0].mxu0 %v2497
    %v2768 = vpop.f32.mrb[0].mxu0
    %v2769 = vadd.f32 0.0, %v2768
    %v2770 = vpop.f32.mrb[0].mxu0
    %2771 = vmatprep.mubr.f32.mxu0 0.0
    %2772 = vmatmul.mubr.f32.gmra.mrb[0].mxu0 %v2500
    %v2773 = vpop.f32.mrb[0].mxu0
    %v2774 = vadd.f32 0.0, %v2773
    %v2775 = vpop.f32.mrb[0].mxu0
    %2776 = vmatprep.mubr.f32.mxu0 0.0
    %2777 = vmatmul.mubr.f32.gmra.mrb[0].mxu0 %v2503
    %v2778 = vpop.f32.mrb[0].mxu0
    %v2779 = vadd.f32 0.0, %v2778
    %v2780 = vpop.f32.mrb[0].mxu0
    %2781 = vmatprep.mubr.f32.mxu0 0.0
    %2782 = vmatmul.mubr.f32.gmra.mrb[0].mxu0 %v2506
    %v2783 = vpop.f32.mrb[0].mxu0
    %v2784 = vadd.f32 0.0, %v2783
    %v2785 = vpop.f32.mrb[0].mxu0
    %2786 = vmatprep.mubr.f32.mxu0 0.0
    %2787 = vmatmul.mubr.f32.gmra.mrb[0].mxu0 %v2509
    %v2788 = vpop.f32.mrb[0].mxu0
    %v2789 = vadd.f32 0.0, %v2788
    %v2790 = vpop.f32.mrb[0].mxu0
    %2791 = vmatprep.mubr.f32.mxu0 0.0
    %2792 = vmatmul.mubr.f32.gmra.mrb[0].mxu0 %v2512
    %v2793 = vpop.f32.mrb[0].mxu0
    %v2794 = vadd.f32 0.0, %v2793
    %v2795 = vpop.f32.mrb[0].mxu0
    %2796 = vmatprep.mubr.f32.mxu0 0.0
    %2797 = vmatmul.mubr.f32.gmra.mrb[0].mxu0 %v2515
    %v2798 = vpop.f32.mrb[0].mxu0
    %v2799 = vadd.f32 0.0, %v2798
    %v2800 = vpop.f32.mrb[0].mxu0
    %2801 = vmatprep.mubr.f32.mxu0 0.0
    %2802 = vmatmul.mubr.f32.gmra.mrb[0].mxu0 %v2518
    %v2803 = vpop.f32.mrb[0].mxu0
    %v2804 = vadd.f32 0.0, %v2803
    %v2805 = vpop.f32.mrb[0].mxu0
    %2806 = vmatprep.mubr.f32.mxu0 0.0
    %2807 = vmatmul.mubr.f32.gmra.mrb[0].mxu0 %v2521
    %v2808 = vpop.f32.mrb[0].mxu0
    %v2809 = vadd.f32 0.0, %v2808
    %v2810 = vpop.f32.mrb[0].mxu0
    %2811 = vmatprep.mubr.f32.mxu0 0.0
    %2812 = vmatmul.mubr.f32.gmra.mrb[0].mxu0 %v2524
    %v2813 = vpop.f32.mrb[0].mxu0
    %v2814 = vadd.f32 0.0, %v2813
    %v2815 = vpop.f32.mrb[0].mxu0
    %2816 = vmatprep.mubr.f32.mxu0 0.0
    %2817 = vmatmul.mubr.f32.gmra.mrb[0].mxu0 %v2527
    %v2818 = vpop.f32.mrb[0].mxu0
    %v2819 = vadd.f32 0.0, %v2818
    %v2820 = vpop.f32.mrb[0].mxu0
    %2821 = vmatprep.mubr.f32.mxu0 0.0
    %2822 = vmatmul.mubr.f32.gmra.mrb[0].mxu0 %v2530
    %v2823 = vpop.f32.mrb[0].mxu0
    %v2824 = vadd.f32 0.0, %v2823
    %v2825 = vpop.f32.mrb[0].mxu0
    %2826 = vmatprep.mubr.f32.mxu0 0.0
    %2827 = vmatmul.mubr.f32.gmra.mrb[0].mxu0 %v2533
    %v2828 = vpop.f32.mrb[0].mxu0
    %v2829 = vadd.f32 0.0, %v2828
    %v2830 = vpop.f32.mrb[0].mxu0
    %2831 = vmatprep.mubr.f32.mxu0 0.0
    %2832 = vmatmul.mubr.f32.gmra.mrb[0].mxu0 %v2536
    %v2833 = vpop.f32.mrb[0].mxu0
    %v2834 = vadd.f32 0.0, %v2833
    %v2835 = vpop.f32.mrb[0].mxu0
    %2836 = vmatprep.mubr.f32.mxu0 0.0
    %2837 = vmatmul.mubr.f32.gmra.mrb[0].mxu0 %v2539
    %v2838 = vpop.f32.mrb[0].mxu0
    %v2839 = vadd.f32 0.0, %v2838
    %v2840 = vpop.f32.mrb[0].mxu0
    %2841 = vmatprep.mubr.f32.mxu0 0.0
    %2842 = vmatmul.mubr.f32.gmra.mrb[0].mxu0 %v2542
    %v2843 = vpop.f32.mrb[0].mxu0
    %v2844 = vadd.f32 0.0, %v2843
    %v2845 = vpop.f32.mrb[0].mxu0
    %2846 = vmatprep.mubr.f32.mxu0 0.0
    %2847 = vmatmul.mubr.f32.gmra.mrb[0].mxu0 %v2545
    %v2848 = vpop.f32.mrb[0].mxu0
    %v2849 = vadd.f32 0.0, %v2848
    %v2850 = vpop.f32.mrb[0].mxu0
    %2851 = vmatprep.mubr.f32.mxu0 0.0
    %2852 = vmatmul.mubr.f32.gmra.mrb[0].mxu0 %v2548
    %v2853 = vpop.f32.mrb[0].mxu0
    %v2854 = vadd.f32 0.0, %v2853
    %v2855 = vpop.f32.mrb[0].mxu0
    %2856 = vmatprep.mubr.f32.mxu0 0.0
    %2857 = vmatmul.mubr.f32.gmra.mrb[0].mxu0 %v2551
    %v2858 = vpop.f32.mrb[0].mxu0
    %v2859 = vadd.f32 0.0, %v2858
    %v2860 = vpop.f32.mrb[0].mxu0
    %2861 = vmatprep.mubr.f32.mxu0 0.0
    %2862 = vmatmul.mubr.f32.gmra.mrb[0].mxu0 %v2554
    %v2863 = vpop.f32.mrb[0].mxu0
    %v2864 = vadd.f32 0.0, %v2863
    %v2865 = vpop.f32.mrb[0].mxu0
    %2866 = vmatprep.mubr.f32.mxu0 0.0
    %2867 = vmatmul.mubr.f32.gmra.mrb[0].mxu0 %v2557
    %v2868 = vpop.f32.mrb[0].mxu0
    %v2869 = vadd.f32 0.0, %v2868
    %v2870 = vpop.f32.mrb[0].mxu0
    %2871 = vmatprep.mubr.f32.mxu0 0.0
    %2872 = vmatmul.mubr.f32.gmra.mrb[0].mxu0 %v2560
    %v2873 = vpop.f32.mrb[0].mxu0
    %v2874 = vadd.f32 0.0, %v2873
    %v2875 = vpop.f32.mrb[0].mxu0
    %2876 = vmatprep.mubr.f32.mxu0 0.0
    %2877 = vmatmul.mubr.f32.gmra.mrb[0].mxu0 %v2563
    %v2878 = vpop.f32.mrb[0].mxu0
    %v2879 = vadd.f32 0.0, %v2878
    %v2880 = vpop.f32.mrb[0].mxu0
    %2881 = vmatprep.mubr.f32.mxu0 0.0
    %2882 = vmatmul.mubr.f32.gmra.mrb[0].mxu0 %v2566
    %v2883 = vpop.f32.mrb[0].mxu0
    %v2884 = vadd.f32 0.0, %v2883
    %v2885 = vpop.f32.mrb[0].mxu0
    %2886 = vmatprep.mubr.f32.mxu0 0.0
    %2887 = vmatmul.mubr.f32.gmra.mrb[0].mxu0 %v2569
    %v2888 = vpop.f32.mrb[0].mxu0
    %v2889 = vadd.f32 0.0, %v2888
    %v2890 = vpop.f32.mrb[0].mxu0
    %2891 = vmatprep.mubr.f32.mxu0 0.0
    %2892 = vmatmul.mubr.f32.gmra.mrb[0].mxu0 %v2572
    %v2893 = vpop.f32.mrb[0].mxu0
    %v2894 = vadd.f32 0.0, %v2893
    %v2895 = vpop.f32.mrb[0].mxu0
    %2896 = vmatprep.mubr.f32.mxu0 0.0
    %2897 = vmatmul.mubr.f32.gmra.mrb[0].mxu0 %v2575
    %v2898 = vpop.f32.mrb[0].mxu0
    %v2899 = vadd.f32 0.0, %v2898
    %v2900 = vpop.f32.mrb[0].mxu0
    %2901 = vmatprep.mubr.f32.mxu0 0.0
    %2902 = vmatmul.mubr.f32.gmra.mrb[0].mxu0 %v2578
    %v2903 = vpop.f32.mrb[0].mxu0
    %v2904 = vadd.f32 0.0, %v2903
    %v2905 = vpop.f32.mrb[0].mxu0
    %2906 = vmatprep.mubr.f32.mxu0 0.0
    %2907 = vmatmul.mubr.f32.gmra.mrb[0].mxu0 %v2581
    %v2908 = vpop.f32.mrb[0].mxu0
    %v2909 = vadd.f32 0.0, %v2908
    %v2910 = vpop.f32.mrb[0].mxu0
    %2911 = vmatprep.mubr.f32.mxu0 0.0
    %2912 = vmatmul.mubr.f32.gmra.mrb[0].mxu0 %v2584
    %v2913 = vpop.f32.mrb[0].mxu0
    %v2914 = vadd.f32 0.0, %v2913
    %v2915 = vpop.f32.mrb[0].mxu0
    %2916 = vmatprep.mubr.f32.mxu0 0.0
    %2917 = vmatmul.mubr.f32.gmra.mrb[0].mxu0 %v2587
    %v2918 = vpop.f32.mrb[0].mxu0
    %v2919 = vadd.f32 0.0, %v2918
    %v2920 = vpop.f32.mrb[0].mxu0
    %2921 = vmatprep.mubr.f32.mxu0 0.0
    %2922 = vmatmul.mubr.f32.gmra.mrb[0].mxu0 %v2590
    %v2923 = vpop.f32.mrb[0].mxu0
    %v2924 = vadd.f32 0.0, %v2923
    %v2925 = vpop.f32.mrb[0].mxu0
    %2926 = vmatprep.mubr.f32.mxu0 0.0
    %2927 = vmatmul.mubr.f32.gmra.mrb[0].mxu0 %v2593
    %v2928 = vpop.f32.mrb[0].mxu0
    %v2929 = vadd.f32 0.0, %v2928
    %v2930 = vpop.f32.mrb[0].mxu0
    %2931 = vmatprep.mubr.f32.mxu0 0.0
    %2932 = vmatmul.mubr.f32.gmra.mrb[0].mxu0 %v2596
    %v2933 = vpop.f32.mrb[0].mxu0
    %v2934 = vadd.f32 0.0, %v2933
    %v2935 = vpop.f32.mrb[0].mxu0
    %2936 = vmatprep.mubr.f32.mxu0 0.0
    %2937 = vmatmul.mubr.f32.gmra.mrb[0].mxu0 %v2599
    %v2938 = vpop.f32.mrb[0].mxu0
    %v2939 = vadd.f32 0.0, %v2938
    %v2940 = vpop.f32.mrb[0].mxu0
    %2941 = vmatprep.mubr.f32.mxu0 0.0
    %2942 = vmatmul.mubr.f32.gmra.mrb[0].mxu0 %v2602
    %v2943 = vpop.f32.mrb[0].mxu0
    %v2944 = vadd.f32 0.0, %v2943
    %v2945 = vpop.f32.mrb[0].mxu0
    %2946 = vmatprep.mubr.f32.mxu0 0.0
    %2947 = vmatmul.mubr.f32.gmra.mrb[0].mxu0 %v2605
    %v2948 = vpop.f32.mrb[0].mxu0
    %v2949 = vadd.f32 0.0, %v2948
    %v2950 = vpop.f32.mrb[0].mxu0
    %2951 = vmatprep.mubr.f32.mxu0 0.0
    %2952 = vmatmul.mubr.f32.gmra.mrb[0].mxu0 %v2608
    %v2953 = vpop.f32.mrb[0].mxu0
    %v2954 = vadd.f32 0.0, %v2953
    %v2955 = vpop.f32.mrb[0].mxu0
    %2956 = vmatprep.mubr.f32.mxu0 0.0
    %2957 = vmatmul.mubr.f32.gmra.mrb[0].mxu0 %v2611
    %v2958 = vpop.f32.mrb[0].mxu0
    %v2959 = vadd.f32 0.0, %v2958
    %v2960 = vpop.f32.mrb[0].mxu0
    %2961 = vmatprep.mubr.f32.mxu0 0.0
    %2962 = vmatmul.mubr.f32.gmra.mrb[0].mxu0 %v2614
    %v2963 = vpop.f32.mrb[0].mxu0
    %v2964 = vadd.f32 0.0, %v2963
    %v2965 = vpop.f32.mrb[0].mxu0
    %2966 = vmatprep.mubr.f32.mxu0 0.0
    %2967 = vmatmul.mubr.f32.gmra.mrb[0].mxu0 %v2617
    %v2968 = vpop.f32.mrb[0].mxu0
    %v2969 = vadd.f32 0.0, %v2968
    %v2970 = vpop.f32.mrb[0].mxu0
    %2971 = vmatprep.mubr.f32.mxu0 0.0
    %2972 = vmatmul.mubr.f32.gmra.mrb[0].mxu0 %v2620
    %v2973 = vpop.f32.mrb[0].mxu0
    %v2974 = vadd.f32 0.0, %v2973
    %v2975 = vpop.f32.mrb[0].mxu0
    %2976 = vmatprep.mubr.f32.mxu0 0.0
    %2977 = vmatmul.mubr.f32.gmra.mrb[0].mxu0 %v2623
    %v2978 = vpop.f32.mrb[0].mxu0
    %v2979 = vadd.f32 0.0, %v2978
    %v2980 = vpop.f32.mrb[0].mxu0
    %2981 = vmatprep.mubr.f32.mxu0 0.0
    %2982 = vmatmul.mubr.f32.gmra.mrb[0].mxu0 %v2626
    %v2983 = vpop.f32.mrb[0].mxu0
    %v2984 = vadd.f32 0.0, %v2983
    %v2985 = vpop.f32.mrb[0].mxu0
    %2986 = vmatprep.mubr.f32.mxu0 0.0
    %2987 = vmatmul.mubr.f32.gmra.mrb[0].mxu0 %v2629
    %v2988 = vpop.f32.mrb[0].mxu0
    %v2989 = vadd.f32 0.0, %v2988
    %v2990 = vpop.f32.mrb[0].mxu0
    %2991 = vmatprep.mubr.f32.mxu0 0.0
    %2992 = vmatmul.mubr.f32.gmra.mrb[0].mxu0 %v2632
    %v2993 = vpop.f32.mrb[0].mxu0
    %v2994 = vadd.f32 0.0, %v2993
    %v2995 = vpop.f32.mrb[0].mxu0
    %2996 = vmatprep.mubr.f32.mxu0 0.0
    %2997 = vmatmul.mubr.f32.gmra.mrb[0].mxu0 %v2635
    %v2998 = vpop.f32.mrb[0].mxu0
    %v2999 = vadd.f32 0.0, %v2998
    %v3000 = vpop.f32.mrb[0].mxu0
    %3001 = vmatprep.mubr.f32.mxu0 0.0
    %3002 = vmatmul.mubr.f32.gmra.mrb[0].mxu0 %v2638
    %v3003 = vpop.f32.mrb[0].mxu0
    %v3004 = vadd.f32 0.0, %v3003
    %v3005 = vpop.f32.mrb[0].mxu0
    %3006 = vmatprep.mubr.f32.mxu0 0.0
    %3007 = vmatmul.mubr.f32.gmra.mrb[0].mxu0 %v2641
    %v3008 = vpop.f32.mrb[0].mxu0
    %v3009 = vadd.f32 0.0, %v3008
    %v3010 = vpop.f32.mrb[0].mxu0
    %3011 = vmatprep.mubr.f32.mxu0 0.0
    %3012 = vmatmul.mubr.f32.gmra.mrb[0].mxu0 %v2644
    %v3013 = vpop.f32.mrb[0].mxu0
    %v3014 = vadd.f32 0.0, %v3013
    %v3015 = vpop.f32.mrb[0].mxu0
    %3016 = vmatprep.mubr.f32.mxu0 0.0
    %3017 = vmatmul.mubr.f32.gmra.mrb[0].mxu0 %v2647
    %v3018 = vpop.f32.mrb[0].mxu0
    %v3019 = vadd.f32 0.0, %v3018
    %v3020 = vpop.f32.mrb[0].mxu0
    %3021 = vmatprep.mubr.f32.mxu0 0.0
    %3022 = vmatmul.mubr.f32.gmra.mrb[0].mxu0 %v2650
    %v3023 = vpop.f32.mrb[0].mxu0
    %v3024 = vadd.f32 0.0, %v3023
    %v3025 = vpop.f32.mrb[0].mxu0
    %3026 = vmatprep.mubr.f32.mxu0 0.0
    %3027 = vmatmul.mubr.f32.gmra.mrb[0].mxu0 %v2653
    %v3028 = vpop.f32.mrb[0].mxu0
    %v3029 = vadd.f32 0.0, %v3028
    %v3030 = vpop.f32.mrb[0].mxu0
    %3031 = vmatprep.mubr.f32.mxu0 0.0
    %3032 = vmatmul.mubr.f32.gmra.mrb[0].mxu0 %v2656
    %v3033 = vpop.f32.mrb[0].mxu0
    %v3034 = vadd.f32 0.0, %v3033
    %v3035 = vpop.f32.mrb[0].mxu0
    %3036 = vmatprep.mubr.f32.mxu0 0.0
    %3037 = vmatmul.mubr.f32.gmra.mrb[0].mxu0 %v2659
    %v3038 = vpop.f32.mrb[0].mxu0
    %v3039 = vadd.f32 0.0, %v3038
    %v3040 = vpop.f32.mrb[0].mxu0
    %3041 = vmatprep.mubr.f32.mxu0 0.0
    %3042 = vmatmul.mubr.f32.gmra.mrb[0].mxu0 %v2662
    %v3043 = vpop.f32.mrb[0].mxu0
    %v3044 = vadd.f32 0.0, %v3043
    %v3045 = vpop.f32.mrb[0].mxu0
    %3046 = vmatprep.mubr.f32.mxu0 0.0
    %3047 = vmatmul.mubr.f32.gmra.mrb[0].mxu0 %v2665
    %v3048 = vpop.f32.mrb[0].mxu0
    %v3049 = vadd.f32 0.0, %v3048
    %v3050 = vpop.f32.mrb[0].mxu0
    %3051 = vdwg.mxu0
    %v3052 = vld [vmem:[#allocation2] sm:$0xff]
    %v3053 = vld [vmem:[#allocation2 + $0x8] sm:$0xff]
    %v3054 = vld [vmem:[#allocation2 + $0x10] sm:$0xff]
    %v3055 = vld [vmem:[#allocation2 + $0x18] sm:$0xff]
    %v3056 = vld [vmem:[#allocation2 + $0x20] sm:$0xff]
    %v3057 = vld [vmem:[#allocation2 + $0x28] sm:$0xff]
    %v3058 = vld [vmem:[#allocation2 + $0x30] sm:$0xff]
    %v3059 = vld [vmem:[#allocation2 + $0x38] sm:$0xff]
    %v3060 = vld [vmem:[#allocation2 + $0x40] sm:$0xff]
    %v3061 = vld [vmem:[#allocation2 + $0x48] sm:$0xff]
    %v3062 = vld [vmem:[#allocation2 + $0x50] sm:$0xff]
    %v3063 = vld [vmem:[#allocation2 + $0x58] sm:$0xff]
    %v3064 = vld [vmem:[#allocation2 + $0x60] sm:$0xff]
    %v3065 = vld [vmem:[#allocation2 + $0x68] sm:$0xff]
    %v3066 = vld [vmem:[#allocation2 + $0x70] sm:$0xff]
    %v3067 = vld [vmem:[#allocation2 + $0x78] sm:$0xff]
    %v3068 = vld [vmem:[#allocation2 + $0x80] sm:$0xff]
    %v3069 = vld [vmem:[#allocation2 + $0x88] sm:$0xff]
    %v3070 = vld [vmem:[#allocation2 + $0x90] sm:$0xff]
    %v3071 = vld [vmem:[#allocation2 + $0x98] sm:$0xff]
    %v3072 = vld [vmem:[#allocation2 + $0xa0] sm:$0xff]
    %v3073 = vld [vmem:[#allocation2 + $0xa8] sm:$0xff]
    %v3074 = vld [vmem:[#allocation2 + $0xb0] sm:$0xff]
    %v3075 = vld [vmem:[#allocation2 + $0xb8] sm:$0xff]
    %v3076 = vld [vmem:[#allocation2 + $0xc0] sm:$0xff]
    %v3077 = vld [vmem:[#allocation2 + $0xc8] sm:$0xff]
    %v3078 = vld [vmem:[#allocation2 + $0xd0] sm:$0xff]
    %v3079 = vld [vmem:[#allocation2 + $0xd8] sm:$0xff]
    %v3080 = vld [vmem:[#allocation2 + $0xe0] sm:$0xff]
    %v3081 = vld [vmem:[#allocation2 + $0xe8] sm:$0xff]
    %v3082 = vld [vmem:[#allocation2 + $0xf0] sm:$0xff]
    %v3083 = vld [vmem:[#allocation2 + $0xf8] sm:$0xff]
    %v3084 = vld [vmem:[#allocation2 + $0x100] sm:$0xff]
    %v3085 = vld [vmem:[#allocation2 + $0x108] sm:$0xff]
    %v3086 = vld [vmem:[#allocation2 + $0x110] sm:$0xff]
    %v3087 = vld [vmem:[#allocation2 + $0x118] sm:$0xff]
    %v3088 = vld [vmem:[#allocation2 + $0x120] sm:$0xff]
    %v3089 = vld [vmem:[#allocation2 + $0x128] sm:$0xff]
    %v3090 = vld [vmem:[#allocation2 + $0x130] sm:$0xff]
    %v3091 = vld [vmem:[#allocation2 + $0x138] sm:$0xff]
    %v3092 = vld [vmem:[#allocation2 + $0x140] sm:$0xff]
    %v3093 = vld [vmem:[#allocation2 + $0x148] sm:$0xff]
    %v3094 = vld [vmem:[#allocation2 + $0x150] sm:$0xff]
    %v3095 = vld [vmem:[#allocation2 + $0x158] sm:$0xff]
    %v3096 = vld [vmem:[#allocation2 + $0x160] sm:$0xff]
    %v3097 = vld [vmem:[#allocation2 + $0x168] sm:$0xff]
    %v3098 = vld [vmem:[#allocation2 + $0x170] sm:$0xff]
    %v3099 = vld [vmem:[#allocation2 + $0x178] sm:$0xff]
    %v3100 = vld [vmem:[#allocation2 + $0x180] sm:$0xff]
    %v3101 = vld [vmem:[#allocation2 + $0x188] sm:$0xff]
    %v3102 = vld [vmem:[#allocation2 + $0x190] sm:$0xff]
    %v3103 = vld [vmem:[#allocation2 + $0x198] sm:$0xff]
    %v3104 = vld [vmem:[#allocation2 + $0x1a0] sm:$0xff]
    %v3105 = vld [vmem:[#allocation2 + $0x1a8] sm:$0xff]
    %v3106 = vld [vmem:[#allocation2 + $0x1b0] sm:$0xff]
    %v3107 = vld [vmem:[#allocation2 + $0x1b8] sm:$0xff]
    %v3108 = vld [vmem:[#allocation2 + $0x1c0] sm:$0xff]
    %v3109 = vld [vmem:[#allocation2 + $0x1c8] sm:$0xff]
    %v3110 = vld [vmem:[#allocation2 + $0x1d0] sm:$0xff]
    %v3111 = vld [vmem:[#allocation2 + $0x1d8] sm:$0xff]
    %v3112 = vld [vmem:[#allocation2 + $0x1e0] sm:$0xff]
    %v3113 = vld [vmem:[#allocation2 + $0x1e8] sm:$0xff]
    %v3114 = vld [vmem:[#allocation2 + $0x1f0] sm:$0xff]
    %v3115 = vld [vmem:[#allocation2 + $0x1f8] sm:$0xff]
    %v3116 = vadd.f32 %v3052, %v2734
    %v3117 = vadd.f32 %v3053, %v2739
    %v3118 = vadd.f32 %v3054, %v2744
    %v3119 = vadd.f32 %v3055, %v2749
    %v3120 = vadd.f32 %v3056, %v2754
    %v3121 = vadd.f32 %v3057, %v2759
    %v3122 = vadd.f32 %v3058, %v2764
    %v3123 = vadd.f32 %v3059, %v2769
    %v3124 = vadd.f32 %v3060, %v2774
    %v3125 = vadd.f32 %v3061, %v2779
    %v3126 = vadd.f32 %v3062, %v2784
    %v3127 = vadd.f32 %v3063, %v2789
    %v3128 = vadd.f32 %v3064, %v2794
    %v3129 = vadd.f32 %v3065, %v2799
    %v3130 = vadd.f32 %v3066, %v2804
    %v3131 = vadd.f32 %v3067, %v2809
    %v3132 = vadd.f32 %v3068, %v2814
    %v3133 = vadd.f32 %v3069, %v2819
    %v3134 = vadd.f32 %v3070, %v2824
    %v3135 = vadd.f32 %v3071, %v2829
    %v3136 = vadd.f32 %v3072, %v2834
    %v3137 = vadd.f32 %v3073, %v2839
    %v3138 = vadd.f32 %v3074, %v2844
    %v3139 = vadd.f32 %v3075, %v2849
    %v3140 = vadd.f32 %v3076, %v2854
    %v3141 = vadd.f32 %v3077, %v2859
    %v3142 = vadd.f32 %v3078, %v2864
    %v3143 = vadd.f32 %v3079, %v2869
    %v3144 = vadd.f32 %v3080, %v2874
    %v3145 = vadd.f32 %v3081, %v2879
    %v3146 = vadd.f32 %v3082, %v2884
    %v3147 = vadd.f32 %v3083, %v2889
    %v3148 = vadd.f32 %v3084, %v2894
    %v3149 = vadd.f32 %v3085, %v2899
    %v3150 = vadd.f32 %v3086, %v2904
    %v3151 = vadd.f32 %v3087, %v2909
    %v3152 = vadd.f32 %v3088, %v2914
    %v3153 = vadd.f32 %v3089, %v2919
    %v3154 = vadd.f32 %v3090, %v2924
    %v3155 = vadd.f32 %v3091, %v2929
    %v3156 = vadd.f32 %v3092, %v2934
    %v3157 = vadd.f32 %v3093, %v2939
    %v3158 = vadd.f32 %v3094, %v2944
    %v3159 = vadd.f32 %v3095, %v2949
    %v3160 = vadd.f32 %v3096, %v2954
    %v3161 = vadd.f32 %v3097, %v2959
    %v3162 = vadd.f32 %v3098, %v2964
    %v3163 = vadd.f32 %v3099, %v2969
    %v3164 = vadd.f32 %v3100, %v2974
    %v3165 = vadd.f32 %v3101, %v2979
    %v3166 = vadd.f32 %v3102, %v2984
    %v3167 = vadd.f32 %v3103, %v2989
    %v3168 = vadd.f32 %v3104, %v2994
    %v3169 = vadd.f32 %v3105, %v2999
    %v3170 = vadd.f32 %v3106, %v3004
    %v3171 = vadd.f32 %v3107, %v3009
    %v3172 = vadd.f32 %v3108, %v3014
    %v3173 = vadd.f32 %v3109, %v3019
    %v3174 = vadd.f32 %v3110, %v3024
    %v3175 = vadd.f32 %v3111, %v3029
    %v3176 = vadd.f32 %v3112, %v3034
    %v3177 = vadd.f32 %v3113, %v3039
    %v3178 = vadd.f32 %v3114, %v3044
    %v3179 = vadd.f32 %v3115, %v3049
    %3180 = vst.msk [vmem:[#allocation2] sm:$0xff] %vm95, %v3116
    %3181 = vst.msk [vmem:[#allocation2 + $0x8] sm:$0xff] %vm95, %v3117
    %3182 = vst.msk [vmem:[#allocation2 + $0x10] sm:$0xff] %vm95, %v3118
    %3183 = vst.msk [vmem:[#allocation2 + $0x18] sm:$0xff] %vm95, %v3119
    %3184 = vst.msk [vmem:[#allocation2 + $0x20] sm:$0xff] %vm95, %v3120
    %3185 = vst.msk [vmem:[#allocation2 + $0x28] sm:$0xff] %vm95, %v3121
    %3186 = vst.msk [vmem:[#allocation2 + $0x30] sm:$0xff] %vm95, %v3122
    %3187 = vst.msk [vmem:[#allocation2 + $0x38] sm:$0xff] %vm95, %v3123
    %3188 = vst.msk [vmem:[#allocation2 + $0x40] sm:$0xff] %vm95, %v3124
    %3189 = vst.msk [vmem:[#allocation2 + $0x48] sm:$0xff] %vm95, %v3125
    %3190 = vst.msk [vmem:[#allocation2 + $0x50] sm:$0xff] %vm95, %v3126
    %3191 = vst.msk [vmem:[#allocation2 + $0x58] sm:$0xff] %vm95, %v3127
    %3192 = vst.msk [vmem:[#allocation2 + $0x60] sm:$0xff] %vm95, %v3128
    %3193 = vst.msk [vmem:[#allocation2 + $0x68] sm:$0xff] %vm95, %v3129
    %3194 = vst.msk [vmem:[#allocation2 + $0x70] sm:$0xff] %vm95, %v3130
    %3195 = vst.msk [vmem:[#allocation2 + $0x78] sm:$0xff] %vm95, %v3131
    %3196 = vst.msk [vmem:[#allocation2 + $0x80] sm:$0xff] %vm95, %v3132
    %3197 = vst.msk [vmem:[#allocation2 + $0x88] sm:$0xff] %vm95, %v3133
    %3198 = vst.msk [vmem:[#allocation2 + $0x90] sm:$0xff] %vm95, %v3134
    %3199 = vst.msk [vmem:[#allocation2 + $0x98] sm:$0xff] %vm95, %v3135
    %3200 = vst.msk [vmem:[#allocation2 + $0xa0] sm:$0xff] %vm95, %v3136
    %3201 = vst.msk [vmem:[#allocation2 + $0xa8] sm:$0xff] %vm95, %v3137
    %3202 = vst.msk [vmem:[#allocation2 + $0xb0] sm:$0xff] %vm95, %v3138
    %3203 = vst.msk [vmem:[#allocation2 + $0xb8] sm:$0xff] %vm95, %v3139
    %3204 = vst.msk [vmem:[#allocation2 + $0xc0] sm:$0xff] %vm95, %v3140
    %3205 = vst.msk [vmem:[#allocation2 + $0xc8] sm:$0xff] %vm95, %v3141
    %3206 = vst.msk [vmem:[#allocation2 + $0xd0] sm:$0xff] %vm95, %v3142
    %3207 = vst.msk [vmem:[#allocation2 + $0xd8] sm:$0xff] %vm95, %v3143
    %3208 = vst.msk [vmem:[#allocation2 + $0xe0] sm:$0xff] %vm95, %v3144
    %3209 = vst.msk [vmem:[#allocation2 + $0xe8] sm:$0xff] %vm95, %v3145
    %3210 = vst.msk [vmem:[#allocation2 + $0xf0] sm:$0xff] %vm95, %v3146
    %3211 = vst.msk [vmem:[#allocation2 + $0xf8] sm:$0xff] %vm95, %v3147
    %3212 = vst.msk [vmem:[#allocation2 + $0x100] sm:$0xff] %vm95, %v3148
    %3213 = vst.msk [vmem:[#allocation2 + $0x108] sm:$0xff] %vm95, %v3149
    %3214 = vst.msk [vmem:[#allocation2 + $0x110] sm:$0xff] %vm95, %v3150
    %3215 = vst.msk [vmem:[#allocation2 + $0x118] sm:$0xff] %vm95, %v3151
    %3216 = vst.msk [vmem:[#allocation2 + $0x120] sm:$0xff] %vm95, %v3152
    %3217 = vst.msk [vmem:[#allocation2 + $0x128] sm:$0xff] %vm95, %v3153
    %3218 = vst.msk [vmem:[#allocation2 + $0x130] sm:$0xff] %vm95, %v3154
    %3219 = vst.msk [vmem:[#allocation2 + $0x138] sm:$0xff] %vm95, %v3155
    %3220 = vst.msk [vmem:[#allocation2 + $0x140] sm:$0xff] %vm95, %v3156
    %3221 = vst.msk [vmem:[#allocation2 + $0x148] sm:$0xff] %vm95, %v3157
    %3222 = vst.msk [vmem:[#allocation2 + $0x150] sm:$0xff] %vm95, %v3158
    %3223 = vst.msk [vmem:[#allocation2 + $0x158] sm:$0xff] %vm95, %v3159
    %3224 = vst.msk [vmem:[#allocation2 + $0x160] sm:$0xff] %vm95, %v3160
    %3225 = vst.msk [vmem:[#allocation2 + $0x168] sm:$0xff] %vm95, %v3161
    %3226 = vst.msk [vmem:[#allocation2 + $0x170] sm:$0xff] %vm95, %v3162
    %3227 = vst.msk [vmem:[#allocation2 + $0x178] sm:$0xff] %vm95, %v3163
    %3228 = vst.msk [vmem:[#allocation2 + $0x180] sm:$0xff] %vm95, %v3164
    %3229 = vst.msk [vmem:[#allocation2 + $0x188] sm:$0xff] %vm95, %v3165
    %3230 = vst.msk [vmem:[#allocation2 + $0x190] sm:$0xff] %vm95, %v3166
    %3231 = vst.msk [vmem:[#allocation2 + $0x198] sm:$0xff] %vm95, %v3167
    %3232 = vst.msk [vmem:[#allocation2 + $0x1a0] sm:$0xff] %vm95, %v3168
    %3233 = vst.msk [vmem:[#allocation2 + $0x1a8] sm:$0xff] %vm95, %v3169
    %3234 = vst.msk [vmem:[#allocation2 + $0x1b0] sm:$0xff] %vm95, %v3170
    %3235 = vst.msk [vmem:[#allocation2 + $0x1b8] sm:$0xff] %vm95, %v3171
    %3236 = vst.msk [vmem:[#allocation2 + $0x1c0] sm:$0xff] %vm95, %v3172
    %3237 = vst.msk [vmem:[#allocation2 + $0x1c8] sm:$0xff] %vm95, %v3173
    %3238 = vst.msk [vmem:[#allocation2 + $0x1d0] sm:$0xff] %vm95, %v3174
    %3239 = vst.msk [vmem:[#allocation2 + $0x1d8] sm:$0xff] %vm95, %v3175
    %3240 = vst.msk [vmem:[#allocation2 + $0x1e0] sm:$0xff] %vm95, %v3176
    %3241 = vst.msk [vmem:[#allocation2 + $0x1e8] sm:$0xff] %vm95, %v3177
    %3242 = vst.msk [vmem:[#allocation2 + $0x1f0] sm:$0xff] %vm95, %v3178
    %3243 = vst.msk [vmem:[#allocation2 + $0x1f8] sm:$0xff] %vm95, %v3179
    %v3244 = vld [vmem:[%s737 + $0x1] sm:$0xff]
    %v3245 = vld [vmem:[%s737 + $0x9] sm:$0xff]
    %v3246 = vld [vmem:[%s737 + $0x19] sm:$0xff]
    %v3247 = vld [vmem:[%s737 + $0x21] sm:$0xff]
    %v3248 = vld [vmem:[%s737 + $0x31] sm:$0xff]
    %v3249 = vld [vmem:[%s737 + $0x39] sm:$0xff]
    %v3250 = vld [vmem:[%s737 + $0x49] sm:$0xff]
    %v3251 = vld [vmem:[%s737 + $0x51] sm:$0xff]
    %v3252 = vld [vmem:[%s737 + $0x61] sm:$0xff]
    %v3253 = vld [vmem:[%s737 + $0x69] sm:$0xff]
    %v3254 = vld [vmem:[%s737 + $0x79] sm:$0xff]
    %v3255 = vld [vmem:[%s737 + $0x81] sm:$0xff]
    %v3256 = vld [vmem:[%s737 + $0x91] sm:$0xff]
    %v3257 = vld [vmem:[%s737 + $0x99] sm:$0xff]
    %v3258 = vld [vmem:[%s737 + $0xa9] sm:$0xff]
    %v3259 = vld [vmem:[%s737 + $0xb1] sm:$0xff]
    %v3260 = vld [vmem:[%s737 + $0xc1] sm:$0xff]
    %v3261 = vld [vmem:[%s737 + $0xc9] sm:$0xff]
    %v3262 = vld [vmem:[%s737 + $0xd9] sm:$0xff]
    %v3263 = vld [vmem:[%s737 + $0xe1] sm:$0xff]
    %v3264 = vld [vmem:[%s737 + $0xf1] sm:$0xff]
    %v3265 = vld [vmem:[%s737 + $0xf9] sm:$0xff]
    %v3266 = vld [vmem:[%s737 + $0x109] sm:$0xff]
    %v3267 = vld [vmem:[%s737 + $0x111] sm:$0xff]
    %v3268 = vld [vmem:[%s737 + $0x121] sm:$0xff]
    %v3269 = vld [vmem:[%s737 + $0x129] sm:$0xff]
    %v3270 = vld [vmem:[%s737 + $0x139] sm:$0xff]
    %v3271 = vld [vmem:[%s737 + $0x141] sm:$0xff]
    %v3272 = vld [vmem:[%s737 + $0x151] sm:$0xff]
    %v3273 = vld [vmem:[%s737 + $0x159] sm:$0xff]
    %v3274 = vld [vmem:[%s737 + $0x169] sm:$0xff]
    %v3275 = vld [vmem:[%s737 + $0x171] sm:$0xff]
    %v3276 = vld [vmem:[%s737 + $0x1b1] sm:$0xff]
    %v3277 = vld [vmem:[%s737 + $0x1b9] sm:$0xff]
    %v3278 = vld [vmem:[%s737 + $0x1c9] sm:$0xff]
    %v3279 = vld [vmem:[%s737 + $0x1d1] sm:$0xff]
    %v3280 = vld [vmem:[%s737 + $0x1e1] sm:$0xff]
    %v3281 = vld [vmem:[%s737 + $0x1e9] sm:$0xff]
    %v3282 = vld [vmem:[%s737 + $0x1f9] sm:$0xff]
    %v3283 = vld [vmem:[%s737 + $0x201] sm:$0xff]
    %v3284 = vld [vmem:[%s737 + $0x211] sm:$0xff]
    %v3285 = vld [vmem:[%s737 + $0x219] sm:$0xff]
    %v3286 = vld [vmem:[%s737 + $0x229] sm:$0xff]
    %v3287 = vld [vmem:[%s737 + $0x231] sm:$0xff]
    %v3288 = vld [vmem:[%s737 + $0x241] sm:$0xff]
    %v3289 = vld [vmem:[%s737 + $0x249] sm:$0xff]
    %v3290 = vld [vmem:[%s737 + $0x259] sm:$0xff]
    %v3291 = vld [vmem:[%s737 + $0x261] sm:$0xff]
    %v3292 = vld [vmem:[%s737 + $0x271] sm:$0xff]
    %v3293 = vld [vmem:[%s737 + $0x279] sm:$0xff]
    %v3294 = vld [vmem:[%s737 + $0x289] sm:$0xff]
    %v3295 = vld [vmem:[%s737 + $0x291] sm:$0xff]
    %v3296 = vld [vmem:[%s737 + $0x2a1] sm:$0xff]
    %v3297 = vld [vmem:[%s737 + $0x2a9] sm:$0xff]
    %v3298 = vld [vmem:[%s737 + $0x2b9] sm:$0xff]
    %v3299 = vld [vmem:[%s737 + $0x2c1] sm:$0xff]
    %v3300 = vld [vmem:[%s737 + $0x2d1] sm:$0xff]
    %v3301 = vld [vmem:[%s737 + $0x2d9] sm:$0xff]
    %v3302 = vld [vmem:[%s737 + $0x2e9] sm:$0xff]
    %v3303 = vld [vmem:[%s737 + $0x2f1] sm:$0xff]
    %v3304 = vld [vmem:[%s737 + $0x301] sm:$0xff]
    %v3305 = vld [vmem:[%s737 + $0x309] sm:$0xff]
    %v3306 = vld [vmem:[%s737 + $0x319] sm:$0xff]
    %v3307 = vld [vmem:[%s737 + $0x321] sm:$0xff]
    %s3308 = scalar_lea.vmem %s1, 32
    %v3309 = vld [vmem:[%s3308] sm:$0xff]
    %v3311 = vsel %vm95, %v3244, 0
    %v3314 = vsel %vm95, %v3245, 0
    %v3317 = vsel %vm95, %v3246, 0
    %v3320 = vsel %vm95, %v3247, 0
    %v3323 = vsel %vm95, %v3248, 0
    %v3326 = vsel %vm95, %v3249, 0
    %v3329 = vsel %vm95, %v3250, 0
    %v3332 = vsel %vm95, %v3251, 0
    %v3335 = vsel %vm95, %v3252, 0
    %v3338 = vsel %vm95, %v3253, 0
    %v3341 = vsel %vm95, %v3254, 0
    %v3344 = vsel %vm95, %v3255, 0
    %v3347 = vsel %vm95, %v3256, 0
    %v3350 = vsel %vm95, %v3257, 0
    %v3353 = vsel %vm95, %v3258, 0
    %v3356 = vsel %vm95, %v3259, 0
    %v3359 = vsel %vm95, %v3260, 0
    %v3362 = vsel %vm95, %v3261, 0
    %v3365 = vsel %vm95, %v3262, 0
    %v3368 = vsel %vm95, %v3263, 0
    %v3371 = vsel %vm95, %v3264, 0
    %v3374 = vsel %vm95, %v3265, 0
    %v3377 = vsel %vm95, %v3266, 0
    %v3380 = vsel %vm95, %v3267, 0
    %v3383 = vsel %vm95, %v3268, 0
    %v3386 = vsel %vm95, %v3269, 0
    %v3389 = vsel %vm95, %v3270, 0
    %v3392 = vsel %vm95, %v3271, 0
    %v3395 = vsel %vm95, %v3272, 0
    %v3398 = vsel %vm95, %v3273, 0
    %v3401 = vsel %vm95, %v3274, 0
    %v3404 = vsel %vm95, %v3275, 0
    %v3407 = vsel %vm95, %v3276, 0
    %v3410 = vsel %vm95, %v3277, 0
    %v3413 = vsel %vm95, %v3278, 0
    %v3416 = vsel %vm95, %v3279, 0
    %v3419 = vsel %vm95, %v3280, 0
    %v3422 = vsel %vm95, %v3281, 0
    %v3425 = vsel %vm95, %v3282, 0
    %v3428 = vsel %vm95, %v3283, 0
    %v3431 = vsel %vm95, %v3284, 0
    %v3434 = vsel %vm95, %v3285, 0
    %v3437 = vsel %vm95, %v3286, 0
    %v3440 = vsel %vm95, %v3287, 0
    %v3443 = vsel %vm95, %v3288, 0
    %v3446 = vsel %vm95, %v3289, 0
    %v3449 = vsel %vm95, %v3290, 0
    %v3452 = vsel %vm95, %v3291, 0
    %v3455 = vsel %vm95, %v3292, 0
    %v3458 = vsel %vm95, %v3293, 0
    %v3461 = vsel %vm95, %v3294, 0
    %v3464 = vsel %vm95, %v3295, 0
    %v3467 = vsel %vm95, %v3296, 0
    %v3470 = vsel %vm95, %v3297, 0
    %v3473 = vsel %vm95, %v3298, 0
    %v3476 = vsel %vm95, %v3299, 0
    %v3479 = vsel %vm95, %v3300, 0
    %v3482 = vsel %vm95, %v3301, 0
    %v3485 = vsel %vm95, %v3302, 0
    %v3488 = vsel %vm95, %v3303, 0
    %v3491 = vsel %vm95, %v3304, 0
    %v3494 = vsel %vm95, %v3305, 0
    %v3497 = vsel %vm95, %v3306, 0
    %v3500 = vsel %vm95, %v3307, 0
    %3502 = vmatprep.subr.mxu0 0.0
    %3503 = vmatpush1.msra.mxu0 %v3309
    %3504 = vmatprep.subr.mxu0 0.0
    %3505 = vmatpush1.msra.mxu0 0.0
    %3506 = vmatprep.subr.mxu0 0.0
    %3507 = vmatpush1.msra.mxu0 0.0
    %3508 = vmatprep.subr.mxu0 0.0
    %3509 = vmatpush1.msra.mxu0 0.0
    %3510 = vmatprep.subr.mxu0 0.0
    %3511 = vmatpush1.msra.mxu0 0.0
    %3512 = vmatprep.subr.mxu0 0.0
    %3513 = vmatpush1.msra.mxu0 0.0
    %3514 = vmatprep.subr.mxu0 0.0
    %3515 = vmatpush1.msra.mxu0 0.0
    %3516 = vmatprep.subr.mxu0 0.0
    %3517 = vmatpush1.msra.mxu0 0.0
    %3518 = vmatprep.subr.mxu0 0.0
    %3519 = vmatpush1.msra.mxu0 0.0
    %3520 = vmatprep.subr.mxu0 0.0
    %3521 = vmatpush1.msra.mxu0 0.0
    %3522 = vmatprep.subr.mxu0 0.0
    %3523 = vmatpush1.msra.mxu0 0.0
    %3524 = vmatprep.subr.mxu0 0.0
    %3525 = vmatpush1.msra.mxu0 0.0
    %3526 = vmatprep.subr.mxu0 0.0
    %3527 = vmatpush1.msra.mxu0 0.0
    %3528 = vmatprep.subr.mxu0 0.0
    %3529 = vmatpush1.msra.mxu0 0.0
    %3530 = vmatprep.subr.mxu0 0.0
    %3531 = vmatpush1.msra.mxu0 0.0
    %3532 = vmatprep.subr.mxu0 0.0
    %3533 = vmatpush1.msra.mxu0 0.0
    %3534 = vmatprep.subr.mxu0 0.0
    %3535 = vmatpush1.msra.mxu0 0.0
    %3536 = vmatprep.subr.mxu0 0.0
    %3537 = vmatpush1.msra.mxu0 0.0
    %3538 = vmatprep.subr.mxu0 0.0
    %3539 = vmatpush1.msra.mxu0 0.0
    %3540 = vmatprep.subr.mxu0 0.0
    %3541 = vmatpush1.msra.mxu0 0.0
    %3542 = vmatprep.subr.mxu0 0.0
    %3543 = vmatpush1.msra.mxu0 0.0
    %3544 = vmatprep.subr.mxu0 0.0
    %3545 = vmatpush1.msra.mxu0 0.0
    %3546 = vmatprep.subr.mxu0 0.0
    %3547 = vmatpush1.msra.mxu0 0.0
    %3548 = vmatprep.subr.mxu0 0.0
    %3549 = vmatpush1.msra.mxu0 0.0
    %3550 = vmatprep.subr.mxu0 0.0
    %3551 = vmatpush1.msra.mxu0 0.0
    %3552 = vmatprep.subr.mxu0 0.0
    %3553 = vmatpush1.msra.mxu0 0.0
    %3554 = vmatprep.subr.mxu0 0.0
    %3555 = vmatpush1.msra.mxu0 0.0
    %3556 = vmatprep.subr.mxu0 0.0
    %3557 = vmatpush1.msra.mxu0 0.0
    %3558 = vmatprep.subr.mxu0 0.0
    %3559 = vmatpush1.msra.mxu0 0.0
    %3560 = vmatprep.subr.mxu0 0.0
    %3561 = vmatpush1.msra.mxu0 0.0
    %3562 = vmatprep.subr.mxu0 0.0
    %3563 = vmatpush1.msra.mxu0 0.0
    %3564 = vmatprep.subr.mxu0 0.0
    %3565 = vmatpush1.msra.mxu0 0.0
    %3566 = vmatprep.mubr.f32.mxu0 0.0
    %3567 = vmatmul.mubr.f32.gmra.mrb[0].mxu0 %v3311
    %v3568 = vpop.f32.mrb[0].mxu0
    %v3569 = vadd.f32 0.0, %v3568
    %v3570 = vpop.f32.mrb[0].mxu0
    %3571 = vmatprep.mubr.f32.mxu0 0.0
    %3572 = vmatmul.mubr.f32.gmra.mrb[0].mxu0 %v3314
    %v3573 = vpop.f32.mrb[0].mxu0
    %v3574 = vadd.f32 0.0, %v3573
    %v3575 = vpop.f32.mrb[0].mxu0
    %3576 = vmatprep.mubr.f32.mxu0 0.0
    %3577 = vmatmul.mubr.f32.gmra.mrb[0].mxu0 %v3317
    %v3578 = vpop.f32.mrb[0].mxu0
    %v3579 = vadd.f32 0.0, %v3578
    %v3580 = vpop.f32.mrb[0].mxu0
    %3581 = vmatprep.mubr.f32.mxu0 0.0
    %3582 = vmatmul.mubr.f32.gmra.mrb[0].mxu0 %v3320
    %v3583 = vpop.f32.mrb[0].mxu0
    %v3584 = vadd.f32 0.0, %v3583
    %v3585 = vpop.f32.mrb[0].mxu0
    %3586 = vmatprep.mubr.f32.mxu0 0.0
    %3587 = vmatmul.mubr.f32.gmra.mrb[0].mxu0 %v3323
    %v3588 = vpop.f32.mrb[0].mxu0
    %v3589 = vadd.f32 0.0, %v3588
    %v3590 = vpop.f32.mrb[0].mxu0
    %3591 = vmatprep.mubr.f32.mxu0 0.0
    %3592 = vmatmul.mubr.f32.gmra.mrb[0].mxu0 %v3326
    %v3593 = vpop.f32.mrb[0].mxu0
    %v3594 = vadd.f32 0.0, %v3593
    %v3595 = vpop.f32.mrb[0].mxu0
    %3596 = vmatprep.mubr.f32.mxu0 0.0
    %3597 = vmatmul.mubr.f32.gmra.mrb[0].mxu0 %v3329
    %v3598 = vpop.f32.mrb[0].mxu0
    %v3599 = vadd.f32 0.0, %v3598
    %v3600 = vpop.f32.mrb[0].mxu0
    %3601 = vmatprep.mubr.f32.mxu0 0.0
    %3602 = vmatmul.mubr.f32.gmra.mrb[0].mxu0 %v3332
    %v3603 = vpop.f32.mrb[0].mxu0
    %v3604 = vadd.f32 0.0, %v3603
    %v3605 = vpop.f32.mrb[0].mxu0
    %3606 = vmatprep.mubr.f32.mxu0 0.0
    %3607 = vmatmul.mubr.f32.gmra.mrb[0].mxu0 %v3335
    %v3608 = vpop.f32.mrb[0].mxu0
    %v3609 = vadd.f32 0.0, %v3608
    %v3610 = vpop.f32.mrb[0].mxu0
    %3611 = vmatprep.mubr.f32.mxu0 0.0
    %3612 = vmatmul.mubr.f32.gmra.mrb[0].mxu0 %v3338
    %v3613 = vpop.f32.mrb[0].mxu0
    %v3614 = vadd.f32 0.0, %v3613
    %v3615 = vpop.f32.mrb[0].mxu0
    %3616 = vmatprep.mubr.f32.mxu0 0.0
    %3617 = vmatmul.mubr.f32.gmra.mrb[0].mxu0 %v3341
    %v3618 = vpop.f32.mrb[0].mxu0
    %v3619 = vadd.f32 0.0, %v3618
    %v3620 = vpop.f32.mrb[0].mxu0
    %3621 = vmatprep.mubr.f32.mxu0 0.0
    %3622 = vmatmul.mubr.f32.gmra.mrb[0].mxu0 %v3344
    %v3623 = vpop.f32.mrb[0].mxu0
    %v3624 = vadd.f32 0.0, %v3623
    %v3625 = vpop.f32.mrb[0].mxu0
    %3626 = vmatprep.mubr.f32.mxu0 0.0
    %3627 = vmatmul.mubr.f32.gmra.mrb[0].mxu0 %v3347
    %v3628 = vpop.f32.mrb[0].mxu0
    %v3629 = vadd.f32 0.0, %v3628
    %v3630 = vpop.f32.mrb[0].mxu0
    %3631 = vmatprep.mubr.f32.mxu0 0.0
    %3632 = vmatmul.mubr.f32.gmra.mrb[0].mxu0 %v3350
    %v3633 = vpop.f32.mrb[0].mxu0
    %v3634 = vadd.f32 0.0, %v3633
    %v3635 = vpop.f32.mrb[0].mxu0
    %3636 = vmatprep.mubr.f32.mxu0 0.0
    %3637 = vmatmul.mubr.f32.gmra.mrb[0].mxu0 %v3353
    %v3638 = vpop.f32.mrb[0].mxu0
    %v3639 = vadd.f32 0.0, %v3638
    %v3640 = vpop.f32.mrb[0].mxu0
    %3641 = vmatprep.mubr.f32.mxu0 0.0
    %3642 = vmatmul.mubr.f32.gmra.mrb[0].mxu0 %v3356
    %v3643 = vpop.f32.mrb[0].mxu0
    %v3644 = vadd.f32 0.0, %v3643
    %v3645 = vpop.f32.mrb[0].mxu0
    %3646 = vmatprep.mubr.f32.mxu0 0.0
    %3647 = vmatmul.mubr.f32.gmra.mrb[0].mxu0 %v3359
    %v3648 = vpop.f32.mrb[0].mxu0
    %v3649 = vadd.f32 0.0, %v3648
    %v3650 = vpop.f32.mrb[0].mxu0
    %3651 = vmatprep.mubr.f32.mxu0 0.0
    %3652 = vmatmul.mubr.f32.gmra.mrb[0].mxu0 %v3362
    %v3653 = vpop.f32.mrb[0].mxu0
    %v3654 = vadd.f32 0.0, %v3653
    %v3655 = vpop.f32.mrb[0].mxu0
    %3656 = vmatprep.mubr.f32.mxu0 0.0
    %3657 = vmatmul.mubr.f32.gmra.mrb[0].mxu0 %v3365
    %v3658 = vpop.f32.mrb[0].mxu0
    %v3659 = vadd.f32 0.0, %v3658
    %v3660 = vpop.f32.mrb[0].mxu0
    %3661 = vmatprep.mubr.f32.mxu0 0.0
    %3662 = vmatmul.mubr.f32.gmra.mrb[0].mxu0 %v3368
    %v3663 = vpop.f32.mrb[0].mxu0
    %v3664 = vadd.f32 0.0, %v3663
    %v3665 = vpop.f32.mrb[0].mxu0
    %3666 = vmatprep.mubr.f32.mxu0 0.0
    %3667 = vmatmul.mubr.f32.gmra.mrb[0].mxu0 %v3371
    %v3668 = vpop.f32.mrb[0].mxu0
    %v3669 = vadd.f32 0.0, %v3668
    %v3670 = vpop.f32.mrb[0].mxu0
    %3671 = vmatprep.mubr.f32.mxu0 0.0
    %3672 = vmatmul.mubr.f32.gmra.mrb[0].mxu0 %v3374
    %v3673 = vpop.f32.mrb[0].mxu0
    %v3674 = vadd.f32 0.0, %v3673
    %v3675 = vpop.f32.mrb[0].mxu0
    %3676 = vmatprep.mubr.f32.mxu0 0.0
    %3677 = vmatmul.mubr.f32.gmra.mrb[0].mxu0 %v3377
    %v3678 = vpop.f32.mrb[0].mxu0
    %v3679 = vadd.f32 0.0, %v3678
    %v3680 = vpop.f32.mrb[0].mxu0
    %3681 = vmatprep.mubr.f32.mxu0 0.0
    %3682 = vmatmul.mubr.f32.gmra.mrb[0].mxu0 %v3380
    %v3683 = vpop.f32.mrb[0].mxu0
    %v3684 = vadd.f32 0.0, %v3683
    %v3685 = vpop.f32.mrb[0].mxu0
    %3686 = vmatprep.mubr.f32.mxu0 0.0
    %3687 = vmatmul.mubr.f32.gmra.mrb[0].mxu0 %v3383
    %v3688 = vpop.f32.mrb[0].mxu0
    %v3689 = vadd.f32 0.0, %v3688
    %v3690 = vpop.f32.mrb[0].mxu0
    %3691 = vmatprep.mubr.f32.mxu0 0.0
    %3692 = vmatmul.mubr.f32.gmra.mrb[0].mxu0 %v3386
    %v3693 = vpop.f32.mrb[0].mxu0
    %v3694 = vadd.f32 0.0, %v3693
    %v3695 = vpop.f32.mrb[0].mxu0
    %3696 = vmatprep.mubr.f32.mxu0 0.0
    %3697 = vmatmul.mubr.f32.gmra.mrb[0].mxu0 %v3389
    %v3698 = vpop.f32.mrb[0].mxu0
    %v3699 = vadd.f32 0.0, %v3698
    %v3700 = vpop.f32.mrb[0].mxu0
    %3701 = vmatprep.mubr.f32.mxu0 0.0
    %3702 = vmatmul.mubr.f32.gmra.mrb[0].mxu0 %v3392
    %v3703 = vpop.f32.mrb[0].mxu0
    %v3704 = vadd.f32 0.0, %v3703
    %v3705 = vpop.f32.mrb[0].mxu0
    %3706 = vmatprep.mubr.f32.mxu0 0.0
    %3707 = vmatmul.mubr.f32.gmra.mrb[0].mxu0 %v3395
    %v3708 = vpop.f32.mrb[0].mxu0
    %v3709 = vadd.f32 0.0, %v3708
    %v3710 = vpop.f32.mrb[0].mxu0
    %3711 = vmatprep.mubr.f32.mxu0 0.0
    %3712 = vmatmul.mubr.f32.gmra.mrb[0].mxu0 %v3398
    %v3713 = vpop.f32.mrb[0].mxu0
    %v3714 = vadd.f32 0.0, %v3713
    %v3715 = vpop.f32.mrb[0].mxu0
    %3716 = vmatprep.mubr.f32.mxu0 0.0
    %3717 = vmatmul.mubr.f32.gmra.mrb[0].mxu0 %v3401
    %v3718 = vpop.f32.mrb[0].mxu0
    %v3719 = vadd.f32 0.0, %v3718
    %v3720 = vpop.f32.mrb[0].mxu0
    %3721 = vmatprep.mubr.f32.mxu0 0.0
    %3722 = vmatmul.mubr.f32.gmra.mrb[0].mxu0 %v3404
    %v3723 = vpop.f32.mrb[0].mxu0
    %v3724 = vadd.f32 0.0, %v3723
    %v3725 = vpop.f32.mrb[0].mxu0
    %3726 = vmatprep.mubr.f32.mxu0 0.0
    %3727 = vmatmul.mubr.f32.gmra.mrb[0].mxu0 %v3407
    %v3728 = vpop.f32.mrb[0].mxu0
    %v3729 = vadd.f32 0.0, %v3728
    %v3730 = vpop.f32.mrb[0].mxu0
    %3731 = vmatprep.mubr.f32.mxu0 0.0
    %3732 = vmatmul.mubr.f32.gmra.mrb[0].mxu0 %v3410
    %v3733 = vpop.f32.mrb[0].mxu0
    %v3734 = vadd.f32 0.0, %v3733
    %v3735 = vpop.f32.mrb[0].mxu0
    %3736 = vmatprep.mubr.f32.mxu0 0.0
    %3737 = vmatmul.mubr.f32.gmra.mrb[0].mxu0 %v3413
    %v3738 = vpop.f32.mrb[0].mxu0
    %v3739 = vadd.f32 0.0, %v3738
    %v3740 = vpop.f32.mrb[0].mxu0
    %3741 = vmatprep.mubr.f32.mxu0 0.0
    %3742 = vmatmul.mubr.f32.gmra.mrb[0].mxu0 %v3416
    %v3743 = vpop.f32.mrb[0].mxu0
    %v3744 = vadd.f32 0.0, %v3743
    %v3745 = vpop.f32.mrb[0].mxu0
    %3746 = vmatprep.mubr.f32.mxu0 0.0
    %3747 = vmatmul.mubr.f32.gmra.mrb[0].mxu0 %v3419
    %v3748 = vpop.f32.mrb[0].mxu0
    %v3749 = vadd.f32 0.0, %v3748
    %v3750 = vpop.f32.mrb[0].mxu0
    %3751 = vmatprep.mubr.f32.mxu0 0.0
    %3752 = vmatmul.mubr.f32.gmra.mrb[0].mxu0 %v3422
    %v3753 = vpop.f32.mrb[0].mxu0
    %v3754 = vadd.f32 0.0, %v3753
    %v3755 = vpop.f32.mrb[0].mxu0
    %3756 = vmatprep.mubr.f32.mxu0 0.0
    %3757 = vmatmul.mubr.f32.gmra.mrb[0].mxu0 %v3425
    %v3758 = vpop.f32.mrb[0].mxu0
    %v3759 = vadd.f32 0.0, %v3758
    %v3760 = vpop.f32.mrb[0].mxu0
    %3761 = vmatprep.mubr.f32.mxu0 0.0
    %3762 = vmatmul.mubr.f32.gmra.mrb[0].mxu0 %v3428
    %v3763 = vpop.f32.mrb[0].mxu0
    %v3764 = vadd.f32 0.0, %v3763
    %v3765 = vpop.f32.mrb[0].mxu0
    %3766 = vmatprep.mubr.f32.mxu0 0.0
    %3767 = vmatmul.mubr.f32.gmra.mrb[0].mxu0 %v3431
    %v3768 = vpop.f32.mrb[0].mxu0
    %v3769 = vadd.f32 0.0, %v3768
    %v3770 = vpop.f32.mrb[0].mxu0
    %3771 = vmatprep.mubr.f32.mxu0 0.0
    %3772 = vmatmul.mubr.f32.gmra.mrb[0].mxu0 %v3434
    %v3773 = vpop.f32.mrb[0].mxu0
    %v3774 = vadd.f32 0.0, %v3773
    %v3775 = vpop.f32.mrb[0].mxu0
    %3776 = vmatprep.mubr.f32.mxu0 0.0
    %3777 = vmatmul.mubr.f32.gmra.mrb[0].mxu0 %v3437
    %v3778 = vpop.f32.mrb[0].mxu0
    %v3779 = vadd.f32 0.0, %v3778
    %v3780 = vpop.f32.mrb[0].mxu0
    %3781 = vmatprep.mubr.f32.mxu0 0.0
    %3782 = vmatmul.mubr.f32.gmra.mrb[0].mxu0 %v3440
    %v3783 = vpop.f32.mrb[0].mxu0
    %v3784 = vadd.f32 0.0, %v3783
    %v3785 = vpop.f32.mrb[0].mxu0
    %3786 = vmatprep.mubr.f32.mxu0 0.0
    %3787 = vmatmul.mubr.f32.gmra.mrb[0].mxu0 %v3443
    %v3788 = vpop.f32.mrb[0].mxu0
    %v3789 = vadd.f32 0.0, %v3788
    %v3790 = vpop.f32.mrb[0].mxu0
    %3791 = vmatprep.mubr.f32.mxu0 0.0
    %3792 = vmatmul.mubr.f32.gmra.mrb[0].mxu0 %v3446
    %v3793 = vpop.f32.mrb[0].mxu0
    %v3794 = vadd.f32 0.0, %v3793
    %v3795 = vpop.f32.mrb[0].mxu0
    %3796 = vmatprep.mubr.f32.mxu0 0.0
    %3797 = vmatmul.mubr.f32.gmra.mrb[0].mxu0 %v3449
    %v3798 = vpop.f32.mrb[0].mxu0
    %v3799 = vadd.f32 0.0, %v3798
    %v3800 = vpop.f32.mrb[0].mxu0
    %3801 = vmatprep.mubr.f32.mxu0 0.0
    %3802 = vmatmul.mubr.f32.gmra.mrb[0].mxu0 %v3452
    %v3803 = vpop.f32.mrb[0].mxu0
    %v3804 = vadd.f32 0.0, %v3803
    %v3805 = vpop.f32.mrb[0].mxu0
    %3806 = vmatprep.mubr.f32.mxu0 0.0
    %3807 = vmatmul.mubr.f32.gmra.mrb[0].mxu0 %v3455
    %v3808 = vpop.f32.mrb[0].mxu0
    %v3809 = vadd.f32 0.0, %v3808
    %v3810 = vpop.f32.mrb[0].mxu0
    %3811 = vmatprep.mubr.f32.mxu0 0.0
    %3812 = vmatmul.mubr.f32.gmra.mrb[0].mxu0 %v3458
    %v3813 = vpop.f32.mrb[0].mxu0
    %v3814 = vadd.f32 0.0, %v3813
    %v3815 = vpop.f32.mrb[0].mxu0
    %3816 = vmatprep.mubr.f32.mxu0 0.0
    %3817 = vmatmul.mubr.f32.gmra.mrb[0].mxu0 %v3461
    %v3818 = vpop.f32.mrb[0].mxu0
    %v3819 = vadd.f32 0.0, %v3818
    %v3820 = vpop.f32.mrb[0].mxu0
    %3821 = vmatprep.mubr.f32.mxu0 0.0
    %3822 = vmatmul.mubr.f32.gmra.mrb[0].mxu0 %v3464
    %v3823 = vpop.f32.mrb[0].mxu0
    %v3824 = vadd.f32 0.0, %v3823
    %v3825 = vpop.f32.mrb[0].mxu0
    %3826 = vmatprep.mubr.f32.mxu0 0.0
    %3827 = vmatmul.mubr.f32.gmra.mrb[0].mxu0 %v3467
    %v3828 = vpop.f32.mrb[0].mxu0
    %v3829 = vadd.f32 0.0, %v3828
    %v3830 = vpop.f32.mrb[0].mxu0
    %3831 = vmatprep.mubr.f32.mxu0 0.0
    %3832 = vmatmul.mubr.f32.gmra.mrb[0].mxu0 %v3470
    %v3833 = vpop.f32.mrb[0].mxu0
    %v3834 = vadd.f32 0.0, %v3833
    %v3835 = vpop.f32.mrb[0].mxu0
    %3836 = vmatprep.mubr.f32.mxu0 0.0
    %3837 = vmatmul.mubr.f32.gmra.mrb[0].mxu0 %v3473
    %v3838 = vpop.f32.mrb[0].mxu0
    %v3839 = vadd.f32 0.0, %v3838
    %v3840 = vpop.f32.mrb[0].mxu0
    %3841 = vmatprep.mubr.f32.mxu0 0.0
    %3842 = vmatmul.mubr.f32.gmra.mrb[0].mxu0 %v3476
    %v3843 = vpop.f32.mrb[0].mxu0
    %v3844 = vadd.f32 0.0, %v3843
    %v3845 = vpop.f32.mrb[0].mxu0
    %3846 = vmatprep.mubr.f32.mxu0 0.0
    %3847 = vmatmul.mubr.f32.gmra.mrb[0].mxu0 %v3479
    %v3848 = vpop.f32.mrb[0].mxu0
    %v3849 = vadd.f32 0.0, %v3848
    %v3850 = vpop.f32.mrb[0].mxu0
    %3851 = vmatprep.mubr.f32.mxu0 0.0
    %3852 = vmatmul.mubr.f32.gmra.mrb[0].mxu0 %v3482
    %v3853 = vpop.f32.mrb[0].mxu0
    %v3854 = vadd.f32 0.0, %v3853
    %v3855 = vpop.f32.mrb[0].mxu0
    %3856 = vmatprep.mubr.f32.mxu0 0.0
    %3857 = vmatmul.mubr.f32.gmra.mrb[0].mxu0 %v3485
    %v3858 = vpop.f32.mrb[0].mxu0
    %v3859 = vadd.f32 0.0, %v3858
    %v3860 = vpop.f32.mrb[0].mxu0
    %3861 = vmatprep.mubr.f32.mxu0 0.0
    %3862 = vmatmul.mubr.f32.gmra.mrb[0].mxu0 %v3488
    %v3863 = vpop.f32.mrb[0].mxu0
    %v3864 = vadd.f32 0.0, %v3863
    %v3865 = vpop.f32.mrb[0].mxu0
    %3866 = vmatprep.mubr.f32.mxu0 0.0
    %3867 = vmatmul.mubr.f32.gmra.mrb[0].mxu0 %v3491
    %v3868 = vpop.f32.mrb[0].mxu0
    %v3869 = vadd.f32 0.0, %v3868
    %v3870 = vpop.f32.mrb[0].mxu0
    %3871 = vmatprep.mubr.f32.mxu0 0.0
    %3872 = vmatmul.mubr.f32.gmra.mrb[0].mxu0 %v3494
    %v3873 = vpop.f32.mrb[0].mxu0
    %v3874 = vadd.f32 0.0, %v3873
    %v3875 = vpop.f32.mrb[0].mxu0
    %3876 = vmatprep.mubr.f32.mxu0 0.0
    %3877 = vmatmul.mubr.f32.gmra.mrb[0].mxu0 %v3497
    %v3878 = vpop.f32.mrb[0].mxu0
    %v3879 = vadd.f32 0.0, %v3878
    %v3880 = vpop.f32.mrb[0].mxu0
    %3881 = vmatprep.mubr.f32.mxu0 0.0
    %3882 = vmatmul.mubr.f32.gmra.mrb[0].mxu0 %v3500
    %v3883 = vpop.f32.mrb[0].mxu0
    %v3884 = vadd.f32 0.0, %v3883
    %v3885 = vpop.f32.mrb[0].mxu0
    %3886 = vdwg.mxu0
    %v3887 = vld [vmem:[#allocation2] sm:$0xff]
    %v3888 = vld [vmem:[#allocation2 + $0x8] sm:$0xff]
    %v3889 = vld [vmem:[#allocation2 + $0x10] sm:$0xff]
    %v3890 = vld [vmem:[#allocation2 + $0x18] sm:$0xff]
    %v3891 = vld [vmem:[#allocation2 + $0x20] sm:$0xff]
    %v3892 = vld [vmem:[#allocation2 + $0x28] sm:$0xff]
    %v3893 = vld [vmem:[#allocation2 + $0x30] sm:$0xff]
    %v3894 = vld [vmem:[#allocation2 + $0x38] sm:$0xff]
    %v3895 = vld [vmem:[#allocation2 + $0x40] sm:$0xff]
    %v3896 = vld [vmem:[#allocation2 + $0x48] sm:$0xff]
    %v3897 = vld [vmem:[#allocation2 + $0x50] sm:$0xff]
    %v3898 = vld [vmem:[#allocation2 + $0x58] sm:$0xff]
    %v3899 = vld [vmem:[#allocation2 + $0x60] sm:$0xff]
    %v3900 = vld [vmem:[#allocation2 + $0x68] sm:$0xff]
    %v3901 = vld [vmem:[#allocation2 + $0x70] sm:$0xff]
    %v3902 = vld [vmem:[#allocation2 + $0x78] sm:$0xff]
    %v3903 = vld [vmem:[#allocation2 + $0x80] sm:$0xff]
    %v3904 = vld [vmem:[#allocation2 + $0x88] sm:$0xff]
    %v3905 = vld [vmem:[#allocation2 + $0x90] sm:$0xff]
    %v3906 = vld [vmem:[#allocation2 + $0x98] sm:$0xff]
    %v3907 = vld [vmem:[#allocation2 + $0xa0] sm:$0xff]
    %v3908 = vld [vmem:[#allocation2 + $0xa8] sm:$0xff]
    %v3909 = vld [vmem:[#allocation2 + $0xb0] sm:$0xff]
    %v3910 = vld [vmem:[#allocation2 + $0xb8] sm:$0xff]
    %v3911 = vld [vmem:[#allocation2 + $0xc0] sm:$0xff]
    %v3912 = vld [vmem:[#allocation2 + $0xc8] sm:$0xff]
    %v3913 = vld [vmem:[#allocation2 + $0xd0] sm:$0xff]
    %v3914 = vld [vmem:[#allocation2 + $0xd8] sm:$0xff]
    %v3915 = vld [vmem:[#allocation2 + $0xe0] sm:$0xff]
    %v3916 = vld [vmem:[#allocation2 + $0xe8] sm:$0xff]
    %v3917 = vld [vmem:[#allocation2 + $0xf0] sm:$0xff]
    %v3918 = vld [vmem:[#allocation2 + $0xf8] sm:$0xff]
    %v3919 = vld [vmem:[#allocation2 + $0x100] sm:$0xff]
    %v3920 = vld [vmem:[#allocation2 + $0x108] sm:$0xff]
    %v3921 = vld [vmem:[#allocation2 + $0x110] sm:$0xff]
    %v3922 = vld [vmem:[#allocation2 + $0x118] sm:$0xff]
    %v3923 = vld [vmem:[#allocation2 + $0x120] sm:$0xff]
    %v3924 = vld [vmem:[#allocation2 + $0x128] sm:$0xff]
    %v3925 = vld [vmem:[#allocation2 + $0x130] sm:$0xff]
    %v3926 = vld [vmem:[#allocation2 + $0x138] sm:$0xff]
    %v3927 = vld [vmem:[#allocation2 + $0x140] sm:$0xff]
    %v3928 = vld [vmem:[#allocation2 + $0x148] sm:$0xff]
    %v3929 = vld [vmem:[#allocation2 + $0x150] sm:$0xff]
    %v3930 = vld [vmem:[#allocation2 + $0x158] sm:$0xff]
    %v3931 = vld [vmem:[#allocation2 + $0x160] sm:$0xff]
    %v3932 = vld [vmem:[#allocation2 + $0x168] sm:$0xff]
    %v3933 = vld [vmem:[#allocation2 + $0x170] sm:$0xff]
    %v3934 = vld [vmem:[#allocation2 + $0x178] sm:$0xff]
    %v3935 = vld [vmem:[#allocation2 + $0x180] sm:$0xff]
    %v3936 = vld [vmem:[#allocation2 + $0x188] sm:$0xff]
    %v3937 = vld [vmem:[#allocation2 + $0x190] sm:$0xff]
    %v3938 = vld [vmem:[#allocation2 + $0x198] sm:$0xff]
    %v3939 = vld [vmem:[#allocation2 + $0x1a0] sm:$0xff]
    %v3940 = vld [vmem:[#allocation2 + $0x1a8] sm:$0xff]
    %v3941 = vld [vmem:[#allocation2 + $0x1b0] sm:$0xff]
    %v3942 = vld [vmem:[#allocation2 + $0x1b8] sm:$0xff]
    %v3943 = vld [vmem:[#allocation2 + $0x1c0] sm:$0xff]
    %v3944 = vld [vmem:[#allocation2 + $0x1c8] sm:$0xff]
    %v3945 = vld [vmem:[#allocation2 + $0x1d0] sm:$0xff]
    %v3946 = vld [vmem:[#allocation2 + $0x1d8] sm:$0xff]
    %v3947 = vld [vmem:[#allocation2 + $0x1e0] sm:$0xff]
    %v3948 = vld [vmem:[#allocation2 + $0x1e8] sm:$0xff]
    %v3949 = vld [vmem:[#allocation2 + $0x1f0] sm:$0xff]
    %v3950 = vld [vmem:[#allocation2 + $0x1f8] sm:$0xff]
    %v3951 = vadd.f32 %v3887, %v3569
    %v3952 = vadd.f32 %v3888, %v3574
    %v3953 = vadd.f32 %v3889, %v3579
    %v3954 = vadd.f32 %v3890, %v3584
    %v3955 = vadd.f32 %v3891, %v3589
    %v3956 = vadd.f32 %v3892, %v3594
    %v3957 = vadd.f32 %v3893, %v3599
    %v3958 = vadd.f32 %v3894, %v3604
    %v3959 = vadd.f32 %v3895, %v3609
    %v3960 = vadd.f32 %v3896, %v3614
    %v3961 = vadd.f32 %v3897, %v3619
    %v3962 = vadd.f32 %v3898, %v3624
    %v3963 = vadd.f32 %v3899, %v3629
    %v3964 = vadd.f32 %v3900, %v3634
    %v3965 = vadd.f32 %v3901, %v3639
    %v3966 = vadd.f32 %v3902, %v3644
    %v3967 = vadd.f32 %v3903, %v3649
    %v3968 = vadd.f32 %v3904, %v3654
    %v3969 = vadd.f32 %v3905, %v3659
    %v3970 = vadd.f32 %v3906, %v3664
    %v3971 = vadd.f32 %v3907, %v3669
    %v3972 = vadd.f32 %v3908, %v3674
    %v3973 = vadd.f32 %v3909, %v3679
    %v3974 = vadd.f32 %v3910, %v3684
    %v3975 = vadd.f32 %v3911, %v3689
    %v3976 = vadd.f32 %v3912, %v3694
    %v3977 = vadd.f32 %v3913, %v3699
    %v3978 = vadd.f32 %v3914, %v3704
    %v3979 = vadd.f32 %v3915, %v3709
    %v3980 = vadd.f32 %v3916, %v3714
    %v3981 = vadd.f32 %v3917, %v3719
    %v3982 = vadd.f32 %v3918, %v3724
    %v3983 = vadd.f32 %v3919, %v3729
    %v3984 = vadd.f32 %v3920, %v3734
    %v3985 = vadd.f32 %v3921, %v3739
    %v3986 = vadd.f32 %v3922, %v3744
    %v3987 = vadd.f32 %v3923, %v3749
    %v3988 = vadd.f32 %v3924, %v3754
    %v3989 = vadd.f32 %v3925, %v3759
    %v3990 = vadd.f32 %v3926, %v3764
    %v3991 = vadd.f32 %v3927, %v3769
    %v3992 = vadd.f32 %v3928, %v3774
    %v3993 = vadd.f32 %v3929, %v3779
    %v3994 = vadd.f32 %v3930, %v3784
    %v3995 = vadd.f32 %v3931, %v3789
    %v3996 = vadd.f32 %v3932, %v3794
    %v3997 = vadd.f32 %v3933, %v3799
    %v3998 = vadd.f32 %v3934, %v3804
    %v3999 = vadd.f32 %v3935, %v3809
    %v4000 = vadd.f32 %v3936, %v3814
    %v4001 = vadd.f32 %v3937, %v3819
    %v4002 = vadd.f32 %v3938, %v3824
    %v4003 = vadd.f32 %v3939, %v3829
    %v4004 = vadd.f32 %v3940, %v3834
    %v4005 = vadd.f32 %v3941, %v3839
    %v4006 = vadd.f32 %v3942, %v3844
    %v4007 = vadd.f32 %v3943, %v3849
    %v4008 = vadd.f32 %v3944, %v3854
    %v4009 = vadd.f32 %v3945, %v3859
    %v4010 = vadd.f32 %v3946, %v3864
    %v4011 = vadd.f32 %v3947, %v3869
    %v4012 = vadd.f32 %v3948, %v3874
    %v4013 = vadd.f32 %v3949, %v3879
    %v4014 = vadd.f32 %v3950, %v3884
    %4015 = vst.msk [vmem:[#allocation2] sm:$0xff] %vm95, %v3951
    %4016 = vst.msk [vmem:[#allocation2 + $0x8] sm:$0xff] %vm95, %v3952
    %4017 = vst.msk [vmem:[#allocation2 + $0x10] sm:$0xff] %vm95, %v3953
    %4018 = vst.msk [vmem:[#allocation2 + $0x18] sm:$0xff] %vm95, %v3954
    %4019 = vst.msk [vmem:[#allocation2 + $0x20] sm:$0xff] %vm95, %v3955
    %4020 = vst.msk [vmem:[#allocation2 + $0x28] sm:$0xff] %vm95, %v3956
    %4021 = vst.msk [vmem:[#allocation2 + $0x30] sm:$0xff] %vm95, %v3957
    %4022 = vst.msk [vmem:[#allocation2 + $0x38] sm:$0xff] %vm95, %v3958
    %4023 = vst.msk [vmem:[#allocation2 + $0x40] sm:$0xff] %vm95, %v3959
    %4024 = vst.msk [vmem:[#allocation2 + $0x48] sm:$0xff] %vm95, %v3960
    %4025 = vst.msk [vmem:[#allocation2 + $0x50] sm:$0xff] %vm95, %v3961
    %4026 = vst.msk [vmem:[#allocation2 + $0x58] sm:$0xff] %vm95, %v3962
    %4027 = vst.msk [vmem:[#allocation2 + $0x60] sm:$0xff] %vm95, %v3963
    %4028 = vst.msk [vmem:[#allocation2 + $0x68] sm:$0xff] %vm95, %v3964
    %4029 = vst.msk [vmem:[#allocation2 + $0x70] sm:$0xff] %vm95, %v3965
    %4030 = vst.msk [vmem:[#allocation2 + $0x78] sm:$0xff] %vm95, %v3966
    %4031 = vst.msk [vmem:[#allocation2 + $0x80] sm:$0xff] %vm95, %v3967
    %4032 = vst.msk [vmem:[#allocation2 + $0x88] sm:$0xff] %vm95, %v3968
    %4033 = vst.msk [vmem:[#allocation2 + $0x90] sm:$0xff] %vm95, %v3969
    %4034 = vst.msk [vmem:[#allocation2 + $0x98] sm:$0xff] %vm95, %v3970
    %4035 = vst.msk [vmem:[#allocation2 + $0xa0] sm:$0xff] %vm95, %v3971
    %4036 = vst.msk [vmem:[#allocation2 + $0xa8] sm:$0xff] %vm95, %v3972
    %4037 = vst.msk [vmem:[#allocation2 + $0xb0] sm:$0xff] %vm95, %v3973
    %4038 = vst.msk [vmem:[#allocation2 + $0xb8] sm:$0xff] %vm95, %v3974
    %4039 = vst.msk [vmem:[#allocation2 + $0xc0] sm:$0xff] %vm95, %v3975
    %4040 = vst.msk [vmem:[#allocation2 + $0xc8] sm:$0xff] %vm95, %v3976
    %4041 = vst.msk [vmem:[#allocation2 + $0xd0] sm:$0xff] %vm95, %v3977
    %4042 = vst.msk [vmem:[#allocation2 + $0xd8] sm:$0xff] %vm95, %v3978
    %4043 = vst.msk [vmem:[#allocation2 + $0xe0] sm:$0xff] %vm95, %v3979
    %4044 = vst.msk [vmem:[#allocation2 + $0xe8] sm:$0xff] %vm95, %v3980
    %4045 = vst.msk [vmem:[#allocation2 + $0xf0] sm:$0xff] %vm95, %v3981
    %4046 = vst.msk [vmem:[#allocation2 + $0xf8] sm:$0xff] %vm95, %v3982
    %4047 = vst.msk [vmem:[#allocation2 + $0x100] sm:$0xff] %vm95, %v3983
    %4048 = vst.msk [vmem:[#allocation2 + $0x108] sm:$0xff] %vm95, %v3984
    %4049 = vst.msk [vmem:[#allocation2 + $0x110] sm:$0xff] %vm95, %v3985
    %4050 = vst.msk [vmem:[#allocation2 + $0x118] sm:$0xff] %vm95, %v3986
    %4051 = vst.msk [vmem:[#allocation2 + $0x120] sm:$0xff] %vm95, %v3987
    %4052 = vst.msk [vmem:[#allocation2 + $0x128] sm:$0xff] %vm95, %v3988
    %4053 = vst.msk [vmem:[#allocation2 + $0x130] sm:$0xff] %vm95, %v3989
    %4054 = vst.msk [vmem:[#allocation2 + $0x138] sm:$0xff] %vm95, %v3990
    %4055 = vst.msk [vmem:[#allocation2 + $0x140] sm:$0xff] %vm95, %v3991
    %4056 = vst.msk [vmem:[#allocation2 + $0x148] sm:$0xff] %vm95, %v3992
    %4057 = vst.msk [vmem:[#allocation2 + $0x150] sm:$0xff] %vm95, %v3993
    %4058 = vst.msk [vmem:[#allocation2 + $0x158] sm:$0xff] %vm95, %v3994
    %4059 = vst.msk [vmem:[#allocation2 + $0x160] sm:$0xff] %vm95, %v3995
    %4060 = vst.msk [vmem:[#allocation2 + $0x168] sm:$0xff] %vm95, %v3996
    %4061 = vst.msk [vmem:[#allocation2 + $0x170] sm:$0xff] %vm95, %v3997
    %4062 = vst.msk [vmem:[#allocation2 + $0x178] sm:$0xff] %vm95, %v3998
    %4063 = vst.msk [vmem:[#allocation2 + $0x180] sm:$0xff] %vm95, %v3999
    %4064 = vst.msk [vmem:[#allocation2 + $0x188] sm:$0xff] %vm95, %v4000
    %4065 = vst.msk [vmem:[#allocation2 + $0x190] sm:$0xff] %vm95, %v4001
    %4066 = vst.msk [vmem:[#allocation2 + $0x198] sm:$0xff] %vm95, %v4002
    %4067 = vst.msk [vmem:[#allocation2 + $0x1a0] sm:$0xff] %vm95, %v4003
    %4068 = vst.msk [vmem:[#allocation2 + $0x1a8] sm:$0xff] %vm95, %v4004
    %4069 = vst.msk [vmem:[#allocation2 + $0x1b0] sm:$0xff] %vm95, %v4005
    %4070 = vst.msk [vmem:[#allocation2 + $0x1b8] sm:$0xff] %vm95, %v4006
    %4071 = vst.msk [vmem:[#allocation2 + $0x1c0] sm:$0xff] %vm95, %v4007
    %4072 = vst.msk [vmem:[#allocation2 + $0x1c8] sm:$0xff] %vm95, %v4008
    %4073 = vst.msk [vmem:[#allocation2 + $0x1d0] sm:$0xff] %vm95, %v4009
    %4074 = vst.msk [vmem:[#allocation2 + $0x1d8] sm:$0xff] %vm95, %v4010
    %4075 = vst.msk [vmem:[#allocation2 + $0x1e0] sm:$0xff] %vm95, %v4011
    %4076 = vst.msk [vmem:[#allocation2 + $0x1e8] sm:$0xff] %vm95, %v4012
    %4077 = vst.msk [vmem:[#allocation2 + $0x1f0] sm:$0xff] %vm95, %v4013
    %4078 = vst.msk [vmem:[#allocation2 + $0x1f8] sm:$0xff] %vm95, %v4014
    %v4079 = vld [vmem:[%s1573 + $0x1] sm:$0xff]
    %v4080 = vld [vmem:[%s1573 + $0x9] sm:$0xff]
    %v4081 = vld [vmem:[%s1573 + $0x19] sm:$0xff]
    %v4082 = vld [vmem:[%s1573 + $0x21] sm:$0xff]
    %v4083 = vld [vmem:[%s1573 + $0x31] sm:$0xff]
    %v4084 = vld [vmem:[%s1573 + $0x39] sm:$0xff]
    %v4085 = vld [vmem:[%s1573 + $0x49] sm:$0xff]
    %v4086 = vld [vmem:[%s1573 + $0x51] sm:$0xff]
    %v4087 = vld [vmem:[%s1573 + $0x61] sm:$0xff]
    %v4088 = vld [vmem:[%s1573 + $0x69] sm:$0xff]
    %v4089 = vld [vmem:[%s1573 + $0x79] sm:$0xff]
    %v4090 = vld [vmem:[%s1573 + $0x81] sm:$0xff]
    %v4091 = vld [vmem:[%s1573 + $0x91] sm:$0xff]
    %v4092 = vld [vmem:[%s1573 + $0x99] sm:$0xff]
    %v4093 = vld [vmem:[%s1573 + $0xa9] sm:$0xff]
    %v4094 = vld [vmem:[%s1573 + $0xb1] sm:$0xff]
    %v4095 = vld [vmem:[%s1573 + $0xc1] sm:$0xff]
    %v4096 = vld [vmem:[%s1573 + $0xc9] sm:$0xff]
    %v4097 = vld [vmem:[%s1573 + $0xd9] sm:$0xff]
    %v4098 = vld [vmem:[%s1573 + $0xe1] sm:$0xff]
    %v4099 = vld [vmem:[%s1573 + $0xf1] sm:$0xff]
    %v4100 = vld [vmem:[%s1573 + $0xf9] sm:$0xff]
    %v4101 = vld [vmem:[%s1573 + $0x109] sm:$0xff]
    %v4102 = vld [vmem:[%s1573 + $0x111] sm:$0xff]
    %v4103 = vld [vmem:[%s1573 + $0x121] sm:$0xff]
    %v4104 = vld [vmem:[%s1573 + $0x129] sm:$0xff]
    %v4105 = vld [vmem:[%s1573 + $0x139] sm:$0xff]
    %v4106 = vld [vmem:[%s1573 + $0x141] sm:$0xff]
    %v4107 = vld [vmem:[%s1573 + $0x151] sm:$0xff]
    %v4108 = vld [vmem:[%s1573 + $0x159] sm:$0xff]
    %v4109 = vld [vmem:[%s1573 + $0x169] sm:$0xff]
    %v4110 = vld [vmem:[%s1573 + $0x171] sm:$0xff]
    %v4111 = vld [vmem:[%s1573 + $0x1b1] sm:$0xff]
    %v4112 = vld [vmem:[%s1573 + $0x1b9] sm:$0xff]
    %v4113 = vld [vmem:[%s1573 + $0x1c9] sm:$0xff]
    %v4114 = vld [vmem:[%s1573 + $0x1d1] sm:$0xff]
    %v4115 = vld [vmem:[%s1573 + $0x1e1] sm:$0xff]
    %v4116 = vld [vmem:[%s1573 + $0x1e9] sm:$0xff]
    %v4117 = vld [vmem:[%s1573 + $0x1f9] sm:$0xff]
    %v4118 = vld [vmem:[%s1573 + $0x201] sm:$0xff]
    %v4119 = vld [vmem:[%s1573 + $0x211] sm:$0xff]
    %v4120 = vld [vmem:[%s1573 + $0x219] sm:$0xff]
    %v4121 = vld [vmem:[%s1573 + $0x229] sm:$0xff]
    %v4122 = vld [vmem:[%s1573 + $0x231] sm:$0xff]
    %v4123 = vld [vmem:[%s1573 + $0x241] sm:$0xff]
    %v4124 = vld [vmem:[%s1573 + $0x249] sm:$0xff]
    %v4125 = vld [vmem:[%s1573 + $0x259] sm:$0xff]
    %v4126 = vld [vmem:[%s1573 + $0x261] sm:$0xff]
    %v4127 = vld [vmem:[%s1573 + $0x271] sm:$0xff]
    %v4128 = vld [vmem:[%s1573 + $0x279] sm:$0xff]
    %v4129 = vld [vmem:[%s1573 + $0x289] sm:$0xff]
    %v4130 = vld [vmem:[%s1573 + $0x291] sm:$0xff]
    %v4131 = vld [vmem:[%s1573 + $0x2a1] sm:$0xff]
    %v4132 = vld [vmem:[%s1573 + $0x2a9] sm:$0xff]
    %v4133 = vld [vmem:[%s1573 + $0x2b9] sm:$0xff]
    %v4134 = vld [vmem:[%s1573 + $0x2c1] sm:$0xff]
    %v4135 = vld [vmem:[%s1573 + $0x2d1] sm:$0xff]
    %v4136 = vld [vmem:[%s1573 + $0x2d9] sm:$0xff]
    %v4137 = vld [vmem:[%s1573 + $0x2e9] sm:$0xff]
    %v4138 = vld [vmem:[%s1573 + $0x2f1] sm:$0xff]
    %v4139 = vld [vmem:[%s1573 + $0x301] sm:$0xff]
    %v4140 = vld [vmem:[%s1573 + $0x309] sm:$0xff]
    %v4141 = vld [vmem:[%s1573 + $0x319] sm:$0xff]
    %v4142 = vld [vmem:[%s1573 + $0x321] sm:$0xff]
    %s4143 = scalar_lea.vmem %s1, 40
    %v4144 = vld [vmem:[%s4143] sm:$0xff]
    %v4146 = vsel %vm95, %v4079, 0
    %v4149 = vsel %vm95, %v4080, 0
    %v4152 = vsel %vm95, %v4081, 0
    %v4155 = vsel %vm95, %v4082, 0
    %v4158 = vsel %vm95, %v4083, 0
    %v4161 = vsel %vm95, %v4084, 0
    %v4164 = vsel %vm95, %v4085, 0
    %v4167 = vsel %vm95, %v4086, 0
    %v4170 = vsel %vm95, %v4087, 0
    %v4173 = vsel %vm95, %v4088, 0
    %v4176 = vsel %vm95, %v4089, 0
    %v4179 = vsel %vm95, %v4090, 0
    %v4182 = vsel %vm95, %v4091, 0
    %v4185 = vsel %vm95, %v4092, 0
    %v4188 = vsel %vm95, %v4093, 0
    %v4191 = vsel %vm95, %v4094, 0
    %v4194 = vsel %vm95, %v4095, 0
    %v4197 = vsel %vm95, %v4096, 0
    %v4200 = vsel %vm95, %v4097, 0
    %v4203 = vsel %vm95, %v4098, 0
    %v4206 = vsel %vm95, %v4099, 0
    %v4209 = vsel %vm95, %v4100, 0
    %v4212 = vsel %vm95, %v4101, 0
    %v4215 = vsel %vm95, %v4102, 0
    %v4218 = vsel %vm95, %v4103, 0
    %v4221 = vsel %vm95, %v4104, 0
    %v4224 = vsel %vm95, %v4105, 0
    %v4227 = vsel %vm95, %v4106, 0
    %v4230 = vsel %vm95, %v4107, 0
    %v4233 = vsel %vm95, %v4108, 0
    %v4236 = vsel %vm95, %v4109, 0
    %v4239 = vsel %vm95, %v4110, 0
    %v4242 = vsel %vm95, %v4111, 0
    %v4245 = vsel %vm95, %v4112, 0
    %v4248 = vsel %vm95, %v4113, 0
    %v4251 = vsel %vm95, %v4114, 0
    %v4254 = vsel %vm95, %v4115, 0
    %v4257 = vsel %vm95, %v4116, 0
    %v4260 = vsel %vm95, %v4117, 0
    %v4263 = vsel %vm95, %v4118, 0
    %v4266 = vsel %vm95, %v4119, 0
    %v4269 = vsel %vm95, %v4120, 0
    %v4272 = vsel %vm95, %v4121, 0
    %v4275 = vsel %vm95, %v4122, 0
    %v4278 = vsel %vm95, %v4123, 0
    %v4281 = vsel %vm95, %v4124, 0
    %v4284 = vsel %vm95, %v4125, 0
    %v4287 = vsel %vm95, %v4126, 0
    %v4290 = vsel %vm95, %v4127, 0
    %v4293 = vsel %vm95, %v4128, 0
    %v4296 = vsel %vm95, %v4129, 0
    %v4299 = vsel %vm95, %v4130, 0
    %v4302 = vsel %vm95, %v4131, 0
    %v4305 = vsel %vm95, %v4132, 0
    %v4308 = vsel %vm95, %v4133, 0
    %v4311 = vsel %vm95, %v4134, 0
    %v4314 = vsel %vm95, %v4135, 0
    %v4317 = vsel %vm95, %v4136, 0
    %v4320 = vsel %vm95, %v4137, 0
    %v4323 = vsel %vm95, %v4138, 0
    %v4326 = vsel %vm95, %v4139, 0
    %v4329 = vsel %vm95, %v4140, 0
    %v4332 = vsel %vm95, %v4141, 0
    %v4335 = vsel %vm95, %v4142, 0
    %4337 = vmatprep.subr.mxu0 0.0
    %4338 = vmatpush1.msra.mxu0 %v4144
    %4339 = vmatprep.subr.mxu0 0.0
    %4340 = vmatpush1.msra.mxu0 0.0
    %4341 = vmatprep.subr.mxu0 0.0
    %4342 = vmatpush1.msra.mxu0 0.0
    %4343 = vmatprep.subr.mxu0 0.0
    %4344 = vmatpush1.msra.mxu0 0.0
    %4345 = vmatprep.subr.mxu0 0.0
    %4346 = vmatpush1.msra.mxu0 0.0
    %4347 = vmatprep.subr.mxu0 0.0
    %4348 = vmatpush1.msra.mxu0 0.0
    %4349 = vmatprep.subr.mxu0 0.0
    %4350 = vmatpush1.msra.mxu0 0.0
    %4351 = vmatprep.subr.mxu0 0.0
    %4352 = vmatpush1.msra.mxu0 0.0
    %4353 = vmatprep.subr.mxu0 0.0
    %4354 = vmatpush1.msra.mxu0 0.0
    %4355 = vmatprep.subr.mxu0 0.0
    %4356 = vmatpush1.msra.mxu0 0.0
    %4357 = vmatprep.subr.mxu0 0.0
    %4358 = vmatpush1.msra.mxu0 0.0
    %4359 = vmatprep.subr.mxu0 0.0
    %4360 = vmatpush1.msra.mxu0 0.0
    %4361 = vmatprep.subr.mxu0 0.0
    %4362 = vmatpush1.msra.mxu0 0.0
    %4363 = vmatprep.subr.mxu0 0.0
    %4364 = vmatpush1.msra.mxu0 0.0
    %4365 = vmatprep.subr.mxu0 0.0
    %4366 = vmatpush1.msra.mxu0 0.0
    %4367 = vmatprep.subr.mxu0 0.0
    %4368 = vmatpush1.msra.mxu0 0.0
    %4369 = vmatprep.subr.mxu0 0.0
    %4370 = vmatpush1.msra.mxu0 0.0
    %4371 = vmatprep.subr.mxu0 0.0
    %4372 = vmatpush1.msra.mxu0 0.0
    %4373 = vmatprep.subr.mxu0 0.0
    %4374 = vmatpush1.msra.mxu0 0.0
    %4375 = vmatprep.subr.mxu0 0.0
    %4376 = vmatpush1.msra.mxu0 0.0
    %4377 = vmatprep.subr.mxu0 0.0
    %4378 = vmatpush1.msra.mxu0 0.0
    %4379 = vmatprep.subr.mxu0 0.0
    %4380 = vmatpush1.msra.mxu0 0.0
    %4381 = vmatprep.subr.mxu0 0.0
    %4382 = vmatpush1.msra.mxu0 0.0
    %4383 = vmatprep.subr.mxu0 0.0
    %4384 = vmatpush1.msra.mxu0 0.0
    %4385 = vmatprep.subr.mxu0 0.0
    %4386 = vmatpush1.msra.mxu0 0.0
    %4387 = vmatprep.subr.mxu0 0.0
    %4388 = vmatpush1.msra.mxu0 0.0
    %4389 = vmatprep.subr.mxu0 0.0
    %4390 = vmatpush1.msra.mxu0 0.0
    %4391 = vmatprep.subr.mxu0 0.0
    %4392 = vmatpush1.msra.mxu0 0.0
    %4393 = vmatprep.subr.mxu0 0.0
    %4394 = vmatpush1.msra.mxu0 0.0
    %4395 = vmatprep.subr.mxu0 0.0
    %4396 = vmatpush1.msra.mxu0 0.0
    %4397 = vmatprep.subr.mxu0 0.0
    %4398 = vmatpush1.msra.mxu0 0.0
    %4399 = vmatprep.subr.mxu0 0.0
    %4400 = vmatpush1.msra.mxu0 0.0
    %4401 = vmatprep.mubr.f32.mxu0 0.0
    %4402 = vmatmul.mubr.f32.gmra.mrb[0].mxu0 %v4146
    %v4403 = vpop.f32.mrb[0].mxu0
    %v4404 = vadd.f32 0.0, %v4403
    %v4405 = vpop.f32.mrb[0].mxu0
    %4406 = vmatprep.mubr.f32.mxu0 0.0
    %4407 = vmatmul.mubr.f32.gmra.mrb[0].mxu0 %v4149
    %v4408 = vpop.f32.mrb[0].mxu0
    %v4409 = vadd.f32 0.0, %v4408
    %v4410 = vpop.f32.mrb[0].mxu0
    %4411 = vmatprep.mubr.f32.mxu0 0.0
    %4412 = vmatmul.mubr.f32.gmra.mrb[0].mxu0 %v4152
    %v4413 = vpop.f32.mrb[0].mxu0
    %v4414 = vadd.f32 0.0, %v4413
    %v4415 = vpop.f32.mrb[0].mxu0
    %4416 = vmatprep.mubr.f32.mxu0 0.0
    %4417 = vmatmul.mubr.f32.gmra.mrb[0].mxu0 %v4155
    %v4418 = vpop.f32.mrb[0].mxu0
    %v4419 = vadd.f32 0.0, %v4418
    %v4420 = vpop.f32.mrb[0].mxu0
    %4421 = vmatprep.mubr.f32.mxu0 0.0
    %4422 = vmatmul.mubr.f32.gmra.mrb[0].mxu0 %v4158
    %v4423 = vpop.f32.mrb[0].mxu0
    %v4424 = vadd.f32 0.0, %v4423
    %v4425 = vpop.f32.mrb[0].mxu0
    %4426 = vmatprep.mubr.f32.mxu0 0.0
    %4427 = vmatmul.mubr.f32.gmra.mrb[0].mxu0 %v4161
    %v4428 = vpop.f32.mrb[0].mxu0
    %v4429 = vadd.f32 0.0, %v4428
    %v4430 = vpop.f32.mrb[0].mxu0
    %4431 = vmatprep.mubr.f32.mxu0 0.0
    %4432 = vmatmul.mubr.f32.gmra.mrb[0].mxu0 %v4164
    %v4433 = vpop.f32.mrb[0].mxu0
    %v4434 = vadd.f32 0.0, %v4433
    %v4435 = vpop.f32.mrb[0].mxu0
    %4436 = vmatprep.mubr.f32.mxu0 0.0
    %4437 = vmatmul.mubr.f32.gmra.mrb[0].mxu0 %v4167
    %v4438 = vpop.f32.mrb[0].mxu0
    %v4439 = vadd.f32 0.0, %v4438
    %v4440 = vpop.f32.mrb[0].mxu0
    %4441 = vmatprep.mubr.f32.mxu0 0.0
    %4442 = vmatmul.mubr.f32.gmra.mrb[0].mxu0 %v4170
    %v4443 = vpop.f32.mrb[0].mxu0
    %v4444 = vadd.f32 0.0, %v4443
    %v4445 = vpop.f32.mrb[0].mxu0
    %4446 = vmatprep.mubr.f32.mxu0 0.0
    %4447 = vmatmul.mubr.f32.gmra.mrb[0].mxu0 %v4173
    %v4448 = vpop.f32.mrb[0].mxu0
    %v4449 = vadd.f32 0.0, %v4448
    %v4450 = vpop.f32.mrb[0].mxu0
    %4451 = vmatprep.mubr.f32.mxu0 0.0
    %4452 = vmatmul.mubr.f32.gmra.mrb[0].mxu0 %v4176
    %v4453 = vpop.f32.mrb[0].mxu0
    %v4454 = vadd.f32 0.0, %v4453
    %v4455 = vpop.f32.mrb[0].mxu0
    %4456 = vmatprep.mubr.f32.mxu0 0.0
    %4457 = vmatmul.mubr.f32.gmra.mrb[0].mxu0 %v4179
    %v4458 = vpop.f32.mrb[0].mxu0
    %v4459 = vadd.f32 0.0, %v4458
    %v4460 = vpop.f32.mrb[0].mxu0
    %4461 = vmatprep.mubr.f32.mxu0 0.0
    %4462 = vmatmul.mubr.f32.gmra.mrb[0].mxu0 %v4182
    %v4463 = vpop.f32.mrb[0].mxu0
    %v4464 = vadd.f32 0.0, %v4463
    %v4465 = vpop.f32.mrb[0].mxu0
    %4466 = vmatprep.mubr.f32.mxu0 0.0
    %4467 = vmatmul.mubr.f32.gmra.mrb[0].mxu0 %v4185
    %v4468 = vpop.f32.mrb[0].mxu0
    %v4469 = vadd.f32 0.0, %v4468
    %v4470 = vpop.f32.mrb[0].mxu0
    %4471 = vmatprep.mubr.f32.mxu0 0.0
    %4472 = vmatmul.mubr.f32.gmra.mrb[0].mxu0 %v4188
    %v4473 = vpop.f32.mrb[0].mxu0
    %v4474 = vadd.f32 0.0, %v4473
    %v4475 = vpop.f32.mrb[0].mxu0
    %4476 = vmatprep.mubr.f32.mxu0 0.0
    %4477 = vmatmul.mubr.f32.gmra.mrb[0].mxu0 %v4191
    %v4478 = vpop.f32.mrb[0].mxu0
    %v4479 = vadd.f32 0.0, %v4478
    %v4480 = vpop.f32.mrb[0].mxu0
    %4481 = vmatprep.mubr.f32.mxu0 0.0
    %4482 = vmatmul.mubr.f32.gmra.mrb[0].mxu0 %v4194
    %v4483 = vpop.f32.mrb[0].mxu0
    %v4484 = vadd.f32 0.0, %v4483
    %v4485 = vpop.f32.mrb[0].mxu0
    %4486 = vmatprep.mubr.f32.mxu0 0.0
    %4487 = vmatmul.mubr.f32.gmra.mrb[0].mxu0 %v4197
    %v4488 = vpop.f32.mrb[0].mxu0
    %v4489 = vadd.f32 0.0, %v4488
    %v4490 = vpop.f32.mrb[0].mxu0
    %4491 = vmatprep.mubr.f32.mxu0 0.0
    %4492 = vmatmul.mubr.f32.gmra.mrb[0].mxu0 %v4200
    %v4493 = vpop.f32.mrb[0].mxu0
    %v4494 = vadd.f32 0.0, %v4493
    %v4495 = vpop.f32.mrb[0].mxu0
    %4496 = vmatprep.mubr.f32.mxu0 0.0
    %4497 = vmatmul.mubr.f32.gmra.mrb[0].mxu0 %v4203
    %v4498 = vpop.f32.mrb[0].mxu0
    %v4499 = vadd.f32 0.0, %v4498
    %v4500 = vpop.f32.mrb[0].mxu0
    %4501 = vmatprep.mubr.f32.mxu0 0.0
    %4502 = vmatmul.mubr.f32.gmra.mrb[0].mxu0 %v4206
    %v4503 = vpop.f32.mrb[0].mxu0
    %v4504 = vadd.f32 0.0, %v4503
    %v4505 = vpop.f32.mrb[0].mxu0
    %4506 = vmatprep.mubr.f32.mxu0 0.0
    %4507 = vmatmul.mubr.f32.gmra.mrb[0].mxu0 %v4209
    %v4508 = vpop.f32.mrb[0].mxu0
    %v4509 = vadd.f32 0.0, %v4508
    %v4510 = vpop.f32.mrb[0].mxu0
    %4511 = vmatprep.mubr.f32.mxu0 0.0
    %4512 = vmatmul.mubr.f32.gmra.mrb[0].mxu0 %v4212
    %v4513 = vpop.f32.mrb[0].mxu0
    %v4514 = vadd.f32 0.0, %v4513
    %v4515 = vpop.f32.mrb[0].mxu0
    %4516 = vmatprep.mubr.f32.mxu0 0.0
    %4517 = vmatmul.mubr.f32.gmra.mrb[0].mxu0 %v4215
    %v4518 = vpop.f32.mrb[0].mxu0
    %v4519 = vadd.f32 0.0, %v4518
    %v4520 = vpop.f32.mrb[0].mxu0
    %4521 = vmatprep.mubr.f32.mxu0 0.0
    %4522 = vmatmul.mubr.f32.gmra.mrb[0].mxu0 %v4218
    %v4523 = vpop.f32.mrb[0].mxu0
    %v4524 = vadd.f32 0.0, %v4523
    %v4525 = vpop.f32.mrb[0].mxu0
    %4526 = vmatprep.mubr.f32.mxu0 0.0
    %4527 = vmatmul.mubr.f32.gmra.mrb[0].mxu0 %v4221
    %v4528 = vpop.f32.mrb[0].mxu0
    %v4529 = vadd.f32 0.0, %v4528
    %v4530 = vpop.f32.mrb[0].mxu0
    %4531 = vmatprep.mubr.f32.mxu0 0.0
    %4532 = vmatmul.mubr.f32.gmra.mrb[0].mxu0 %v4224
    %v4533 = vpop.f32.mrb[0].mxu0
    %v4534 = vadd.f32 0.0, %v4533
    %v4535 = vpop.f32.mrb[0].mxu0
    %4536 = vmatprep.mubr.f32.mxu0 0.0
    %4537 = vmatmul.mubr.f32.gmra.mrb[0].mxu0 %v4227
    %v4538 = vpop.f32.mrb[0].mxu0
    %v4539 = vadd.f32 0.0, %v4538
    %v4540 = vpop.f32.mrb[0].mxu0
    %4541 = vmatprep.mubr.f32.mxu0 0.0
    %4542 = vmatmul.mubr.f32.gmra.mrb[0].mxu0 %v4230
    %v4543 = vpop.f32.mrb[0].mxu0
    %v4544 = vadd.f32 0.0, %v4543
    %v4545 = vpop.f32.mrb[0].mxu0
    %4546 = vmatprep.mubr.f32.mxu0 0.0
    %4547 = vmatmul.mubr.f32.gmra.mrb[0].mxu0 %v4233
    %v4548 = vpop.f32.mrb[0].mxu0
    %v4549 = vadd.f32 0.0, %v4548
    %v4550 = vpop.f32.mrb[0].mxu0
    %4551 = vmatprep.mubr.f32.mxu0 0.0
    %4552 = vmatmul.mubr.f32.gmra.mrb[0].mxu0 %v4236
    %v4553 = vpop.f32.mrb[0].mxu0
    %v4554 = vadd.f32 0.0, %v4553
    %v4555 = vpop.f32.mrb[0].mxu0
    %4556 = vmatprep.mubr.f32.mxu0 0.0
    %4557 = vmatmul.mubr.f32.gmra.mrb[0].mxu0 %v4239
    %v4558 = vpop.f32.mrb[0].mxu0
    %v4559 = vadd.f32 0.0, %v4558
    %v4560 = vpop.f32.mrb[0].mxu0
    %4561 = vmatprep.mubr.f32.mxu0 0.0
    %4562 = vmatmul.mubr.f32.gmra.mrb[0].mxu0 %v4242
    %v4563 = vpop.f32.mrb[0].mxu0
    %v4564 = vadd.f32 0.0, %v4563
    %v4565 = vpop.f32.mrb[0].mxu0
    %4566 = vmatprep.mubr.f32.mxu0 0.0
    %4567 = vmatmul.mubr.f32.gmra.mrb[0].mxu0 %v4245
    %v4568 = vpop.f32.mrb[0].mxu0
    %v4569 = vadd.f32 0.0, %v4568
    %v4570 = vpop.f32.mrb[0].mxu0
    %4571 = vmatprep.mubr.f32.mxu0 0.0
    %4572 = vmatmul.mubr.f32.gmra.mrb[0].mxu0 %v4248
    %v4573 = vpop.f32.mrb[0].mxu0
    %v4574 = vadd.f32 0.0, %v4573
    %v4575 = vpop.f32.mrb[0].mxu0
    %4576 = vmatprep.mubr.f32.mxu0 0.0
    %4577 = vmatmul.mubr.f32.gmra.mrb[0].mxu0 %v4251
    %v4578 = vpop.f32.mrb[0].mxu0
    %v4579 = vadd.f32 0.0, %v4578
    %v4580 = vpop.f32.mrb[0].mxu0
    %4581 = vmatprep.mubr.f32.mxu0 0.0
    %4582 = vmatmul.mubr.f32.gmra.mrb[0].mxu0 %v4254
    %v4583 = vpop.f32.mrb[0].mxu0
    %v4584 = vadd.f32 0.0, %v4583
    %v4585 = vpop.f32.mrb[0].mxu0
    %4586 = vmatprep.mubr.f32.mxu0 0.0
    %4587 = vmatmul.mubr.f32.gmra.mrb[0].mxu0 %v4257
    %v4588 = vpop.f32.mrb[0].mxu0
    %v4589 = vadd.f32 0.0, %v4588
    %v4590 = vpop.f32.mrb[0].mxu0
    %4591 = vmatprep.mubr.f32.mxu0 0.0
    %4592 = vmatmul.mubr.f32.gmra.mrb[0].mxu0 %v4260
    %v4593 = vpop.f32.mrb[0].mxu0
    %v4594 = vadd.f32 0.0, %v4593
    %v4595 = vpop.f32.mrb[0].mxu0
    %4596 = vmatprep.mubr.f32.mxu0 0.0
    %4597 = vmatmul.mubr.f32.gmra.mrb[0].mxu0 %v4263
    %v4598 = vpop.f32.mrb[0].mxu0
    %v4599 = vadd.f32 0.0, %v4598
    %v4600 = vpop.f32.mrb[0].mxu0
    %4601 = vmatprep.mubr.f32.mxu0 0.0
    %4602 = vmatmul.mubr.f32.gmra.mrb[0].mxu0 %v4266
    %v4603 = vpop.f32.mrb[0].mxu0
    %v4604 = vadd.f32 0.0, %v4603
    %v4605 = vpop.f32.mrb[0].mxu0
    %4606 = vmatprep.mubr.f32.mxu0 0.0
    %4607 = vmatmul.mubr.f32.gmra.mrb[0].mxu0 %v4269
    %v4608 = vpop.f32.mrb[0].mxu0
    %v4609 = vadd.f32 0.0, %v4608
    %v4610 = vpop.f32.mrb[0].mxu0
    %4611 = vmatprep.mubr.f32.mxu0 0.0
    %4612 = vmatmul.mubr.f32.gmra.mrb[0].mxu0 %v4272
    %v4613 = vpop.f32.mrb[0].mxu0
    %v4614 = vadd.f32 0.0, %v4613
    %v4615 = vpop.f32.mrb[0].mxu0
    %4616 = vmatprep.mubr.f32.mxu0 0.0
    %4617 = vmatmul.mubr.f32.gmra.mrb[0].mxu0 %v4275
    %v4618 = vpop.f32.mrb[0].mxu0
    %v4619 = vadd.f32 0.0, %v4618
    %v4620 = vpop.f32.mrb[0].mxu0
    %4621 = vmatprep.mubr.f32.mxu0 0.0
    %4622 = vmatmul.mubr.f32.gmra.mrb[0].mxu0 %v4278
    %v4623 = vpop.f32.mrb[0].mxu0
    %v4624 = vadd.f32 0.0, %v4623
    %v4625 = vpop.f32.mrb[0].mxu0
    %4626 = vmatprep.mubr.f32.mxu0 0.0
    %4627 = vmatmul.mubr.f32.gmra.mrb[0].mxu0 %v4281
    %v4628 = vpop.f32.mrb[0].mxu0
    %v4629 = vadd.f32 0.0, %v4628
    %v4630 = vpop.f32.mrb[0].mxu0
    %4631 = vmatprep.mubr.f32.mxu0 0.0
    %4632 = vmatmul.mubr.f32.gmra.mrb[0].mxu0 %v4284
    %v4633 = vpop.f32.mrb[0].mxu0
    %v4634 = vadd.f32 0.0, %v4633
    %v4635 = vpop.f32.mrb[0].mxu0
    %4636 = vmatprep.mubr.f32.mxu0 0.0
    %4637 = vmatmul.mubr.f32.gmra.mrb[0].mxu0 %v4287
    %v4638 = vpop.f32.mrb[0].mxu0
    %v4639 = vadd.f32 0.0, %v4638
    %v4640 = vpop.f32.mrb[0].mxu0
    %4641 = vmatprep.mubr.f32.mxu0 0.0
    %4642 = vmatmul.mubr.f32.gmra.mrb[0].mxu0 %v4290
    %v4643 = vpop.f32.mrb[0].mxu0
    %v4644 = vadd.f32 0.0, %v4643
    %v4645 = vpop.f32.mrb[0].mxu0
    %4646 = vmatprep.mubr.f32.mxu0 0.0
    %4647 = vmatmul.mubr.f32.gmra.mrb[0].mxu0 %v4293
    %v4648 = vpop.f32.mrb[0].mxu0
    %v4649 = vadd.f32 0.0, %v4648
    %v4650 = vpop.f32.mrb[0].mxu0
    %4651 = vmatprep.mubr.f32.mxu0 0.0
    %4652 = vmatmul.mubr.f32.gmra.mrb[0].mxu0 %v4296
    %v4653 = vpop.f32.mrb[0].mxu0
    %v4654 = vadd.f32 0.0, %v4653
    %v4655 = vpop.f32.mrb[0].mxu0
    %4656 = vmatprep.mubr.f32.mxu0 0.0
    %4657 = vmatmul.mubr.f32.gmra.mrb[0].mxu0 %v4299
    %v4658 = vpop.f32.mrb[0].mxu0
    %v4659 = vadd.f32 0.0, %v4658
    %v4660 = vpop.f32.mrb[0].mxu0
    %4661 = vmatprep.mubr.f32.mxu0 0.0
    %4662 = vmatmul.mubr.f32.gmra.mrb[0].mxu0 %v4302
    %v4663 = vpop.f32.mrb[0].mxu0
    %v4664 = vadd.f32 0.0, %v4663
    %v4665 = vpop.f32.mrb[0].mxu0
    %4666 = vmatprep.mubr.f32.mxu0 0.0
    %4667 = vmatmul.mubr.f32.gmra.mrb[0].mxu0 %v4305
    %v4668 = vpop.f32.mrb[0].mxu0
    %v4669 = vadd.f32 0.0, %v4668
    %v4670 = vpop.f32.mrb[0].mxu0
    %4671 = vmatprep.mubr.f32.mxu0 0.0
    %4672 = vmatmul.mubr.f32.gmra.mrb[0].mxu0 %v4308
    %v4673 = vpop.f32.mrb[0].mxu0
    %v4674 = vadd.f32 0.0, %v4673
    %v4675 = vpop.f32.mrb[0].mxu0
    %4676 = vmatprep.mubr.f32.mxu0 0.0
    %4677 = vmatmul.mubr.f32.gmra.mrb[0].mxu0 %v4311
    %v4678 = vpop.f32.mrb[0].mxu0
    %v4679 = vadd.f32 0.0, %v4678
    %v4680 = vpop.f32.mrb[0].mxu0
    %4681 = vmatprep.mubr.f32.mxu0 0.0
    %4682 = vmatmul.mubr.f32.gmra.mrb[0].mxu0 %v4314
    %v4683 = vpop.f32.mrb[0].mxu0
    %v4684 = vadd.f32 0.0, %v4683
    %v4685 = vpop.f32.mrb[0].mxu0
    %4686 = vmatprep.mubr.f32.mxu0 0.0
    %4687 = vmatmul.mubr.f32.gmra.mrb[0].mxu0 %v4317
    %v4688 = vpop.f32.mrb[0].mxu0
    %v4689 = vadd.f32 0.0, %v4688
    %v4690 = vpop.f32.mrb[0].mxu0
    %4691 = vmatprep.mubr.f32.mxu0 0.0
    %4692 = vmatmul.mubr.f32.gmra.mrb[0].mxu0 %v4320
    %v4693 = vpop.f32.mrb[0].mxu0
    %v4694 = vadd.f32 0.0, %v4693
    %v4695 = vpop.f32.mrb[0].mxu0
    %4696 = vmatprep.mubr.f32.mxu0 0.0
    %4697 = vmatmul.mubr.f32.gmra.mrb[0].mxu0 %v4323
    %v4698 = vpop.f32.mrb[0].mxu0
    %v4699 = vadd.f32 0.0, %v4698
    %v4700 = vpop.f32.mrb[0].mxu0
    %4701 = vmatprep.mubr.f32.mxu0 0.0
    %4702 = vmatmul.mubr.f32.gmra.mrb[0].mxu0 %v4326
    %v4703 = vpop.f32.mrb[0].mxu0
    %v4704 = vadd.f32 0.0, %v4703
    %v4705 = vpop.f32.mrb[0].mxu0
    %4706 = vmatprep.mubr.f32.mxu0 0.0
    %4707 = vmatmul.mubr.f32.gmra.mrb[0].mxu0 %v4329
    %v4708 = vpop.f32.mrb[0].mxu0
    %v4709 = vadd.f32 0.0, %v4708
    %v4710 = vpop.f32.mrb[0].mxu0
    %4711 = vmatprep.mubr.f32.mxu0 0.0
    %4712 = vmatmul.mubr.f32.gmra.mrb[0].mxu0 %v4332
    %v4713 = vpop.f32.mrb[0].mxu0
    %v4714 = vadd.f32 0.0, %v4713
    %v4715 = vpop.f32.mrb[0].mxu0
    %4716 = vmatprep.mubr.f32.mxu0 0.0
    %4717 = vmatmul.mubr.f32.gmra.mrb[0].mxu0 %v4335
    %v4718 = vpop.f32.mrb[0].mxu0
    %v4719 = vadd.f32 0.0, %v4718
    %v4720 = vpop.f32.mrb[0].mxu0
    %4721 = vdwg.mxu0
    %v4722 = vld [vmem:[#allocation2] sm:$0xff]
    %v4723 = vld [vmem:[#allocation2 + $0x8] sm:$0xff]
    %v4724 = vld [vmem:[#allocation2 + $0x10] sm:$0xff]
    %v4725 = vld [vmem:[#allocation2 + $0x18] sm:$0xff]
    %v4726 = vld [vmem:[#allocation2 + $0x20] sm:$0xff]
    %v4727 = vld [vmem:[#allocation2 + $0x28] sm:$0xff]
    %v4728 = vld [vmem:[#allocation2 + $0x30] sm:$0xff]
    %v4729 = vld [vmem:[#allocation2 + $0x38] sm:$0xff]
    %v4730 = vld [vmem:[#allocation2 + $0x40] sm:$0xff]
    %v4731 = vld [vmem:[#allocation2 + $0x48] sm:$0xff]
    %v4732 = vld [vmem:[#allocation2 + $0x50] sm:$0xff]
    %v4733 = vld [vmem:[#allocation2 + $0x58] sm:$0xff]
    %v4734 = vld [vmem:[#allocation2 + $0x60] sm:$0xff]
    %v4735 = vld [vmem:[#allocation2 + $0x68] sm:$0xff]
    %v4736 = vld [vmem:[#allocation2 + $0x70] sm:$0xff]
    %v4737 = vld [vmem:[#allocation2 + $0x78] sm:$0xff]
    %v4738 = vld [vmem:[#allocation2 + $0x80] sm:$0xff]
    %v4739 = vld [vmem:[#allocation2 + $0x88] sm:$0xff]
    %v4740 = vld [vmem:[#allocation2 + $0x90] sm:$0xff]
    %v4741 = vld [vmem:[#allocation2 + $0x98] sm:$0xff]
    %v4742 = vld [vmem:[#allocation2 + $0xa0] sm:$0xff]
    %v4743 = vld [vmem:[#allocation2 + $0xa8] sm:$0xff]
    %v4744 = vld [vmem:[#allocation2 + $0xb0] sm:$0xff]
    %v4745 = vld [vmem:[#allocation2 + $0xb8] sm:$0xff]
    %v4746 = vld [vmem:[#allocation2 + $0xc0] sm:$0xff]
    %v4747 = vld [vmem:[#allocation2 + $0xc8] sm:$0xff]
    %v4748 = vld [vmem:[#allocation2 + $0xd0] sm:$0xff]
    %v4749 = vld [vmem:[#allocation2 + $0xd8] sm:$0xff]
    %v4750 = vld [vmem:[#allocation2 + $0xe0] sm:$0xff]
    %v4751 = vld [vmem:[#allocation2 + $0xe8] sm:$0xff]
    %v4752 = vld [vmem:[#allocation2 + $0xf0] sm:$0xff]
    %v4753 = vld [vmem:[#allocation2 + $0xf8] sm:$0xff]
    %v4754 = vld [vmem:[#allocation2 + $0x100] sm:$0xff]
    %v4755 = vld [vmem:[#allocation2 + $0x108] sm:$0xff]
    %v4756 = vld [vmem:[#allocation2 + $0x110] sm:$0xff]
    %v4757 = vld [vmem:[#allocation2 + $0x118] sm:$0xff]
    %v4758 = vld [vmem:[#allocation2 + $0x120] sm:$0xff]
    %v4759 = vld [vmem:[#allocation2 + $0x128] sm:$0xff]
    %v4760 = vld [vmem:[#allocation2 + $0x130] sm:$0xff]
    %v4761 = vld [vmem:[#allocation2 + $0x138] sm:$0xff]
    %v4762 = vld [vmem:[#allocation2 + $0x140] sm:$0xff]
    %v4763 = vld [vmem:[#allocation2 + $0x148] sm:$0xff]
    %v4764 = vld [vmem:[#allocation2 + $0x150] sm:$0xff]
    %v4765 = vld [vmem:[#allocation2 + $0x158] sm:$0xff]
    %v4766 = vld [vmem:[#allocation2 + $0x160] sm:$0xff]
    %v4767 = vld [vmem:[#allocation2 + $0x168] sm:$0xff]
    %v4768 = vld [vmem:[#allocation2 + $0x170] sm:$0xff]
    %v4769 = vld [vmem:[#allocation2 + $0x178] sm:$0xff]
    %v4770 = vld [vmem:[#allocation2 + $0x180] sm:$0xff]
    %v4771 = vld [vmem:[#allocation2 + $0x188] sm:$0xff]
    %v4772 = vld [vmem:[#allocation2 + $0x190] sm:$0xff]
    %v4773 = vld [vmem:[#allocation2 + $0x198] sm:$0xff]
    %v4774 = vld [vmem:[#allocation2 + $0x1a0] sm:$0xff]
    %v4775 = vld [vmem:[#allocation2 + $0x1a8] sm:$0xff]
    %v4776 = vld [vmem:[#allocation2 + $0x1b0] sm:$0xff]
    %v4777 = vld [vmem:[#allocation2 + $0x1b8] sm:$0xff]
    %v4778 = vld [vmem:[#allocation2 + $0x1c0] sm:$0xff]
    %v4779 = vld [vmem:[#allocation2 + $0x1c8] sm:$0xff]
    %v4780 = vld [vmem:[#allocation2 + $0x1d0] sm:$0xff]
    %v4781 = vld [vmem:[#allocation2 + $0x1d8] sm:$0xff]
    %v4782 = vld [vmem:[#allocation2 + $0x1e0] sm:$0xff]
    %v4783 = vld [vmem:[#allocation2 + $0x1e8] sm:$0xff]
    %v4784 = vld [vmem:[#allocation2 + $0x1f0] sm:$0xff]
    %v4785 = vld [vmem:[#allocation2 + $0x1f8] sm:$0xff]
    %v4786 = vadd.f32 %v4722, %v4404
    %v4787 = vadd.f32 %v4723, %v4409
    %v4788 = vadd.f32 %v4724, %v4414
    %v4789 = vadd.f32 %v4725, %v4419
    %v4790 = vadd.f32 %v4726, %v4424
    %v4791 = vadd.f32 %v4727, %v4429
    %v4792 = vadd.f32 %v4728, %v4434
    %v4793 = vadd.f32 %v4729, %v4439
    %v4794 = vadd.f32 %v4730, %v4444
    %v4795 = vadd.f32 %v4731, %v4449
    %v4796 = vadd.f32 %v4732, %v4454
    %v4797 = vadd.f32 %v4733, %v4459
    %v4798 = vadd.f32 %v4734, %v4464
    %v4799 = vadd.f32 %v4735, %v4469
    %v4800 = vadd.f32 %v4736, %v4474
    %v4801 = vadd.f32 %v4737, %v4479
    %v4802 = vadd.f32 %v4738, %v4484
    %v4803 = vadd.f32 %v4739, %v4489
    %v4804 = vadd.f32 %v4740, %v4494
    %v4805 = vadd.f32 %v4741, %v4499
    %v4806 = vadd.f32 %v4742, %v4504
    %v4807 = vadd.f32 %v4743, %v4509
    %v4808 = vadd.f32 %v4744, %v4514
    %v4809 = vadd.f32 %v4745, %v4519
    %v4810 = vadd.f32 %v4746, %v4524
    %v4811 = vadd.f32 %v4747, %v4529
    %v4812 = vadd.f32 %v4748, %v4534
    %v4813 = vadd.f32 %v4749, %v4539
    %v4814 = vadd.f32 %v4750, %v4544
    %v4815 = vadd.f32 %v4751, %v4549
    %v4816 = vadd.f32 %v4752, %v4554
    %v4817 = vadd.f32 %v4753, %v4559
    %v4818 = vadd.f32 %v4754, %v4564
    %v4819 = vadd.f32 %v4755, %v4569
    %v4820 = vadd.f32 %v4756, %v4574
    %v4821 = vadd.f32 %v4757, %v4579
    %v4822 = vadd.f32 %v4758, %v4584
    %v4823 = vadd.f32 %v4759, %v4589
    %v4824 = vadd.f32 %v4760, %v4594
    %v4825 = vadd.f32 %v4761, %v4599
    %v4826 = vadd.f32 %v4762, %v4604
    %v4827 = vadd.f32 %v4763, %v4609
    %v4828 = vadd.f32 %v4764, %v4614
    %v4829 = vadd.f32 %v4765, %v4619
    %v4830 = vadd.f32 %v4766, %v4624
    %v4831 = vadd.f32 %v4767, %v4629
    %v4832 = vadd.f32 %v4768, %v4634
    %v4833 = vadd.f32 %v4769, %v4639
    %v4834 = vadd.f32 %v4770, %v4644
    %v4835 = vadd.f32 %v4771, %v4649
    %v4836 = vadd.f32 %v4772, %v4654
    %v4837 = vadd.f32 %v4773, %v4659
    %v4838 = vadd.f32 %v4774, %v4664
    %v4839 = vadd.f32 %v4775, %v4669
    %v4840 = vadd.f32 %v4776, %v4674
    %v4841 = vadd.f32 %v4777, %v4679
    %v4842 = vadd.f32 %v4778, %v4684
    %v4843 = vadd.f32 %v4779, %v4689
    %v4844 = vadd.f32 %v4780, %v4694
    %v4845 = vadd.f32 %v4781, %v4699
    %v4846 = vadd.f32 %v4782, %v4704
    %v4847 = vadd.f32 %v4783, %v4709
    %v4848 = vadd.f32 %v4784, %v4714
    %v4849 = vadd.f32 %v4785, %v4719
    %4850 = vst.msk [vmem:[#allocation2] sm:$0xff] %vm95, %v4786
    %4851 = vst.msk [vmem:[#allocation2 + $0x8] sm:$0xff] %vm95, %v4787
    %4852 = vst.msk [vmem:[#allocation2 + $0x10] sm:$0xff] %vm95, %v4788
    %4853 = vst.msk [vmem:[#allocation2 + $0x18] sm:$0xff] %vm95, %v4789
    %4854 = vst.msk [vmem:[#allocation2 + $0x20] sm:$0xff] %vm95, %v4790
    %4855 = vst.msk [vmem:[#allocation2 + $0x28] sm:$0xff] %vm95, %v4791
    %4856 = vst.msk [vmem:[#allocation2 + $0x30] sm:$0xff] %vm95, %v4792
    %4857 = vst.msk [vmem:[#allocation2 + $0x38] sm:$0xff] %vm95, %v4793
    %4858 = vst.msk [vmem:[#allocation2 + $0x40] sm:$0xff] %vm95, %v4794
    %4859 = vst.msk [vmem:[#allocation2 + $0x48] sm:$0xff] %vm95, %v4795
    %4860 = vst.msk [vmem:[#allocation2 + $0x50] sm:$0xff] %vm95, %v4796
    %4861 = vst.msk [vmem:[#allocation2 + $0x58] sm:$0xff] %vm95, %v4797
    %4862 = vst.msk [vmem:[#allocation2 + $0x60] sm:$0xff] %vm95, %v4798
    %4863 = vst.msk [vmem:[#allocation2 + $0x68] sm:$0xff] %vm95, %v4799
    %4864 = vst.msk [vmem:[#allocation2 + $0x70] sm:$0xff] %vm95, %v4800
    %4865 = vst.msk [vmem:[#allocation2 + $0x78] sm:$0xff] %vm95, %v4801
    %4866 = vst.msk [vmem:[#allocation2 + $0x80] sm:$0xff] %vm95, %v4802
    %4867 = vst.msk [vmem:[#allocation2 + $0x88] sm:$0xff] %vm95, %v4803
    %4868 = vst.msk [vmem:[#allocation2 + $0x90] sm:$0xff] %vm95, %v4804
    %4869 = vst.msk [vmem:[#allocation2 + $0x98] sm:$0xff] %vm95, %v4805
    %4870 = vst.msk [vmem:[#allocation2 + $0xa0] sm:$0xff] %vm95, %v4806
    %4871 = vst.msk [vmem:[#allocation2 + $0xa8] sm:$0xff] %vm95, %v4807
    %4872 = vst.msk [vmem:[#allocation2 + $0xb0] sm:$0xff] %vm95, %v4808
    %4873 = vst.msk [vmem:[#allocation2 + $0xb8] sm:$0xff] %vm95, %v4809
    %4874 = vst.msk [vmem:[#allocation2 + $0xc0] sm:$0xff] %vm95, %v4810
    %4875 = vst.msk [vmem:[#allocation2 + $0xc8] sm:$0xff] %vm95, %v4811
    %4876 = vst.msk [vmem:[#allocation2 + $0xd0] sm:$0xff] %vm95, %v4812
    %4877 = vst.msk [vmem:[#allocation2 + $0xd8] sm:$0xff] %vm95, %v4813
    %4878 = vst.msk [vmem:[#allocation2 + $0xe0] sm:$0xff] %vm95, %v4814
    %4879 = vst.msk [vmem:[#allocation2 + $0xe8] sm:$0xff] %vm95, %v4815
    %4880 = vst.msk [vmem:[#allocation2 + $0xf0] sm:$0xff] %vm95, %v4816
    %4881 = vst.msk [vmem:[#allocation2 + $0xf8] sm:$0xff] %vm95, %v4817
    %4882 = vst.msk [vmem:[#allocation2 + $0x100] sm:$0xff] %vm95, %v4818
    %4883 = vst.msk [vmem:[#allocation2 + $0x108] sm:$0xff] %vm95, %v4819
    %4884 = vst.msk [vmem:[#allocation2 + $0x110] sm:$0xff] %vm95, %v4820
    %4885 = vst.msk [vmem:[#allocation2 + $0x118] sm:$0xff] %vm95, %v4821
    %4886 = vst.msk [vmem:[#allocation2 + $0x120] sm:$0xff] %vm95, %v4822
    %4887 = vst.msk [vmem:[#allocation2 + $0x128] sm:$0xff] %vm95, %v4823
    %4888 = vst.msk [vmem:[#allocation2 + $0x130] sm:$0xff] %vm95, %v4824
    %4889 = vst.msk [vmem:[#allocation2 + $0x138] sm:$0xff] %vm95, %v4825
    %4890 = vst.msk [vmem:[#allocation2 + $0x140] sm:$0xff] %vm95, %v4826
    %4891 = vst.msk [vmem:[#allocation2 + $0x148] sm:$0xff] %vm95, %v4827
    %4892 = vst.msk [vmem:[#allocation2 + $0x150] sm:$0xff] %vm95, %v4828
    %4893 = vst.msk [vmem:[#allocation2 + $0x158] sm:$0xff] %vm95, %v4829
    %4894 = vst.msk [vmem:[#allocation2 + $0x160] sm:$0xff] %vm95, %v4830
    %4895 = vst.msk [vmem:[#allocation2 + $0x168] sm:$0xff] %vm95, %v4831
    %4896 = vst.msk [vmem:[#allocation2 + $0x170] sm:$0xff] %vm95, %v4832
    %4897 = vst.msk [vmem:[#allocation2 + $0x178] sm:$0xff] %vm95, %v4833
    %4898 = vst.msk [vmem:[#allocation2 + $0x180] sm:$0xff] %vm95, %v4834
    %4899 = vst.msk [vmem:[#allocation2 + $0x188] sm:$0xff] %vm95, %v4835
    %4900 = vst.msk [vmem:[#allocation2 + $0x190] sm:$0xff] %vm95, %v4836
    %4901 = vst.msk [vmem:[#allocation2 + $0x198] sm:$0xff] %vm95, %v4837
    %4902 = vst.msk [vmem:[#allocation2 + $0x1a0] sm:$0xff] %vm95, %v4838
    %4903 = vst.msk [vmem:[#allocation2 + $0x1a8] sm:$0xff] %vm95, %v4839
    %4904 = vst.msk [vmem:[#allocation2 + $0x1b0] sm:$0xff] %vm95, %v4840
    %4905 = vst.msk [vmem:[#allocation2 + $0x1b8] sm:$0xff] %vm95, %v4841
    %4906 = vst.msk [vmem:[#allocation2 + $0x1c0] sm:$0xff] %vm95, %v4842
    %4907 = vst.msk [vmem:[#allocation2 + $0x1c8] sm:$0xff] %vm95, %v4843
    %4908 = vst.msk [vmem:[#allocation2 + $0x1d0] sm:$0xff] %vm95, %v4844
    %4909 = vst.msk [vmem:[#allocation2 + $0x1d8] sm:$0xff] %vm95, %v4845
    %4910 = vst.msk [vmem:[#allocation2 + $0x1e0] sm:$0xff] %vm95, %v4846
    %4911 = vst.msk [vmem:[#allocation2 + $0x1e8] sm:$0xff] %vm95, %v4847
    %4912 = vst.msk [vmem:[#allocation2 + $0x1f0] sm:$0xff] %vm95, %v4848
    %4913 = vst.msk [vmem:[#allocation2 + $0x1f8] sm:$0xff] %vm95, %v4849
    %v4914 = vld [vmem:[%s0 + $0x2] sm:$0xff]
    %v4915 = vld [vmem:[%s0 + $0xa] sm:$0xff]
    %v4916 = vld [vmem:[%s0 + $0x1a] sm:$0xff]
    %v4917 = vld [vmem:[%s0 + $0x22] sm:$0xff]
    %v4918 = vld [vmem:[%s0 + $0x32] sm:$0xff]
    %v4919 = vld [vmem:[%s0 + $0x3a] sm:$0xff]
    %v4920 = vld [vmem:[%s0 + $0x4a] sm:$0xff]
    %v4921 = vld [vmem:[%s0 + $0x52] sm:$0xff]
    %v4922 = vld [vmem:[%s0 + $0x62] sm:$0xff]
    %v4923 = vld [vmem:[%s0 + $0x6a] sm:$0xff]
    %v4924 = vld [vmem:[%s0 + $0x7a] sm:$0xff]
    %v4925 = vld [vmem:[%s0 + $0x82] sm:$0xff]
    %v4926 = vld [vmem:[%s0 + $0x92] sm:$0xff]
    %v4927 = vld [vmem:[%s0 + $0x9a] sm:$0xff]
    %v4928 = vld [vmem:[%s0 + $0xaa] sm:$0xff]
    %v4929 = vld [vmem:[%s0 + $0xb2] sm:$0xff]
    %v4930 = vld [vmem:[%s0 + $0xc2] sm:$0xff]
    %v4931 = vld [vmem:[%s0 + $0xca] sm:$0xff]
    %v4932 = vld [vmem:[%s0 + $0xda] sm:$0xff]
    %v4933 = vld [vmem:[%s0 + $0xe2] sm:$0xff]
    %v4934 = vld [vmem:[%s0 + $0xf2] sm:$0xff]
    %v4935 = vld [vmem:[%s0 + $0xfa] sm:$0xff]
    %v4936 = vld [vmem:[%s0 + $0x10a] sm:$0xff]
    %v4937 = vld [vmem:[%s0 + $0x112] sm:$0xff]
    %v4938 = vld [vmem:[%s0 + $0x122] sm:$0xff]
    %v4939 = vld [vmem:[%s0 + $0x12a] sm:$0xff]
    %v4940 = vld [vmem:[%s0 + $0x13a] sm:$0xff]
    %v4941 = vld [vmem:[%s0 + $0x142] sm:$0xff]
    %v4942 = vld [vmem:[%s0 + $0x152] sm:$0xff]
    %v4943 = vld [vmem:[%s0 + $0x15a] sm:$0xff]
    %v4944 = vld [vmem:[%s0 + $0x16a] sm:$0xff]
    %v4945 = vld [vmem:[%s0 + $0x172] sm:$0xff]
    %v4946 = vld [vmem:[%s0 + $0x1b2] sm:$0xff]
    %v4947 = vld [vmem:[%s0 + $0x1ba] sm:$0xff]
    %v4948 = vld [vmem:[%s0 + $0x1ca] sm:$0xff]
    %v4949 = vld [vmem:[%s0 + $0x1d2] sm:$0xff]
    %v4950 = vld [vmem:[%s0 + $0x1e2] sm:$0xff]
    %v4951 = vld [vmem:[%s0 + $0x1ea] sm:$0xff]
    %v4952 = vld [vmem:[%s0 + $0x1fa] sm:$0xff]
    %v4953 = vld [vmem:[%s0 + $0x202] sm:$0xff]
    %v4954 = vld [vmem:[%s0 + $0x212] sm:$0xff]
    %v4955 = vld [vmem:[%s0 + $0x21a] sm:$0xff]
    %v4956 = vld [vmem:[%s0 + $0x22a] sm:$0xff]
    %v4957 = vld [vmem:[%s0 + $0x232] sm:$0xff]
    %v4958 = vld [vmem:[%s0 + $0x242] sm:$0xff]
    %v4959 = vld [vmem:[%s0 + $0x24a] sm:$0xff]
    %v4960 = vld [vmem:[%s0 + $0x25a] sm:$0xff]
    %v4961 = vld [vmem:[%s0 + $0x262] sm:$0xff]
    %v4962 = vld [vmem:[%s0 + $0x272] sm:$0xff]
    %v4963 = vld [vmem:[%s0 + $0x27a] sm:$0xff]
    %v4964 = vld [vmem:[%s0 + $0x28a] sm:$0xff]
    %v4965 = vld [vmem:[%s0 + $0x292] sm:$0xff]
    %v4966 = vld [vmem:[%s0 + $0x2a2] sm:$0xff]
    %v4967 = vld [vmem:[%s0 + $0x2aa] sm:$0xff]
    %v4968 = vld [vmem:[%s0 + $0x2ba] sm:$0xff]
    %v4969 = vld [vmem:[%s0 + $0x2c2] sm:$0xff]
    %v4970 = vld [vmem:[%s0 + $0x2d2] sm:$0xff]
    %v4971 = vld [vmem:[%s0 + $0x2da] sm:$0xff]
    %v4972 = vld [vmem:[%s0 + $0x2ea] sm:$0xff]
    %v4973 = vld [vmem:[%s0 + $0x2f2] sm:$0xff]
    %v4974 = vld [vmem:[%s0 + $0x302] sm:$0xff]
    %v4975 = vld [vmem:[%s0 + $0x30a] sm:$0xff]
    %v4976 = vld [vmem:[%s0 + $0x31a] sm:$0xff]
    %v4977 = vld [vmem:[%s0 + $0x322] sm:$0xff]
    %s4978 = scalar_lea.vmem %s1, 48
    %v4979 = vld [vmem:[%s4978] sm:$0xff]
    %v4981 = vsel %vm95, %v4914, 0
    %v4984 = vsel %vm95, %v4915, 0
    %v4987 = vsel %vm95, %v4916, 0
    %v4990 = vsel %vm95, %v4917, 0
    %v4993 = vsel %vm95, %v4918, 0
    %v4996 = vsel %vm95, %v4919, 0
    %v4999 = vsel %vm95, %v4920, 0
    %v5002 = vsel %vm95, %v4921, 0
    %v5005 = vsel %vm95, %v4922, 0
    %v5008 = vsel %vm95, %v4923, 0
    %v5011 = vsel %vm95, %v4924, 0
    %v5014 = vsel %vm95, %v4925, 0
    %v5017 = vsel %vm95, %v4926, 0
    %v5020 = vsel %vm95, %v4927, 0
    %v5023 = vsel %vm95, %v4928, 0
    %v5026 = vsel %vm95, %v4929, 0
    %v5029 = vsel %vm95, %v4930, 0
    %v5032 = vsel %vm95, %v4931, 0
    %v5035 = vsel %vm95, %v4932, 0
    %v5038 = vsel %vm95, %v4933, 0
    %v5041 = vsel %vm95, %v4934, 0
    %v5044 = vsel %vm95, %v4935, 0
    %v5047 = vsel %vm95, %v4936, 0
    %v5050 = vsel %vm95, %v4937, 0
    %v5053 = vsel %vm95, %v4938, 0
    %v5056 = vsel %vm95, %v4939, 0
    %v5059 = vsel %vm95, %v4940, 0
    %v5062 = vsel %vm95, %v4941, 0
    %v5065 = vsel %vm95, %v4942, 0
    %v5068 = vsel %vm95, %v4943, 0
    %v5071 = vsel %vm95, %v4944, 0
    %v5074 = vsel %vm95, %v4945, 0
    %v5077 = vsel %vm95, %v4946, 0
    %v5080 = vsel %vm95, %v4947, 0
    %v5083 = vsel %vm95, %v4948, 0
    %v5086 = vsel %vm95, %v4949, 0
    %v5089 = vsel %vm95, %v4950, 0
    %v5092 = vsel %vm95, %v4951, 0
    %v5095 = vsel %vm95, %v4952, 0
    %v5098 = vsel %vm95, %v4953, 0
    %v5101 = vsel %vm95, %v4954, 0
    %v5104 = vsel %vm95, %v4955, 0
    %v5107 = vsel %vm95, %v4956, 0
    %v5110 = vsel %vm95, %v4957, 0
    %v5113 = vsel %vm95, %v4958, 0
    %v5116 = vsel %vm95, %v4959, 0
    %v5119 = vsel %vm95, %v4960, 0
    %v5122 = vsel %vm95, %v4961, 0
    %v5125 = vsel %vm95, %v4962, 0
    %v5128 = vsel %vm95, %v4963, 0
    %v5131 = vsel %vm95, %v4964, 0
    %v5134 = vsel %vm95, %v4965, 0
    %v5137 = vsel %vm95, %v4966, 0
    %v5140 = vsel %vm95, %v4967, 0
    %v5143 = vsel %vm95, %v4968, 0
    %v5146 = vsel %vm95, %v4969, 0
    %v5149 = vsel %vm95, %v4970, 0
    %v5152 = vsel %vm95, %v4971, 0
    %v5155 = vsel %vm95, %v4972, 0
    %v5158 = vsel %vm95, %v4973, 0
    %v5161 = vsel %vm95, %v4974, 0
    %v5164 = vsel %vm95, %v4975, 0
    %v5167 = vsel %vm95, %v4976, 0
    %v5170 = vsel %vm95, %v4977, 0
    %5172 = vmatprep.subr.mxu0 0.0
    %5173 = vmatpush1.msra.mxu0 %v4979
    %5174 = vmatprep.subr.mxu0 0.0
    %5175 = vmatpush1.msra.mxu0 0.0
    %5176 = vmatprep.subr.mxu0 0.0
    %5177 = vmatpush1.msra.mxu0 0.0
    %5178 = vmatprep.subr.mxu0 0.0
    %5179 = vmatpush1.msra.mxu0 0.0
    %5180 = vmatprep.subr.mxu0 0.0
    %5181 = vmatpush1.msra.mxu0 0.0
    %5182 = vmatprep.subr.mxu0 0.0
    %5183 = vmatpush1.msra.mxu0 0.0
    %5184 = vmatprep.subr.mxu0 0.0
    %5185 = vmatpush1.msra.mxu0 0.0
    %5186 = vmatprep.subr.mxu0 0.0
    %5187 = vmatpush1.msra.mxu0 0.0
    %5188 = vmatprep.subr.mxu0 0.0
    %5189 = vmatpush1.msra.mxu0 0.0
    %5190 = vmatprep.subr.mxu0 0.0
    %5191 = vmatpush1.msra.mxu0 0.0
    %5192 = vmatprep.subr.mxu0 0.0
    %5193 = vmatpush1.msra.mxu0 0.0
    %5194 = vmatprep.subr.mxu0 0.0
    %5195 = vmatpush1.msra.mxu0 0.0
    %5196 = vmatprep.subr.mxu0 0.0
    %5197 = vmatpush1.msra.mxu0 0.0
    %5198 = vmatprep.subr.mxu0 0.0
    %5199 = vmatpush1.msra.mxu0 0.0
    %5200 = vmatprep.subr.mxu0 0.0
    %5201 = vmatpush1.msra.mxu0 0.0
    %5202 = vmatprep.subr.mxu0 0.0
    %5203 = vmatpush1.msra.mxu0 0.0
    %5204 = vmatprep.subr.mxu0 0.0
    %5205 = vmatpush1.msra.mxu0 0.0
    %5206 = vmatprep.subr.mxu0 0.0
    %5207 = vmatpush1.msra.mxu0 0.0
    %5208 = vmatprep.subr.mxu0 0.0
    %5209 = vmatpush1.msra.mxu0 0.0
    %5210 = vmatprep.subr.mxu0 0.0
    %5211 = vmatpush1.msra.mxu0 0.0
    %5212 = vmatprep.subr.mxu0 0.0
    %5213 = vmatpush1.msra.mxu0 0.0
    %5214 = vmatprep.subr.mxu0 0.0
    %5215 = vmatpush1.msra.mxu0 0.0
    %5216 = vmatprep.subr.mxu0 0.0
    %5217 = vmatpush1.msra.mxu0 0.0
    %5218 = vmatprep.subr.mxu0 0.0
    %5219 = vmatpush1.msra.mxu0 0.0
    %5220 = vmatprep.subr.mxu0 0.0
    %5221 = vmatpush1.msra.mxu0 0.0
    %5222 = vmatprep.subr.mxu0 0.0
    %5223 = vmatpush1.msra.mxu0 0.0
    %5224 = vmatprep.subr.mxu0 0.0
    %5225 = vmatpush1.msra.mxu0 0.0
    %5226 = vmatprep.subr.mxu0 0.0
    %5227 = vmatpush1.msra.mxu0 0.0
    %5228 = vmatprep.subr.mxu0 0.0
    %5229 = vmatpush1.msra.mxu0 0.0
    %5230 = vmatprep.subr.mxu0 0.0
    %5231 = vmatpush1.msra.mxu0 0.0
    %5232 = vmatprep.subr.mxu0 0.0
    %5233 = vmatpush1.msra.mxu0 0.0
    %5234 = vmatprep.subr.mxu0 0.0
    %5235 = vmatpush1.msra.mxu0 0.0
    %5236 = vmatprep.mubr.f32.mxu0 0.0
    %5237 = vmatmul.mubr.f32.gmra.mrb[0].mxu0 %v4981
    %v5238 = vpop.f32.mrb[0].mxu0
    %v5239 = vadd.f32 0.0, %v5238
    %v5240 = vpop.f32.mrb[0].mxu0
    %5241 = vmatprep.mubr.f32.mxu0 0.0
    %5242 = vmatmul.mubr.f32.gmra.mrb[0].mxu0 %v4984
    %v5243 = vpop.f32.mrb[0].mxu0
    %v5244 = vadd.f32 0.0, %v5243
    %v5245 = vpop.f32.mrb[0].mxu0
    %5246 = vmatprep.mubr.f32.mxu0 0.0
    %5247 = vmatmul.mubr.f32.gmra.mrb[0].mxu0 %v4987
    %v5248 = vpop.f32.mrb[0].mxu0
    %v5249 = vadd.f32 0.0, %v5248
    %v5250 = vpop.f32.mrb[0].mxu0
    %5251 = vmatprep.mubr.f32.mxu0 0.0
    %5252 = vmatmul.mubr.f32.gmra.mrb[0].mxu0 %v4990
    %v5253 = vpop.f32.mrb[0].mxu0
    %v5254 = vadd.f32 0.0, %v5253
    %v5255 = vpop.f32.mrb[0].mxu0
    %5256 = vmatprep.mubr.f32.mxu0 0.0
    %5257 = vmatmul.mubr.f32.gmra.mrb[0].mxu0 %v4993
    %v5258 = vpop.f32.mrb[0].mxu0
    %v5259 = vadd.f32 0.0, %v5258
    %v5260 = vpop.f32.mrb[0].mxu0
    %5261 = vmatprep.mubr.f32.mxu0 0.0
    %5262 = vmatmul.mubr.f32.gmra.mrb[0].mxu0 %v4996
    %v5263 = vpop.f32.mrb[0].mxu0
    %v5264 = vadd.f32 0.0, %v5263
    %v5265 = vpop.f32.mrb[0].mxu0
    %5266 = vmatprep.mubr.f32.mxu0 0.0
    %5267 = vmatmul.mubr.f32.gmra.mrb[0].mxu0 %v4999
    %v5268 = vpop.f32.mrb[0].mxu0
    %v5269 = vadd.f32 0.0, %v5268
    %v5270 = vpop.f32.mrb[0].mxu0
    %5271 = vmatprep.mubr.f32.mxu0 0.0
    %5272 = vmatmul.mubr.f32.gmra.mrb[0].mxu0 %v5002
    %v5273 = vpop.f32.mrb[0].mxu0
    %v5274 = vadd.f32 0.0, %v5273
    %v5275 = vpop.f32.mrb[0].mxu0
    %5276 = vmatprep.mubr.f32.mxu0 0.0
    %5277 = vmatmul.mubr.f32.gmra.mrb[0].mxu0 %v5005
    %v5278 = vpop.f32.mrb[0].mxu0
    %v5279 = vadd.f32 0.0, %v5278
    %v5280 = vpop.f32.mrb[0].mxu0
    %5281 = vmatprep.mubr.f32.mxu0 0.0
    %5282 = vmatmul.mubr.f32.gmra.mrb[0].mxu0 %v5008
    %v5283 = vpop.f32.mrb[0].mxu0
    %v5284 = vadd.f32 0.0, %v5283
    %v5285 = vpop.f32.mrb[0].mxu0
    %5286 = vmatprep.mubr.f32.mxu0 0.0
    %5287 = vmatmul.mubr.f32.gmra.mrb[0].mxu0 %v5011
    %v5288 = vpop.f32.mrb[0].mxu0
    %v5289 = vadd.f32 0.0, %v5288
    %v5290 = vpop.f32.mrb[0].mxu0
    %5291 = vmatprep.mubr.f32.mxu0 0.0
    %5292 = vmatmul.mubr.f32.gmra.mrb[0].mxu0 %v5014
    %v5293 = vpop.f32.mrb[0].mxu0
    %v5294 = vadd.f32 0.0, %v5293
    %v5295 = vpop.f32.mrb[0].mxu0
    %5296 = vmatprep.mubr.f32.mxu0 0.0
    %5297 = vmatmul.mubr.f32.gmra.mrb[0].mxu0 %v5017
    %v5298 = vpop.f32.mrb[0].mxu0
    %v5299 = vadd.f32 0.0, %v5298
    %v5300 = vpop.f32.mrb[0].mxu0
    %5301 = vmatprep.mubr.f32.mxu0 0.0
    %5302 = vmatmul.mubr.f32.gmra.mrb[0].mxu0 %v5020
    %v5303 = vpop.f32.mrb[0].mxu0
    %v5304 = vadd.f32 0.0, %v5303
    %v5305 = vpop.f32.mrb[0].mxu0
    %5306 = vmatprep.mubr.f32.mxu0 0.0
    %5307 = vmatmul.mubr.f32.gmra.mrb[0].mxu0 %v5023
    %v5308 = vpop.f32.mrb[0].mxu0
    %v5309 = vadd.f32 0.0, %v5308
    %v5310 = vpop.f32.mrb[0].mxu0
    %5311 = vmatprep.mubr.f32.mxu0 0.0
    %5312 = vmatmul.mubr.f32.gmra.mrb[0].mxu0 %v5026
    %v5313 = vpop.f32.mrb[0].mxu0
    %v5314 = vadd.f32 0.0, %v5313
    %v5315 = vpop.f32.mrb[0].mxu0
    %5316 = vmatprep.mubr.f32.mxu0 0.0
    %5317 = vmatmul.mubr.f32.gmra.mrb[0].mxu0 %v5029
    %v5318 = vpop.f32.mrb[0].mxu0
    %v5319 = vadd.f32 0.0, %v5318
    %v5320 = vpop.f32.mrb[0].mxu0
    %5321 = vmatprep.mubr.f32.mxu0 0.0
    %5322 = vmatmul.mubr.f32.gmra.mrb[0].mxu0 %v5032
    %v5323 = vpop.f32.mrb[0].mxu0
    %v5324 = vadd.f32 0.0, %v5323
    %v5325 = vpop.f32.mrb[0].mxu0
    %5326 = vmatprep.mubr.f32.mxu0 0.0
    %5327 = vmatmul.mubr.f32.gmra.mrb[0].mxu0 %v5035
    %v5328 = vpop.f32.mrb[0].mxu0
    %v5329 = vadd.f32 0.0, %v5328
    %v5330 = vpop.f32.mrb[0].mxu0
    %5331 = vmatprep.mubr.f32.mxu0 0.0
    %5332 = vmatmul.mubr.f32.gmra.mrb[0].mxu0 %v5038
    %v5333 = vpop.f32.mrb[0].mxu0
    %v5334 = vadd.f32 0.0, %v5333
    %v5335 = vpop.f32.mrb[0].mxu0
    %5336 = vmatprep.mubr.f32.mxu0 0.0
    %5337 = vmatmul.mubr.f32.gmra.mrb[0].mxu0 %v5041
    %v5338 = vpop.f32.mrb[0].mxu0
    %v5339 = vadd.f32 0.0, %v5338
    %v5340 = vpop.f32.mrb[0].mxu0
    %5341 = vmatprep.mubr.f32.mxu0 0.0
    %5342 = vmatmul.mubr.f32.gmra.mrb[0].mxu0 %v5044
    %v5343 = vpop.f32.mrb[0].mxu0
    %v5344 = vadd.f32 0.0, %v5343
    %v5345 = vpop.f32.mrb[0].mxu0
    %5346 = vmatprep.mubr.f32.mxu0 0.0
    %5347 = vmatmul.mubr.f32.gmra.mrb[0].mxu0 %v5047
    %v5348 = vpop.f32.mrb[0].mxu0
    %v5349 = vadd.f32 0.0, %v5348
    %v5350 = vpop.f32.mrb[0].mxu0
    %5351 = vmatprep.mubr.f32.mxu0 0.0
    %5352 = vmatmul.mubr.f32.gmra.mrb[0].mxu0 %v5050
    %v5353 = vpop.f32.mrb[0].mxu0
    %v5354 = vadd.f32 0.0, %v5353
    %v5355 = vpop.f32.mrb[0].mxu0
    %5356 = vmatprep.mubr.f32.mxu0 0.0
    %5357 = vmatmul.mubr.f32.gmra.mrb[0].mxu0 %v5053
    %v5358 = vpop.f32.mrb[0].mxu0
    %v5359 = vadd.f32 0.0, %v5358
    %v5360 = vpop.f32.mrb[0].mxu0
    %5361 = vmatprep.mubr.f32.mxu0 0.0
    %5362 = vmatmul.mubr.f32.gmra.mrb[0].mxu0 %v5056
    %v5363 = vpop.f32.mrb[0].mxu0
    %v5364 = vadd.f32 0.0, %v5363
    %v5365 = vpop.f32.mrb[0].mxu0
    %5366 = vmatprep.mubr.f32.mxu0 0.0
    %5367 = vmatmul.mubr.f32.gmra.mrb[0].mxu0 %v5059
    %v5368 = vpop.f32.mrb[0].mxu0
    %v5369 = vadd.f32 0.0, %v5368
    %v5370 = vpop.f32.mrb[0].mxu0
    %5371 = vmatprep.mubr.f32.mxu0 0.0
    %5372 = vmatmul.mubr.f32.gmra.mrb[0].mxu0 %v5062
    %v5373 = vpop.f32.mrb[0].mxu0
    %v5374 = vadd.f32 0.0, %v5373
    %v5375 = vpop.f32.mrb[0].mxu0
    %5376 = vmatprep.mubr.f32.mxu0 0.0
    %5377 = vmatmul.mubr.f32.gmra.mrb[0].mxu0 %v5065
    %v5378 = vpop.f32.mrb[0].mxu0
    %v5379 = vadd.f32 0.0, %v5378
    %v5380 = vpop.f32.mrb[0].mxu0
    %5381 = vmatprep.mubr.f32.mxu0 0.0
    %5382 = vmatmul.mubr.f32.gmra.mrb[0].mxu0 %v5068
    %v5383 = vpop.f32.mrb[0].mxu0
    %v5384 = vadd.f32 0.0, %v5383
    %v5385 = vpop.f32.mrb[0].mxu0
    %5386 = vmatprep.mubr.f32.mxu0 0.0
    %5387 = vmatmul.mubr.f32.gmra.mrb[0].mxu0 %v5071
    %v5388 = vpop.f32.mrb[0].mxu0
    %v5389 = vadd.f32 0.0, %v5388
    %v5390 = vpop.f32.mrb[0].mxu0
    %5391 = vmatprep.mubr.f32.mxu0 0.0
    %5392 = vmatmul.mubr.f32.gmra.mrb[0].mxu0 %v5074
    %v5393 = vpop.f32.mrb[0].mxu0
    %v5394 = vadd.f32 0.0, %v5393
    %v5395 = vpop.f32.mrb[0].mxu0
    %5396 = vmatprep.mubr.f32.mxu0 0.0
    %5397 = vmatmul.mubr.f32.gmra.mrb[0].mxu0 %v5077
    %v5398 = vpop.f32.mrb[0].mxu0
    %v5399 = vadd.f32 0.0, %v5398
    %v5400 = vpop.f32.mrb[0].mxu0
    %5401 = vmatprep.mubr.f32.mxu0 0.0
    %5402 = vmatmul.mubr.f32.gmra.mrb[0].mxu0 %v5080
    %v5403 = vpop.f32.mrb[0].mxu0
    %v5404 = vadd.f32 0.0, %v5403
    %v5405 = vpop.f32.mrb[0].mxu0
    %5406 = vmatprep.mubr.f32.mxu0 0.0
    %5407 = vmatmul.mubr.f32.gmra.mrb[0].mxu0 %v5083
    %v5408 = vpop.f32.mrb[0].mxu0
    %v5409 = vadd.f32 0.0, %v5408
    %v5410 = vpop.f32.mrb[0].mxu0
    %5411 = vmatprep.mubr.f32.mxu0 0.0
    %5412 = vmatmul.mubr.f32.gmra.mrb[0].mxu0 %v5086
    %v5413 = vpop.f32.mrb[0].mxu0
    %v5414 = vadd.f32 0.0, %v5413
    %v5415 = vpop.f32.mrb[0].mxu0
    %5416 = vmatprep.mubr.f32.mxu0 0.0
    %5417 = vmatmul.mubr.f32.gmra.mrb[0].mxu0 %v5089
    %v5418 = vpop.f32.mrb[0].mxu0
    %v5419 = vadd.f32 0.0, %v5418
    %v5420 = vpop.f32.mrb[0].mxu0
    %5421 = vmatprep.mubr.f32.mxu0 0.0
    %5422 = vmatmul.mubr.f32.gmra.mrb[0].mxu0 %v5092
    %v5423 = vpop.f32.mrb[0].mxu0
    %v5424 = vadd.f32 0.0, %v5423
    %v5425 = vpop.f32.mrb[0].mxu0
    %5426 = vmatprep.mubr.f32.mxu0 0.0
    %5427 = vmatmul.mubr.f32.gmra.mrb[0].mxu0 %v5095
    %v5428 = vpop.f32.mrb[0].mxu0
    %v5429 = vadd.f32 0.0, %v5428
    %v5430 = vpop.f32.mrb[0].mxu0
    %5431 = vmatprep.mubr.f32.mxu0 0.0
    %5432 = vmatmul.mubr.f32.gmra.mrb[0].mxu0 %v5098
    %v5433 = vpop.f32.mrb[0].mxu0
    %v5434 = vadd.f32 0.0, %v5433
    %v5435 = vpop.f32.mrb[0].mxu0
    %5436 = vmatprep.mubr.f32.mxu0 0.0
    %5437 = vmatmul.mubr.f32.gmra.mrb[0].mxu0 %v5101
    %v5438 = vpop.f32.mrb[0].mxu0
    %v5439 = vadd.f32 0.0, %v5438
    %v5440 = vpop.f32.mrb[0].mxu0
    %5441 = vmatprep.mubr.f32.mxu0 0.0
    %5442 = vmatmul.mubr.f32.gmra.mrb[0].mxu0 %v5104
    %v5443 = vpop.f32.mrb[0].mxu0
    %v5444 = vadd.f32 0.0, %v5443
    %v5445 = vpop.f32.mrb[0].mxu0
    %5446 = vmatprep.mubr.f32.mxu0 0.0
    %5447 = vmatmul.mubr.f32.gmra.mrb[0].mxu0 %v5107
    %v5448 = vpop.f32.mrb[0].mxu0
    %v5449 = vadd.f32 0.0, %v5448
    %v5450 = vpop.f32.mrb[0].mxu0
    %5451 = vmatprep.mubr.f32.mxu0 0.0
    %5452 = vmatmul.mubr.f32.gmra.mrb[0].mxu0 %v5110
    %v5453 = vpop.f32.mrb[0].mxu0
    %v5454 = vadd.f32 0.0, %v5453
    %v5455 = vpop.f32.mrb[0].mxu0
    %5456 = vmatprep.mubr.f32.mxu0 0.0
    %5457 = vmatmul.mubr.f32.gmra.mrb[0].mxu0 %v5113
    %v5458 = vpop.f32.mrb[0].mxu0
    %v5459 = vadd.f32 0.0, %v5458
    %v5460 = vpop.f32.mrb[0].mxu0
    %5461 = vmatprep.mubr.f32.mxu0 0.0
    %5462 = vmatmul.mubr.f32.gmra.mrb[0].mxu0 %v5116
    %v5463 = vpop.f32.mrb[0].mxu0
    %v5464 = vadd.f32 0.0, %v5463
    %v5465 = vpop.f32.mrb[0].mxu0
    %5466 = vmatprep.mubr.f32.mxu0 0.0
    %5467 = vmatmul.mubr.f32.gmra.mrb[0].mxu0 %v5119
    %v5468 = vpop.f32.mrb[0].mxu0
    %v5469 = vadd.f32 0.0, %v5468
    %v5470 = vpop.f32.mrb[0].mxu0
    %5471 = vmatprep.mubr.f32.mxu0 0.0
    %5472 = vmatmul.mubr.f32.gmra.mrb[0].mxu0 %v5122
    %v5473 = vpop.f32.mrb[0].mxu0
    %v5474 = vadd.f32 0.0, %v5473
    %v5475 = vpop.f32.mrb[0].mxu0
    %5476 = vmatprep.mubr.f32.mxu0 0.0
    %5477 = vmatmul.mubr.f32.gmra.mrb[0].mxu0 %v5125
    %v5478 = vpop.f32.mrb[0].mxu0
    %v5479 = vadd.f32 0.0, %v5478
    %v5480 = vpop.f32.mrb[0].mxu0
    %5481 = vmatprep.mubr.f32.mxu0 0.0
    %5482 = vmatmul.mubr.f32.gmra.mrb[0].mxu0 %v5128
    %v5483 = vpop.f32.mrb[0].mxu0
    %v5484 = vadd.f32 0.0, %v5483
    %v5485 = vpop.f32.mrb[0].mxu0
    %5486 = vmatprep.mubr.f32.mxu0 0.0
    %5487 = vmatmul.mubr.f32.gmra.mrb[0].mxu0 %v5131
    %v5488 = vpop.f32.mrb[0].mxu0
    %v5489 = vadd.f32 0.0, %v5488
    %v5490 = vpop.f32.mrb[0].mxu0
    %5491 = vmatprep.mubr.f32.mxu0 0.0
    %5492 = vmatmul.mubr.f32.gmra.mrb[0].mxu0 %v5134
    %v5493 = vpop.f32.mrb[0].mxu0
    %v5494 = vadd.f32 0.0, %v5493
    %v5495 = vpop.f32.mrb[0].mxu0
    %5496 = vmatprep.mubr.f32.mxu0 0.0
    %5497 = vmatmul.mubr.f32.gmra.mrb[0].mxu0 %v5137
    %v5498 = vpop.f32.mrb[0].mxu0
    %v5499 = vadd.f32 0.0, %v5498
    %v5500 = vpop.f32.mrb[0].mxu0
    %5501 = vmatprep.mubr.f32.mxu0 0.0
    %5502 = vmatmul.mubr.f32.gmra.mrb[0].mxu0 %v5140
    %v5503 = vpop.f32.mrb[0].mxu0
    %v5504 = vadd.f32 0.0, %v5503
    %v5505 = vpop.f32.mrb[0].mxu0
    %5506 = vmatprep.mubr.f32.mxu0 0.0
    %5507 = vmatmul.mubr.f32.gmra.mrb[0].mxu0 %v5143
    %v5508 = vpop.f32.mrb[0].mxu0
    %v5509 = vadd.f32 0.0, %v5508
    %v5510 = vpop.f32.mrb[0].mxu0
    %5511 = vmatprep.mubr.f32.mxu0 0.0
    %5512 = vmatmul.mubr.f32.gmra.mrb[0].mxu0 %v5146
    %v5513 = vpop.f32.mrb[0].mxu0
    %v5514 = vadd.f32 0.0, %v5513
    %v5515 = vpop.f32.mrb[0].mxu0
    %5516 = vmatprep.mubr.f32.mxu0 0.0
    %5517 = vmatmul.mubr.f32.gmra.mrb[0].mxu0 %v5149
    %v5518 = vpop.f32.mrb[0].mxu0
    %v5519 = vadd.f32 0.0, %v5518
    %v5520 = vpop.f32.mrb[0].mxu0
    %5521 = vmatprep.mubr.f32.mxu0 0.0
    %5522 = vmatmul.mubr.f32.gmra.mrb[0].mxu0 %v5152
    %v5523 = vpop.f32.mrb[0].mxu0
    %v5524 = vadd.f32 0.0, %v5523
    %v5525 = vpop.f32.mrb[0].mxu0
    %5526 = vmatprep.mubr.f32.mxu0 0.0
    %5527 = vmatmul.mubr.f32.gmra.mrb[0].mxu0 %v5155
    %v5528 = vpop.f32.mrb[0].mxu0
    %v5529 = vadd.f32 0.0, %v5528
    %v5530 = vpop.f32.mrb[0].mxu0
    %5531 = vmatprep.mubr.f32.mxu0 0.0
    %5532 = vmatmul.mubr.f32.gmra.mrb[0].mxu0 %v5158
    %v5533 = vpop.f32.mrb[0].mxu0
    %v5534 = vadd.f32 0.0, %v5533
    %v5535 = vpop.f32.mrb[0].mxu0
    %5536 = vmatprep.mubr.f32.mxu0 0.0
    %5537 = vmatmul.mubr.f32.gmra.mrb[0].mxu0 %v5161
    %v5538 = vpop.f32.mrb[0].mxu0
    %v5539 = vadd.f32 0.0, %v5538
    %v5540 = vpop.f32.mrb[0].mxu0
    %5541 = vmatprep.mubr.f32.mxu0 0.0
    %5542 = vmatmul.mubr.f32.gmra.mrb[0].mxu0 %v5164
    %v5543 = vpop.f32.mrb[0].mxu0
    %v5544 = vadd.f32 0.0, %v5543
    %v5545 = vpop.f32.mrb[0].mxu0
    %5546 = vmatprep.mubr.f32.mxu0 0.0
    %5547 = vmatmul.mubr.f32.gmra.mrb[0].mxu0 %v5167
    %v5548 = vpop.f32.mrb[0].mxu0
    %v5549 = vadd.f32 0.0, %v5548
    %v5550 = vpop.f32.mrb[0].mxu0
    %5551 = vmatprep.mubr.f32.mxu0 0.0
    %5552 = vmatmul.mubr.f32.gmra.mrb[0].mxu0 %v5170
    %v5553 = vpop.f32.mrb[0].mxu0
    %v5554 = vadd.f32 0.0, %v5553
    %v5555 = vpop.f32.mrb[0].mxu0
    %5556 = vdwg.mxu0
    %v5557 = vld [vmem:[#allocation2] sm:$0xff]
    %v5558 = vld [vmem:[#allocation2 + $0x8] sm:$0xff]
    %v5559 = vld [vmem:[#allocation2 + $0x10] sm:$0xff]
    %v5560 = vld [vmem:[#allocation2 + $0x18] sm:$0xff]
    %v5561 = vld [vmem:[#allocation2 + $0x20] sm:$0xff]
    %v5562 = vld [vmem:[#allocation2 + $0x28] sm:$0xff]
    %v5563 = vld [vmem:[#allocation2 + $0x30] sm:$0xff]
    %v5564 = vld [vmem:[#allocation2 + $0x38] sm:$0xff]
    %v5565 = vld [vmem:[#allocation2 + $0x40] sm:$0xff]
    %v5566 = vld [vmem:[#allocation2 + $0x48] sm:$0xff]
    %v5567 = vld [vmem:[#allocation2 + $0x50] sm:$0xff]
    %v5568 = vld [vmem:[#allocation2 + $0x58] sm:$0xff]
    %v5569 = vld [vmem:[#allocation2 + $0x60] sm:$0xff]
    %v5570 = vld [vmem:[#allocation2 + $0x68] sm:$0xff]
    %v5571 = vld [vmem:[#allocation2 + $0x70] sm:$0xff]
    %v5572 = vld [vmem:[#allocation2 + $0x78] sm:$0xff]
    %v5573 = vld [vmem:[#allocation2 + $0x80] sm:$0xff]
    %v5574 = vld [vmem:[#allocation2 + $0x88] sm:$0xff]
    %v5575 = vld [vmem:[#allocation2 + $0x90] sm:$0xff]
    %v5576 = vld [vmem:[#allocation2 + $0x98] sm:$0xff]
    %v5577 = vld [vmem:[#allocation2 + $0xa0] sm:$0xff]
    %v5578 = vld [vmem:[#allocation2 + $0xa8] sm:$0xff]
    %v5579 = vld [vmem:[#allocation2 + $0xb0] sm:$0xff]
    %v5580 = vld [vmem:[#allocation2 + $0xb8] sm:$0xff]
    %v5581 = vld [vmem:[#allocation2 + $0xc0] sm:$0xff]
    %v5582 = vld [vmem:[#allocation2 + $0xc8] sm:$0xff]
    %v5583 = vld [vmem:[#allocation2 + $0xd0] sm:$0xff]
    %v5584 = vld [vmem:[#allocation2 + $0xd8] sm:$0xff]
    %v5585 = vld [vmem:[#allocation2 + $0xe0] sm:$0xff]
    %v5586 = vld [vmem:[#allocation2 + $0xe8] sm:$0xff]
    %v5587 = vld [vmem:[#allocation2 + $0xf0] sm:$0xff]
    %v5588 = vld [vmem:[#allocation2 + $0xf8] sm:$0xff]
    %v5589 = vld [vmem:[#allocation2 + $0x100] sm:$0xff]
    %v5590 = vld [vmem:[#allocation2 + $0x108] sm:$0xff]
    %v5591 = vld [vmem:[#allocation2 + $0x110] sm:$0xff]
    %v5592 = vld [vmem:[#allocation2 + $0x118] sm:$0xff]
    %v5593 = vld [vmem:[#allocation2 + $0x120] sm:$0xff]
    %v5594 = vld [vmem:[#allocation2 + $0x128] sm:$0xff]
    %v5595 = vld [vmem:[#allocation2 + $0x130] sm:$0xff]
    %v5596 = vld [vmem:[#allocation2 + $0x138] sm:$0xff]
    %v5597 = vld [vmem:[#allocation2 + $0x140] sm:$0xff]
    %v5598 = vld [vmem:[#allocation2 + $0x148] sm:$0xff]
    %v5599 = vld [vmem:[#allocation2 + $0x150] sm:$0xff]
    %v5600 = vld [vmem:[#allocation2 + $0x158] sm:$0xff]
    %v5601 = vld [vmem:[#allocation2 + $0x160] sm:$0xff]
    %v5602 = vld [vmem:[#allocation2 + $0x168] sm:$0xff]
    %v5603 = vld [vmem:[#allocation2 + $0x170] sm:$0xff]
    %v5604 = vld [vmem:[#allocation2 + $0x178] sm:$0xff]
    %v5605 = vld [vmem:[#allocation2 + $0x180] sm:$0xff]
    %v5606 = vld [vmem:[#allocation2 + $0x188] sm:$0xff]
    %v5607 = vld [vmem:[#allocation2 + $0x190] sm:$0xff]
    %v5608 = vld [vmem:[#allocation2 + $0x198] sm:$0xff]
    %v5609 = vld [vmem:[#allocation2 + $0x1a0] sm:$0xff]
    %v5610 = vld [vmem:[#allocation2 + $0x1a8] sm:$0xff]
    %v5611 = vld [vmem:[#allocation2 + $0x1b0] sm:$0xff]
    %v5612 = vld [vmem:[#allocation2 + $0x1b8] sm:$0xff]
    %v5613 = vld [vmem:[#allocation2 + $0x1c0] sm:$0xff]
    %v5614 = vld [vmem:[#allocation2 + $0x1c8] sm:$0xff]
    %v5615 = vld [vmem:[#allocation2 + $0x1d0] sm:$0xff]
    %v5616 = vld [vmem:[#allocation2 + $0x1d8] sm:$0xff]
    %v5617 = vld [vmem:[#allocation2 + $0x1e0] sm:$0xff]
    %v5618 = vld [vmem:[#allocation2 + $0x1e8] sm:$0xff]
    %v5619 = vld [vmem:[#allocation2 + $0x1f0] sm:$0xff]
    %v5620 = vld [vmem:[#allocation2 + $0x1f8] sm:$0xff]
    %v5621 = vadd.f32 %v5557, %v5239
    %v5622 = vadd.f32 %v5558, %v5244
    %v5623 = vadd.f32 %v5559, %v5249
    %v5624 = vadd.f32 %v5560, %v5254
    %v5625 = vadd.f32 %v5561, %v5259
    %v5626 = vadd.f32 %v5562, %v5264
    %v5627 = vadd.f32 %v5563, %v5269
    %v5628 = vadd.f32 %v5564, %v5274
    %v5629 = vadd.f32 %v5565, %v5279
    %v5630 = vadd.f32 %v5566, %v5284
    %v5631 = vadd.f32 %v5567, %v5289
    %v5632 = vadd.f32 %v5568, %v5294
    %v5633 = vadd.f32 %v5569, %v5299
    %v5634 = vadd.f32 %v5570, %v5304
    %v5635 = vadd.f32 %v5571, %v5309
    %v5636 = vadd.f32 %v5572, %v5314
    %v5637 = vadd.f32 %v5573, %v5319
    %v5638 = vadd.f32 %v5574, %v5324
    %v5639 = vadd.f32 %v5575, %v5329
    %v5640 = vadd.f32 %v5576, %v5334
    %v5641 = vadd.f32 %v5577, %v5339
    %v5642 = vadd.f32 %v5578, %v5344
    %v5643 = vadd.f32 %v5579, %v5349
    %v5644 = vadd.f32 %v5580, %v5354
    %v5645 = vadd.f32 %v5581, %v5359
    %v5646 = vadd.f32 %v5582, %v5364
    %v5647 = vadd.f32 %v5583, %v5369
    %v5648 = vadd.f32 %v5584, %v5374
    %v5649 = vadd.f32 %v5585, %v5379
    %v5650 = vadd.f32 %v5586, %v5384
    %v5651 = vadd.f32 %v5587, %v5389
    %v5652 = vadd.f32 %v5588, %v5394
    %v5653 = vadd.f32 %v5589, %v5399
    %v5654 = vadd.f32 %v5590, %v5404
    %v5655 = vadd.f32 %v5591, %v5409
    %v5656 = vadd.f32 %v5592, %v5414
    %v5657 = vadd.f32 %v5593, %v5419
    %v5658 = vadd.f32 %v5594, %v5424
    %v5659 = vadd.f32 %v5595, %v5429
    %v5660 = vadd.f32 %v5596, %v5434
    %v5661 = vadd.f32 %v5597, %v5439
    %v5662 = vadd.f32 %v5598, %v5444
    %v5663 = vadd.f32 %v5599, %v5449
    %v5664 = vadd.f32 %v5600, %v5454
    %v5665 = vadd.f32 %v5601, %v5459
    %v5666 = vadd.f32 %v5602, %v5464
    %v5667 = vadd.f32 %v5603, %v5469
    %v5668 = vadd.f32 %v5604, %v5474
    %v5669 = vadd.f32 %v5605, %v5479
    %v5670 = vadd.f32 %v5606, %v5484
    %v5671 = vadd.f32 %v5607, %v5489
    %v5672 = vadd.f32 %v5608, %v5494
    %v5673 = vadd.f32 %v5609, %v5499
    %v5674 = vadd.f32 %v5610, %v5504
    %v5675 = vadd.f32 %v5611, %v5509
    %v5676 = vadd.f32 %v5612, %v5514
    %v5677 = vadd.f32 %v5613, %v5519
    %v5678 = vadd.f32 %v5614, %v5524
    %v5679 = vadd.f32 %v5615, %v5529
    %v5680 = vadd.f32 %v5616, %v5534
    %v5681 = vadd.f32 %v5617, %v5539
    %v5682 = vadd.f32 %v5618, %v5544
    %v5683 = vadd.f32 %v5619, %v5549
    %v5684 = vadd.f32 %v5620, %v5554
    %5685 = vst.msk [vmem:[#allocation2] sm:$0xff] %vm95, %v5621
    %5686 = vst.msk [vmem:[#allocation2 + $0x8] sm:$0xff] %vm95, %v5622
    %5687 = vst.msk [vmem:[#allocation2 + $0x10] sm:$0xff] %vm95, %v5623
    %5688 = vst.msk [vmem:[#allocation2 + $0x18] sm:$0xff] %vm95, %v5624
    %5689 = vst.msk [vmem:[#allocation2 + $0x20] sm:$0xff] %vm95, %v5625
    %5690 = vst.msk [vmem:[#allocation2 + $0x28] sm:$0xff] %vm95, %v5626
    %5691 = vst.msk [vmem:[#allocation2 + $0x30] sm:$0xff] %vm95, %v5627
    %5692 = vst.msk [vmem:[#allocation2 + $0x38] sm:$0xff] %vm95, %v5628
    %5693 = vst.msk [vmem:[#allocation2 + $0x40] sm:$0xff] %vm95, %v5629
    %5694 = vst.msk [vmem:[#allocation2 + $0x48] sm:$0xff] %vm95, %v5630
    %5695 = vst.msk [vmem:[#allocation2 + $0x50] sm:$0xff] %vm95, %v5631
    %5696 = vst.msk [vmem:[#allocation2 + $0x58] sm:$0xff] %vm95, %v5632
    %5697 = vst.msk [vmem:[#allocation2 + $0x60] sm:$0xff] %vm95, %v5633
    %5698 = vst.msk [vmem:[#allocation2 + $0x68] sm:$0xff] %vm95, %v5634
    %5699 = vst.msk [vmem:[#allocation2 + $0x70] sm:$0xff] %vm95, %v5635
    %5700 = vst.msk [vmem:[#allocation2 + $0x78] sm:$0xff] %vm95, %v5636
    %5701 = vst.msk [vmem:[#allocation2 + $0x80] sm:$0xff] %vm95, %v5637
    %5702 = vst.msk [vmem:[#allocation2 + $0x88] sm:$0xff] %vm95, %v5638
    %5703 = vst.msk [vmem:[#allocation2 + $0x90] sm:$0xff] %vm95, %v5639
    %5704 = vst.msk [vmem:[#allocation2 + $0x98] sm:$0xff] %vm95, %v5640
    %5705 = vst.msk [vmem:[#allocation2 + $0xa0] sm:$0xff] %vm95, %v5641
    %5706 = vst.msk [vmem:[#allocation2 + $0xa8] sm:$0xff] %vm95, %v5642
    %5707 = vst.msk [vmem:[#allocation2 + $0xb0] sm:$0xff] %vm95, %v5643
    %5708 = vst.msk [vmem:[#allocation2 + $0xb8] sm:$0xff] %vm95, %v5644
    %5709 = vst.msk [vmem:[#allocation2 + $0xc0] sm:$0xff] %vm95, %v5645
    %5710 = vst.msk [vmem:[#allocation2 + $0xc8] sm:$0xff] %vm95, %v5646
    %5711 = vst.msk [vmem:[#allocation2 + $0xd0] sm:$0xff] %vm95, %v5647
    %5712 = vst.msk [vmem:[#allocation2 + $0xd8] sm:$0xff] %vm95, %v5648
    %5713 = vst.msk [vmem:[#allocation2 + $0xe0] sm:$0xff] %vm95, %v5649
    %5714 = vst.msk [vmem:[#allocation2 + $0xe8] sm:$0xff] %vm95, %v5650
    %5715 = vst.msk [vmem:[#allocation2 + $0xf0] sm:$0xff] %vm95, %v5651
    %5716 = vst.msk [vmem:[#allocation2 + $0xf8] sm:$0xff] %vm95, %v5652
    %5717 = vst.msk [vmem:[#allocation2 + $0x100] sm:$0xff] %vm95, %v5653
    %5718 = vst.msk [vmem:[#allocation2 + $0x108] sm:$0xff] %vm95, %v5654
    %5719 = vst.msk [vmem:[#allocation2 + $0x110] sm:$0xff] %vm95, %v5655
    %5720 = vst.msk [vmem:[#allocation2 + $0x118] sm:$0xff] %vm95, %v5656
    %5721 = vst.msk [vmem:[#allocation2 + $0x120] sm:$0xff] %vm95, %v5657
    %5722 = vst.msk [vmem:[#allocation2 + $0x128] sm:$0xff] %vm95, %v5658
    %5723 = vst.msk [vmem:[#allocation2 + $0x130] sm:$0xff] %vm95, %v5659
    %5724 = vst.msk [vmem:[#allocation2 + $0x138] sm:$0xff] %vm95, %v5660
    %5725 = vst.msk [vmem:[#allocation2 + $0x140] sm:$0xff] %vm95, %v5661
    %5726 = vst.msk [vmem:[#allocation2 + $0x148] sm:$0xff] %vm95, %v5662
    %5727 = vst.msk [vmem:[#allocation2 + $0x150] sm:$0xff] %vm95, %v5663
    %5728 = vst.msk [vmem:[#allocation2 + $0x158] sm:$0xff] %vm95, %v5664
    %5729 = vst.msk [vmem:[#allocation2 + $0x160] sm:$0xff] %vm95, %v5665
    %5730 = vst.msk [vmem:[#allocation2 + $0x168] sm:$0xff] %vm95, %v5666
    %5731 = vst.msk [vmem:[#allocation2 + $0x170] sm:$0xff] %vm95, %v5667
    %5732 = vst.msk [vmem:[#allocation2 + $0x178] sm:$0xff] %vm95, %v5668
    %5733 = vst.msk [vmem:[#allocation2 + $0x180] sm:$0xff] %vm95, %v5669
    %5734 = vst.msk [vmem:[#allocation2 + $0x188] sm:$0xff] %vm95, %v5670
    %5735 = vst.msk [vmem:[#allocation2 + $0x190] sm:$0xff] %vm95, %v5671
    %5736 = vst.msk [vmem:[#allocation2 + $0x198] sm:$0xff] %vm95, %v5672
    %5737 = vst.msk [vmem:[#allocation2 + $0x1a0] sm:$0xff] %vm95, %v5673
    %5738 = vst.msk [vmem:[#allocation2 + $0x1a8] sm:$0xff] %vm95, %v5674
    %5739 = vst.msk [vmem:[#allocation2 + $0x1b0] sm:$0xff] %vm95, %v5675
    %5740 = vst.msk [vmem:[#allocation2 + $0x1b8] sm:$0xff] %vm95, %v5676
    %5741 = vst.msk [vmem:[#allocation2 + $0x1c0] sm:$0xff] %vm95, %v5677
    %5742 = vst.msk [vmem:[#allocation2 + $0x1c8] sm:$0xff] %vm95, %v5678
    %5743 = vst.msk [vmem:[#allocation2 + $0x1d0] sm:$0xff] %vm95, %v5679
    %5744 = vst.msk [vmem:[#allocation2 + $0x1d8] sm:$0xff] %vm95, %v5680
    %5745 = vst.msk [vmem:[#allocation2 + $0x1e0] sm:$0xff] %vm95, %v5681
    %5746 = vst.msk [vmem:[#allocation2 + $0x1e8] sm:$0xff] %vm95, %v5682
    %5747 = vst.msk [vmem:[#allocation2 + $0x1f0] sm:$0xff] %vm95, %v5683
    %5748 = vst.msk [vmem:[#allocation2 + $0x1f8] sm:$0xff] %vm95, %v5684
    %v5749 = vld [vmem:[%s737 + $0x2] sm:$0xff]
    %v5750 = vld [vmem:[%s737 + $0xa] sm:$0xff]
    %v5751 = vld [vmem:[%s737 + $0x1a] sm:$0xff]
    %v5752 = vld [vmem:[%s737 + $0x22] sm:$0xff]
    %v5753 = vld [vmem:[%s737 + $0x32] sm:$0xff]
    %v5754 = vld [vmem:[%s737 + $0x3a] sm:$0xff]
    %v5755 = vld [vmem:[%s737 + $0x4a] sm:$0xff]
    %v5756 = vld [vmem:[%s737 + $0x52] sm:$0xff]
    %v5757 = vld [vmem:[%s737 + $0x62] sm:$0xff]
    %v5758 = vld [vmem:[%s737 + $0x6a] sm:$0xff]
    %v5759 = vld [vmem:[%s737 + $0x7a] sm:$0xff]
    %v5760 = vld [vmem:[%s737 + $0x82] sm:$0xff]
    %v5761 = vld [vmem:[%s737 + $0x92] sm:$0xff]
    %v5762 = vld [vmem:[%s737 + $0x9a] sm:$0xff]
    %v5763 = vld [vmem:[%s737 + $0xaa] sm:$0xff]
    %v5764 = vld [vmem:[%s737 + $0xb2] sm:$0xff]
    %v5765 = vld [vmem:[%s737 + $0xc2] sm:$0xff]
    %v5766 = vld [vmem:[%s737 + $0xca] sm:$0xff]
    %v5767 = vld [vmem:[%s737 + $0xda] sm:$0xff]
    %v5768 = vld [vmem:[%s737 + $0xe2] sm:$0xff]
    %v5769 = vld [vmem:[%s737 + $0xf2] sm:$0xff]
    %v5770 = vld [vmem:[%s737 + $0xfa] sm:$0xff]
    %v5771 = vld [vmem:[%s737 + $0x10a] sm:$0xff]
    %v5772 = vld [vmem:[%s737 + $0x112] sm:$0xff]
    %v5773 = vld [vmem:[%s737 + $0x122] sm:$0xff]
    %v5774 = vld [vmem:[%s737 + $0x12a] sm:$0xff]
    %v5775 = vld [vmem:[%s737 + $0x13a] sm:$0xff]
    %v5776 = vld [vmem:[%s737 + $0x142] sm:$0xff]
    %v5777 = vld [vmem:[%s737 + $0x152] sm:$0xff]
    %v5778 = vld [vmem:[%s737 + $0x15a] sm:$0xff]
    %v5779 = vld [vmem:[%s737 + $0x16a] sm:$0xff]
    %v5780 = vld [vmem:[%s737 + $0x172] sm:$0xff]
    %v5781 = vld [vmem:[%s737 + $0x1b2] sm:$0xff]
    %v5782 = vld [vmem:[%s737 + $0x1ba] sm:$0xff]
    %v5783 = vld [vmem:[%s737 + $0x1ca] sm:$0xff]
    %v5784 = vld [vmem:[%s737 + $0x1d2] sm:$0xff]
    %v5785 = vld [vmem:[%s737 + $0x1e2] sm:$0xff]
    %v5786 = vld [vmem:[%s737 + $0x1ea] sm:$0xff]
    %v5787 = vld [vmem:[%s737 + $0x1fa] sm:$0xff]
    %v5788 = vld [vmem:[%s737 + $0x202] sm:$0xff]
    %v5789 = vld [vmem:[%s737 + $0x212] sm:$0xff]
    %v5790 = vld [vmem:[%s737 + $0x21a] sm:$0xff]
    %v5791 = vld [vmem:[%s737 + $0x22a] sm:$0xff]
    %v5792 = vld [vmem:[%s737 + $0x232] sm:$0xff]
    %v5793 = vld [vmem:[%s737 + $0x242] sm:$0xff]
    %v5794 = vld [vmem:[%s737 + $0x24a] sm:$0xff]
    %v5795 = vld [vmem:[%s737 + $0x25a] sm:$0xff]
    %v5796 = vld [vmem:[%s737 + $0x262] sm:$0xff]
    %v5797 = vld [vmem:[%s737 + $0x272] sm:$0xff]
    %v5798 = vld [vmem:[%s737 + $0x27a] sm:$0xff]
    %v5799 = vld [vmem:[%s737 + $0x28a] sm:$0xff]
    %v5800 = vld [vmem:[%s737 + $0x292] sm:$0xff]
    %v5801 = vld [vmem:[%s737 + $0x2a2] sm:$0xff]
    %v5802 = vld [vmem:[%s737 + $0x2aa] sm:$0xff]
    %v5803 = vld [vmem:[%s737 + $0x2ba] sm:$0xff]
    %v5804 = vld [vmem:[%s737 + $0x2c2] sm:$0xff]
    %v5805 = vld [vmem:[%s737 + $0x2d2] sm:$0xff]
    %v5806 = vld [vmem:[%s737 + $0x2da] sm:$0xff]
    %v5807 = vld [vmem:[%s737 + $0x2ea] sm:$0xff]
    %v5808 = vld [vmem:[%s737 + $0x2f2] sm:$0xff]
    %v5809 = vld [vmem:[%s737 + $0x302] sm:$0xff]
    %v5810 = vld [vmem:[%s737 + $0x30a] sm:$0xff]
    %v5811 = vld [vmem:[%s737 + $0x31a] sm:$0xff]
    %v5812 = vld [vmem:[%s737 + $0x322] sm:$0xff]
    %s5813 = scalar_lea.vmem %s1, 56
    %v5814 = vld [vmem:[%s5813] sm:$0xff]
    %v5816 = vsel %vm95, %v5749, 0
    %v5819 = vsel %vm95, %v5750, 0
    %v5822 = vsel %vm95, %v5751, 0
    %v5825 = vsel %vm95, %v5752, 0
    %v5828 = vsel %vm95, %v5753, 0
    %v5831 = vsel %vm95, %v5754, 0
    %v5834 = vsel %vm95, %v5755, 0
    %v5837 = vsel %vm95, %v5756, 0
    %v5840 = vsel %vm95, %v5757, 0
    %v5843 = vsel %vm95, %v5758, 0
    %v5846 = vsel %vm95, %v5759, 0
    %v5849 = vsel %vm95, %v5760, 0
    %v5852 = vsel %vm95, %v5761, 0
    %v5855 = vsel %vm95, %v5762, 0
    %v5858 = vsel %vm95, %v5763, 0
    %v5861 = vsel %vm95, %v5764, 0
    %v5864 = vsel %vm95, %v5765, 0
    %v5867 = vsel %vm95, %v5766, 0
    %v5870 = vsel %vm95, %v5767, 0
    %v5873 = vsel %vm95, %v5768, 0
    %v5876 = vsel %vm95, %v5769, 0
    %v5879 = vsel %vm95, %v5770, 0
    %v5882 = vsel %vm95, %v5771, 0
    %v5885 = vsel %vm95, %v5772, 0
    %v5888 = vsel %vm95, %v5773, 0
    %v5891 = vsel %vm95, %v5774, 0
    %v5894 = vsel %vm95, %v5775, 0
    %v5897 = vsel %vm95, %v5776, 0
    %v5900 = vsel %vm95, %v5777, 0
    %v5903 = vsel %vm95, %v5778, 0
    %v5906 = vsel %vm95, %v5779, 0
    %v5909 = vsel %vm95, %v5780, 0
    %v5912 = vsel %vm95, %v5781, 0
    %v5915 = vsel %vm95, %v5782, 0
    %v5918 = vsel %vm95, %v5783, 0
    %v5921 = vsel %vm95, %v5784, 0
    %v5924 = vsel %vm95, %v5785, 0
    %v5927 = vsel %vm95, %v5786, 0
    %v5930 = vsel %vm95, %v5787, 0
    %v5933 = vsel %vm95, %v5788, 0
    %v5936 = vsel %vm95, %v5789, 0
    %v5939 = vsel %vm95, %v5790, 0
    %v5942 = vsel %vm95, %v5791, 0
    %v5945 = vsel %vm95, %v5792, 0
    %v5948 = vsel %vm95, %v5793, 0
    %v5951 = vsel %vm95, %v5794, 0
    %v5954 = vsel %vm95, %v5795, 0
    %v5957 = vsel %vm95, %v5796, 0
    %v5960 = vsel %vm95, %v5797, 0
    %v5963 = vsel %vm95, %v5798, 0
    %v5966 = vsel %vm95, %v5799, 0
    %v5969 = vsel %vm95, %v5800, 0
    %v5972 = vsel %vm95, %v5801, 0
    %v5975 = vsel %vm95, %v5802, 0
    %v5978 = vsel %vm95, %v5803, 0
    %v5981 = vsel %vm95, %v5804, 0
    %v5984 = vsel %vm95, %v5805, 0
    %v5987 = vsel %vm95, %v5806, 0
    %v5990 = vsel %vm95, %v5807, 0
    %v5993 = vsel %vm95, %v5808, 0
    %v5996 = vsel %vm95, %v5809, 0
    %v5999 = vsel %vm95, %v5810, 0
    %v6002 = vsel %vm95, %v5811, 0
    %v6005 = vsel %vm95, %v5812, 0
    %6007 = vmatprep.subr.mxu0 0.0
    %6008 = vmatpush1.msra.mxu0 %v5814
    %6009 = vmatprep.subr.mxu0 0.0
    %6010 = vmatpush1.msra.mxu0 0.0
    %6011 = vmatprep.subr.mxu0 0.0
    %6012 = vmatpush1.msra.mxu0 0.0
    %6013 = vmatprep.subr.mxu0 0.0
    %6014 = vmatpush1.msra.mxu0 0.0
    %6015 = vmatprep.subr.mxu0 0.0
    %6016 = vmatpush1.msra.mxu0 0.0
    %6017 = vmatprep.subr.mxu0 0.0
    %6018 = vmatpush1.msra.mxu0 0.0
    %6019 = vmatprep.subr.mxu0 0.0
    %6020 = vmatpush1.msra.mxu0 0.0
    %6021 = vmatprep.subr.mxu0 0.0
    %6022 = vmatpush1.msra.mxu0 0.0
    %6023 = vmatprep.subr.mxu0 0.0
    %6024 = vmatpush1.msra.mxu0 0.0
    %6025 = vmatprep.subr.mxu0 0.0
    %6026 = vmatpush1.msra.mxu0 0.0
    %6027 = vmatprep.subr.mxu0 0.0
    %6028 = vmatpush1.msra.mxu0 0.0
    %6029 = vmatprep.subr.mxu0 0.0
    %6030 = vmatpush1.msra.mxu0 0.0
    %6031 = vmatprep.subr.mxu0 0.0
    %6032 = vmatpush1.msra.mxu0 0.0
    %6033 = vmatprep.subr.mxu0 0.0
    %6034 = vmatpush1.msra.mxu0 0.0
    %6035 = vmatprep.subr.mxu0 0.0
    %6036 = vmatpush1.msra.mxu0 0.0
    %6037 = vmatprep.subr.mxu0 0.0
    %6038 = vmatpush1.msra.mxu0 0.0
    %6039 = vmatprep.subr.mxu0 0.0
    %6040 = vmatpush1.msra.mxu0 0.0
    %6041 = vmatprep.subr.mxu0 0.0
    %6042 = vmatpush1.msra.mxu0 0.0
    %6043 = vmatprep.subr.mxu0 0.0
    %6044 = vmatpush1.msra.mxu0 0.0
    %6045 = vmatprep.subr.mxu0 0.0
    %6046 = vmatpush1.msra.mxu0 0.0
    %6047 = vmatprep.subr.mxu0 0.0
    %6048 = vmatpush1.msra.mxu0 0.0
    %6049 = vmatprep.subr.mxu0 0.0
    %6050 = vmatpush1.msra.mxu0 0.0
    %6051 = vmatprep.subr.mxu0 0.0
    %6052 = vmatpush1.msra.mxu0 0.0
    %6053 = vmatprep.subr.mxu0 0.0
    %6054 = vmatpush1.msra.mxu0 0.0
    %6055 = vmatprep.subr.mxu0 0.0
    %6056 = vmatpush1.msra.mxu0 0.0
    %6057 = vmatprep.subr.mxu0 0.0
    %6058 = vmatpush1.msra.mxu0 0.0
    %6059 = vmatprep.subr.mxu0 0.0
    %6060 = vmatpush1.msra.mxu0 0.0
    %6061 = vmatprep.subr.mxu0 0.0
    %6062 = vmatpush1.msra.mxu0 0.0
    %6063 = vmatprep.subr.mxu0 0.0
    %6064 = vmatpush1.msra.mxu0 0.0
    %6065 = vmatprep.subr.mxu0 0.0
    %6066 = vmatpush1.msra.mxu0 0.0
    %6067 = vmatprep.subr.mxu0 0.0
    %6068 = vmatpush1.msra.mxu0 0.0
    %6069 = vmatprep.subr.mxu0 0.0
    %6070 = vmatpush1.msra.mxu0 0.0
    %6071 = vmatprep.mubr.f32.mxu0 0.0
    %6072 = vmatmul.mubr.f32.gmra.mrb[0].mxu0 %v5816
    %v6073 = vpop.f32.mrb[0].mxu0
    %v6074 = vadd.f32 0.0, %v6073
    %v6075 = vpop.f32.mrb[0].mxu0
    %6076 = vmatprep.mubr.f32.mxu0 0.0
    %6077 = vmatmul.mubr.f32.gmra.mrb[0].mxu0 %v5819
    %v6078 = vpop.f32.mrb[0].mxu0
    %v6079 = vadd.f32 0.0, %v6078
    %v6080 = vpop.f32.mrb[0].mxu0
    %6081 = vmatprep.mubr.f32.mxu0 0.0
    %6082 = vmatmul.mubr.f32.gmra.mrb[0].mxu0 %v5822
    %v6083 = vpop.f32.mrb[0].mxu0
    %v6084 = vadd.f32 0.0, %v6083
    %v6085 = vpop.f32.mrb[0].mxu0
    %6086 = vmatprep.mubr.f32.mxu0 0.0
    %6087 = vmatmul.mubr.f32.gmra.mrb[0].mxu0 %v5825
    %v6088 = vpop.f32.mrb[0].mxu0
    %v6089 = vadd.f32 0.0, %v6088
    %v6090 = vpop.f32.mrb[0].mxu0
    %6091 = vmatprep.mubr.f32.mxu0 0.0
    %6092 = vmatmul.mubr.f32.gmra.mrb[0].mxu0 %v5828
    %v6093 = vpop.f32.mrb[0].mxu0
    %v6094 = vadd.f32 0.0, %v6093
    %v6095 = vpop.f32.mrb[0].mxu0
    %6096 = vmatprep.mubr.f32.mxu0 0.0
    %6097 = vmatmul.mubr.f32.gmra.mrb[0].mxu0 %v5831
    %v6098 = vpop.f32.mrb[0].mxu0
    %v6099 = vadd.f32 0.0, %v6098
    %v6100 = vpop.f32.mrb[0].mxu0
    %6101 = vmatprep.mubr.f32.mxu0 0.0
    %6102 = vmatmul.mubr.f32.gmra.mrb[0].mxu0 %v5834
    %v6103 = vpop.f32.mrb[0].mxu0
    %v6104 = vadd.f32 0.0, %v6103
    %v6105 = vpop.f32.mrb[0].mxu0
    %6106 = vmatprep.mubr.f32.mxu0 0.0
    %6107 = vmatmul.mubr.f32.gmra.mrb[0].mxu0 %v5837
    %v6108 = vpop.f32.mrb[0].mxu0
    %v6109 = vadd.f32 0.0, %v6108
    %v6110 = vpop.f32.mrb[0].mxu0
    %6111 = vmatprep.mubr.f32.mxu0 0.0
    %6112 = vmatmul.mubr.f32.gmra.mrb[0].mxu0 %v5840
    %v6113 = vpop.f32.mrb[0].mxu0
    %v6114 = vadd.f32 0.0, %v6113
    %v6115 = vpop.f32.mrb[0].mxu0
    %6116 = vmatprep.mubr.f32.mxu0 0.0
    %6117 = vmatmul.mubr.f32.gmra.mrb[0].mxu0 %v5843
    %v6118 = vpop.f32.mrb[0].mxu0
    %v6119 = vadd.f32 0.0, %v6118
    %v6120 = vpop.f32.mrb[0].mxu0
    %6121 = vmatprep.mubr.f32.mxu0 0.0
    %6122 = vmatmul.mubr.f32.gmra.mrb[0].mxu0 %v5846
    %v6123 = vpop.f32.mrb[0].mxu0
    %v6124 = vadd.f32 0.0, %v6123
    %v6125 = vpop.f32.mrb[0].mxu0
    %6126 = vmatprep.mubr.f32.mxu0 0.0
    %6127 = vmatmul.mubr.f32.gmra.mrb[0].mxu0 %v5849
    %v6128 = vpop.f32.mrb[0].mxu0
    %v6129 = vadd.f32 0.0, %v6128
    %v6130 = vpop.f32.mrb[0].mxu0
    %6131 = vmatprep.mubr.f32.mxu0 0.0
    %6132 = vmatmul.mubr.f32.gmra.mrb[0].mxu0 %v5852
    %v6133 = vpop.f32.mrb[0].mxu0
    %v6134 = vadd.f32 0.0, %v6133
    %v6135 = vpop.f32.mrb[0].mxu0
    %6136 = vmatprep.mubr.f32.mxu0 0.0
    %6137 = vmatmul.mubr.f32.gmra.mrb[0].mxu0 %v5855
    %v6138 = vpop.f32.mrb[0].mxu0
    %v6139 = vadd.f32 0.0, %v6138
    %v6140 = vpop.f32.mrb[0].mxu0
    %6141 = vmatprep.mubr.f32.mxu0 0.0
    %6142 = vmatmul.mubr.f32.gmra.mrb[0].mxu0 %v5858
    %v6143 = vpop.f32.mrb[0].mxu0
    %v6144 = vadd.f32 0.0, %v6143
    %v6145 = vpop.f32.mrb[0].mxu0
    %6146 = vmatprep.mubr.f32.mxu0 0.0
    %6147 = vmatmul.mubr.f32.gmra.mrb[0].mxu0 %v5861
    %v6148 = vpop.f32.mrb[0].mxu0
    %v6149 = vadd.f32 0.0, %v6148
    %v6150 = vpop.f32.mrb[0].mxu0
    %6151 = vmatprep.mubr.f32.mxu0 0.0
    %6152 = vmatmul.mubr.f32.gmra.mrb[0].mxu0 %v5864
    %v6153 = vpop.f32.mrb[0].mxu0
    %v6154 = vadd.f32 0.0, %v6153
    %v6155 = vpop.f32.mrb[0].mxu0
    %6156 = vmatprep.mubr.f32.mxu0 0.0
    %6157 = vmatmul.mubr.f32.gmra.mrb[0].mxu0 %v5867
    %v6158 = vpop.f32.mrb[0].mxu0
    %v6159 = vadd.f32 0.0, %v6158
    %v6160 = vpop.f32.mrb[0].mxu0
    %6161 = vmatprep.mubr.f32.mxu0 0.0
    %6162 = vmatmul.mubr.f32.gmra.mrb[0].mxu0 %v5870
    %v6163 = vpop.f32.mrb[0].mxu0
    %v6164 = vadd.f32 0.0, %v6163
    %v6165 = vpop.f32.mrb[0].mxu0
    %6166 = vmatprep.mubr.f32.mxu0 0.0
    %6167 = vmatmul.mubr.f32.gmra.mrb[0].mxu0 %v5873
    %v6168 = vpop.f32.mrb[0].mxu0
    %v6169 = vadd.f32 0.0, %v6168
    %v6170 = vpop.f32.mrb[0].mxu0
    %6171 = vmatprep.mubr.f32.mxu0 0.0
    %6172 = vmatmul.mubr.f32.gmra.mrb[0].mxu0 %v5876
    %v6173 = vpop.f32.mrb[0].mxu0
    %v6174 = vadd.f32 0.0, %v6173
    %v6175 = vpop.f32.mrb[0].mxu0
    %6176 = vmatprep.mubr.f32.mxu0 0.0
    %6177 = vmatmul.mubr.f32.gmra.mrb[0].mxu0 %v5879
    %v6178 = vpop.f32.mrb[0].mxu0
    %v6179 = vadd.f32 0.0, %v6178
    %v6180 = vpop.f32.mrb[0].mxu0
    %6181 = vmatprep.mubr.f32.mxu0 0.0
    %6182 = vmatmul.mubr.f32.gmra.mrb[0].mxu0 %v5882
    %v6183 = vpop.f32.mrb[0].mxu0
    %v6184 = vadd.f32 0.0, %v6183
    %v6185 = vpop.f32.mrb[0].mxu0
    %6186 = vmatprep.mubr.f32.mxu0 0.0
    %6187 = vmatmul.mubr.f32.gmra.mrb[0].mxu0 %v5885
    %v6188 = vpop.f32.mrb[0].mxu0
    %v6189 = vadd.f32 0.0, %v6188
    %v6190 = vpop.f32.mrb[0].mxu0
    %6191 = vmatprep.mubr.f32.mxu0 0.0
    %6192 = vmatmul.mubr.f32.gmra.mrb[0].mxu0 %v5888
    %v6193 = vpop.f32.mrb[0].mxu0
    %v6194 = vadd.f32 0.0, %v6193
    %v6195 = vpop.f32.mrb[0].mxu0
    %6196 = vmatprep.mubr.f32.mxu0 0.0
    %6197 = vmatmul.mubr.f32.gmra.mrb[0].mxu0 %v5891
    %v6198 = vpop.f32.mrb[0].mxu0
    %v6199 = vadd.f32 0.0, %v6198
    %v6200 = vpop.f32.mrb[0].mxu0
    %6201 = vmatprep.mubr.f32.mxu0 0.0
    %6202 = vmatmul.mubr.f32.gmra.mrb[0].mxu0 %v5894
    %v6203 = vpop.f32.mrb[0].mxu0
    %v6204 = vadd.f32 0.0, %v6203
    %v6205 = vpop.f32.mrb[0].mxu0
    %6206 = vmatprep.mubr.f32.mxu0 0.0
    %6207 = vmatmul.mubr.f32.gmra.mrb[0].mxu0 %v5897
    %v6208 = vpop.f32.mrb[0].mxu0
    %v6209 = vadd.f32 0.0, %v6208
    %v6210 = vpop.f32.mrb[0].mxu0
    %6211 = vmatprep.mubr.f32.mxu0 0.0
    %6212 = vmatmul.mubr.f32.gmra.mrb[0].mxu0 %v5900
    %v6213 = vpop.f32.mrb[0].mxu0
    %v6214 = vadd.f32 0.0, %v6213
    %v6215 = vpop.f32.mrb[0].mxu0
    %6216 = vmatprep.mubr.f32.mxu0 0.0
    %6217 = vmatmul.mubr.f32.gmra.mrb[0].mxu0 %v5903
    %v6218 = vpop.f32.mrb[0].mxu0
    %v6219 = vadd.f32 0.0, %v6218
    %v6220 = vpop.f32.mrb[0].mxu0
    %6221 = vmatprep.mubr.f32.mxu0 0.0
    %6222 = vmatmul.mubr.f32.gmra.mrb[0].mxu0 %v5906
    %v6223 = vpop.f32.mrb[0].mxu0
    %v6224 = vadd.f32 0.0, %v6223
    %v6225 = vpop.f32.mrb[0].mxu0
    %6226 = vmatprep.mubr.f32.mxu0 0.0
    %6227 = vmatmul.mubr.f32.gmra.mrb[0].mxu0 %v5909
    %v6228 = vpop.f32.mrb[0].mxu0
    %v6229 = vadd.f32 0.0, %v6228
    %v6230 = vpop.f32.mrb[0].mxu0
    %6231 = vmatprep.mubr.f32.mxu0 0.0
    %6232 = vmatmul.mubr.f32.gmra.mrb[0].mxu0 %v5912
    %v6233 = vpop.f32.mrb[0].mxu0
    %v6234 = vadd.f32 0.0, %v6233
    %v6235 = vpop.f32.mrb[0].mxu0
    %6236 = vmatprep.mubr.f32.mxu0 0.0
    %6237 = vmatmul.mubr.f32.gmra.mrb[0].mxu0 %v5915
    %v6238 = vpop.f32.mrb[0].mxu0
    %v6239 = vadd.f32 0.0, %v6238
    %v6240 = vpop.f32.mrb[0].mxu0
    %6241 = vmatprep.mubr.f32.mxu0 0.0
    %6242 = vmatmul.mubr.f32.gmra.mrb[0].mxu0 %v5918
    %v6243 = vpop.f32.mrb[0].mxu0
    %v6244 = vadd.f32 0.0, %v6243
    %v6245 = vpop.f32.mrb[0].mxu0
    %6246 = vmatprep.mubr.f32.mxu0 0.0
    %6247 = vmatmul.mubr.f32.gmra.mrb[0].mxu0 %v5921
    %v6248 = vpop.f32.mrb[0].mxu0
    %v6249 = vadd.f32 0.0, %v6248
    %v6250 = vpop.f32.mrb[0].mxu0
    %6251 = vmatprep.mubr.f32.mxu0 0.0
    %6252 = vmatmul.mubr.f32.gmra.mrb[0].mxu0 %v5924
    %v6253 = vpop.f32.mrb[0].mxu0
    %v6254 = vadd.f32 0.0, %v6253
    %v6255 = vpop.f32.mrb[0].mxu0
    %6256 = vmatprep.mubr.f32.mxu0 0.0
    %6257 = vmatmul.mubr.f32.gmra.mrb[0].mxu0 %v5927
    %v6258 = vpop.f32.mrb[0].mxu0
    %v6259 = vadd.f32 0.0, %v6258
    %v6260 = vpop.f32.mrb[0].mxu0
    %6261 = vmatprep.mubr.f32.mxu0 0.0
    %6262 = vmatmul.mubr.f32.gmra.mrb[0].mxu0 %v5930
    %v6263 = vpop.f32.mrb[0].mxu0
    %v6264 = vadd.f32 0.0, %v6263
    %v6265 = vpop.f32.mrb[0].mxu0
    %6266 = vmatprep.mubr.f32.mxu0 0.0
    %6267 = vmatmul.mubr.f32.gmra.mrb[0].mxu0 %v5933
    %v6268 = vpop.f32.mrb[0].mxu0
    %v6269 = vadd.f32 0.0, %v6268
    %v6270 = vpop.f32.mrb[0].mxu0
    %6271 = vmatprep.mubr.f32.mxu0 0.0
    %6272 = vmatmul.mubr.f32.gmra.mrb[0].mxu0 %v5936
    %v6273 = vpop.f32.mrb[0].mxu0
    %v6274 = vadd.f32 0.0, %v6273
    %v6275 = vpop.f32.mrb[0].mxu0
    %6276 = vmatprep.mubr.f32.mxu0 0.0
    %6277 = vmatmul.mubr.f32.gmra.mrb[0].mxu0 %v5939
    %v6278 = vpop.f32.mrb[0].mxu0
    %v6279 = vadd.f32 0.0, %v6278
    %v6280 = vpop.f32.mrb[0].mxu0
    %6281 = vmatprep.mubr.f32.mxu0 0.0
    %6282 = vmatmul.mubr.f32.gmra.mrb[0].mxu0 %v5942
    %v6283 = vpop.f32.mrb[0].mxu0
    %v6284 = vadd.f32 0.0, %v6283
    %v6285 = vpop.f32.mrb[0].mxu0
    %6286 = vmatprep.mubr.f32.mxu0 0.0
    %6287 = vmatmul.mubr.f32.gmra.mrb[0].mxu0 %v5945
    %v6288 = vpop.f32.mrb[0].mxu0
    %v6289 = vadd.f32 0.0, %v6288
    %v6290 = vpop.f32.mrb[0].mxu0
    %6291 = vmatprep.mubr.f32.mxu0 0.0
    %6292 = vmatmul.mubr.f32.gmra.mrb[0].mxu0 %v5948
    %v6293 = vpop.f32.mrb[0].mxu0
    %v6294 = vadd.f32 0.0, %v6293
    %v6295 = vpop.f32.mrb[0].mxu0
    %6296 = vmatprep.mubr.f32.mxu0 0.0
    %6297 = vmatmul.mubr.f32.gmra.mrb[0].mxu0 %v5951
    %v6298 = vpop.f32.mrb[0].mxu0
    %v6299 = vadd.f32 0.0, %v6298
    %v6300 = vpop.f32.mrb[0].mxu0
    %6301 = vmatprep.mubr.f32.mxu0 0.0
    %6302 = vmatmul.mubr.f32.gmra.mrb[0].mxu0 %v5954
    %v6303 = vpop.f32.mrb[0].mxu0
    %v6304 = vadd.f32 0.0, %v6303
    %v6305 = vpop.f32.mrb[0].mxu0
    %6306 = vmatprep.mubr.f32.mxu0 0.0
    %6307 = vmatmul.mubr.f32.gmra.mrb[0].mxu0 %v5957
    %v6308 = vpop.f32.mrb[0].mxu0
    %v6309 = vadd.f32 0.0, %v6308
    %v6310 = vpop.f32.mrb[0].mxu0
    %6311 = vmatprep.mubr.f32.mxu0 0.0
    %6312 = vmatmul.mubr.f32.gmra.mrb[0].mxu0 %v5960
    %v6313 = vpop.f32.mrb[0].mxu0
    %v6314 = vadd.f32 0.0, %v6313
    %v6315 = vpop.f32.mrb[0].mxu0
    %6316 = vmatprep.mubr.f32.mxu0 0.0
    %6317 = vmatmul.mubr.f32.gmra.mrb[0].mxu0 %v5963
    %v6318 = vpop.f32.mrb[0].mxu0
    %v6319 = vadd.f32 0.0, %v6318
    %v6320 = vpop.f32.mrb[0].mxu0
    %6321 = vmatprep.mubr.f32.mxu0 0.0
    %6322 = vmatmul.mubr.f32.gmra.mrb[0].mxu0 %v5966
    %v6323 = vpop.f32.mrb[0].mxu0
    %v6324 = vadd.f32 0.0, %v6323
    %v6325 = vpop.f32.mrb[0].mxu0
    %6326 = vmatprep.mubr.f32.mxu0 0.0
    %6327 = vmatmul.mubr.f32.gmra.mrb[0].mxu0 %v5969
    %v6328 = vpop.f32.mrb[0].mxu0
    %v6329 = vadd.f32 0.0, %v6328
    %v6330 = vpop.f32.mrb[0].mxu0
    %6331 = vmatprep.mubr.f32.mxu0 0.0
    %6332 = vmatmul.mubr.f32.gmra.mrb[0].mxu0 %v5972
    %v6333 = vpop.f32.mrb[0].mxu0
    %v6334 = vadd.f32 0.0, %v6333
    %v6335 = vpop.f32.mrb[0].mxu0
    %6336 = vmatprep.mubr.f32.mxu0 0.0
    %6337 = vmatmul.mubr.f32.gmra.mrb[0].mxu0 %v5975
    %v6338 = vpop.f32.mrb[0].mxu0
    %v6339 = vadd.f32 0.0, %v6338
    %v6340 = vpop.f32.mrb[0].mxu0
    %6341 = vmatprep.mubr.f32.mxu0 0.0
    %6342 = vmatmul.mubr.f32.gmra.mrb[0].mxu0 %v5978
    %v6343 = vpop.f32.mrb[0].mxu0
    %v6344 = vadd.f32 0.0, %v6343
    %v6345 = vpop.f32.mrb[0].mxu0
    %6346 = vmatprep.mubr.f32.mxu0 0.0
    %6347 = vmatmul.mubr.f32.gmra.mrb[0].mxu0 %v5981
    %v6348 = vpop.f32.mrb[0].mxu0
    %v6349 = vadd.f32 0.0, %v6348
    %v6350 = vpop.f32.mrb[0].mxu0
    %6351 = vmatprep.mubr.f32.mxu0 0.0
    %6352 = vmatmul.mubr.f32.gmra.mrb[0].mxu0 %v5984
    %v6353 = vpop.f32.mrb[0].mxu0
    %v6354 = vadd.f32 0.0, %v6353
    %v6355 = vpop.f32.mrb[0].mxu0
    %6356 = vmatprep.mubr.f32.mxu0 0.0
    %6357 = vmatmul.mubr.f32.gmra.mrb[0].mxu0 %v5987
    %v6358 = vpop.f32.mrb[0].mxu0
    %v6359 = vadd.f32 0.0, %v6358
    %v6360 = vpop.f32.mrb[0].mxu0
    %6361 = vmatprep.mubr.f32.mxu0 0.0
    %6362 = vmatmul.mubr.f32.gmra.mrb[0].mxu0 %v5990
    %v6363 = vpop.f32.mrb[0].mxu0
    %v6364 = vadd.f32 0.0, %v6363
    %v6365 = vpop.f32.mrb[0].mxu0
    %6366 = vmatprep.mubr.f32.mxu0 0.0
    %6367 = vmatmul.mubr.f32.gmra.mrb[0].mxu0 %v5993
    %v6368 = vpop.f32.mrb[0].mxu0
    %v6369 = vadd.f32 0.0, %v6368
    %v6370 = vpop.f32.mrb[0].mxu0
    %6371 = vmatprep.mubr.f32.mxu0 0.0
    %6372 = vmatmul.mubr.f32.gmra.mrb[0].mxu0 %v5996
    %v6373 = vpop.f32.mrb[0].mxu0
    %v6374 = vadd.f32 0.0, %v6373
    %v6375 = vpop.f32.mrb[0].mxu0
    %6376 = vmatprep.mubr.f32.mxu0 0.0
    %6377 = vmatmul.mubr.f32.gmra.mrb[0].mxu0 %v5999
    %v6378 = vpop.f32.mrb[0].mxu0
    %v6379 = vadd.f32 0.0, %v6378
    %v6380 = vpop.f32.mrb[0].mxu0
    %6381 = vmatprep.mubr.f32.mxu0 0.0
    %6382 = vmatmul.mubr.f32.gmra.mrb[0].mxu0 %v6002
    %v6383 = vpop.f32.mrb[0].mxu0
    %v6384 = vadd.f32 0.0, %v6383
    %v6385 = vpop.f32.mrb[0].mxu0
    %6386 = vmatprep.mubr.f32.mxu0 0.0
    %6387 = vmatmul.mubr.f32.gmra.mrb[0].mxu0 %v6005
    %v6388 = vpop.f32.mrb[0].mxu0
    %v6389 = vadd.f32 0.0, %v6388
    %v6390 = vpop.f32.mrb[0].mxu0
    %6391 = vdwg.mxu0
    %v6392 = vld [vmem:[#allocation2] sm:$0xff]
    %v6393 = vld [vmem:[#allocation2 + $0x8] sm:$0xff]
    %v6394 = vld [vmem:[#allocation2 + $0x10] sm:$0xff]
    %v6395 = vld [vmem:[#allocation2 + $0x18] sm:$0xff]
    %v6396 = vld [vmem:[#allocation2 + $0x20] sm:$0xff]
    %v6397 = vld [vmem:[#allocation2 + $0x28] sm:$0xff]
    %v6398 = vld [vmem:[#allocation2 + $0x30] sm:$0xff]
    %v6399 = vld [vmem:[#allocation2 + $0x38] sm:$0xff]
    %v6400 = vld [vmem:[#allocation2 + $0x40] sm:$0xff]
    %v6401 = vld [vmem:[#allocation2 + $0x48] sm:$0xff]
    %v6402 = vld [vmem:[#allocation2 + $0x50] sm:$0xff]
    %v6403 = vld [vmem:[#allocation2 + $0x58] sm:$0xff]
    %v6404 = vld [vmem:[#allocation2 + $0x60] sm:$0xff]
    %v6405 = vld [vmem:[#allocation2 + $0x68] sm:$0xff]
    %v6406 = vld [vmem:[#allocation2 + $0x70] sm:$0xff]
    %v6407 = vld [vmem:[#allocation2 + $0x78] sm:$0xff]
    %v6408 = vld [vmem:[#allocation2 + $0x80] sm:$0xff]
    %v6409 = vld [vmem:[#allocation2 + $0x88] sm:$0xff]
    %v6410 = vld [vmem:[#allocation2 + $0x90] sm:$0xff]
    %v6411 = vld [vmem:[#allocation2 + $0x98] sm:$0xff]
    %v6412 = vld [vmem:[#allocation2 + $0xa0] sm:$0xff]
    %v6413 = vld [vmem:[#allocation2 + $0xa8] sm:$0xff]
    %v6414 = vld [vmem:[#allocation2 + $0xb0] sm:$0xff]
    %v6415 = vld [vmem:[#allocation2 + $0xb8] sm:$0xff]
    %v6416 = vld [vmem:[#allocation2 + $0xc0] sm:$0xff]
    %v6417 = vld [vmem:[#allocation2 + $0xc8] sm:$0xff]
    %v6418 = vld [vmem:[#allocation2 + $0xd0] sm:$0xff]
    %v6419 = vld [vmem:[#allocation2 + $0xd8] sm:$0xff]
    %v6420 = vld [vmem:[#allocation2 + $0xe0] sm:$0xff]
    %v6421 = vld [vmem:[#allocation2 + $0xe8] sm:$0xff]
    %v6422 = vld [vmem:[#allocation2 + $0xf0] sm:$0xff]
    %v6423 = vld [vmem:[#allocation2 + $0xf8] sm:$0xff]
    %v6424 = vld [vmem:[#allocation2 + $0x100] sm:$0xff]
    %v6425 = vld [vmem:[#allocation2 + $0x108] sm:$0xff]
    %v6426 = vld [vmem:[#allocation2 + $0x110] sm:$0xff]
    %v6427 = vld [vmem:[#allocation2 + $0x118] sm:$0xff]
    %v6428 = vld [vmem:[#allocation2 + $0x120] sm:$0xff]
    %v6429 = vld [vmem:[#allocation2 + $0x128] sm:$0xff]
    %v6430 = vld [vmem:[#allocation2 + $0x130] sm:$0xff]
    %v6431 = vld [vmem:[#allocation2 + $0x138] sm:$0xff]
    %v6432 = vld [vmem:[#allocation2 + $0x140] sm:$0xff]
    %v6433 = vld [vmem:[#allocation2 + $0x148] sm:$0xff]
    %v6434 = vld [vmem:[#allocation2 + $0x150] sm:$0xff]
    %v6435 = vld [vmem:[#allocation2 + $0x158] sm:$0xff]
    %v6436 = vld [vmem:[#allocation2 + $0x160] sm:$0xff]
    %v6437 = vld [vmem:[#allocation2 + $0x168] sm:$0xff]
    %v6438 = vld [vmem:[#allocation2 + $0x170] sm:$0xff]
    %v6439 = vld [vmem:[#allocation2 + $0x178] sm:$0xff]
    %v6440 = vld [vmem:[#allocation2 + $0x180] sm:$0xff]
    %v6441 = vld [vmem:[#allocation2 + $0x188] sm:$0xff]
    %v6442 = vld [vmem:[#allocation2 + $0x190] sm:$0xff]
    %v6443 = vld [vmem:[#allocation2 + $0x198] sm:$0xff]
    %v6444 = vld [vmem:[#allocation2 + $0x1a0] sm:$0xff]
    %v6445 = vld [vmem:[#allocation2 + $0x1a8] sm:$0xff]
    %v6446 = vld [vmem:[#allocation2 + $0x1b0] sm:$0xff]
    %v6447 = vld [vmem:[#allocation2 + $0x1b8] sm:$0xff]
    %v6448 = vld [vmem:[#allocation2 + $0x1c0] sm:$0xff]
    %v6449 = vld [vmem:[#allocation2 + $0x1c8] sm:$0xff]
    %v6450 = vld [vmem:[#allocation2 + $0x1d0] sm:$0xff]
    %v6451 = vld [vmem:[#allocation2 + $0x1d8] sm:$0xff]
    %v6452 = vld [vmem:[#allocation2 + $0x1e0] sm:$0xff]
    %v6453 = vld [vmem:[#allocation2 + $0x1e8] sm:$0xff]
    %v6454 = vld [vmem:[#allocation2 + $0x1f0] sm:$0xff]
    %v6455 = vld [vmem:[#allocation2 + $0x1f8] sm:$0xff]
    %v6456 = vadd.f32 %v6392, %v6074
    %v6457 = vadd.f32 %v6393, %v6079
    %v6458 = vadd.f32 %v6394, %v6084
    %v6459 = vadd.f32 %v6395, %v6089
    %v6460 = vadd.f32 %v6396, %v6094
    %v6461 = vadd.f32 %v6397, %v6099
    %v6462 = vadd.f32 %v6398, %v6104
    %v6463 = vadd.f32 %v6399, %v6109
    %v6464 = vadd.f32 %v6400, %v6114
    %v6465 = vadd.f32 %v6401, %v6119
    %v6466 = vadd.f32 %v6402, %v6124
    %v6467 = vadd.f32 %v6403, %v6129
    %v6468 = vadd.f32 %v6404, %v6134
    %v6469 = vadd.f32 %v6405, %v6139
    %v6470 = vadd.f32 %v6406, %v6144
    %v6471 = vadd.f32 %v6407, %v6149
    %v6472 = vadd.f32 %v6408, %v6154
    %v6473 = vadd.f32 %v6409, %v6159
    %v6474 = vadd.f32 %v6410, %v6164
    %v6475 = vadd.f32 %v6411, %v6169
    %v6476 = vadd.f32 %v6412, %v6174
    %v6477 = vadd.f32 %v6413, %v6179
    %v6478 = vadd.f32 %v6414, %v6184
    %v6479 = vadd.f32 %v6415, %v6189
    %v6480 = vadd.f32 %v6416, %v6194
    %v6481 = vadd.f32 %v6417, %v6199
    %v6482 = vadd.f32 %v6418, %v6204
    %v6483 = vadd.f32 %v6419, %v6209
    %v6484 = vadd.f32 %v6420, %v6214
    %v6485 = vadd.f32 %v6421, %v6219
    %v6486 = vadd.f32 %v6422, %v6224
    %v6487 = vadd.f32 %v6423, %v6229
    %v6488 = vadd.f32 %v6424, %v6234
    %v6489 = vadd.f32 %v6425, %v6239
    %v6490 = vadd.f32 %v6426, %v6244
    %v6491 = vadd.f32 %v6427, %v6249
    %v6492 = vadd.f32 %v6428, %v6254
    %v6493 = vadd.f32 %v6429, %v6259
    %v6494 = vadd.f32 %v6430, %v6264
    %v6495 = vadd.f32 %v6431, %v6269
    %v6496 = vadd.f32 %v6432, %v6274
    %v6497 = vadd.f32 %v6433, %v6279
    %v6498 = vadd.f32 %v6434, %v6284
    %v6499 = vadd.f32 %v6435, %v6289
    %v6500 = vadd.f32 %v6436, %v6294
    %v6501 = vadd.f32 %v6437, %v6299
    %v6502 = vadd.f32 %v6438, %v6304
    %v6503 = vadd.f32 %v6439, %v6309
    %v6504 = vadd.f32 %v6440, %v6314
    %v6505 = vadd.f32 %v6441, %v6319
    %v6506 = vadd.f32 %v6442, %v6324
    %v6507 = vadd.f32 %v6443, %v6329
    %v6508 = vadd.f32 %v6444, %v6334
    %v6509 = vadd.f32 %v6445, %v6339
    %v6510 = vadd.f32 %v6446, %v6344
    %v6511 = vadd.f32 %v6447, %v6349
    %v6512 = vadd.f32 %v6448, %v6354
    %v6513 = vadd.f32 %v6449, %v6359
    %v6514 = vadd.f32 %v6450, %v6364
    %v6515 = vadd.f32 %v6451, %v6369
    %v6516 = vadd.f32 %v6452, %v6374
    %v6517 = vadd.f32 %v6453, %v6379
    %v6518 = vadd.f32 %v6454, %v6384
    %v6519 = vadd.f32 %v6455, %v6389
    %6520 = vst.msk [vmem:[#allocation2] sm:$0xff] %vm95, %v6456
    %6521 = vst.msk [vmem:[#allocation2 + $0x8] sm:$0xff] %vm95, %v6457
    %6522 = vst.msk [vmem:[#allocation2 + $0x10] sm:$0xff] %vm95, %v6458
    %6523 = vst.msk [vmem:[#allocation2 + $0x18] sm:$0xff] %vm95, %v6459
    %6524 = vst.msk [vmem:[#allocation2 + $0x20] sm:$0xff] %vm95, %v6460
    %6525 = vst.msk [vmem:[#allocation2 + $0x28] sm:$0xff] %vm95, %v6461
    %6526 = vst.msk [vmem:[#allocation2 + $0x30] sm:$0xff] %vm95, %v6462
    %6527 = vst.msk [vmem:[#allocation2 + $0x38] sm:$0xff] %vm95, %v6463
    %6528 = vst.msk [vmem:[#allocation2 + $0x40] sm:$0xff] %vm95, %v6464
    %6529 = vst.msk [vmem:[#allocation2 + $0x48] sm:$0xff] %vm95, %v6465
    %6530 = vst.msk [vmem:[#allocation2 + $0x50] sm:$0xff] %vm95, %v6466
    %6531 = vst.msk [vmem:[#allocation2 + $0x58] sm:$0xff] %vm95, %v6467
    %6532 = vst.msk [vmem:[#allocation2 + $0x60] sm:$0xff] %vm95, %v6468
    %6533 = vst.msk [vmem:[#allocation2 + $0x68] sm:$0xff] %vm95, %v6469
    %6534 = vst.msk [vmem:[#allocation2 + $0x70] sm:$0xff] %vm95, %v6470
    %6535 = vst.msk [vmem:[#allocation2 + $0x78] sm:$0xff] %vm95, %v6471
    %6536 = vst.msk [vmem:[#allocation2 + $0x80] sm:$0xff] %vm95, %v6472
    %6537 = vst.msk [vmem:[#allocation2 + $0x88] sm:$0xff] %vm95, %v6473
    %6538 = vst.msk [vmem:[#allocation2 + $0x90] sm:$0xff] %vm95, %v6474
    %6539 = vst.msk [vmem:[#allocation2 + $0x98] sm:$0xff] %vm95, %v6475
    %6540 = vst.msk [vmem:[#allocation2 + $0xa0] sm:$0xff] %vm95, %v6476
    %6541 = vst.msk [vmem:[#allocation2 + $0xa8] sm:$0xff] %vm95, %v6477
    %6542 = vst.msk [vmem:[#allocation2 + $0xb0] sm:$0xff] %vm95, %v6478
    %6543 = vst.msk [vmem:[#allocation2 + $0xb8] sm:$0xff] %vm95, %v6479
    %6544 = vst.msk [vmem:[#allocation2 + $0xc0] sm:$0xff] %vm95, %v6480
    %6545 = vst.msk [vmem:[#allocation2 + $0xc8] sm:$0xff] %vm95, %v6481
    %6546 = vst.msk [vmem:[#allocation2 + $0xd0] sm:$0xff] %vm95, %v6482
    %6547 = vst.msk [vmem:[#allocation2 + $0xd8] sm:$0xff] %vm95, %v6483
    %6548 = vst.msk [vmem:[#allocation2 + $0xe0] sm:$0xff] %vm95, %v6484
    %6549 = vst.msk [vmem:[#allocation2 + $0xe8] sm:$0xff] %vm95, %v6485
    %6550 = vst.msk [vmem:[#allocation2 + $0xf0] sm:$0xff] %vm95, %v6486
    %6551 = vst.msk [vmem:[#allocation2 + $0xf8] sm:$0xff] %vm95, %v6487
    %6552 = vst.msk [vmem:[#allocation2 + $0x100] sm:$0xff] %vm95, %v6488
    %6553 = vst.msk [vmem:[#allocation2 + $0x108] sm:$0xff] %vm95, %v6489
    %6554 = vst.msk [vmem:[#allocation2 + $0x110] sm:$0xff] %vm95, %v6490
    %6555 = vst.msk [vmem:[#allocation2 + $0x118] sm:$0xff] %vm95, %v6491
    %6556 = vst.msk [vmem:[#allocation2 + $0x120] sm:$0xff] %vm95, %v6492
    %6557 = vst.msk [vmem:[#allocation2 + $0x128] sm:$0xff] %vm95, %v6493
    %6558 = vst.msk [vmem:[#allocation2 + $0x130] sm:$0xff] %vm95, %v6494
    %6559 = vst.msk [vmem:[#allocation2 + $0x138] sm:$0xff] %vm95, %v6495
    %6560 = vst.msk [vmem:[#allocation2 + $0x140] sm:$0xff] %vm95, %v6496
    %6561 = vst.msk [vmem:[#allocation2 + $0x148] sm:$0xff] %vm95, %v6497
    %6562 = vst.msk [vmem:[#allocation2 + $0x150] sm:$0xff] %vm95, %v6498
    %6563 = vst.msk [vmem:[#allocation2 + $0x158] sm:$0xff] %vm95, %v6499
    %6564 = vst.msk [vmem:[#allocation2 + $0x160] sm:$0xff] %vm95, %v6500
    %6565 = vst.msk [vmem:[#allocation2 + $0x168] sm:$0xff] %vm95, %v6501
    %6566 = vst.msk [vmem:[#allocation2 + $0x170] sm:$0xff] %vm95, %v6502
    %6567 = vst.msk [vmem:[#allocation2 + $0x178] sm:$0xff] %vm95, %v6503
    %6568 = vst.msk [vmem:[#allocation2 + $0x180] sm:$0xff] %vm95, %v6504
    %6569 = vst.msk [vmem:[#allocation2 + $0x188] sm:$0xff] %vm95, %v6505
    %6570 = vst.msk [vmem:[#allocation2 + $0x190] sm:$0xff] %vm95, %v6506
    %6571 = vst.msk [vmem:[#allocation2 + $0x198] sm:$0xff] %vm95, %v6507
    %6572 = vst.msk [vmem:[#allocation2 + $0x1a0] sm:$0xff] %vm95, %v6508
    %6573 = vst.msk [vmem:[#allocation2 + $0x1a8] sm:$0xff] %vm95, %v6509
    %6574 = vst.msk [vmem:[#allocation2 + $0x1b0] sm:$0xff] %vm95, %v6510
    %6575 = vst.msk [vmem:[#allocation2 + $0x1b8] sm:$0xff] %vm95, %v6511
    %6576 = vst.msk [vmem:[#allocation2 + $0x1c0] sm:$0xff] %vm95, %v6512
    %6577 = vst.msk [vmem:[#allocation2 + $0x1c8] sm:$0xff] %vm95, %v6513
    %6578 = vst.msk [vmem:[#allocation2 + $0x1d0] sm:$0xff] %vm95, %v6514
    %6579 = vst.msk [vmem:[#allocation2 + $0x1d8] sm:$0xff] %vm95, %v6515
    %6580 = vst.msk [vmem:[#allocation2 + $0x1e0] sm:$0xff] %vm95, %v6516
    %6581 = vst.msk [vmem:[#allocation2 + $0x1e8] sm:$0xff] %vm95, %v6517
    %6582 = vst.msk [vmem:[#allocation2 + $0x1f0] sm:$0xff] %vm95, %v6518
    %6583 = vst.msk [vmem:[#allocation2 + $0x1f8] sm:$0xff] %vm95, %v6519
    %v6584 = vld [vmem:[%s1573 + $0x2] sm:$0xff]
    %v6585 = vld [vmem:[%s1573 + $0xa] sm:$0xff]
    %v6586 = vld [vmem:[%s1573 + $0x1a] sm:$0xff]
    %v6587 = vld [vmem:[%s1573 + $0x22] sm:$0xff]
    %v6588 = vld [vmem:[%s1573 + $0x32] sm:$0xff]
    %v6589 = vld [vmem:[%s1573 + $0x3a] sm:$0xff]
    %v6590 = vld [vmem:[%s1573 + $0x4a] sm:$0xff]
    %v6591 = vld [vmem:[%s1573 + $0x52] sm:$0xff]
    %v6592 = vld [vmem:[%s1573 + $0x62] sm:$0xff]
    %v6593 = vld [vmem:[%s1573 + $0x6a] sm:$0xff]
    %v6594 = vld [vmem:[%s1573 + $0x7a] sm:$0xff]
    %v6595 = vld [vmem:[%s1573 + $0x82] sm:$0xff]
    %v6596 = vld [vmem:[%s1573 + $0x92] sm:$0xff]
    %v6597 = vld [vmem:[%s1573 + $0x9a] sm:$0xff]
    %v6598 = vld [vmem:[%s1573 + $0xaa] sm:$0xff]
    %v6599 = vld [vmem:[%s1573 + $0xb2] sm:$0xff]
    %v6600 = vld [vmem:[%s1573 + $0xc2] sm:$0xff]
    %v6601 = vld [vmem:[%s1573 + $0xca] sm:$0xff]
    %v6602 = vld [vmem:[%s1573 + $0xda] sm:$0xff]
    %v6603 = vld [vmem:[%s1573 + $0xe2] sm:$0xff]
    %v6604 = vld [vmem:[%s1573 + $0xf2] sm:$0xff]
    %v6605 = vld [vmem:[%s1573 + $0xfa] sm:$0xff]
    %v6606 = vld [vmem:[%s1573 + $0x10a] sm:$0xff]
    %v6607 = vld [vmem:[%s1573 + $0x112] sm:$0xff]
    %v6608 = vld [vmem:[%s1573 + $0x122] sm:$0xff]
    %v6609 = vld [vmem:[%s1573 + $0x12a] sm:$0xff]
    %v6610 = vld [vmem:[%s1573 + $0x13a] sm:$0xff]
    %v6611 = vld [vmem:[%s1573 + $0x142] sm:$0xff]
    %v6612 = vld [vmem:[%s1573 + $0x152] sm:$0xff]
    %v6613 = vld [vmem:[%s1573 + $0x15a] sm:$0xff]
    %v6614 = vld [vmem:[%s1573 + $0x16a] sm:$0xff]
    %v6615 = vld [vmem:[%s1573 + $0x172] sm:$0xff]
    %v6616 = vld [vmem:[%s1573 + $0x1b2] sm:$0xff]
    %v6617 = vld [vmem:[%s1573 + $0x1ba] sm:$0xff]
    %v6618 = vld [vmem:[%s1573 + $0x1ca] sm:$0xff]
    %v6619 = vld [vmem:[%s1573 + $0x1d2] sm:$0xff]
    %v6620 = vld [vmem:[%s1573 + $0x1e2] sm:$0xff]
    %v6621 = vld [vmem:[%s1573 + $0x1ea] sm:$0xff]
    %v6622 = vld [vmem:[%s1573 + $0x1fa] sm:$0xff]
    %v6623 = vld [vmem:[%s1573 + $0x202] sm:$0xff]
    %v6624 = vld [vmem:[%s1573 + $0x212] sm:$0xff]
    %v6625 = vld [vmem:[%s1573 + $0x21a] sm:$0xff]
    %v6626 = vld [vmem:[%s1573 + $0x22a] sm:$0xff]
    %v6627 = vld [vmem:[%s1573 + $0x232] sm:$0xff]
    %v6628 = vld [vmem:[%s1573 + $0x242] sm:$0xff]
    %v6629 = vld [vmem:[%s1573 + $0x24a] sm:$0xff]
    %v6630 = vld [vmem:[%s1573 + $0x25a] sm:$0xff]
    %v6631 = vld [vmem:[%s1573 + $0x262] sm:$0xff]
    %v6632 = vld [vmem:[%s1573 + $0x272] sm:$0xff]
    %v6633 = vld [vmem:[%s1573 + $0x27a] sm:$0xff]
    %v6634 = vld [vmem:[%s1573 + $0x28a] sm:$0xff]
    %v6635 = vld [vmem:[%s1573 + $0x292] sm:$0xff]
    %v6636 = vld [vmem:[%s1573 + $0x2a2] sm:$0xff]
    %v6637 = vld [vmem:[%s1573 + $0x2aa] sm:$0xff]
    %v6638 = vld [vmem:[%s1573 + $0x2ba] sm:$0xff]
    %v6639 = vld [vmem:[%s1573 + $0x2c2] sm:$0xff]
    %v6640 = vld [vmem:[%s1573 + $0x2d2] sm:$0xff]
    %v6641 = vld [vmem:[%s1573 + $0x2da] sm:$0xff]
    %v6642 = vld [vmem:[%s1573 + $0x2ea] sm:$0xff]
    %v6643 = vld [vmem:[%s1573 + $0x2f2] sm:$0xff]
    %v6644 = vld [vmem:[%s1573 + $0x302] sm:$0xff]
    %v6645 = vld [vmem:[%s1573 + $0x30a] sm:$0xff]
    %v6646 = vld [vmem:[%s1573 + $0x31a] sm:$0xff]
    %v6647 = vld [vmem:[%s1573 + $0x322] sm:$0xff]
    %s6648 = scalar_lea.vmem %s1, 64
    %v6649 = vld [vmem:[%s6648] sm:$0xff]
    %v6651 = vsel %vm95, %v6584, 0
    %v6654 = vsel %vm95, %v6585, 0
    %v6657 = vsel %vm95, %v6586, 0
    %v6660 = vsel %vm95, %v6587, 0
    %v6663 = vsel %vm95, %v6588, 0
    %v6666 = vsel %vm95, %v6589, 0
    %v6669 = vsel %vm95, %v6590, 0
    %v6672 = vsel %vm95, %v6591, 0
    %v6675 = vsel %vm95, %v6592, 0
    %v6678 = vsel %vm95, %v6593, 0
    %v6681 = vsel %vm95, %v6594, 0
    %v6684 = vsel %vm95, %v6595, 0
    %v6687 = vsel %vm95, %v6596, 0
    %v6690 = vsel %vm95, %v6597, 0
    %v6693 = vsel %vm95, %v6598, 0
    %v6696 = vsel %vm95, %v6599, 0
    %v6699 = vsel %vm95, %v6600, 0
    %v6702 = vsel %vm95, %v6601, 0
    %v6705 = vsel %vm95, %v6602, 0
    %v6708 = vsel %vm95, %v6603, 0
    %v6711 = vsel %vm95, %v6604, 0
    %v6714 = vsel %vm95, %v6605, 0
    %v6717 = vsel %vm95, %v6606, 0
    %v6720 = vsel %vm95, %v6607, 0
    %v6723 = vsel %vm95, %v6608, 0
    %v6726 = vsel %vm95, %v6609, 0
    %v6729 = vsel %vm95, %v6610, 0
    %v6732 = vsel %vm95, %v6611, 0
    %v6735 = vsel %vm95, %v6612, 0
    %v6738 = vsel %vm95, %v6613, 0
    %v6741 = vsel %vm95, %v6614, 0
    %v6744 = vsel %vm95, %v6615, 0
    %v6747 = vsel %vm95, %v6616, 0
    %v6750 = vsel %vm95, %v6617, 0
    %v6753 = vsel %vm95, %v6618, 0
    %v6756 = vsel %vm95, %v6619, 0
    %v6759 = vsel %vm95, %v6620, 0
    %v6762 = vsel %vm95, %v6621, 0
    %v6765 = vsel %vm95, %v6622, 0
    %v6768 = vsel %vm95, %v6623, 0
    %v6771 = vsel %vm95, %v6624, 0
    %v6774 = vsel %vm95, %v6625, 0
    %v6777 = vsel %vm95, %v6626, 0
    %v6780 = vsel %vm95, %v6627, 0
    %v6783 = vsel %vm95, %v6628, 0
    %v6786 = vsel %vm95, %v6629, 0
    %v6789 = vsel %vm95, %v6630, 0
    %v6792 = vsel %vm95, %v6631, 0
    %v6795 = vsel %vm95, %v6632, 0
    %v6798 = vsel %vm95, %v6633, 0
    %v6801 = vsel %vm95, %v6634, 0
    %v6804 = vsel %vm95, %v6635, 0
    %v6807 = vsel %vm95, %v6636, 0
    %v6810 = vsel %vm95, %v6637, 0
    %v6813 = vsel %vm95, %v6638, 0
    %v6816 = vsel %vm95, %v6639, 0
    %v6819 = vsel %vm95, %v6640, 0
    %v6822 = vsel %vm95, %v6641, 0
    %v6825 = vsel %vm95, %v6642, 0
    %v6828 = vsel %vm95, %v6643, 0
    %v6831 = vsel %vm95, %v6644, 0
    %v6834 = vsel %vm95, %v6645, 0
    %v6837 = vsel %vm95, %v6646, 0
    %v6840 = vsel %vm95, %v6647, 0
    %6842 = vmatprep.subr.mxu0 0.0
    %6843 = vmatpush1.msra.mxu0 %v6649
    %6844 = vmatprep.subr.mxu0 0.0
    %6845 = vmatpush1.msra.mxu0 0.0
    %6846 = vmatprep.subr.mxu0 0.0
    %6847 = vmatpush1.msra.mxu0 0.0
    %6848 = vmatprep.subr.mxu0 0.0
    %6849 = vmatpush1.msra.mxu0 0.0
    %6850 = vmatprep.subr.mxu0 0.0
    %6851 = vmatpush1.msra.mxu0 0.0
    %6852 = vmatprep.subr.mxu0 0.0
    %6853 = vmatpush1.msra.mxu0 0.0
    %6854 = vmatprep.subr.mxu0 0.0
    %6855 = vmatpush1.msra.mxu0 0.0
    %6856 = vmatprep.subr.mxu0 0.0
    %6857 = vmatpush1.msra.mxu0 0.0
    %6858 = vmatprep.subr.mxu0 0.0
    %6859 = vmatpush1.msra.mxu0 0.0
    %6860 = vmatprep.subr.mxu0 0.0
    %6861 = vmatpush1.msra.mxu0 0.0
    %6862 = vmatprep.subr.mxu0 0.0
    %6863 = vmatpush1.msra.mxu0 0.0
    %6864 = vmatprep.subr.mxu0 0.0
    %6865 = vmatpush1.msra.mxu0 0.0
    %6866 = vmatprep.subr.mxu0 0.0
    %6867 = vmatpush1.msra.mxu0 0.0
    %6868 = vmatprep.subr.mxu0 0.0
    %6869 = vmatpush1.msra.mxu0 0.0
    %6870 = vmatprep.subr.mxu0 0.0
    %6871 = vmatpush1.msra.mxu0 0.0
    %6872 = vmatprep.subr.mxu0 0.0
    %6873 = vmatpush1.msra.mxu0 0.0
    %6874 = vmatprep.subr.mxu0 0.0
    %6875 = vmatpush1.msra.mxu0 0.0
    %6876 = vmatprep.subr.mxu0 0.0
    %6877 = vmatpush1.msra.mxu0 0.0
    %6878 = vmatprep.subr.mxu0 0.0
    %6879 = vmatpush1.msra.mxu0 0.0
    %6880 = vmatprep.subr.mxu0 0.0
    %6881 = vmatpush1.msra.mxu0 0.0
    %6882 = vmatprep.subr.mxu0 0.0
    %6883 = vmatpush1.msra.mxu0 0.0
    %6884 = vmatprep.subr.mxu0 0.0
    %6885 = vmatpush1.msra.mxu0 0.0
    %6886 = vmatprep.subr.mxu0 0.0
    %6887 = vmatpush1.msra.mxu0 0.0
    %6888 = vmatprep.subr.mxu0 0.0
    %6889 = vmatpush1.msra.mxu0 0.0
    %6890 = vmatprep.subr.mxu0 0.0
    %6891 = vmatpush1.msra.mxu0 0.0
    %6892 = vmatprep.subr.mxu0 0.0
    %6893 = vmatpush1.msra.mxu0 0.0
    %6894 = vmatprep.subr.mxu0 0.0
    %6895 = vmatpush1.msra.mxu0 0.0
    %6896 = vmatprep.subr.mxu0 0.0
    %6897 = vmatpush1.msra.mxu0 0.0
    %6898 = vmatprep.subr.mxu0 0.0
    %6899 = vmatpush1.msra.mxu0 0.0
    %6900 = vmatprep.subr.mxu0 0.0
    %6901 = vmatpush1.msra.mxu0 0.0
    %6902 = vmatprep.subr.mxu0 0.0
    %6903 = vmatpush1.msra.mxu0 0.0
    %6904 = vmatprep.subr.mxu0 0.0
    %6905 = vmatpush1.msra.mxu0 0.0
    %6906 = vmatprep.mubr.f32.mxu0 0.0
    %6907 = vmatmul.mubr.f32.gmra.mrb[0].mxu0 %v6651
    %v6908 = vpop.f32.mrb[0].mxu0
    %v6909 = vadd.f32 0.0, %v6908
    %v6910 = vpop.f32.mrb[0].mxu0
    %6911 = vmatprep.mubr.f32.mxu0 0.0
    %6912 = vmatmul.mubr.f32.gmra.mrb[0].mxu0 %v6654
    %v6913 = vpop.f32.mrb[0].mxu0
    %v6914 = vadd.f32 0.0, %v6913
    %v6915 = vpop.f32.mrb[0].mxu0
    %6916 = vmatprep.mubr.f32.mxu0 0.0
    %6917 = vmatmul.mubr.f32.gmra.mrb[0].mxu0 %v6657
    %v6918 = vpop.f32.mrb[0].mxu0
    %v6919 = vadd.f32 0.0, %v6918
    %v6920 = vpop.f32.mrb[0].mxu0
    %6921 = vmatprep.mubr.f32.mxu0 0.0
    %6922 = vmatmul.mubr.f32.gmra.mrb[0].mxu0 %v6660
    %v6923 = vpop.f32.mrb[0].mxu0
    %v6924 = vadd.f32 0.0, %v6923
    %v6925 = vpop.f32.mrb[0].mxu0
    %6926 = vmatprep.mubr.f32.mxu0 0.0
    %6927 = vmatmul.mubr.f32.gmra.mrb[0].mxu0 %v6663
    %v6928 = vpop.f32.mrb[0].mxu0
    %v6929 = vadd.f32 0.0, %v6928
    %v6930 = vpop.f32.mrb[0].mxu0
    %6931 = vmatprep.mubr.f32.mxu0 0.0
    %6932 = vmatmul.mubr.f32.gmra.mrb[0].mxu0 %v6666
    %v6933 = vpop.f32.mrb[0].mxu0
    %v6934 = vadd.f32 0.0, %v6933
    %v6935 = vpop.f32.mrb[0].mxu0
    %6936 = vmatprep.mubr.f32.mxu0 0.0
    %6937 = vmatmul.mubr.f32.gmra.mrb[0].mxu0 %v6669
    %v6938 = vpop.f32.mrb[0].mxu0
    %v6939 = vadd.f32 0.0, %v6938
    %v6940 = vpop.f32.mrb[0].mxu0
    %6941 = vmatprep.mubr.f32.mxu0 0.0
    %6942 = vmatmul.mubr.f32.gmra.mrb[0].mxu0 %v6672
    %v6943 = vpop.f32.mrb[0].mxu0
    %v6944 = vadd.f32 0.0, %v6943
    %v6945 = vpop.f32.mrb[0].mxu0
    %6946 = vmatprep.mubr.f32.mxu0 0.0
    %6947 = vmatmul.mubr.f32.gmra.mrb[0].mxu0 %v6675
    %v6948 = vpop.f32.mrb[0].mxu0
    %v6949 = vadd.f32 0.0, %v6948
    %v6950 = vpop.f32.mrb[0].mxu0
    %6951 = vmatprep.mubr.f32.mxu0 0.0
    %6952 = vmatmul.mubr.f32.gmra.mrb[0].mxu0 %v6678
    %v6953 = vpop.f32.mrb[0].mxu0
    %v6954 = vadd.f32 0.0, %v6953
    %v6955 = vpop.f32.mrb[0].mxu0
    %6956 = vmatprep.mubr.f32.mxu0 0.0
    %6957 = vmatmul.mubr.f32.gmra.mrb[0].mxu0 %v6681
    %v6958 = vpop.f32.mrb[0].mxu0
    %v6959 = vadd.f32 0.0, %v6958
    %v6960 = vpop.f32.mrb[0].mxu0
    %6961 = vmatprep.mubr.f32.mxu0 0.0
    %6962 = vmatmul.mubr.f32.gmra.mrb[0].mxu0 %v6684
    %v6963 = vpop.f32.mrb[0].mxu0
    %v6964 = vadd.f32 0.0, %v6963
    %v6965 = vpop.f32.mrb[0].mxu0
    %6966 = vmatprep.mubr.f32.mxu0 0.0
    %6967 = vmatmul.mubr.f32.gmra.mrb[0].mxu0 %v6687
    %v6968 = vpop.f32.mrb[0].mxu0
    %v6969 = vadd.f32 0.0, %v6968
    %v6970 = vpop.f32.mrb[0].mxu0
    %6971 = vmatprep.mubr.f32.mxu0 0.0
    %6972 = vmatmul.mubr.f32.gmra.mrb[0].mxu0 %v6690
    %v6973 = vpop.f32.mrb[0].mxu0
    %v6974 = vadd.f32 0.0, %v6973
    %v6975 = vpop.f32.mrb[0].mxu0
    %6976 = vmatprep.mubr.f32.mxu0 0.0
    %6977 = vmatmul.mubr.f32.gmra.mrb[0].mxu0 %v6693
    %v6978 = vpop.f32.mrb[0].mxu0
    %v6979 = vadd.f32 0.0, %v6978
    %v6980 = vpop.f32.mrb[0].mxu0
    %6981 = vmatprep.mubr.f32.mxu0 0.0
    %6982 = vmatmul.mubr.f32.gmra.mrb[0].mxu0 %v6696
    %v6983 = vpop.f32.mrb[0].mxu0
    %v6984 = vadd.f32 0.0, %v6983
    %v6985 = vpop.f32.mrb[0].mxu0
    %6986 = vmatprep.mubr.f32.mxu0 0.0
    %6987 = vmatmul.mubr.f32.gmra.mrb[0].mxu0 %v6699
    %v6988 = vpop.f32.mrb[0].mxu0
    %v6989 = vadd.f32 0.0, %v6988
    %v6990 = vpop.f32.mrb[0].mxu0
    %6991 = vmatprep.mubr.f32.mxu0 0.0
    %6992 = vmatmul.mubr.f32.gmra.mrb[0].mxu0 %v6702
    %v6993 = vpop.f32.mrb[0].mxu0
    %v6994 = vadd.f32 0.0, %v6993
    %v6995 = vpop.f32.mrb[0].mxu0
    %6996 = vmatprep.mubr.f32.mxu0 0.0
    %6997 = vmatmul.mubr.f32.gmra.mrb[0].mxu0 %v6705
    %v6998 = vpop.f32.mrb[0].mxu0
    %v6999 = vadd.f32 0.0, %v6998
    %v7000 = vpop.f32.mrb[0].mxu0
    %7001 = vmatprep.mubr.f32.mxu0 0.0
    %7002 = vmatmul.mubr.f32.gmra.mrb[0].mxu0 %v6708
    %v7003 = vpop.f32.mrb[0].mxu0
    %v7004 = vadd.f32 0.0, %v7003
    %v7005 = vpop.f32.mrb[0].mxu0
    %7006 = vmatprep.mubr.f32.mxu0 0.0
    %7007 = vmatmul.mubr.f32.gmra.mrb[0].mxu0 %v6711
    %v7008 = vpop.f32.mrb[0].mxu0
    %v7009 = vadd.f32 0.0, %v7008
    %v7010 = vpop.f32.mrb[0].mxu0
    %7011 = vmatprep.mubr.f32.mxu0 0.0
    %7012 = vmatmul.mubr.f32.gmra.mrb[0].mxu0 %v6714
    %v7013 = vpop.f32.mrb[0].mxu0
    %v7014 = vadd.f32 0.0, %v7013
    %v7015 = vpop.f32.mrb[0].mxu0
    %7016 = vmatprep.mubr.f32.mxu0 0.0
    %7017 = vmatmul.mubr.f32.gmra.mrb[0].mxu0 %v6717
    %v7018 = vpop.f32.mrb[0].mxu0
    %v7019 = vadd.f32 0.0, %v7018
    %v7020 = vpop.f32.mrb[0].mxu0
    %7021 = vmatprep.mubr.f32.mxu0 0.0
    %7022 = vmatmul.mubr.f32.gmra.mrb[0].mxu0 %v6720
    %v7023 = vpop.f32.mrb[0].mxu0
    %v7024 = vadd.f32 0.0, %v7023
    %v7025 = vpop.f32.mrb[0].mxu0
    %7026 = vmatprep.mubr.f32.mxu0 0.0
    %7027 = vmatmul.mubr.f32.gmra.mrb[0].mxu0 %v6723
    %v7028 = vpop.f32.mrb[0].mxu0
    %v7029 = vadd.f32 0.0, %v7028
    %v7030 = vpop.f32.mrb[0].mxu0
    %7031 = vmatprep.mubr.f32.mxu0 0.0
    %7032 = vmatmul.mubr.f32.gmra.mrb[0].mxu0 %v6726
    %v7033 = vpop.f32.mrb[0].mxu0
    %v7034 = vadd.f32 0.0, %v7033
    %v7035 = vpop.f32.mrb[0].mxu0
    %7036 = vmatprep.mubr.f32.mxu0 0.0
    %7037 = vmatmul.mubr.f32.gmra.mrb[0].mxu0 %v6729
    %v7038 = vpop.f32.mrb[0].mxu0
    %v7039 = vadd.f32 0.0, %v7038
    %v7040 = vpop.f32.mrb[0].mxu0
    %7041 = vmatprep.mubr.f32.mxu0 0.0
    %7042 = vmatmul.mubr.f32.gmra.mrb[0].mxu0 %v6732
    %v7043 = vpop.f32.mrb[0].mxu0
    %v7044 = vadd.f32 0.0, %v7043
    %v7045 = vpop.f32.mrb[0].mxu0
    %7046 = vmatprep.mubr.f32.mxu0 0.0
    %7047 = vmatmul.mubr.f32.gmra.mrb[0].mxu0 %v6735
    %v7048 = vpop.f32.mrb[0].mxu0
    %v7049 = vadd.f32 0.0, %v7048
    %v7050 = vpop.f32.mrb[0].mxu0
    %7051 = vmatprep.mubr.f32.mxu0 0.0
    %7052 = vmatmul.mubr.f32.gmra.mrb[0].mxu0 %v6738
    %v7053 = vpop.f32.mrb[0].mxu0
    %v7054 = vadd.f32 0.0, %v7053
    %v7055 = vpop.f32.mrb[0].mxu0
    %7056 = vmatprep.mubr.f32.mxu0 0.0
    %7057 = vmatmul.mubr.f32.gmra.mrb[0].mxu0 %v6741
    %v7058 = vpop.f32.mrb[0].mxu0
    %v7059 = vadd.f32 0.0, %v7058
    %v7060 = vpop.f32.mrb[0].mxu0
    %7061 = vmatprep.mubr.f32.mxu0 0.0
    %7062 = vmatmul.mubr.f32.gmra.mrb[0].mxu0 %v6744
    %v7063 = vpop.f32.mrb[0].mxu0
    %v7064 = vadd.f32 0.0, %v7063
    %v7065 = vpop.f32.mrb[0].mxu0
    %7066 = vmatprep.mubr.f32.mxu0 0.0
    %7067 = vmatmul.mubr.f32.gmra.mrb[0].mxu0 %v6747
    %v7068 = vpop.f32.mrb[0].mxu0
    %v7069 = vadd.f32 0.0, %v7068
    %v7070 = vpop.f32.mrb[0].mxu0
    %7071 = vmatprep.mubr.f32.mxu0 0.0
    %7072 = vmatmul.mubr.f32.gmra.mrb[0].mxu0 %v6750
    %v7073 = vpop.f32.mrb[0].mxu0
    %v7074 = vadd.f32 0.0, %v7073
    %v7075 = vpop.f32.mrb[0].mxu0
    %7076 = vmatprep.mubr.f32.mxu0 0.0
    %7077 = vmatmul.mubr.f32.gmra.mrb[0].mxu0 %v6753
    %v7078 = vpop.f32.mrb[0].mxu0
    %v7079 = vadd.f32 0.0, %v7078
    %v7080 = vpop.f32.mrb[0].mxu0
    %7081 = vmatprep.mubr.f32.mxu0 0.0
    %7082 = vmatmul.mubr.f32.gmra.mrb[0].mxu0 %v6756
    %v7083 = vpop.f32.mrb[0].mxu0
    %v7084 = vadd.f32 0.0, %v7083
    %v7085 = vpop.f32.mrb[0].mxu0
    %7086 = vmatprep.mubr.f32.mxu0 0.0
    %7087 = vmatmul.mubr.f32.gmra.mrb[0].mxu0 %v6759
    %v7088 = vpop.f32.mrb[0].mxu0
    %v7089 = vadd.f32 0.0, %v7088
    %v7090 = vpop.f32.mrb[0].mxu0
    %7091 = vmatprep.mubr.f32.mxu0 0.0
    %7092 = vmatmul.mubr.f32.gmra.mrb[0].mxu0 %v6762
    %v7093 = vpop.f32.mrb[0].mxu0
    %v7094 = vadd.f32 0.0, %v7093
    %v7095 = vpop.f32.mrb[0].mxu0
    %7096 = vmatprep.mubr.f32.mxu0 0.0
    %7097 = vmatmul.mubr.f32.gmra.mrb[0].mxu0 %v6765
    %v7098 = vpop.f32.mrb[0].mxu0
    %v7099 = vadd.f32 0.0, %v7098
    %v7100 = vpop.f32.mrb[0].mxu0
    %7101 = vmatprep.mubr.f32.mxu0 0.0
    %7102 = vmatmul.mubr.f32.gmra.mrb[0].mxu0 %v6768
    %v7103 = vpop.f32.mrb[0].mxu0
    %v7104 = vadd.f32 0.0, %v7103
    %v7105 = vpop.f32.mrb[0].mxu0
    %7106 = vmatprep.mubr.f32.mxu0 0.0
    %7107 = vmatmul.mubr.f32.gmra.mrb[0].mxu0 %v6771
    %v7108 = vpop.f32.mrb[0].mxu0
    %v7109 = vadd.f32 0.0, %v7108
    %v7110 = vpop.f32.mrb[0].mxu0
    %7111 = vmatprep.mubr.f32.mxu0 0.0
    %7112 = vmatmul.mubr.f32.gmra.mrb[0].mxu0 %v6774
    %v7113 = vpop.f32.mrb[0].mxu0
    %v7114 = vadd.f32 0.0, %v7113
    %v7115 = vpop.f32.mrb[0].mxu0
    %7116 = vmatprep.mubr.f32.mxu0 0.0
    %7117 = vmatmul.mubr.f32.gmra.mrb[0].mxu0 %v6777
    %v7118 = vpop.f32.mrb[0].mxu0
    %v7119 = vadd.f32 0.0, %v7118
    %v7120 = vpop.f32.mrb[0].mxu0
    %7121 = vmatprep.mubr.f32.mxu0 0.0
    %7122 = vmatmul.mubr.f32.gmra.mrb[0].mxu0 %v6780
    %v7123 = vpop.f32.mrb[0].mxu0
    %v7124 = vadd.f32 0.0, %v7123
    %v7125 = vpop.f32.mrb[0].mxu0
    %7126 = vmatprep.mubr.f32.mxu0 0.0
    %7127 = vmatmul.mubr.f32.gmra.mrb[0].mxu0 %v6783
    %v7128 = vpop.f32.mrb[0].mxu0
    %v7129 = vadd.f32 0.0, %v7128
    %v7130 = vpop.f32.mrb[0].mxu0
    %7131 = vmatprep.mubr.f32.mxu0 0.0
    %7132 = vmatmul.mubr.f32.gmra.mrb[0].mxu0 %v6786
    %v7133 = vpop.f32.mrb[0].mxu0
    %v7134 = vadd.f32 0.0, %v7133
    %v7135 = vpop.f32.mrb[0].mxu0
    %7136 = vmatprep.mubr.f32.mxu0 0.0
    %7137 = vmatmul.mubr.f32.gmra.mrb[0].mxu0 %v6789
    %v7138 = vpop.f32.mrb[0].mxu0
    %v7139 = vadd.f32 0.0, %v7138
    %v7140 = vpop.f32.mrb[0].mxu0
    %7141 = vmatprep.mubr.f32.mxu0 0.0
    %7142 = vmatmul.mubr.f32.gmra.mrb[0].mxu0 %v6792
    %v7143 = vpop.f32.mrb[0].mxu0
    %v7144 = vadd.f32 0.0, %v7143
    %v7145 = vpop.f32.mrb[0].mxu0
    %7146 = vmatprep.mubr.f32.mxu0 0.0
    %7147 = vmatmul.mubr.f32.gmra.mrb[0].mxu0 %v6795
    %v7148 = vpop.f32.mrb[0].mxu0
    %v7149 = vadd.f32 0.0, %v7148
    %v7150 = vpop.f32.mrb[0].mxu0
    %7151 = vmatprep.mubr.f32.mxu0 0.0
    %7152 = vmatmul.mubr.f32.gmra.mrb[0].mxu0 %v6798
    %v7153 = vpop.f32.mrb[0].mxu0
    %v7154 = vadd.f32 0.0, %v7153
    %v7155 = vpop.f32.mrb[0].mxu0
    %7156 = vmatprep.mubr.f32.mxu0 0.0
    %7157 = vmatmul.mubr.f32.gmra.mrb[0].mxu0 %v6801
    %v7158 = vpop.f32.mrb[0].mxu0
    %v7159 = vadd.f32 0.0, %v7158
    %v7160 = vpop.f32.mrb[0].mxu0
    %7161 = vmatprep.mubr.f32.mxu0 0.0
    %7162 = vmatmul.mubr.f32.gmra.mrb[0].mxu0 %v6804
    %v7163 = vpop.f32.mrb[0].mxu0
    %v7164 = vadd.f32 0.0, %v7163
    %v7165 = vpop.f32.mrb[0].mxu0
    %7166 = vmatprep.mubr.f32.mxu0 0.0
    %7167 = vmatmul.mubr.f32.gmra.mrb[0].mxu0 %v6807
    %v7168 = vpop.f32.mrb[0].mxu0
    %v7169 = vadd.f32 0.0, %v7168
    %v7170 = vpop.f32.mrb[0].mxu0
    %7171 = vmatprep.mubr.f32.mxu0 0.0
    %7172 = vmatmul.mubr.f32.gmra.mrb[0].mxu0 %v6810
    %v7173 = vpop.f32.mrb[0].mxu0
    %v7174 = vadd.f32 0.0, %v7173
    %v7175 = vpop.f32.mrb[0].mxu0
    %7176 = vmatprep.mubr.f32.mxu0 0.0
    %7177 = vmatmul.mubr.f32.gmra.mrb[0].mxu0 %v6813
    %v7178 = vpop.f32.mrb[0].mxu0
    %v7179 = vadd.f32 0.0, %v7178
    %v7180 = vpop.f32.mrb[0].mxu0
    %7181 = vmatprep.mubr.f32.mxu0 0.0
    %7182 = vmatmul.mubr.f32.gmra.mrb[0].mxu0 %v6816
    %v7183 = vpop.f32.mrb[0].mxu0
    %v7184 = vadd.f32 0.0, %v7183
    %v7185 = vpop.f32.mrb[0].mxu0
    %7186 = vmatprep.mubr.f32.mxu0 0.0
    %7187 = vmatmul.mubr.f32.gmra.mrb[0].mxu0 %v6819
    %v7188 = vpop.f32.mrb[0].mxu0
    %v7189 = vadd.f32 0.0, %v7188
    %v7190 = vpop.f32.mrb[0].mxu0
    %7191 = vmatprep.mubr.f32.mxu0 0.0
    %7192 = vmatmul.mubr.f32.gmra.mrb[0].mxu0 %v6822
    %v7193 = vpop.f32.mrb[0].mxu0
    %v7194 = vadd.f32 0.0, %v7193
    %v7195 = vpop.f32.mrb[0].mxu0
    %7196 = vmatprep.mubr.f32.mxu0 0.0
    %7197 = vmatmul.mubr.f32.gmra.mrb[0].mxu0 %v6825
    %v7198 = vpop.f32.mrb[0].mxu0
    %v7199 = vadd.f32 0.0, %v7198
    %v7200 = vpop.f32.mrb[0].mxu0
    %7201 = vmatprep.mubr.f32.mxu0 0.0
    %7202 = vmatmul.mubr.f32.gmra.mrb[0].mxu0 %v6828
    %v7203 = vpop.f32.mrb[0].mxu0
    %v7204 = vadd.f32 0.0, %v7203
    %v7205 = vpop.f32.mrb[0].mxu0
    %7206 = vmatprep.mubr.f32.mxu0 0.0
    %7207 = vmatmul.mubr.f32.gmra.mrb[0].mxu0 %v6831
    %v7208 = vpop.f32.mrb[0].mxu0
    %v7209 = vadd.f32 0.0, %v7208
    %v7210 = vpop.f32.mrb[0].mxu0
    %7211 = vmatprep.mubr.f32.mxu0 0.0
    %7212 = vmatmul.mubr.f32.gmra.mrb[0].mxu0 %v6834
    %v7213 = vpop.f32.mrb[0].mxu0
    %v7214 = vadd.f32 0.0, %v7213
    %v7215 = vpop.f32.mrb[0].mxu0
    %7216 = vmatprep.mubr.f32.mxu0 0.0
    %7217 = vmatmul.mubr.f32.gmra.mrb[0].mxu0 %v6837
    %v7218 = vpop.f32.mrb[0].mxu0
    %v7219 = vadd.f32 0.0, %v7218
    %v7220 = vpop.f32.mrb[0].mxu0
    %7221 = vmatprep.mubr.f32.mxu0 0.0
    %7222 = vmatmul.mubr.f32.gmra.mrb[0].mxu0 %v6840
    %v7223 = vpop.f32.mrb[0].mxu0
    %v7224 = vadd.f32 0.0, %v7223
    %v7225 = vpop.f32.mrb[0].mxu0
    %7226 = vdwg.mxu0
    %v7227 = vld [vmem:[#allocation2] sm:$0xff]
    %v7228 = vld [vmem:[#allocation2 + $0x8] sm:$0xff]
    %v7229 = vld [vmem:[#allocation2 + $0x10] sm:$0xff]
    %v7230 = vld [vmem:[#allocation2 + $0x18] sm:$0xff]
    %v7231 = vld [vmem:[#allocation2 + $0x20] sm:$0xff]
    %v7232 = vld [vmem:[#allocation2 + $0x28] sm:$0xff]
    %v7233 = vld [vmem:[#allocation2 + $0x30] sm:$0xff]
    %v7234 = vld [vmem:[#allocation2 + $0x38] sm:$0xff]
    %v7235 = vld [vmem:[#allocation2 + $0x40] sm:$0xff]
    %v7236 = vld [vmem:[#allocation2 + $0x48] sm:$0xff]
    %v7237 = vld [vmem:[#allocation2 + $0x50] sm:$0xff]
    %v7238 = vld [vmem:[#allocation2 + $0x58] sm:$0xff]
    %v7239 = vld [vmem:[#allocation2 + $0x60] sm:$0xff]
    %v7240 = vld [vmem:[#allocation2 + $0x68] sm:$0xff]
    %v7241 = vld [vmem:[#allocation2 + $0x70] sm:$0xff]
    %v7242 = vld [vmem:[#allocation2 + $0x78] sm:$0xff]
    %v7243 = vld [vmem:[#allocation2 + $0x80] sm:$0xff]
    %v7244 = vld [vmem:[#allocation2 + $0x88] sm:$0xff]
    %v7245 = vld [vmem:[#allocation2 + $0x90] sm:$0xff]
    %v7246 = vld [vmem:[#allocation2 + $0x98] sm:$0xff]
    %v7247 = vld [vmem:[#allocation2 + $0xa0] sm:$0xff]
    %v7248 = vld [vmem:[#allocation2 + $0xa8] sm:$0xff]
    %v7249 = vld [vmem:[#allocation2 + $0xb0] sm:$0xff]
    %v7250 = vld [vmem:[#allocation2 + $0xb8] sm:$0xff]
    %v7251 = vld [vmem:[#allocation2 + $0xc0] sm:$0xff]
    %v7252 = vld [vmem:[#allocation2 + $0xc8] sm:$0xff]
    %v7253 = vld [vmem:[#allocation2 + $0xd0] sm:$0xff]
    %v7254 = vld [vmem:[#allocation2 + $0xd8] sm:$0xff]
    %v7255 = vld [vmem:[#allocation2 + $0xe0] sm:$0xff]
    %v7256 = vld [vmem:[#allocation2 + $0xe8] sm:$0xff]
    %v7257 = vld [vmem:[#allocation2 + $0xf0] sm:$0xff]
    %v7258 = vld [vmem:[#allocation2 + $0xf8] sm:$0xff]
    %v7259 = vld [vmem:[#allocation2 + $0x100] sm:$0xff]
    %v7260 = vld [vmem:[#allocation2 + $0x108] sm:$0xff]
    %v7261 = vld [vmem:[#allocation2 + $0x110] sm:$0xff]
    %v7262 = vld [vmem:[#allocation2 + $0x118] sm:$0xff]
    %v7263 = vld [vmem:[#allocation2 + $0x120] sm:$0xff]
    %v7264 = vld [vmem:[#allocation2 + $0x128] sm:$0xff]
    %v7265 = vld [vmem:[#allocation2 + $0x130] sm:$0xff]
    %v7266 = vld [vmem:[#allocation2 + $0x138] sm:$0xff]
    %v7267 = vld [vmem:[#allocation2 + $0x140] sm:$0xff]
    %v7268 = vld [vmem:[#allocation2 + $0x148] sm:$0xff]
    %v7269 = vld [vmem:[#allocation2 + $0x150] sm:$0xff]
    %v7270 = vld [vmem:[#allocation2 + $0x158] sm:$0xff]
    %v7271 = vld [vmem:[#allocation2 + $0x160] sm:$0xff]
    %v7272 = vld [vmem:[#allocation2 + $0x168] sm:$0xff]
    %v7273 = vld [vmem:[#allocation2 + $0x170] sm:$0xff]
    %v7274 = vld [vmem:[#allocation2 + $0x178] sm:$0xff]
    %v7275 = vld [vmem:[#allocation2 + $0x180] sm:$0xff]
    %v7276 = vld [vmem:[#allocation2 + $0x188] sm:$0xff]
    %v7277 = vld [vmem:[#allocation2 + $0x190] sm:$0xff]
    %v7278 = vld [vmem:[#allocation2 + $0x198] sm:$0xff]
    %v7279 = vld [vmem:[#allocation2 + $0x1a0] sm:$0xff]
    %v7280 = vld [vmem:[#allocation2 + $0x1a8] sm:$0xff]
    %v7281 = vld [vmem:[#allocation2 + $0x1b0] sm:$0xff]
    %v7282 = vld [vmem:[#allocation2 + $0x1b8] sm:$0xff]
    %v7283 = vld [vmem:[#allocation2 + $0x1c0] sm:$0xff]
    %v7284 = vld [vmem:[#allocation2 + $0x1c8] sm:$0xff]
    %v7285 = vld [vmem:[#allocation2 + $0x1d0] sm:$0xff]
    %v7286 = vld [vmem:[#allocation2 + $0x1d8] sm:$0xff]
    %v7287 = vld [vmem:[#allocation2 + $0x1e0] sm:$0xff]
    %v7288 = vld [vmem:[#allocation2 + $0x1e8] sm:$0xff]
    %v7289 = vld [vmem:[#allocation2 + $0x1f0] sm:$0xff]
    %v7290 = vld [vmem:[#allocation2 + $0x1f8] sm:$0xff]
    %v7291 = vadd.f32 %v7227, %v6909
    %v7292 = vadd.f32 %v7228, %v6914
    %v7293 = vadd.f32 %v7229, %v6919
    %v7294 = vadd.f32 %v7230, %v6924
    %v7295 = vadd.f32 %v7231, %v6929
    %v7296 = vadd.f32 %v7232, %v6934
    %v7297 = vadd.f32 %v7233, %v6939
    %v7298 = vadd.f32 %v7234, %v6944
    %v7299 = vadd.f32 %v7235, %v6949
    %v7300 = vadd.f32 %v7236, %v6954
    %v7301 = vadd.f32 %v7237, %v6959
    %v7302 = vadd.f32 %v7238, %v6964
    %v7303 = vadd.f32 %v7239, %v6969
    %v7304 = vadd.f32 %v7240, %v6974
    %v7305 = vadd.f32 %v7241, %v6979
    %v7306 = vadd.f32 %v7242, %v6984
    %v7307 = vadd.f32 %v7243, %v6989
    %v7308 = vadd.f32 %v7244, %v6994
    %v7309 = vadd.f32 %v7245, %v6999
    %v7310 = vadd.f32 %v7246, %v7004
    %v7311 = vadd.f32 %v7247, %v7009
    %v7312 = vadd.f32 %v7248, %v7014
    %v7313 = vadd.f32 %v7249, %v7019
    %v7314 = vadd.f32 %v7250, %v7024
    %v7315 = vadd.f32 %v7251, %v7029
    %v7316 = vadd.f32 %v7252, %v7034
    %v7317 = vadd.f32 %v7253, %v7039
    %v7318 = vadd.f32 %v7254, %v7044
    %v7319 = vadd.f32 %v7255, %v7049
    %v7320 = vadd.f32 %v7256, %v7054
    %v7321 = vadd.f32 %v7257, %v7059
    %v7322 = vadd.f32 %v7258, %v7064
    %v7323 = vadd.f32 %v7259, %v7069
    %v7324 = vadd.f32 %v7260, %v7074
    %v7325 = vadd.f32 %v7261, %v7079
    %v7326 = vadd.f32 %v7262, %v7084
    %v7327 = vadd.f32 %v7263, %v7089
    %v7328 = vadd.f32 %v7264, %v7094
    %v7329 = vadd.f32 %v7265, %v7099
    %v7330 = vadd.f32 %v7266, %v7104
    %v7331 = vadd.f32 %v7267, %v7109
    %v7332 = vadd.f32 %v7268, %v7114
    %v7333 = vadd.f32 %v7269, %v7119
    %v7334 = vadd.f32 %v7270, %v7124
    %v7335 = vadd.f32 %v7271, %v7129
    %v7336 = vadd.f32 %v7272, %v7134
    %v7337 = vadd.f32 %v7273, %v7139
    %v7338 = vadd.f32 %v7274, %v7144
    %v7339 = vadd.f32 %v7275, %v7149
    %v7340 = vadd.f32 %v7276, %v7154
    %v7341 = vadd.f32 %v7277, %v7159
    %v7342 = vadd.f32 %v7278, %v7164
    %v7343 = vadd.f32 %v7279, %v7169
    %v7344 = vadd.f32 %v7280, %v7174
    %v7345 = vadd.f32 %v7281, %v7179
    %v7346 = vadd.f32 %v7282, %v7184
    %v7347 = vadd.f32 %v7283, %v7189
    %v7348 = vadd.f32 %v7284, %v7194
    %v7349 = vadd.f32 %v7285, %v7199
    %v7350 = vadd.f32 %v7286, %v7204
    %v7351 = vadd.f32 %v7287, %v7209
    %v7352 = vadd.f32 %v7288, %v7214
    %v7353 = vadd.f32 %v7289, %v7219
    %v7354 = vadd.f32 %v7290, %v7224
    %7355 = vst.msk [vmem:[#allocation2] sm:$0xff] %vm95, %v7291
    %7356 = vst.msk [vmem:[#allocation2 + $0x8] sm:$0xff] %vm95, %v7292
    %7357 = vst.msk [vmem:[#allocation2 + $0x10] sm:$0xff] %vm95, %v7293
    %7358 = vst.msk [vmem:[#allocation2 + $0x18] sm:$0xff] %vm95, %v7294
    %7359 = vst.msk [vmem:[#allocation2 + $0x20] sm:$0xff] %vm95, %v7295
    %7360 = vst.msk [vmem:[#allocation2 + $0x28] sm:$0xff] %vm95, %v7296
    %7361 = vst.msk [vmem:[#allocation2 + $0x30] sm:$0xff] %vm95, %v7297
    %7362 = vst.msk [vmem:[#allocation2 + $0x38] sm:$0xff] %vm95, %v7298
    %7363 = vst.msk [vmem:[#allocation2 + $0x40] sm:$0xff] %vm95, %v7299
    %7364 = vst.msk [vmem:[#allocation2 + $0x48] sm:$0xff] %vm95, %v7300
    %7365 = vst.msk [vmem:[#allocation2 + $0x50] sm:$0xff] %vm95, %v7301
    %7366 = vst.msk [vmem:[#allocation2 + $0x58] sm:$0xff] %vm95, %v7302
    %7367 = vst.msk [vmem:[#allocation2 + $0x60] sm:$0xff] %vm95, %v7303
    %7368 = vst.msk [vmem:[#allocation2 + $0x68] sm:$0xff] %vm95, %v7304
    %7369 = vst.msk [vmem:[#allocation2 + $0x70] sm:$0xff] %vm95, %v7305
    %7370 = vst.msk [vmem:[#allocation2 + $0x78] sm:$0xff] %vm95, %v7306
    %7371 = vst.msk [vmem:[#allocation2 + $0x80] sm:$0xff] %vm95, %v7307
    %7372 = vst.msk [vmem:[#allocation2 + $0x88] sm:$0xff] %vm95, %v7308
    %7373 = vst.msk [vmem:[#allocation2 + $0x90] sm:$0xff] %vm95, %v7309
    %7374 = vst.msk [vmem:[#allocation2 + $0x98] sm:$0xff] %vm95, %v7310
    %7375 = vst.msk [vmem:[#allocation2 + $0xa0] sm:$0xff] %vm95, %v7311
    %7376 = vst.msk [vmem:[#allocation2 + $0xa8] sm:$0xff] %vm95, %v7312
    %7377 = vst.msk [vmem:[#allocation2 + $0xb0] sm:$0xff] %vm95, %v7313
    %7378 = vst.msk [vmem:[#allocation2 + $0xb8] sm:$0xff] %vm95, %v7314
    %7379 = vst.msk [vmem:[#allocation2 + $0xc0] sm:$0xff] %vm95, %v7315
    %7380 = vst.msk [vmem:[#allocation2 + $0xc8] sm:$0xff] %vm95, %v7316
    %7381 = vst.msk [vmem:[#allocation2 + $0xd0] sm:$0xff] %vm95, %v7317
    %7382 = vst.msk [vmem:[#allocation2 + $0xd8] sm:$0xff] %vm95, %v7318
    %7383 = vst.msk [vmem:[#allocation2 + $0xe0] sm:$0xff] %vm95, %v7319
    %7384 = vst.msk [vmem:[#allocation2 + $0xe8] sm:$0xff] %vm95, %v7320
    %7385 = vst.msk [vmem:[#allocation2 + $0xf0] sm:$0xff] %vm95, %v7321
    %7386 = vst.msk [vmem:[#allocation2 + $0xf8] sm:$0xff] %vm95, %v7322
    %7387 = vst.msk [vmem:[#allocation2 + $0x100] sm:$0xff] %vm95, %v7323
    %7388 = vst.msk [vmem:[#allocation2 + $0x108] sm:$0xff] %vm95, %v7324
    %7389 = vst.msk [vmem:[#allocation2 + $0x110] sm:$0xff] %vm95, %v7325
    %7390 = vst.msk [vmem:[#allocation2 + $0x118] sm:$0xff] %vm95, %v7326
    %7391 = vst.msk [vmem:[#allocation2 + $0x120] sm:$0xff] %vm95, %v7327
    %7392 = vst.msk [vmem:[#allocation2 + $0x128] sm:$0xff] %vm95, %v7328
    %7393 = vst.msk [vmem:[#allocation2 + $0x130] sm:$0xff] %vm95, %v7329
    %7394 = vst.msk [vmem:[#allocation2 + $0x138] sm:$0xff] %vm95, %v7330
    %7395 = vst.msk [vmem:[#allocation2 + $0x140] sm:$0xff] %vm95, %v7331
    %7396 = vst.msk [vmem:[#allocation2 + $0x148] sm:$0xff] %vm95, %v7332
    %7397 = vst.msk [vmem:[#allocation2 + $0x150] sm:$0xff] %vm95, %v7333
    %7398 = vst.msk [vmem:[#allocation2 + $0x158] sm:$0xff] %vm95, %v7334
    %7399 = vst.msk [vmem:[#allocation2 + $0x160] sm:$0xff] %vm95, %v7335
    %7400 = vst.msk [vmem:[#allocation2 + $0x168] sm:$0xff] %vm95, %v7336
    %7401 = vst.msk [vmem:[#allocation2 + $0x170] sm:$0xff] %vm95, %v7337
    %7402 = vst.msk [vmem:[#allocation2 + $0x178] sm:$0xff] %vm95, %v7338
    %7403 = vst.msk [vmem:[#allocation2 + $0x180] sm:$0xff] %vm95, %v7339
    %7404 = vst.msk [vmem:[#allocation2 + $0x188] sm:$0xff] %vm95, %v7340
    %7405 = vst.msk [vmem:[#allocation2 + $0x190] sm:$0xff] %vm95, %v7341
    %7406 = vst.msk [vmem:[#allocation2 + $0x198] sm:$0xff] %vm95, %v7342
    %7407 = vst.msk [vmem:[#allocation2 + $0x1a0] sm:$0xff] %vm95, %v7343
    %7408 = vst.msk [vmem:[#allocation2 + $0x1a8] sm:$0xff] %vm95, %v7344
    %7409 = vst.msk [vmem:[#allocation2 + $0x1b0] sm:$0xff] %vm95, %v7345
    %7410 = vst.msk [vmem:[#allocation2 + $0x1b8] sm:$0xff] %vm95, %v7346
    %7411 = vst.msk [vmem:[#allocation2 + $0x1c0] sm:$0xff] %vm95, %v7347
    %7412 = vst.msk [vmem:[#allocation2 + $0x1c8] sm:$0xff] %vm95, %v7348
    %7413 = vst.msk [vmem:[#allocation2 + $0x1d0] sm:$0xff] %vm95, %v7349
    %7414 = vst.msk [vmem:[#allocation2 + $0x1d8] sm:$0xff] %vm95, %v7350
    %7415 = vst.msk [vmem:[#allocation2 + $0x1e0] sm:$0xff] %vm95, %v7351
    %7416 = vst.msk [vmem:[#allocation2 + $0x1e8] sm:$0xff] %vm95, %v7352
    %7417 = vst.msk [vmem:[#allocation2 + $0x1f0] sm:$0xff] %vm95, %v7353
    %7418 = vst.msk [vmem:[#allocation2 + $0x1f8] sm:$0xff] %vm95, %v7354
    %v7419 = vld [vmem:[#allocation2] sm:$0xff]
    %v7420 = vld [vmem:[#allocation2 + $0x8] sm:$0xff]
    %7421 = vst.msk [vmem:[#allocation3] sm:$0xff] %vm95, %v7419
    %7422 = vst.msk [vmem:[#allocation3 + $0x10] sm:$0xff] %vm95, %v7420
    %v7423 = vld [vmem:[#allocation2 + $0x10] sm:$0xff]
    %v7424 = vld [vmem:[#allocation2 + $0x18] sm:$0xff]
    %7427 = vrot.lane.b32.xlu0 %v7423, 8
    %v7428 = vpop.permute.xlu0 %7427
    %7429 = vrot.lane.b32.xlu0 %v7424, 8
    %v7430 = vpop.permute.xlu0 %7429
    %vm7433 = vcmask 130112
    %7434 = vst.msk [vmem:[#allocation3] sm:$0xff] %vm7433, %v7428
    %7435 = vst.msk [vmem:[#allocation3 + $0x10] sm:$0xff] %vm7433, %v7430
    %v7436 = vld [vmem:[#allocation2 + $0x20] sm:$0xff]
    %v7437 = vld [vmem:[#allocation2 + $0x28] sm:$0xff]
    %7440 = vrot.lane.b32.xlu0 %v7436, 16
    %v7441 = vpop.permute.xlu0 %7440
    %7442 = vrot.lane.b32.xlu0 %v7437, 16
    %v7443 = vpop.permute.xlu0 %7442
    %vm7446 = vcmask 195712
    %7447 = vst.msk [vmem:[#allocation3] sm:$0xff] %vm7446, %v7441
    %7448 = vst.msk [vmem:[#allocation3 + $0x10] sm:$0xff] %vm7446, %v7443
    %v7449 = vld [vmem:[#allocation2 + $0x30] sm:$0xff]
    %v7450 = vld [vmem:[#allocation2 + $0x38] sm:$0xff]
    %7453 = vrot.lane.b32.xlu0 %v7449, 24
    %v7454 = vpop.permute.xlu0 %7453
    %7455 = vrot.lane.b32.xlu0 %v7450, 24
    %v7456 = vpop.permute.xlu0 %7455
    %vm7459 = vcmask 261312
    %7460 = vst.msk [vmem:[#allocation3] sm:$0xff] %vm7459, %v7454
    %7461 = vst.msk [vmem:[#allocation3 + $0x10] sm:$0xff] %vm7459, %v7456
    %v7462 = vld [vmem:[#allocation2 + $0x40] sm:$0xff]
    %v7463 = vld [vmem:[#allocation2 + $0x48] sm:$0xff]
    %7466 = vrot.lane.b32.xlu0 %v7462, 32
    %v7467 = vpop.permute.xlu0 %7466
    %7468 = vrot.lane.b32.xlu0 %v7463, 32
    %v7469 = vpop.permute.xlu0 %7468
    %vm7472 = vcmask 326912
    %7473 = vst.msk [vmem:[#allocation3] sm:$0xff] %vm7472, %v7467
    %7474 = vst.msk [vmem:[#allocation3 + $0x10] sm:$0xff] %vm7472, %v7469
    %v7475 = vld [vmem:[#allocation2 + $0x50] sm:$0xff]
    %v7476 = vld [vmem:[#allocation2 + $0x58] sm:$0xff]
    %7479 = vrot.lane.b32.xlu0 %v7475, 40
    %v7480 = vpop.permute.xlu0 %7479
    %7481 = vrot.lane.b32.xlu0 %v7476, 40
    %v7482 = vpop.permute.xlu0 %7481
    %vm7485 = vcmask 392512
    %7486 = vst.msk [vmem:[#allocation3] sm:$0xff] %vm7485, %v7480
    %7487 = vst.msk [vmem:[#allocation3 + $0x10] sm:$0xff] %vm7485, %v7482
    %v7488 = vld [vmem:[#allocation2 + $0x60] sm:$0xff]
    %v7489 = vld [vmem:[#allocation2 + $0x68] sm:$0xff]
    %7492 = vrot.lane.b32.xlu0 %v7488, 48
    %v7493 = vpop.permute.xlu0 %7492
    %7494 = vrot.lane.b32.xlu0 %v7489, 48
    %v7495 = vpop.permute.xlu0 %7494
    %vm7498 = vcmask 458112
    %7499 = vst.msk [vmem:[#allocation3] sm:$0xff] %vm7498, %v7493
    %7500 = vst.msk [vmem:[#allocation3 + $0x10] sm:$0xff] %vm7498, %v7495
    %v7501 = vld [vmem:[#allocation2 + $0x70] sm:$0xff]
    %v7502 = vld [vmem:[#allocation2 + $0x78] sm:$0xff]
    %7505 = vrot.lane.b32.xlu0 %v7501, 56
    %v7506 = vpop.permute.xlu0 %7505
    %7507 = vrot.lane.b32.xlu0 %v7502, 56
    %v7508 = vpop.permute.xlu0 %7507
    %vm7511 = vcmask 523712
    %7512 = vst.msk [vmem:[#allocation3] sm:$0xff] %vm7511, %v7506
    %7513 = vst.msk [vmem:[#allocation3 + $0x10] sm:$0xff] %vm7511, %v7508
    %v7514 = vld [vmem:[#allocation2 + $0x80] sm:$0xff]
    %v7515 = vld [vmem:[#allocation2 + $0x88] sm:$0xff]
    %7518 = vrot.lane.b32.xlu0 %v7514, 64
    %v7519 = vpop.permute.xlu0 %7518
    %7520 = vrot.lane.b32.xlu0 %v7515, 64
    %v7521 = vpop.permute.xlu0 %7520
    %vm7524 = vcmask 589312
    %7525 = vst.msk [vmem:[#allocation3] sm:$0xff] %vm7524, %v7519
    %7526 = vst.msk [vmem:[#allocation3 + $0x10] sm:$0xff] %vm7524, %v7521
    %v7527 = vld [vmem:[#allocation2 + $0x90] sm:$0xff]
    %v7528 = vld [vmem:[#allocation2 + $0x98] sm:$0xff]
    %7531 = vrot.lane.b32.xlu0 %v7527, 72
    %v7532 = vpop.permute.xlu0 %7531
    %7533 = vrot.lane.b32.xlu0 %v7528, 72
    %v7534 = vpop.permute.xlu0 %7533
    %vm7537 = vcmask 654912
    %7538 = vst.msk [vmem:[#allocation3] sm:$0xff] %vm7537, %v7532
    %7539 = vst.msk [vmem:[#allocation3 + $0x10] sm:$0xff] %vm7537, %v7534
    %v7540 = vld [vmem:[#allocation2 + $0xa0] sm:$0xff]
    %v7541 = vld [vmem:[#allocation2 + $0xa8] sm:$0xff]
    %7544 = vrot.lane.b32.xlu0 %v7540, 80
    %v7545 = vpop.permute.xlu0 %7544
    %7546 = vrot.lane.b32.xlu0 %v7541, 80
    %v7547 = vpop.permute.xlu0 %7546
    %vm7550 = vcmask 720512
    %7551 = vst.msk [vmem:[#allocation3] sm:$0xff] %vm7550, %v7545
    %7552 = vst.msk [vmem:[#allocation3 + $0x10] sm:$0xff] %vm7550, %v7547
    %v7553 = vld [vmem:[#allocation2 + $0xb0] sm:$0xff]
    %v7554 = vld [vmem:[#allocation2 + $0xb8] sm:$0xff]
    %7557 = vrot.lane.b32.xlu0 %v7553, 88
    %v7558 = vpop.permute.xlu0 %7557
    %7559 = vrot.lane.b32.xlu0 %v7554, 88
    %v7560 = vpop.permute.xlu0 %7559
    %vm7563 = vcmask 786112
    %7564 = vst.msk [vmem:[#allocation3] sm:$0xff] %vm7563, %v7558
    %7565 = vst.msk [vmem:[#allocation3 + $0x10] sm:$0xff] %vm7563, %v7560
    %v7566 = vld [vmem:[#allocation2 + $0xc0] sm:$0xff]
    %v7567 = vld [vmem:[#allocation2 + $0xc8] sm:$0xff]
    %7570 = vrot.lane.b32.xlu0 %v7566, 96
    %v7571 = vpop.permute.xlu0 %7570
    %7572 = vrot.lane.b32.xlu0 %v7567, 96
    %v7573 = vpop.permute.xlu0 %7572
    %vm7576 = vcmask 851712
    %7577 = vst.msk [vmem:[#allocation3] sm:$0xff] %vm7576, %v7571
    %7578 = vst.msk [vmem:[#allocation3 + $0x10] sm:$0xff] %vm7576, %v7573
    %v7579 = vld [vmem:[#allocation2 + $0xd0] sm:$0xff]
    %v7580 = vld [vmem:[#allocation2 + $0xd8] sm:$0xff]
    %7583 = vrot.lane.b32.xlu0 %v7579, 104
    %v7584 = vpop.permute.xlu0 %7583
    %7585 = vrot.lane.b32.xlu0 %v7580, 104
    %v7586 = vpop.permute.xlu0 %7585
    %vm7589 = vcmask 917312
    %7590 = vst.msk [vmem:[#allocation3] sm:$0xff] %vm7589, %v7584
    %7591 = vst.msk [vmem:[#allocation3 + $0x10] sm:$0xff] %vm7589, %v7586
    %v7592 = vld [vmem:[#allocation2 + $0xe0] sm:$0xff]
    %v7593 = vld [vmem:[#allocation2 + $0xe8] sm:$0xff]
    %7596 = vrot.lane.b32.xlu0 %v7592, 112
    %v7597 = vpop.permute.xlu0 %7596
    %7598 = vrot.lane.b32.xlu0 %v7593, 112
    %v7599 = vpop.permute.xlu0 %7598
    %vm7602 = vcmask 982912
    %7603 = vst.msk [vmem:[#allocation3] sm:$0xff] %vm7602, %v7597
    %7604 = vst.msk [vmem:[#allocation3 + $0x10] sm:$0xff] %vm7602, %v7599
    %v7605 = vld [vmem:[#allocation2 + $0xf0] sm:$0xff]
    %v7606 = vld [vmem:[#allocation2 + $0xf8] sm:$0xff]
    %7609 = vrot.lane.b32.xlu0 %v7605, 120
    %v7610 = vpop.permute.xlu0 %7609
    %7611 = vrot.lane.b32.xlu0 %v7606, 120
    %v7612 = vpop.permute.xlu0 %7611
    %vm7615 = vcmask 1048512
    %7616 = vst.msk [vmem:[#allocation3] sm:$0xff] %vm7615, %v7610
    %7617 = vst.msk [vmem:[#allocation3 + $0x10] sm:$0xff] %vm7615, %v7612
    %v7618 = vld [vmem:[#allocation2 + $0x100] sm:$0xff]
    %v7619 = vld [vmem:[#allocation2 + $0x108] sm:$0xff]
    %7620 = vst.msk [vmem:[#allocation3 + $0x8] sm:$0xff] %vm95, %v7618
    %7621 = vst.msk [vmem:[#allocation3 + $0x18] sm:$0xff] %vm95, %v7619
    %v7622 = vld [vmem:[#allocation2 + $0x110] sm:$0xff]
    %v7623 = vld [vmem:[#allocation2 + $0x118] sm:$0xff]
    %7626 = vrot.lane.b32.xlu0 %v7622, 8
    %v7627 = vpop.permute.xlu0 %7626
    %7628 = vrot.lane.b32.xlu0 %v7623, 8
    %v7629 = vpop.permute.xlu0 %7628
    %7632 = vst.msk [vmem:[#allocation3 + $0x8] sm:$0xff] %vm7433, %v7627
    %7633 = vst.msk [vmem:[#allocation3 + $0x18] sm:$0xff] %vm7433, %v7629
    %v7634 = vld [vmem:[#allocation2 + $0x120] sm:$0xff]
    %v7635 = vld [vmem:[#allocation2 + $0x128] sm:$0xff]
    %7638 = vrot.lane.b32.xlu0 %v7634, 16
    %v7639 = vpop.permute.xlu0 %7638
    %7640 = vrot.lane.b32.xlu0 %v7635, 16
    %v7641 = vpop.permute.xlu0 %7640
    %7644 = vst.msk [vmem:[#allocation3 + $0x8] sm:$0xff] %vm7446, %v7639
    %7645 = vst.msk [vmem:[#allocation3 + $0x18] sm:$0xff] %vm7446, %v7641
    %v7646 = vld [vmem:[#allocation2 + $0x130] sm:$0xff]
    %v7647 = vld [vmem:[#allocation2 + $0x138] sm:$0xff]
    %7650 = vrot.lane.b32.xlu0 %v7646, 24
    %v7651 = vpop.permute.xlu0 %7650
    %7652 = vrot.lane.b32.xlu0 %v7647, 24
    %v7653 = vpop.permute.xlu0 %7652
    %7656 = vst.msk [vmem:[#allocation3 + $0x8] sm:$0xff] %vm7459, %v7651
    %7657 = vst.msk [vmem:[#allocation3 + $0x18] sm:$0xff] %vm7459, %v7653
    %v7658 = vld [vmem:[#allocation2 + $0x140] sm:$0xff]
    %v7659 = vld [vmem:[#allocation2 + $0x148] sm:$0xff]
    %7662 = vrot.lane.b32.xlu0 %v7658, 32
    %v7663 = vpop.permute.xlu0 %7662
    %7664 = vrot.lane.b32.xlu0 %v7659, 32
    %v7665 = vpop.permute.xlu0 %7664
    %7668 = vst.msk [vmem:[#allocation3 + $0x8] sm:$0xff] %vm7472, %v7663
    %7669 = vst.msk [vmem:[#allocation3 + $0x18] sm:$0xff] %vm7472, %v7665
    %v7670 = vld [vmem:[#allocation2 + $0x150] sm:$0xff]
    %v7671 = vld [vmem:[#allocation2 + $0x158] sm:$0xff]
    %7674 = vrot.lane.b32.xlu0 %v7670, 40
    %v7675 = vpop.permute.xlu0 %7674
    %7676 = vrot.lane.b32.xlu0 %v7671, 40
    %v7677 = vpop.permute.xlu0 %7676
    %7680 = vst.msk [vmem:[#allocation3 + $0x8] sm:$0xff] %vm7485, %v7675
    %7681 = vst.msk [vmem:[#allocation3 + $0x18] sm:$0xff] %vm7485, %v7677
    %v7682 = vld [vmem:[#allocation2 + $0x160] sm:$0xff]
    %v7683 = vld [vmem:[#allocation2 + $0x168] sm:$0xff]
    %7686 = vrot.lane.b32.xlu0 %v7682, 48
    %v7687 = vpop.permute.xlu0 %7686
    %7688 = vrot.lane.b32.xlu0 %v7683, 48
    %v7689 = vpop.permute.xlu0 %7688
    %7692 = vst.msk [vmem:[#allocation3 + $0x8] sm:$0xff] %vm7498, %v7687
    %7693 = vst.msk [vmem:[#allocation3 + $0x18] sm:$0xff] %vm7498, %v7689
    %v7694 = vld [vmem:[#allocation2 + $0x170] sm:$0xff]
    %v7695 = vld [vmem:[#allocation2 + $0x178] sm:$0xff]
    %7698 = vrot.lane.b32.xlu0 %v7694, 56
    %v7699 = vpop.permute.xlu0 %7698
    %7700 = vrot.lane.b32.xlu0 %v7695, 56
    %v7701 = vpop.permute.xlu0 %7700
    %7704 = vst.msk [vmem:[#allocation3 + $0x8] sm:$0xff] %vm7511, %v7699
    %7705 = vst.msk [vmem:[#allocation3 + $0x18] sm:$0xff] %vm7511, %v7701
    %v7706 = vld [vmem:[#allocation2 + $0x180] sm:$0xff]
    %v7707 = vld [vmem:[#allocation2 + $0x188] sm:$0xff]
    %7710 = vrot.lane.b32.xlu0 %v7706, 64
    %v7711 = vpop.permute.xlu0 %7710
    %7712 = vrot.lane.b32.xlu0 %v7707, 64
    %v7713 = vpop.permute.xlu0 %7712
    %7716 = vst.msk [vmem:[#allocation3 + $0x8] sm:$0xff] %vm7524, %v7711
    %7717 = vst.msk [vmem:[#allocation3 + $0x18] sm:$0xff] %vm7524, %v7713
    %v7718 = vld [vmem:[#allocation2 + $0x190] sm:$0xff]
    %v7719 = vld [vmem:[#allocation2 + $0x198] sm:$0xff]
    %7722 = vrot.lane.b32.xlu0 %v7718, 72
    %v7723 = vpop.permute.xlu0 %7722
    %7724 = vrot.lane.b32.xlu0 %v7719, 72
    %v7725 = vpop.permute.xlu0 %7724
    %7728 = vst.msk [vmem:[#allocation3 + $0x8] sm:$0xff] %vm7537, %v7723
    %7729 = vst.msk [vmem:[#allocation3 + $0x18] sm:$0xff] %vm7537, %v7725
    %v7730 = vld [vmem:[#allocation2 + $0x1a0] sm:$0xff]
    %v7731 = vld [vmem:[#allocation2 + $0x1a8] sm:$0xff]
    %7734 = vrot.lane.b32.xlu0 %v7730, 80
    %v7735 = vpop.permute.xlu0 %7734
    %7736 = vrot.lane.b32.xlu0 %v7731, 80
    %v7737 = vpop.permute.xlu0 %7736
    %7740 = vst.msk [vmem:[#allocation3 + $0x8] sm:$0xff] %vm7550, %v7735
    %7741 = vst.msk [vmem:[#allocation3 + $0x18] sm:$0xff] %vm7550, %v7737
    %v7742 = vld [vmem:[#allocation2 + $0x1b0] sm:$0xff]
    %v7743 = vld [vmem:[#allocation2 + $0x1b8] sm:$0xff]
    %7746 = vrot.lane.b32.xlu0 %v7742, 88
    %v7747 = vpop.permute.xlu0 %7746
    %7748 = vrot.lane.b32.xlu0 %v7743, 88
    %v7749 = vpop.permute.xlu0 %7748
    %7752 = vst.msk [vmem:[#allocation3 + $0x8] sm:$0xff] %vm7563, %v7747
    %7753 = vst.msk [vmem:[#allocation3 + $0x18] sm:$0xff] %vm7563, %v7749
    %v7754 = vld [vmem:[#allocation2 + $0x1c0] sm:$0xff]
    %v7755 = vld [vmem:[#allocation2 + $0x1c8] sm:$0xff]
    %7758 = vrot.lane.b32.xlu0 %v7754, 96
    %v7759 = vpop.permute.xlu0 %7758
    %7760 = vrot.lane.b32.xlu0 %v7755, 96
    %v7761 = vpop.permute.xlu0 %7760
    %7764 = vst.msk [vmem:[#allocation3 + $0x8] sm:$0xff] %vm7576, %v7759
    %7765 = vst.msk [vmem:[#allocation3 + $0x18] sm:$0xff] %vm7576, %v7761
    %v7766 = vld [vmem:[#allocation2 + $0x1d0] sm:$0xff]
    %v7767 = vld [vmem:[#allocation2 + $0x1d8] sm:$0xff]
    %7770 = vrot.lane.b32.xlu0 %v7766, 104
    %v7771 = vpop.permute.xlu0 %7770
    %7772 = vrot.lane.b32.xlu0 %v7767, 104
    %v7773 = vpop.permute.xlu0 %7772
    %7776 = vst.msk [vmem:[#allocation3 + $0x8] sm:$0xff] %vm7589, %v7771
    %7777 = vst.msk [vmem:[#allocation3 + $0x18] sm:$0xff] %vm7589, %v7773
    %v7778 = vld [vmem:[#allocation2 + $0x1e0] sm:$0xff]
    %v7779 = vld [vmem:[#allocation2 + $0x1e8] sm:$0xff]
    %7782 = vrot.lane.b32.xlu0 %v7778, 112
    %v7783 = vpop.permute.xlu0 %7782
    %7784 = vrot.lane.b32.xlu0 %v7779, 112
    %v7785 = vpop.permute.xlu0 %7784
    %7788 = vst.msk [vmem:[#allocation3 + $0x8] sm:$0xff] %vm7602, %v7783
    %7789 = vst.msk [vmem:[#allocation3 + $0x18] sm:$0xff] %vm7602, %v7785
    %v7790 = vld [vmem:[#allocation2 + $0x1f0] sm:$0xff]
    %v7791 = vld [vmem:[#allocation2 + $0x1f8] sm:$0xff]
    %7794 = vrot.lane.b32.xlu0 %v7790, 120
    %v7795 = vpop.permute.xlu0 %7794
    %7796 = vrot.lane.b32.xlu0 %v7791, 120
    %v7797 = vpop.permute.xlu0 %7796
    %7800 = vst.msk [vmem:[#allocation3 + $0x8] sm:$0xff] %vm7615, %v7795
    %7801 = vst.msk [vmem:[#allocation3 + $0x18] sm:$0xff] %vm7615, %v7797
    %v7802 = vld [vmem:[#allocation3] sm:$0xff]
    %v7803 = vld [vmem:[#allocation3 + $0x8] sm:$0xff]
    %v7804 = vld [vmem:[#allocation3 + $0x10] sm:$0xff]
    %v7805 = vld [vmem:[#allocation3 + $0x18] sm:$0xff]
    %v7806 = vld [vmem:[%s2] sm:$0x3]
    %v7808 = vlaneseq
    %v7809 = vshrl.u32 %v7808, 7
    %v7810 = vsub.s32 0, %v7809
    %v7811 = vrot.slane %v7806, %v7810
    %v7812 = vlaneseq
    %v7813 = vshrl.u32 %v7812, 7
    %v7814 = vsub.s32 1, %v7813
    %v7815 = vrot.slane %v7806, %v7814
    %v7818 = vadd.f32 %v7802, %v7811
    %v7819 = vadd.f32 %v7803, %v7815
    %v7820 = vadd.f32 %v7804, %v7811
    %v7821 = vadd.f32 %v7805, %v7815
    %v7822 = vadd.f32 %v7818, %v7820
    %v7823 = vrot.slane %v7822, 4
    %v7824 = vadd.f32 %v7822, %v7823
    %v7825 = vrot.slane %v7824, 2
    %v7826 = vadd.f32 %v7824, %v7825
    %v7827 = vrot.slane %v7826, 1
    %v7828 = vadd.f32 %v7826, %v7827
    %v7829 = vadd.f32 %v7819, %v7821
    %v7830 = vrot.slane %v7829, 4
    %v7831 = vadd.f32 %v7829, %v7830
    %v7832 = vrot.slane %v7831, 2
    %v7833 = vadd.f32 %v7831, %v7832
    %v7834 = vrot.slane %v7833, 1
    %v7835 = vadd.f32 %v7833, %v7834
    %v7836 = vld [vmem:[%s5] sm:$0xff]
    %v7837 = vld [vmem:[%s5 + $0x8] sm:$0xff]
    %v7838 = vld [vmem:[%s5 + $0x10] sm:$0xff]
    %v7839 = vld [vmem:[%s5 + $0x18] sm:$0xff]
    %v7840 = vld [vmem:[%s5 + $0x20] sm:$0xff]
    %v7841 = vld [vmem:[%s5 + $0x28] sm:$0xff]
    %v7842 = vld [vmem:[%s5 + $0x30] sm:$0xff]
    %v7843 = vld [vmem:[%s5 + $0x38] sm:$0xff]
    %v7844 = vld [vmem:[%s5 + $0x40] sm:$0xff]
    %v7845 = vld [vmem:[%s5 + $0x48] sm:$0xff]
    %v7846 = vld [vmem:[%s5 + $0x50] sm:$0xff]
    %v7847 = vld [vmem:[%s5 + $0x58] sm:$0xff]
    %v7848 = vld [vmem:[%s5 + $0x60] sm:$0xff]
    %v7849 = vld [vmem:[%s5 + $0x68] sm:$0xff]
    %v7850 = vld [vmem:[%s5 + $0x70] sm:$0xff]
    %v7851 = vld [vmem:[%s5 + $0x78] sm:$0xff]
    %v7852 = vld [vmem:[%s5 + $0x80] sm:$0xff]
    %v7853 = vld [vmem:[%s5 + $0x88] sm:$0xff]
    %v7854 = vld [vmem:[%s5 + $0x90] sm:$0xff]
    %v7855 = vld [vmem:[%s5 + $0x98] sm:$0xff]
    %v7856 = vld [vmem:[%s5 + $0xa0] sm:$0xff]
    %v7857 = vld [vmem:[%s5 + $0xa8] sm:$0xff]
    %v7858 = vld [vmem:[%s5 + $0xb0] sm:$0xff]
    %v7859 = vld [vmem:[%s5 + $0xb8] sm:$0xff]
    %v7860 = vld [vmem:[%s5 + $0xc0] sm:$0xff]
    %v7861 = vld [vmem:[%s5 + $0xc8] sm:$0xff]
    %v7862 = vld [vmem:[%s5 + $0xd0] sm:$0xff]
    %v7863 = vld [vmem:[%s5 + $0xd8] sm:$0xff]
    %v7864 = vld [vmem:[%s5 + $0xe0] sm:$0xff]
    %v7865 = vld [vmem:[%s5 + $0xe8] sm:$0xff]
    %v7866 = vld [vmem:[%s5 + $0xf0] sm:$0xff]
    %v7867 = vld [vmem:[%s5 + $0xf8] sm:$0xff]
    %7868 = vmatprep.subr.mxu0 0.0
    %7869 = vmatpush1.msra.mxu0 %v7836
    %7870 = vmatprep.subr.mxu0 0.0
    %7871 = vmatpush1.msra.mxu0 %v7837
    %7872 = vmatprep.subr.mxu0 0.0
    %7873 = vmatpush1.msra.mxu0 %v7838
    %7874 = vmatprep.subr.mxu0 0.0
    %7875 = vmatpush1.msra.mxu0 %v7839
    %7876 = vmatprep.subr.mxu0 0.0
    %7877 = vmatpush1.msra.mxu0 %v7840
    %7878 = vmatprep.subr.mxu0 0.0
    %7879 = vmatpush1.msra.mxu0 %v7841
    %7880 = vmatprep.subr.mxu0 0.0
    %7881 = vmatpush1.msra.mxu0 %v7842
    %7882 = vmatprep.subr.mxu0 0.0
    %7883 = vmatpush1.msra.mxu0 %v7843
    %7884 = vmatprep.subr.mxu0 0.0
    %7885 = vmatpush1.msra.mxu0 %v7844
    %7886 = vmatprep.subr.mxu0 0.0
    %7887 = vmatpush1.msra.mxu0 %v7845
    %7888 = vmatprep.subr.mxu0 0.0
    %7889 = vmatpush1.msra.mxu0 %v7846
    %7890 = vmatprep.subr.mxu0 0.0
    %7891 = vmatpush1.msra.mxu0 %v7847
    %7892 = vmatprep.subr.mxu0 0.0
    %7893 = vmatpush1.msra.mxu0 %v7848
    %7894 = vmatprep.subr.mxu0 0.0
    %7895 = vmatpush1.msra.mxu0 %v7849
    %7896 = vmatprep.subr.mxu0 0.0
    %7897 = vmatpush1.msra.mxu0 %v7850
    %7898 = vmatprep.subr.mxu0 0.0
    %7899 = vmatpush1.msra.mxu0 %v7851
    %7900 = vmatprep.subr.mxu0 0.0
    %7901 = vmatpush1.msra.mxu0 %v7852
    %7902 = vmatprep.subr.mxu0 0.0
    %7903 = vmatpush1.msra.mxu0 %v7853
    %7904 = vmatprep.subr.mxu0 0.0
    %7905 = vmatpush1.msra.mxu0 %v7854
    %7906 = vmatprep.subr.mxu0 0.0
    %7907 = vmatpush1.msra.mxu0 %v7855
    %7908 = vmatprep.subr.mxu0 0.0
    %7909 = vmatpush1.msra.mxu0 %v7856
    %7910 = vmatprep.subr.mxu0 0.0
    %7911 = vmatpush1.msra.mxu0 %v7857
    %7912 = vmatprep.subr.mxu0 0.0
    %7913 = vmatpush1.msra.mxu0 %v7858
    %7914 = vmatprep.subr.mxu0 0.0
    %7915 = vmatpush1.msra.mxu0 %v7859
    %7916 = vmatprep.subr.mxu0 0.0
    %7917 = vmatpush1.msra.mxu0 %v7860
    %7918 = vmatprep.subr.mxu0 0.0
    %7919 = vmatpush1.msra.mxu0 %v7861
    %7920 = vmatprep.subr.mxu0 0.0
    %7921 = vmatpush1.msra.mxu0 %v7862
    %7922 = vmatprep.subr.mxu0 0.0
    %7923 = vmatpush1.msra.mxu0 %v7863
    %7924 = vmatprep.subr.mxu0 0.0
    %7925 = vmatpush1.msra.mxu0 %v7864
    %7926 = vmatprep.subr.mxu0 0.0
    %7927 = vmatpush1.msra.mxu0 %v7865
    %7928 = vmatprep.subr.mxu0 0.0
    %7929 = vmatpush1.msra.mxu0 %v7866
    %7930 = vmatprep.subr.mxu0 0.0
    %7931 = vmatpush1.msra.mxu0 %v7867
    %7932 = vmatprep.mubr.f32.mxu0 %v7835
    %7933 = vmatmul.mubr.f32.gmra.mrb[0].mxu0 %v7828
    %v7934 = vpop.f32.mrb[0].mxu0
    %v7935 = vadd.f32 0.0, %v7934
    %v7936 = vpop.f32.mrb[0].mxu0
    %7937 = vdwg.mxu0
    %v7938 = vld [vmem:[%s6] sm:$0xff]
    %v7939 = vld [vmem:[%s6 + $0x8] sm:$0xff]
    %v7941 = vsel %vm95, %v7935, 0
    %7943 = vmatprep.subr.mxu0 %v7939
    %7944 = vmatpush1.msra.mxu0 %v7938
    %7945 = vmatprep.subr.mxu0 0.0
    %7946 = vmatpush1.msra.mxu0 0.0
    %7947 = vmatprep.subr.mxu0 0.0
    %7948 = vmatpush1.msra.mxu0 0.0
    %7949 = vmatprep.subr.mxu0 0.0
    %7950 = vmatpush1.msra.mxu0 0.0
    %7951 = vmatprep.subr.mxu0 0.0
    %7952 = vmatpush1.msra.mxu0 0.0
    %7953 = vmatprep.subr.mxu0 0.0
    %7954 = vmatpush1.msra.mxu0 0.0
    %7955 = vmatprep.subr.mxu0 0.0
    %7956 = vmatpush1.msra.mxu0 0.0
    %7957 = vmatprep.subr.mxu0 0.0
    %7958 = vmatpush1.msra.mxu0 0.0
    %7959 = vmatprep.subr.mxu0 0.0
    %7960 = vmatpush1.msra.mxu0 0.0
    %7961 = vmatprep.subr.mxu0 0.0
    %7962 = vmatpush1.msra.mxu0 0.0
    %7963 = vmatprep.subr.mxu0 0.0
    %7964 = vmatpush1.msra.mxu0 0.0
    %7965 = vmatprep.subr.mxu0 0.0
    %7966 = vmatpush1.msra.mxu0 0.0
    %7967 = vmatprep.subr.mxu0 0.0
    %7968 = vmatpush1.msra.mxu0 0.0
    %7969 = vmatprep.subr.mxu0 0.0
    %7970 = vmatpush1.msra.mxu0 0.0
    %7971 = vmatprep.subr.mxu0 0.0
    %7972 = vmatpush1.msra.mxu0 0.0
    %7973 = vmatprep.subr.mxu0 0.0
    %7974 = vmatpush1.msra.mxu0 0.0
    %7975 = vmatprep.subr.mxu0 0.0
    %7976 = vmatpush1.msra.mxu0 0.0
    %7977 = vmatprep.subr.mxu0 0.0
    %7978 = vmatpush1.msra.mxu0 0.0
    %7979 = vmatprep.subr.mxu0 0.0
    %7980 = vmatpush1.msra.mxu0 0.0
    %7981 = vmatprep.subr.mxu0 0.0
    %7982 = vmatpush1.msra.mxu0 0.0
    %7983 = vmatprep.subr.mxu0 0.0
    %7984 = vmatpush1.msra.mxu0 0.0
    %7985 = vmatprep.subr.mxu0 0.0
    %7986 = vmatpush1.msra.mxu0 0.0
    %7987 = vmatprep.subr.mxu0 0.0
    %7988 = vmatpush1.msra.mxu0 0.0
    %7989 = vmatprep.subr.mxu0 0.0
    %7990 = vmatpush1.msra.mxu0 0.0
    %7991 = vmatprep.subr.mxu0 0.0
    %7992 = vmatpush1.msra.mxu0 0.0
    %7993 = vmatprep.subr.mxu0 0.0
    %7994 = vmatpush1.msra.mxu0 0.0
    %7995 = vmatprep.subr.mxu0 0.0
    %7996 = vmatpush1.msra.mxu0 0.0
    %7997 = vmatprep.subr.mxu0 0.0
    %7998 = vmatpush1.msra.mxu0 0.0
    %7999 = vmatprep.subr.mxu0 0.0
    %8000 = vmatpush1.msra.mxu0 0.0
    %8001 = vmatprep.subr.mxu0 0.0
    %8002 = vmatpush1.msra.mxu0 0.0
    %8003 = vmatprep.subr.mxu0 0.0
    %8004 = vmatpush1.msra.mxu0 0.0
    %8005 = vmatprep.subr.mxu0 0.0
    %8006 = vmatpush1.msra.mxu0 0.0
    %8007 = vmatprep.mubr.f32.mxu0 0.0
    %8008 = vmatmul.mubr.f32.gmra.mrb[0].mxu0 %v7941
    %v8009 = vpop.f32.mrb[0].mxu0
    %v8010 = vadd.f32 0.0, %v8009
    %v8011 = vpop.f32.mrb[0].mxu0
    %v8012 = vadd.f32 0.0, %v8011
    %8013 = vdwg.mxu0
    %v8014 = vmul.f32 %v8010, 0.001953125
    %v8015 = vmul.f32 %v8012, 0.001953125
    %v8016 = vlaneseq
    %v8017 = vshrl.u32 %v8016, 7
    %v8018 = vsub.s32 0, %v8017
    %v8019 = vrot.slane %v8014, %v8018
    %v8020 = vlaneseq
    %v8021 = vshrl.u32 %v8020, 7
    %v8022 = vsub.s32 0, %v8021
    %v8023 = vrot.slane %v8015, %v8022
    %v8024 = vsub.f32 %v7818, %v8019
    %v8025 = vsub.f32 %v7819, %v8023
    %v8026 = vsub.f32 %v7820, %v8019
    %v8027 = vsub.f32 %v7821, %v8023
    %v8028 = vmul.f32 %v8024, %v8024
    %v8029 = vmul.f32 %v8025, %v8025
    %v8030 = vmul.f32 %v8026, %v8026
    %v8031 = vmul.f32 %v8027, %v8027
    %v8032 = vadd.f32 %v8028, %v8030
    %v8033 = vrot.slane %v8032, 4
    %v8034 = vadd.f32 %v8032, %v8033
    %v8035 = vrot.slane %v8034, 2
    %v8036 = vadd.f32 %v8034, %v8035
    %v8037 = vrot.slane %v8036, 1
    %v8038 = vadd.f32 %v8036, %v8037
    %v8039 = vadd.f32 %v8029, %v8031
    %v8040 = vrot.slane %v8039, 4
    %v8041 = vadd.f32 %v8039, %v8040
    %v8042 = vrot.slane %v8041, 2
    %v8043 = vadd.f32 %v8041, %v8042
    %v8044 = vrot.slane %v8043, 1
    %v8045 = vadd.f32 %v8043, %v8044
    %8046 = vmatprep.subr.mxu0 0.0
    %8047 = vmatpush1.msra.mxu0 %v7836
    %8048 = vmatprep.subr.mxu0 0.0
    %8049 = vmatpush1.msra.mxu0 %v7837
    %8050 = vmatprep.subr.mxu0 0.0
    %8051 = vmatpush1.msra.mxu0 %v7838
    %8052 = vmatprep.subr.mxu0 0.0
    %8053 = vmatpush1.msra.mxu0 %v7839
    %8054 = vmatprep.subr.mxu0 0.0
    %8055 = vmatpush1.msra.mxu0 %v7840
    %8056 = vmatprep.subr.mxu0 0.0
    %8057 = vmatpush1.msra.mxu0 %v7841
    %8058 = vmatprep.subr.mxu0 0.0
    %8059 = vmatpush1.msra.mxu0 %v7842
    %8060 = vmatprep.subr.mxu0 0.0
    %8061 = vmatpush1.msra.mxu0 %v7843
    %8062 = vmatprep.subr.mxu0 0.0
    %8063 = vmatpush1.msra.mxu0 %v7844
    %8064 = vmatprep.subr.mxu0 0.0
    %8065 = vmatpush1.msra.mxu0 %v7845
    %8066 = vmatprep.subr.mxu0 0.0
    %8067 = vmatpush1.msra.mxu0 %v7846
    %8068 = vmatprep.subr.mxu0 0.0
    %8069 = vmatpush1.msra.mxu0 %v7847
    %8070 = vmatprep.subr.mxu0 0.0
    %8071 = vmatpush1.msra.mxu0 %v7848
    %8072 = vmatprep.subr.mxu0 0.0
    %8073 = vmatpush1.msra.mxu0 %v7849
    %8074 = vmatprep.subr.mxu0 0.0
    %8075 = vmatpush1.msra.mxu0 %v7850
    %8076 = vmatprep.subr.mxu0 0.0
    %8077 = vmatpush1.msra.mxu0 %v7851
    %8078 = vmatprep.subr.mxu0 0.0
    %8079 = vmatpush1.msra.mxu0 %v7852
    %8080 = vmatprep.subr.mxu0 0.0
    %8081 = vmatpush1.msra.mxu0 %v7853
    %8082 = vmatprep.subr.mxu0 0.0
    %8083 = vmatpush1.msra.mxu0 %v7854
    %8084 = vmatprep.subr.mxu0 0.0
    %8085 = vmatpush1.msra.mxu0 %v7855
    %8086 = vmatprep.subr.mxu0 0.0
    %8087 = vmatpush1.msra.mxu0 %v7856
    %8088 = vmatprep.subr.mxu0 0.0
    %8089 = vmatpush1.msra.mxu0 %v7857
    %8090 = vmatprep.subr.mxu0 0.0
    %8091 = vmatpush1.msra.mxu0 %v7858
    %8092 = vmatprep.subr.mxu0 0.0
    %8093 = vmatpush1.msra.mxu0 %v7859
    %8094 = vmatprep.subr.mxu0 0.0
    %8095 = vmatpush1.msra.mxu0 %v7860
    %8096 = vmatprep.subr.mxu0 0.0
    %8097 = vmatpush1.msra.mxu0 %v7861
    %8098 = vmatprep.subr.mxu0 0.0
    %8099 = vmatpush1.msra.mxu0 %v7862
    %8100 = vmatprep.subr.mxu0 0.0
    %8101 = vmatpush1.msra.mxu0 %v7863
    %8102 = vmatprep.subr.mxu0 0.0
    %8103 = vmatpush1.msra.mxu0 %v7864
    %8104 = vmatprep.subr.mxu0 0.0
    %8105 = vmatpush1.msra.mxu0 %v7865
    %8106 = vmatprep.subr.mxu0 0.0
    %8107 = vmatpush1.msra.mxu0 %v7866
    %8108 = vmatprep.subr.mxu0 0.0
    %8109 = vmatpush1.msra.mxu0 %v7867
    %8110 = vmatprep.mubr.f32.mxu0 %v8045
    %8111 = vmatmul.mubr.f32.gmra.mrb[0].mxu0 %v8038
    %v8112 = vpop.f32.mrb[0].mxu0
    %v8113 = vadd.f32 0.0, %v8112
    %v8114 = vpop.f32.mrb[0].mxu0
    %8115 = vdwg.mxu0
    %v8117 = vsel %vm95, %v8113, 0
    %8119 = vmatprep.subr.mxu0 %v7939
    %8120 = vmatpush1.msra.mxu0 %v7938
    %8121 = vmatprep.subr.mxu0 0.0
    %8122 = vmatpush1.msra.mxu0 0.0
    %8123 = vmatprep.subr.mxu0 0.0
    %8124 = vmatpush1.msra.mxu0 0.0
    %8125 = vmatprep.subr.mxu0 0.0
    %8126 = vmatpush1.msra.mxu0 0.0
    %8127 = vmatprep.subr.mxu0 0.0
    %8128 = vmatpush1.msra.mxu0 0.0
    %8129 = vmatprep.subr.mxu0 0.0
    %8130 = vmatpush1.msra.mxu0 0.0
    %8131 = vmatprep.subr.mxu0 0.0
    %8132 = vmatpush1.msra.mxu0 0.0
    %8133 = vmatprep.subr.mxu0 0.0
    %8134 = vmatpush1.msra.mxu0 0.0
    %8135 = vmatprep.subr.mxu0 0.0
    %8136 = vmatpush1.msra.mxu0 0.0
    %8137 = vmatprep.subr.mxu0 0.0
    %8138 = vmatpush1.msra.mxu0 0.0
    %8139 = vmatprep.subr.mxu0 0.0
    %8140 = vmatpush1.msra.mxu0 0.0
    %8141 = vmatprep.subr.mxu0 0.0
    %8142 = vmatpush1.msra.mxu0 0.0
    %8143 = vmatprep.subr.mxu0 0.0
    %8144 = vmatpush1.msra.mxu0 0.0
    %8145 = vmatprep.subr.mxu0 0.0
    %8146 = vmatpush1.msra.mxu0 0.0
    %8147 = vmatprep.subr.mxu0 0.0
    %8148 = vmatpush1.msra.mxu0 0.0
    %8149 = vmatprep.subr.mxu0 0.0
    %8150 = vmatpush1.msra.mxu0 0.0
    %8151 = vmatprep.subr.mxu0 0.0
    %8152 = vmatpush1.msra.mxu0 0.0
    %8153 = vmatprep.subr.mxu0 0.0
    %8154 = vmatpush1.msra.mxu0 0.0
    %8155 = vmatprep.subr.mxu0 0.0
    %8156 = vmatpush1.msra.mxu0 0.0
    %8157 = vmatprep.subr.mxu0 0.0
    %8158 = vmatpush1.msra.mxu0 0.0
    %8159 = vmatprep.subr.mxu0 0.0
    %8160 = vmatpush1.msra.mxu0 0.0
    %8161 = vmatprep.subr.mxu0 0.0
    %8162 = vmatpush1.msra.mxu0 0.0
    %8163 = vmatprep.subr.mxu0 0.0
    %8164 = vmatpush1.msra.mxu0 0.0
    %8165 = vmatprep.subr.mxu0 0.0
    %8166 = vmatpush1.msra.mxu0 0.0
    %8167 = vmatprep.subr.mxu0 0.0
    %8168 = vmatpush1.msra.mxu0 0.0
    %8169 = vmatprep.subr.mxu0 0.0
    %8170 = vmatpush1.msra.mxu0 0.0
    %8171 = vmatprep.subr.mxu0 0.0
    %8172 = vmatpush1.msra.mxu0 0.0
    %8173 = vmatprep.subr.mxu0 0.0
    %8174 = vmatpush1.msra.mxu0 0.0
    %8175 = vmatprep.subr.mxu0 0.0
    %8176 = vmatpush1.msra.mxu0 0.0
    %8177 = vmatprep.subr.mxu0 0.0
    %8178 = vmatpush1.msra.mxu0 0.0
    %8179 = vmatprep.subr.mxu0 0.0
    %8180 = vmatpush1.msra.mxu0 0.0
    %8181 = vmatprep.subr.mxu0 0.0
    %8182 = vmatpush1.msra.mxu0 0.0
    %8183 = vmatprep.mubr.f32.mxu0 0.0
    %8184 = vmatmul.mubr.f32.gmra.mrb[0].mxu0 %v8117
    %v8185 = vpop.f32.mrb[0].mxu0
    %v8186 = vadd.f32 0.0, %v8185
    %v8187 = vpop.f32.mrb[0].mxu0
    %v8188 = vadd.f32 0.0, %v8187
    %8189 = vdwg.mxu0
    %v8190 = vmul.f32 %v8186, 0.001953125
    %v8191 = vmul.f32 %v8188, 0.001953125
    %v8192 = vadd.f32 %v8190, 1e-05
    %v8193 = vadd.f32 %v8191, 1e-05
    %v8194 = vrsqrt.pop %v8192
    %v8195 = vrsqrt.pop %v8193
    %v8196 = vlaneseq
    %v8197 = vshrl.u32 %v8196, 7
    %v8198 = vsub.s32 0, %v8197
    %v8199 = vrot.slane %v8194, %v8198
    %v8200 = vlaneseq
    %v8201 = vshrl.u32 %v8200, 7
    %v8202 = vsub.s32 0, %v8201
    %v8203 = vrot.slane %v8195, %v8202
    %v8204 = vmul.f32 %v8024, %v8199
    %v8205 = vmul.f32 %v8025, %v8203
    %v8206 = vmul.f32 %v8026, %v8199
    %v8207 = vmul.f32 %v8027, %v8203
    %v8208 = vld [vmem:[%s3] sm:$0x3]
    %v8210 = vlaneseq
    %v8211 = vshrl.u32 %v8210, 7
    %v8212 = vsub.s32 0, %v8211
    %v8213 = vrot.slane %v8208, %v8212
    %v8214 = vlaneseq
    %v8215 = vshrl.u32 %v8214, 7
    %v8216 = vsub.s32 1, %v8215
    %v8217 = vrot.slane %v8208, %v8216
    %v8220 = vmul.f32 %v8204, %v8213
    %v8221 = vmul.f32 %v8205, %v8217
    %v8222 = vmul.f32 %v8206, %v8213
    %v8223 = vmul.f32 %v8207, %v8217
    %v8224 = vld [vmem:[%s4] sm:$0x3]
    %v8226 = vlaneseq
    %v8227 = vshrl.u32 %v8226, 7
    %v8228 = vsub.s32 0, %v8227
    %v8229 = vrot.slane %v8224, %v8228
    %v8230 = vlaneseq
    %v8231 = vshrl.u32 %v8230, 7
    %v8232 = vsub.s32 1, %v8231
    %v8233 = vrot.slane %v8224, %v8232
    %v8236 = vadd.f32 %v8220, %v8229
    %v8237 = vadd.f32 %v8221, %v8233
    %v8238 = vadd.f32 %v8222, %v8229
    %v8239 = vadd.f32 %v8223, %v8233
    %vm8240 = vcmp.gt.f32.partialorder %v8236, 0.0
    %vm8241 = vcmp.gt.f32.partialorder %v8237, 0.0
    %vm8242 = vcmp.gt.f32.partialorder %v8238, 0.0
    %vm8243 = vcmp.gt.f32.partialorder %v8239, 0.0
    %v8244 = vmul.f32 %v8236, 0.01
    %v8245 = vmul.f32 %v8237, 0.01
    %v8246 = vmul.f32 %v8238, 0.01
    %v8247 = vmul.f32 %v8239, 0.01
    %v8248 = vsel %vm8240, %v8236, %v8244
    %v8249 = vsel %vm8241, %v8237, %v8245
    %v8250 = vsel %vm8242, %v8238, %v8246
    %v8251 = vsel %vm8243, %v8239, %v8247
    %8252 = vst [vmem:[#allocation3] sm:$0xff] %v8248
    %8253 = vst [vmem:[#allocation3 + $0x8] sm:$0xff] %v8249
    %8254 = vst [vmem:[#allocation3 + $0x10] sm:$0xff] %v8250
    %8255 = vst [vmem:[#allocation3 + $0x18] sm:$0xff] %v8251
    %v8256 = vld [vmem:[#allocation3] sm:$0xff]
    %v8257 = vld [vmem:[#allocation3 + $0x10] sm:$0xff]
    %8258 = vst.msk [vmem:[#allocation4] sm:$0xff] %vm95, %v8256
    %8259 = vst.msk [vmem:[#allocation4 + $0x20] sm:$0xff] %vm95, %v8257
    %v8260 = vld [vmem:[#allocation3] sm:$0xff]
    %v8261 = vld [vmem:[#allocation3 + $0x10] sm:$0xff]
    %v8262 = vmul.f32 %v8260, 0.516129
    %v8263 = vmul.f32 %v8261, 0.516129
    %v8264 = vmul.f32 %v8260, 0.48387095
    %v8265 = vmul.f32 %v8261, 0.48387095
    %8268 = vrot.lane.b32.xlu0 %v8264, 120
    %v8269 = vpop.permute.xlu0 %8268
    %8270 = vrot.lane.b32.xlu0 %v8265, 120
    %v8271 = vpop.permute.xlu0 %8270
    %v8274 = vadd.f32 %v8262, %v8269
    %v8275 = vadd.f32 %v8263, %v8271
    %8278 = vrot.lane.b32.xlu0 %v8274, 8
    %v8279 = vpop.permute.xlu0 %8278
    %8280 = vrot.lane.b32.xlu0 %v8275, 8
    %v8281 = vpop.permute.xlu0 %8280
    %8284 = vst.msk [vmem:[#allocation4] sm:$0xff] %vm7433, %v8279
    %8285 = vst.msk [vmem:[#allocation4 + $0x20] sm:$0xff] %vm7433, %v8281
    %v8286 = vld [vmem:[#allocation3] sm:$0xff]
    %v8287 = vld [vmem:[#allocation3 + $0x10] sm:$0xff]
    %v8288 = vmul.f32 %v8286, 0.032258064
    %v8289 = vmul.f32 %v8287, 0.032258064
    %v8290 = vmul.f32 %v8286, 0.9677419
    %v8291 = vmul.f32 %v8287, 0.9677419
    %8294 = vrot.lane.b32.xlu0 %v8290, 120
    %v8295 = vpop.permute.xlu0 %8294
    %8296 = vrot.lane.b32.xlu0 %v8291, 120
    %v8297 = vpop.permute.xlu0 %8296
    %v8300 = vadd.f32 %v8288, %v8295
    %v8301 = vadd.f32 %v8289, %v8297
    %8304 = vrot.lane.b32.xlu0 %v8300, 16
    %v8305 = vpop.permute.xlu0 %8304
    %8306 = vrot.lane.b32.xlu0 %v8301, 16
    %v8307 = vpop.permute.xlu0 %8306
    %8310 = vst.msk [vmem:[#allocation4] sm:$0xff] %vm7446, %v8305
    %8311 = vst.msk [vmem:[#allocation4 + $0x20] sm:$0xff] %vm7446, %v8307
    %v8312 = vld [vmem:[#allocation3] sm:$0xff]
    %v8313 = vld [vmem:[#allocation3 + $0x10] sm:$0xff]
    %v8314 = vmul.f32 %v8312, 0.5483871
    %v8315 = vmul.f32 %v8313, 0.5483871
    %v8316 = vmul.f32 %v8312, 0.4516129
    %v8317 = vmul.f32 %v8313, 0.4516129
    %8320 = vrot.lane.b32.xlu0 %v8316, 120
    %v8321 = vpop.permute.xlu0 %8320
    %8322 = vrot.lane.b32.xlu0 %v8317, 120
    %v8323 = vpop.permute.xlu0 %8322
    %v8326 = vadd.f32 %v8314, %v8321
    %v8327 = vadd.f32 %v8315, %v8323
    %8330 = vrot.lane.b32.xlu0 %v8326, 16
    %v8331 = vpop.permute.xlu0 %8330
    %8332 = vrot.lane.b32.xlu0 %v8327, 16
    %v8333 = vpop.permute.xlu0 %8332
    %8336 = vst.msk [vmem:[#allocation4] sm:$0xff] %vm7459, %v8331
    %8337 = vst.msk [vmem:[#allocation4 + $0x20] sm:$0xff] %vm7459, %v8333
    %v8338 = vld [vmem:[#allocation3] sm:$0xff]
    %v8339 = vld [vmem:[#allocation3 + $0x10] sm:$0xff]
    %v8340 = vmul.f32 %v8338, 0.06451613
    %v8341 = vmul.f32 %v8339, 0.06451613
    %v8342 = vmul.f32 %v8338, 0.9354839
    %v8343 = vmul.f32 %v8339, 0.9354839
    %8346 = vrot.lane.b32.xlu0 %v8342, 120
    %v8347 = vpop.permute.xlu0 %8346
    %8348 = vrot.lane.b32.xlu0 %v8343, 120
    %v8349 = vpop.permute.xlu0 %8348
    %v8352 = vadd.f32 %v8340, %v8347
    %v8353 = vadd.f32 %v8341, %v8349
    %8356 = vrot.lane.b32.xlu0 %v8352, 24
    %v8357 = vpop.permute.xlu0 %8356
    %8358 = vrot.lane.b32.xlu0 %v8353, 24
    %v8359 = vpop.permute.xlu0 %8358
    %8362 = vst.msk [vmem:[#allocation4] sm:$0xff] %vm7472, %v8357
    %8363 = vst.msk [vmem:[#allocation4 + $0x20] sm:$0xff] %vm7472, %v8359
    %v8364 = vld [vmem:[#allocation3] sm:$0xff]
    %v8365 = vld [vmem:[#allocation3 + $0x10] sm:$0xff]
    %v8366 = vmul.f32 %v8364, 0.58064514
    %v8367 = vmul.f32 %v8365, 0.58064514
    %v8368 = vmul.f32 %v8364, 0.41935483
    %v8369 = vmul.f32 %v8365, 0.41935483
    %8372 = vrot.lane.b32.xlu0 %v8368, 120
    %v8373 = vpop.permute.xlu0 %8372
    %8374 = vrot.lane.b32.xlu0 %v8369, 120
    %v8375 = vpop.permute.xlu0 %8374
    %v8378 = vadd.f32 %v8366, %v8373
    %v8379 = vadd.f32 %v8367, %v8375
    %8382 = vrot.lane.b32.xlu0 %v8378, 24
    %v8383 = vpop.permute.xlu0 %8382
    %8384 = vrot.lane.b32.xlu0 %v8379, 24
    %v8385 = vpop.permute.xlu0 %8384
    %8388 = vst.msk [vmem:[#allocation4] sm:$0xff] %vm7485, %v8383
    %8389 = vst.msk [vmem:[#allocation4 + $0x20] sm:$0xff] %vm7485, %v8385
    %v8390 = vld [vmem:[#allocation3] sm:$0xff]
    %v8391 = vld [vmem:[#allocation3 + $0x10] sm:$0xff]
    %v8392 = vmul.f32 %v8390, 0.09677419
    %v8393 = vmul.f32 %v8391, 0.09677419
    %v8394 = vmul.f32 %v8390, 0.9032258
    %v8395 = vmul.f32 %v8391, 0.9032258
    %8398 = vrot.lane.b32.xlu0 %v8394, 120
    %v8399 = vpop.permute.xlu0 %8398
    %8400 = vrot.lane.b32.xlu0 %v8395, 120
    %v8401 = vpop.permute.xlu0 %8400
    %v8404 = vadd.f32 %v8392, %v8399
    %v8405 = vadd.f32 %v8393, %v8401
    %8408 = vrot.lane.b32.xlu0 %v8404, 32
    %v8409 = vpop.permute.xlu0 %8408
    %8410 = vrot.lane.b32.xlu0 %v8405, 32
    %v8411 = vpop.permute.xlu0 %8410
    %8414 = vst.msk [vmem:[#allocation4] sm:$0xff] %vm7498, %v8409
    %8415 = vst.msk [vmem:[#allocation4 + $0x20] sm:$0xff] %vm7498, %v8411
    %v8416 = vld [vmem:[#allocation3] sm:$0xff]
    %v8417 = vld [vmem:[#allocation3 + $0x10] sm:$0xff]
    %v8418 = vmul.f32 %v8416, 0.61290324
    %v8419 = vmul.f32 %v8417, 0.61290324
    %v8420 = vmul.f32 %v8416, 0.38709676
    %v8421 = vmul.f32 %v8417, 0.38709676
    %8424 = vrot.lane.b32.xlu0 %v8420, 120
    %v8425 = vpop.permute.xlu0 %8424
    %8426 = vrot.lane.b32.xlu0 %v8421, 120
    %v8427 = vpop.permute.xlu0 %8426
    %v8430 = vadd.f32 %v8418, %v8425
    %v8431 = vadd.f32 %v8419, %v8427
    %8434 = vrot.lane.b32.xlu0 %v8430, 32
    %v8435 = vpop.permute.xlu0 %8434
    %8436 = vrot.lane.b32.xlu0 %v8431, 32
    %v8437 = vpop.permute.xlu0 %8436
    %8440 = vst.msk [vmem:[#allocation4] sm:$0xff] %vm7511, %v8435
    %8441 = vst.msk [vmem:[#allocation4 + $0x20] sm:$0xff] %vm7511, %v8437
    %v8442 = vld [vmem:[#allocation3] sm:$0xff]
    %v8443 = vld [vmem:[#allocation3 + $0x10] sm:$0xff]
    %v8444 = vmul.f32 %v8442, 0.12903225
    %v8445 = vmul.f32 %v8443, 0.12903225
    %v8446 = vmul.f32 %v8442, 0.87096775
    %v8447 = vmul.f32 %v8443, 0.87096775
    %8450 = vrot.lane.b32.xlu0 %v8446, 120
    %v8451 = vpop.permute.xlu0 %8450
    %8452 = vrot.lane.b32.xlu0 %v8447, 120
    %v8453 = vpop.permute.xlu0 %8452
    %v8456 = vadd.f32 %v8444, %v8451
    %v8457 = vadd.f32 %v8445, %v8453
    %8460 = vrot.lane.b32.xlu0 %v8456, 40
    %v8461 = vpop.permute.xlu0 %8460
    %8462 = vrot.lane.b32.xlu0 %v8457, 40
    %v8463 = vpop.permute.xlu0 %8462
    %8466 = vst.msk [vmem:[#allocation4] sm:$0xff] %vm7524, %v8461
    %8467 = vst.msk [vmem:[#allocation4 + $0x20] sm:$0xff] %vm7524, %v8463
    %v8468 = vld [vmem:[#allocation3] sm:$0xff]
    %v8469 = vld [vmem:[#allocation3 + $0x10] sm:$0xff]
    %v8470 = vmul.f32 %v8468, 0.6451613
    %v8471 = vmul.f32 %v8469, 0.6451613
    %v8472 = vmul.f32 %v8468, 0.3548387
    %v8473 = vmul.f32 %v8469, 0.3548387
    %8476 = vrot.lane.b32.xlu0 %v8472, 120
    %v8477 = vpop.permute.xlu0 %8476
    %8478 = vrot.lane.b32.xlu0 %v8473, 120
    %v8479 = vpop.permute.xlu0 %8478
    %v8482 = vadd.f32 %v8470, %v8477
    %v8483 = vadd.f32 %v8471, %v8479
    %8486 = vrot.lane.b32.xlu0 %v8482, 40
    %v8487 = vpop.permute.xlu0 %8486
    %8488 = vrot.lane.b32.xlu0 %v8483, 40
    %v8489 = vpop.permute.xlu0 %8488
    %8492 = vst.msk [vmem:[#allocation4] sm:$0xff] %vm7537, %v8487
    %8493 = vst.msk [vmem:[#allocation4 + $0x20] sm:$0xff] %vm7537, %v8489
    %v8494 = vld [vmem:[#allocation3] sm:$0xff]
    %v8495 = vld [vmem:[#allocation3 + $0x10] sm:$0xff]
    %v8496 = vmul.f32 %v8494, 0.16129032
    %v8497 = vmul.f32 %v8495, 0.16129032
    %v8498 = vmul.f32 %v8494, 0.83870965
    %v8499 = vmul.f32 %v8495, 0.83870965
    %8502 = vrot.lane.b32.xlu0 %v8498, 120
    %v8503 = vpop.permute.xlu0 %8502
    %8504 = vrot.lane.b32.xlu0 %v8499, 120
    %v8505 = vpop.permute.xlu0 %8504
    %v8508 = vadd.f32 %v8496, %v8503
    %v8509 = vadd.f32 %v8497, %v8505
    %8512 = vrot.lane.b32.xlu0 %v8508, 48
    %v8513 = vpop.permute.xlu0 %8512
    %8514 = vrot.lane.b32.xlu0 %v8509, 48
    %v8515 = vpop.permute.xlu0 %8514
    %8518 = vst.msk [vmem:[#allocation4] sm:$0xff] %vm7550, %v8513
    %8519 = vst.msk [vmem:[#allocation4 + $0x20] sm:$0xff] %vm7550, %v8515
    %v8520 = vld [vmem:[#allocation3] sm:$0xff]
    %v8521 = vld [vmem:[#allocation3 + $0x10] sm:$0xff]
    %v8522 = vmul.f32 %v8520, 0.67741936
    %v8523 = vmul.f32 %v8521, 0.67741936
    %v8524 = vmul.f32 %v8520, 0.32258064
    %v8525 = vmul.f32 %v8521, 0.32258064
    %8528 = vrot.lane.b32.xlu0 %v8524, 120
    %v8529 = vpop.permute.xlu0 %8528
    %8530 = vrot.lane.b32.xlu0 %v8525, 120
    %v8531 = vpop.permute.xlu0 %8530
    %v8534 = vadd.f32 %v8522, %v8529
    %v8535 = vadd.f32 %v8523, %v8531
    %8538 = vrot.lane.b32.xlu0 %v8534, 48
    %v8539 = vpop.permute.xlu0 %8538
    %8540 = vrot.lane.b32.xlu0 %v8535, 48
    %v8541 = vpop.permute.xlu0 %8540
    %8544 = vst.msk [vmem:[#allocation4] sm:$0xff] %vm7563, %v8539
    %8545 = vst.msk [vmem:[#allocation4 + $0x20] sm:$0xff] %vm7563, %v8541
    %v8546 = vld [vmem:[#allocation3] sm:$0xff]
    %v8547 = vld [vmem:[#allocation3 + $0x10] sm:$0xff]
    %v8548 = vmul.f32 %v8546, 0.19354838
    %v8549 = vmul.f32 %v8547, 0.19354838
    %v8550 = vmul.f32 %v8546, 0.8064516
    %v8551 = vmul.f32 %v8547, 0.8064516
    %8554 = vrot.lane.b32.xlu0 %v8550, 120
    %v8555 = vpop.permute.xlu0 %8554
    %8556 = vrot.lane.b32.xlu0 %v8551, 120
    %v8557 = vpop.permute.xlu0 %8556
    %v8560 = vadd.f32 %v8548, %v8555
    %v8561 = vadd.f32 %v8549, %v8557
    %8564 = vrot.lane.b32.xlu0 %v8560, 56
    %v8565 = vpop.permute.xlu0 %8564
    %8566 = vrot.lane.b32.xlu0 %v8561, 56
    %v8567 = vpop.permute.xlu0 %8566
    %8570 = vst.msk [vmem:[#allocation4] sm:$0xff] %vm7576, %v8565
    %8571 = vst.msk [vmem:[#allocation4 + $0x20] sm:$0xff] %vm7576, %v8567
    %v8572 = vld [vmem:[#allocation3] sm:$0xff]
    %v8573 = vld [vmem:[#allocation3 + $0x10] sm:$0xff]
    %v8574 = vmul.f32 %v8572, 0.7096774
    %v8575 = vmul.f32 %v8573, 0.7096774
    %v8576 = vmul.f32 %v8572, 0.29032257
    %v8577 = vmul.f32 %v8573, 0.29032257
    %8580 = vrot.lane.b32.xlu0 %v8576, 120
    %v8581 = vpop.permute.xlu0 %8580
    %8582 = vrot.lane.b32.xlu0 %v8577, 120
    %v8583 = vpop.permute.xlu0 %8582
    %v8586 = vadd.f32 %v8574, %v8581
    %v8587 = vadd.f32 %v8575, %v8583
    %8590 = vrot.lane.b32.xlu0 %v8586, 56
    %v8591 = vpop.permute.xlu0 %8590
    %8592 = vrot.lane.b32.xlu0 %v8587, 56
    %v8593 = vpop.permute.xlu0 %8592
    %8596 = vst.msk [vmem:[#allocation4] sm:$0xff] %vm7589, %v8591
    %8597 = vst.msk [vmem:[#allocation4 + $0x20] sm:$0xff] %vm7589, %v8593
    %v8598 = vld [vmem:[#allocation3] sm:$0xff]
    %v8599 = vld [vmem:[#allocation3 + $0x10] sm:$0xff]
    %v8600 = vmul.f32 %v8598, 0.22580644
    %v8601 = vmul.f32 %v8599, 0.22580644
    %v8602 = vmul.f32 %v8598, 0.7741935
    %v8603 = vmul.f32 %v8599, 0.7741935
    %8606 = vrot.lane.b32.xlu0 %v8602, 120
    %v8607 = vpop.permute.xlu0 %8606
    %8608 = vrot.lane.b32.xlu0 %v8603, 120
    %v8609 = vpop.permute.xlu0 %8608
    %v8612 = vadd.f32 %v8600, %v8607
    %v8613 = vadd.f32 %v8601, %v8609
    %8616 = vrot.lane.b32.xlu0 %v8612, 64
    %v8617 = vpop.permute.xlu0 %8616
    %8618 = vrot.lane.b32.xlu0 %v8613, 64
    %v8619 = vpop.permute.xlu0 %8618
    %8622 = vst.msk [vmem:[#allocation4] sm:$0xff] %vm7602, %v8617
    %8623 = vst.msk [vmem:[#allocation4 + $0x20] sm:$0xff] %vm7602, %v8619
    %v8624 = vld [vmem:[#allocation3] sm:$0xff]
    %v8625 = vld [vmem:[#allocation3 + $0x10] sm:$0xff]
    %v8626 = vmul.f32 %v8624, 0.7419355
    %v8627 = vmul.f32 %v8625, 0.7419355
    %v8628 = vmul.f32 %v8624, 0.2580645
    %v8629 = vmul.f32 %v8625, 0.2580645
    %8632 = vrot.lane.b32.xlu0 %v8628, 120
    %v8633 = vpop.permute.xlu0 %8632
    %8634 = vrot.lane.b32.xlu0 %v8629, 120
    %v8635 = vpop.permute.xlu0 %8634
    %v8638 = vadd.f32 %v8626, %v8633
    %v8639 = vadd.f32 %v8627, %v8635
    %8642 = vrot.lane.b32.xlu0 %v8638, 64
    %v8643 = vpop.permute.xlu0 %8642
    %8644 = vrot.lane.b32.xlu0 %v8639, 64
    %v8645 = vpop.permute.xlu0 %8644
    %8648 = vst.msk [vmem:[#allocation4] sm:$0xff] %vm7615, %v8643
    %8649 = vst.msk [vmem:[#allocation4 + $0x20] sm:$0xff] %vm7615, %v8645
    %v8650 = vld [vmem:[#allocation3] sm:$0xff]
    %v8651 = vld [vmem:[#allocation3 + $0x10] sm:$0xff]
    %v8652 = vmul.f32 %v8650, 0.2580645
    %v8653 = vmul.f32 %v8651, 0.2580645
    %v8654 = vmul.f32 %v8650, 0.7419355
    %v8655 = vmul.f32 %v8651, 0.7419355
    %8658 = vrot.lane.b32.xlu0 %v8654, 120
    %v8659 = vpop.permute.xlu0 %8658
    %8660 = vrot.lane.b32.xlu0 %v8655, 120
    %v8661 = vpop.permute.xlu0 %8660
    %v8664 = vadd.f32 %v8652, %v8659
    %v8665 = vadd.f32 %v8653, %v8661
    %8668 = vrot.lane.b32.xlu0 %v8664, 72
    %v8669 = vpop.permute.xlu0 %8668
    %8670 = vrot.lane.b32.xlu0 %v8665, 72
    %v8671 = vpop.permute.xlu0 %8670
    %8674 = vst.msk [vmem:[#allocation4 + $0x8] sm:$0xff] %vm95, %v8669
    %8675 = vst.msk [vmem:[#allocation4 + $0x28] sm:$0xff] %vm95, %v8671
    %v8676 = vld [vmem:[#allocation3] sm:$0xff]
    %v8677 = vld [vmem:[#allocation3 + $0x10] sm:$0xff]
    %v8678 = vmul.f32 %v8676, 0.7741935
    %v8679 = vmul.f32 %v8677, 0.7741935
    %v8680 = vmul.f32 %v8676, 0.22580644
    %v8681 = vmul.f32 %v8677, 0.22580644
    %8684 = vrot.lane.b32.xlu0 %v8680, 120
    %v8685 = vpop.permute.xlu0 %8684
    %8686 = vrot.lane.b32.xlu0 %v8681, 120
    %v8687 = vpop.permute.xlu0 %8686
    %v8690 = vadd.f32 %v8678, %v8685
    %v8691 = vadd.f32 %v8679, %v8687
    %8694 = vrot.lane.b32.xlu0 %v8690, 72
    %v8695 = vpop.permute.xlu0 %8694
    %8696 = vrot.lane.b32.xlu0 %v8691, 72
    %v8697 = vpop.permute.xlu0 %8696
    %8700 = vst.msk [vmem:[#allocation4 + $0x8] sm:$0xff] %vm7433, %v8695
    %8701 = vst.msk [vmem:[#allocation4 + $0x28] sm:$0xff] %vm7433, %v8697
    %v8702 = vld [vmem:[#allocation3] sm:$0xff]
    %v8703 = vld [vmem:[#allocation3 + $0x10] sm:$0xff]
    %v8704 = vmul.f32 %v8702, 0.29032257
    %v8705 = vmul.f32 %v8703, 0.29032257
    %v8706 = vmul.f32 %v8702, 0.7096774
    %v8707 = vmul.f32 %v8703, 0.7096774
    %8710 = vrot.lane.b32.xlu0 %v8706, 120
    %v8711 = vpop.permute.xlu0 %8710
    %8712 = vrot.lane.b32.xlu0 %v8707, 120
    %v8713 = vpop.permute.xlu0 %8712
    %v8716 = vadd.f32 %v8704, %v8711
    %v8717 = vadd.f32 %v8705, %v8713
    %8720 = vrot.lane.b32.xlu0 %v8716, 80
    %v8721 = vpop.permute.xlu0 %8720
    %8722 = vrot.lane.b32.xlu0 %v8717, 80
    %v8723 = vpop.permute.xlu0 %8722
    %8726 = vst.msk [vmem:[#allocation4 + $0x8] sm:$0xff] %vm7446, %v8721
    %8727 = vst.msk [vmem:[#allocation4 + $0x28] sm:$0xff] %vm7446, %v8723
    %v8728 = vld [vmem:[#allocation3] sm:$0xff]
    %v8729 = vld [vmem:[#allocation3 + $0x10] sm:$0xff]
    %v8730 = vmul.f32 %v8728, 0.8064516
    %v8731 = vmul.f32 %v8729, 0.8064516
    %v8732 = vmul.f32 %v8728, 0.19354838
    %v8733 = vmul.f32 %v8729, 0.19354838
    %8736 = vrot.lane.b32.xlu0 %v8732, 120
    %v8737 = vpop.permute.xlu0 %8736
    %8738 = vrot.lane.b32.xlu0 %v8733, 120
    %v8739 = vpop.permute.xlu0 %8738
    %v8742 = vadd.f32 %v8730, %v8737
    %v8743 = vadd.f32 %v8731, %v8739
    %8746 = vrot.lane.b32.xlu0 %v8742, 80
    %v8747 = vpop.permute.xlu0 %8746
    %8748 = vrot.lane.b32.xlu0 %v8743, 80
    %v8749 = vpop.permute.xlu0 %8748
    %8752 = vst.msk [vmem:[#allocation4 + $0x8] sm:$0xff] %vm7459, %v8747
    %8753 = vst.msk [vmem:[#allocation4 + $0x28] sm:$0xff] %vm7459, %v8749
    %v8754 = vld [vmem:[#allocation3] sm:$0xff]
    %v8755 = vld [vmem:[#allocation3 + $0x10] sm:$0xff]
    %v8756 = vmul.f32 %v8754, 0.32258064
    %v8757 = vmul.f32 %v8755, 0.32258064
    %v8758 = vmul.f32 %v8754, 0.67741936
    %v8759 = vmul.f32 %v8755, 0.67741936
    %8762 = vrot.lane.b32.xlu0 %v8758, 120
    %v8763 = vpop.permute.xlu0 %8762
    %8764 = vrot.lane.b32.xlu0 %v8759, 120
    %v8765 = vpop.permute.xlu0 %8764
    %v8768 = vadd.f32 %v8756, %v8763
    %v8769 = vadd.f32 %v8757, %v8765
    %8772 = vrot.lane.b32.xlu0 %v8768, 88
    %v8773 = vpop.permute.xlu0 %8772
    %8774 = vrot.lane.b32.xlu0 %v8769, 88
    %v8775 = vpop.permute.xlu0 %8774
    %8778 = vst.msk [vmem:[#allocation4 + $0x8] sm:$0xff] %vm7472, %v8773
    %8779 = vst.msk [vmem:[#allocation4 + $0x28] sm:$0xff] %vm7472, %v8775
    %v8780 = vld [vmem:[#allocation3] sm:$0xff]
    %v8781 = vld [vmem:[#allocation3 + $0x10] sm:$0xff]
    %v8782 = vmul.f32 %v8780, 0.83870965
    %v8783 = vmul.f32 %v8781, 0.83870965
    %v8784 = vmul.f32 %v8780, 0.16129032
    %v8785 = vmul.f32 %v8781, 0.16129032
    %8788 = vrot.lane.b32.xlu0 %v8784, 120
    %v8789 = vpop.permute.xlu0 %8788
    %8790 = vrot.lane.b32.xlu0 %v8785, 120
    %v8791 = vpop.permute.xlu0 %8790
    %v8794 = vadd.f32 %v8782, %v8789
    %v8795 = vadd.f32 %v8783, %v8791
    %8798 = vrot.lane.b32.xlu0 %v8794, 88
    %v8799 = vpop.permute.xlu0 %8798
    %8800 = vrot.lane.b32.xlu0 %v8795, 88
    %v8801 = vpop.permute.xlu0 %8800
    %8804 = vst.msk [vmem:[#allocation4 + $0x8] sm:$0xff] %vm7485, %v8799
    %8805 = vst.msk [vmem:[#allocation4 + $0x28] sm:$0xff] %vm7485, %v8801
    %v8806 = vld [vmem:[#allocation3] sm:$0xff]
    %v8807 = vld [vmem:[#allocation3 + $0x10] sm:$0xff]
    %v8808 = vmul.f32 %v8806, 0.3548387
    %v8809 = vmul.f32 %v8807, 0.3548387
    %v8810 = vmul.f32 %v8806, 0.6451613
    %v8811 = vmul.f32 %v8807, 0.6451613
    %8814 = vrot.lane.b32.xlu0 %v8810, 120
    %v8815 = vpop.permute.xlu0 %8814
    %8816 = vrot.lane.b32.xlu0 %v8811, 120
    %v8817 = vpop.permute.xlu0 %8816
    %v8820 = vadd.f32 %v8808, %v8815
    %v8821 = vadd.f32 %v8809, %v8817
    %8824 = vrot.lane.b32.xlu0 %v8820, 96
    %v8825 = vpop.permute.xlu0 %8824
    %8826 = vrot.lane.b32.xlu0 %v8821, 96
    %v8827 = vpop.permute.xlu0 %8826
    %8830 = vst.msk [vmem:[#allocation4 + $0x8] sm:$0xff] %vm7498, %v8825
    %8831 = vst.msk [vmem:[#allocation4 + $0x28] sm:$0xff] %vm7498, %v8827
    %v8832 = vld [vmem:[#allocation3] sm:$0xff]
    %v8833 = vld [vmem:[#allocation3 + $0x10] sm:$0xff]
    %v8834 = vmul.f32 %v8832, 0.87096775
    %v8835 = vmul.f32 %v8833, 0.87096775
    %v8836 = vmul.f32 %v8832, 0.12903225
    %v8837 = vmul.f32 %v8833, 0.12903225
    %8840 = vrot.lane.b32.xlu0 %v8836, 120
    %v8841 = vpop.permute.xlu0 %8840
    %8842 = vrot.lane.b32.xlu0 %v8837, 120
    %v8843 = vpop.permute.xlu0 %8842
    %v8846 = vadd.f32 %v8834, %v8841
    %v8847 = vadd.f32 %v8835, %v8843
    %8850 = vrot.lane.b32.xlu0 %v8846, 96
    %v8851 = vpop.permute.xlu0 %8850
    %8852 = vrot.lane.b32.xlu0 %v8847, 96
    %v8853 = vpop.permute.xlu0 %8852
    %8856 = vst.msk [vmem:[#allocation4 + $0x8] sm:$0xff] %vm7511, %v8851
    %8857 = vst.msk [vmem:[#allocation4 + $0x28] sm:$0xff] %vm7511, %v8853
    %v8858 = vld [vmem:[#allocation3] sm:$0xff]
    %v8859 = vld [vmem:[#allocation3 + $0x10] sm:$0xff]
    %v8860 = vmul.f32 %v8858, 0.38709676
    %v8861 = vmul.f32 %v8859, 0.38709676
    %v8862 = vmul.f32 %v8858, 0.61290324
    %v8863 = vmul.f32 %v8859, 0.61290324
    %8866 = vrot.lane.b32.xlu0 %v8862, 120
    %v8867 = vpop.permute.xlu0 %8866
    %8868 = vrot.lane.b32.xlu0 %v8863, 120
    %v8869 = vpop.permute.xlu0 %8868
    %v8872 = vadd.f32 %v8860, %v8867
    %v8873 = vadd.f32 %v8861, %v8869
    %8876 = vrot.lane.b32.xlu0 %v8872, 104
    %v8877 = vpop.permute.xlu0 %8876
    %8878 = vrot.lane.b32.xlu0 %v8873, 104
    %v8879 = vpop.permute.xlu0 %8878
    %8882 = vst.msk [vmem:[#allocation4 + $0x8] sm:$0xff] %vm7524, %v8877
    %8883 = vst.msk [vmem:[#allocation4 + $0x28] sm:$0xff] %vm7524, %v8879
    %v8884 = vld [vmem:[#allocation3] sm:$0xff]
    %v8885 = vld [vmem:[#allocation3 + $0x10] sm:$0xff]
    %v8886 = vmul.f32 %v8884, 0.9032258
    %v8887 = vmul.f32 %v8885, 0.9032258
    %v8888 = vmul.f32 %v8884, 0.09677419
    %v8889 = vmul.f32 %v8885, 0.09677419
    %8892 = vrot.lane.b32.xlu0 %v8888, 120
    %v8893 = vpop.permute.xlu0 %8892
    %8894 = vrot.lane.b32.xlu0 %v8889, 120
    %v8895 = vpop.permute.xlu0 %8894
    %v8898 = vadd.f32 %v8886, %v8893
    %v8899 = vadd.f32 %v8887, %v8895
    %8902 = vrot.lane.b32.xlu0 %v8898, 104
    %v8903 = vpop.permute.xlu0 %8902
    %8904 = vrot.lane.b32.xlu0 %v8899, 104
    %v8905 = vpop.permute.xlu0 %8904
    %8908 = vst.msk [vmem:[#allocation4 + $0x8] sm:$0xff] %vm7537, %v8903
    %8909 = vst.msk [vmem:[#allocation4 + $0x28] sm:$0xff] %vm7537, %v8905
    %v8910 = vld [vmem:[#allocation3] sm:$0xff]
    %v8911 = vld [vmem:[#allocation3 + $0x10] sm:$0xff]
    %v8912 = vmul.f32 %v8910, 0.41935483
    %v8913 = vmul.f32 %v8911, 0.41935483
    %v8914 = vmul.f32 %v8910, 0.58064514
    %v8915 = vmul.f32 %v8911, 0.58064514
    %8918 = vrot.lane.b32.xlu0 %v8914, 120
    %v8919 = vpop.permute.xlu0 %8918
    %8920 = vrot.lane.b32.xlu0 %v8915, 120
    %v8921 = vpop.permute.xlu0 %8920
    %v8924 = vadd.f32 %v8912, %v8919
    %v8925 = vadd.f32 %v8913, %v8921
    %8928 = vrot.lane.b32.xlu0 %v8924, 112
    %v8929 = vpop.permute.xlu0 %8928
    %8930 = vrot.lane.b32.xlu0 %v8925, 112
    %v8931 = vpop.permute.xlu0 %8930
    %8934 = vst.msk [vmem:[#allocation4 + $0x8] sm:$0xff] %vm7550, %v8929
    %8935 = vst.msk [vmem:[#allocation4 + $0x28] sm:$0xff] %vm7550, %v8931
    %v8936 = vld [vmem:[#allocation3] sm:$0xff]
    %v8937 = vld [vmem:[#allocation3 + $0x10] sm:$0xff]
    %v8938 = vmul.f32 %v8936, 0.9354839
    %v8939 = vmul.f32 %v8937, 0.9354839
    %v8940 = vmul.f32 %v8936, 0.06451613
    %v8941 = vmul.f32 %v8937, 0.06451613
    %8944 = vrot.lane.b32.xlu0 %v8940, 120
    %v8945 = vpop.permute.xlu0 %8944
    %8946 = vrot.lane.b32.xlu0 %v8941, 120
    %v8947 = vpop.permute.xlu0 %8946
    %v8950 = vadd.f32 %v8938, %v8945
    %v8951 = vadd.f32 %v8939, %v8947
    %8954 = vrot.lane.b32.xlu0 %v8950, 112
    %v8955 = vpop.permute.xlu0 %8954
    %8956 = vrot.lane.b32.xlu0 %v8951, 112
    %v8957 = vpop.permute.xlu0 %8956
    %8960 = vst.msk [vmem:[#allocation4 + $0x8] sm:$0xff] %vm7563, %v8955
    %8961 = vst.msk [vmem:[#allocation4 + $0x28] sm:$0xff] %vm7563, %v8957
    %v8962 = vld [vmem:[#allocation3] sm:$0xff]
    %v8963 = vld [vmem:[#allocation3 + $0x10] sm:$0xff]
    %v8964 = vmul.f32 %v8962, 0.4516129
    %v8965 = vmul.f32 %v8963, 0.4516129
    %v8966 = vmul.f32 %v8962, 0.5483871
    %v8967 = vmul.f32 %v8963, 0.5483871
    %8970 = vrot.lane.b32.xlu0 %v8966, 120
    %v8971 = vpop.permute.xlu0 %8970
    %8972 = vrot.lane.b32.xlu0 %v8967, 120
    %v8973 = vpop.permute.xlu0 %8972
    %v8976 = vadd.f32 %v8964, %v8971
    %v8977 = vadd.f32 %v8965, %v8973
    %8980 = vrot.lane.b32.xlu0 %v8976, 120
    %v8981 = vpop.permute.xlu0 %8980
    %8982 = vrot.lane.b32.xlu0 %v8977, 120
    %v8983 = vpop.permute.xlu0 %8982
    %8986 = vst.msk [vmem:[#allocation4 + $0x8] sm:$0xff] %vm7576, %v8981
    %8987 = vst.msk [vmem:[#allocation4 + $0x28] sm:$0xff] %vm7576, %v8983
    %v8988 = vld [vmem:[#allocation3] sm:$0xff]
    %v8989 = vld [vmem:[#allocation3 + $0x10] sm:$0xff]
    %v8990 = vmul.f32 %v8988, 0.9677419
    %v8991 = vmul.f32 %v8989, 0.9677419
    %v8992 = vmul.f32 %v8988, 0.032258064
    %v8993 = vmul.f32 %v8989, 0.032258064
    %8996 = vrot.lane.b32.xlu0 %v8992, 120
    %v8997 = vpop.permute.xlu0 %8996
    %8998 = vrot.lane.b32.xlu0 %v8993, 120
    %v8999 = vpop.permute.xlu0 %8998
    %v9002 = vadd.f32 %v8990, %v8997
    %v9003 = vadd.f32 %v8991, %v8999
    %9006 = vrot.lane.b32.xlu0 %v9002, 120
    %v9007 = vpop.permute.xlu0 %9006
    %9008 = vrot.lane.b32.xlu0 %v9003, 120
    %v9009 = vpop.permute.xlu0 %9008
    %9012 = vst.msk [vmem:[#allocation4 + $0x8] sm:$0xff] %vm7589, %v9007
    %9013 = vst.msk [vmem:[#allocation4 + $0x28] sm:$0xff] %vm7589, %v9009
    %v9014 = vld [vmem:[#allocation3] sm:$0xff]
    %v9015 = vld [vmem:[#allocation3 + $0x10] sm:$0xff]
    %v9016 = vmul.f32 %v9014, 0.48387095
    %v9017 = vmul.f32 %v9015, 0.48387095
    %v9018 = vmul.f32 %v9014, 0.516129
    %v9019 = vmul.f32 %v9015, 0.516129
    %9022 = vrot.lane.b32.xlu0 %v9018, 120
    %v9023 = vpop.permute.xlu0 %9022
    %9024 = vrot.lane.b32.xlu0 %v9019, 120
    %v9025 = vpop.permute.xlu0 %9024
    %v9028 = vadd.f32 %v9016, %v9023
    %v9029 = vadd.f32 %v9017, %v9025
    %9030 = vst.msk [vmem:[#allocation4 + $0x8] sm:$0xff] %vm7602, %v9028
    %9031 = vst.msk [vmem:[#allocation4 + $0x28] sm:$0xff] %vm7602, %v9029
    %v9032 = vld [vmem:[#allocation3] sm:$0xff]
    %v9033 = vld [vmem:[#allocation3 + $0x10] sm:$0xff]
    %9034 = vst.msk [vmem:[#allocation4 + $0x8] sm:$0xff] %vm7615, %v9032
    %9035 = vst.msk [vmem:[#allocation4 + $0x28] sm:$0xff] %vm7615, %v9033
    %v9036 = vld [vmem:[#allocation3 + $0x8] sm:$0xff]
    %v9037 = vld [vmem:[#allocation3 + $0x18] sm:$0xff]
    %9038 = vst.msk [vmem:[#allocation4 + $0x10] sm:$0xff] %vm95, %v9036
    %9039 = vst.msk [vmem:[#allocation4 + $0x30] sm:$0xff] %vm95, %v9037
    %v9040 = vld [vmem:[#allocation3 + $0x8] sm:$0xff]
    %v9041 = vld [vmem:[#allocation3 + $0x18] sm:$0xff]
    %v9042 = vmul.f32 %v9040, 0.516129
    %v9043 = vmul.f32 %v9041, 0.516129
    %v9044 = vmul.f32 %v9040, 0.48387095
    %v9045 = vmul.f32 %v9041, 0.48387095
    %9048 = vrot.lane.b32.xlu0 %v9044, 120
    %v9049 = vpop.permute.xlu0 %9048
    %9050 = vrot.lane.b32.xlu0 %v9045, 120
    %v9051 = vpop.permute.xlu0 %9050
    %v9054 = vadd.f32 %v9042, %v9049
    %v9055 = vadd.f32 %v9043, %v9051
    %9058 = vrot.lane.b32.xlu0 %v9054, 8
    %v9059 = vpop.permute.xlu0 %9058
    %9060 = vrot.lane.b32.xlu0 %v9055, 8
    %v9061 = vpop.permute.xlu0 %9060
    %9064 = vst.msk [vmem:[#allocation4 + $0x10] sm:$0xff] %vm7433, %v9059
    %9065 = vst.msk [vmem:[#allocation4 + $0x30] sm:$0xff] %vm7433, %v9061
    %v9066 = vld [vmem:[#allocation3 + $0x8] sm:$0xff]
    %v9067 = vld [vmem:[#allocation3 + $0x18] sm:$0xff]
    %v9068 = vmul.f32 %v9066, 0.032258064
    %v9069 = vmul.f32 %v9067, 0.032258064
    %v9070 = vmul.f32 %v9066, 0.9677419
    %v9071 = vmul.f32 %v9067, 0.9677419
    %9074 = vrot.lane.b32.xlu0 %v9070, 120
    %v9075 = vpop.permute.xlu0 %9074
    %9076 = vrot.lane.b32.xlu0 %v9071, 120
    %v9077 = vpop.permute.xlu0 %9076
    %v9080 = vadd.f32 %v9068, %v9075
    %v9081 = vadd.f32 %v9069, %v9077
    %9084 = vrot.lane.b32.xlu0 %v9080, 16
    %v9085 = vpop.permute.xlu0 %9084
    %9086 = vrot.lane.b32.xlu0 %v9081, 16
    %v9087 = vpop.permute.xlu0 %9086
    %9090 = vst.msk [vmem:[#allocation4 + $0x10] sm:$0xff] %vm7446, %v9085
    %9091 = vst.msk [vmem:[#allocation4 + $0x30] sm:$0xff] %vm7446, %v9087
    %v9092 = vld [vmem:[#allocation3 + $0x8] sm:$0xff]
    %v9093 = vld [vmem:[#allocation3 + $0x18] sm:$0xff]
    %v9094 = vmul.f32 %v9092, 0.5483871
    %v9095 = vmul.f32 %v9093, 0.5483871
    %v9096 = vmul.f32 %v9092, 0.4516129
    %v9097 = vmul.f32 %v9093, 0.4516129
    %9100 = vrot.lane.b32.xlu0 %v9096, 120
    %v9101 = vpop.permute.xlu0 %9100
    %9102 = vrot.lane.b32.xlu0 %v9097, 120
    %v9103 = vpop.permute.xlu0 %9102
    %v9106 = vadd.f32 %v9094, %v9101
    %v9107 = vadd.f32 %v9095, %v9103
    %9110 = vrot.lane.b32.xlu0 %v9106, 16
    %v9111 = vpop.permute.xlu0 %9110
    %9112 = vrot.lane.b32.xlu0 %v9107, 16
    %v9113 = vpop.permute.xlu0 %9112
    %9116 = vst.msk [vmem:[#allocation4 + $0x10] sm:$0xff] %vm7459, %v9111
    %9117 = vst.msk [vmem:[#allocation4 + $0x30] sm:$0xff] %vm7459, %v9113
    %v9118 = vld [vmem:[#allocation3 + $0x8] sm:$0xff]
    %v9119 = vld [vmem:[#allocation3 + $0x18] sm:$0xff]
    %v9120 = vmul.f32 %v9118, 0.06451613
    %v9121 = vmul.f32 %v9119, 0.06451613
    %v9122 = vmul.f32 %v9118, 0.9354839
    %v9123 = vmul.f32 %v9119, 0.9354839
    %9126 = vrot.lane.b32.xlu0 %v9122, 120
    %v9127 = vpop.permute.xlu0 %9126
    %9128 = vrot.lane.b32.xlu0 %v9123, 120
    %v9129 = vpop.permute.xlu0 %9128
    %v9132 = vadd.f32 %v9120, %v9127
    %v9133 = vadd.f32 %v9121, %v9129
    %9136 = vrot.lane.b32.xlu0 %v9132, 24
    %v9137 = vpop.permute.xlu0 %9136
    %9138 = vrot.lane.b32.xlu0 %v9133, 24
    %v9139 = vpop.permute.xlu0 %9138
    %9142 = vst.msk [vmem:[#allocation4 + $0x10] sm:$0xff] %vm7472, %v9137
    %9143 = vst.msk [vmem:[#allocation4 + $0x30] sm:$0xff] %vm7472, %v9139
    %v9144 = vld [vmem:[#allocation3 + $0x8] sm:$0xff]
    %v9145 = vld [vmem:[#allocation3 + $0x18] sm:$0xff]
    %v9146 = vmul.f32 %v9144, 0.58064514
    %v9147 = vmul.f32 %v9145, 0.58064514
    %v9148 = vmul.f32 %v9144, 0.41935483
    %v9149 = vmul.f32 %v9145, 0.41935483
    %9152 = vrot.lane.b32.xlu0 %v9148, 120
    %v9153 = vpop.permute.xlu0 %9152
    %9154 = vrot.lane.b32.xlu0 %v9149, 120
    %v9155 = vpop.permute.xlu0 %9154
    %v9158 = vadd.f32 %v9146, %v9153
    %v9159 = vadd.f32 %v9147, %v9155
    %9162 = vrot.lane.b32.xlu0 %v9158, 24
    %v9163 = vpop.permute.xlu0 %9162
    %9164 = vrot.lane.b32.xlu0 %v9159, 24
    %v9165 = vpop.permute.xlu0 %9164
    %9168 = vst.msk [vmem:[#allocation4 + $0x10] sm:$0xff] %vm7485, %v9163
    %9169 = vst.msk [vmem:[#allocation4 + $0x30] sm:$0xff] %vm7485, %v9165
    %v9170 = vld [vmem:[#allocation3 + $0x8] sm:$0xff]
    %v9171 = vld [vmem:[#allocation3 + $0x18] sm:$0xff]
    %v9172 = vmul.f32 %v9170, 0.09677419
    %v9173 = vmul.f32 %v9171, 0.09677419
    %v9174 = vmul.f32 %v9170, 0.9032258
    %v9175 = vmul.f32 %v9171, 0.9032258
    %9178 = vrot.lane.b32.xlu0 %v9174, 120
    %v9179 = vpop.permute.xlu0 %9178
    %9180 = vrot.lane.b32.xlu0 %v9175, 120
    %v9181 = vpop.permute.xlu0 %9180
    %v9184 = vadd.f32 %v9172, %v9179
    %v9185 = vadd.f32 %v9173, %v9181
    %9188 = vrot.lane.b32.xlu0 %v9184, 32
    %v9189 = vpop.permute.xlu0 %9188
    %9190 = vrot.lane.b32.xlu0 %v9185, 32
    %v9191 = vpop.permute.xlu0 %9190
    %9194 = vst.msk [vmem:[#allocation4 + $0x10] sm:$0xff] %vm7498, %v9189
    %9195 = vst.msk [vmem:[#allocation4 + $0x30] sm:$0xff] %vm7498, %v9191
    %v9196 = vld [vmem:[#allocation3 + $0x8] sm:$0xff]
    %v9197 = vld [vmem:[#allocation3 + $0x18] sm:$0xff]
    %v9198 = vmul.f32 %v9196, 0.61290324
    %v9199 = vmul.f32 %v9197, 0.61290324
    %v9200 = vmul.f32 %v9196, 0.38709676
    %v9201 = vmul.f32 %v9197, 0.38709676
    %9204 = vrot.lane.b32.xlu0 %v9200, 120
    %v9205 = vpop.permute.xlu0 %9204
    %9206 = vrot.lane.b32.xlu0 %v9201, 120
    %v9207 = vpop.permute.xlu0 %9206
    %v9210 = vadd.f32 %v9198, %v9205
    %v9211 = vadd.f32 %v9199, %v9207
    %9214 = vrot.lane.b32.xlu0 %v9210, 32
    %v9215 = vpop.permute.xlu0 %9214
    %9216 = vrot.lane.b32.xlu0 %v9211, 32
    %v9217 = vpop.permute.xlu0 %9216
    %9220 = vst.msk [vmem:[#allocation4 + $0x10] sm:$0xff] %vm7511, %v9215
    %9221 = vst.msk [vmem:[#allocation4 + $0x30] sm:$0xff] %vm7511, %v9217
    %v9222 = vld [vmem:[#allocation3 + $0x8] sm:$0xff]
    %v9223 = vld [vmem:[#allocation3 + $0x18] sm:$0xff]
    %v9224 = vmul.f32 %v9222, 0.12903225
    %v9225 = vmul.f32 %v9223, 0.12903225
    %v9226 = vmul.f32 %v9222, 0.87096775
    %v9227 = vmul.f32 %v9223, 0.87096775
    %9230 = vrot.lane.b32.xlu0 %v9226, 120
    %v9231 = vpop.permute.xlu0 %9230
    %9232 = vrot.lane.b32.xlu0 %v9227, 120
    %v9233 = vpop.permute.xlu0 %9232
    %v9236 = vadd.f32 %v9224, %v9231
    %v9237 = vadd.f32 %v9225, %v9233
    %9240 = vrot.lane.b32.xlu0 %v9236, 40
    %v9241 = vpop.permute.xlu0 %9240
    %9242 = vrot.lane.b32.xlu0 %v9237, 40
    %v9243 = vpop.permute.xlu0 %9242
    %9246 = vst.msk [vmem:[#allocation4 + $0x10] sm:$0xff] %vm7524, %v9241
    %9247 = vst.msk [vmem:[#allocation4 + $0x30] sm:$0xff] %vm7524, %v9243
    %v9248 = vld [vmem:[#allocation3 + $0x8] sm:$0xff]
    %v9249 = vld [vmem:[#allocation3 + $0x18] sm:$0xff]
    %v9250 = vmul.f32 %v9248, 0.6451613
    %v9251 = vmul.f32 %v9249, 0.6451613
    %v9252 = vmul.f32 %v9248, 0.3548387
    %v9253 = vmul.f32 %v9249, 0.3548387
    %9256 = vrot.lane.b32.xlu0 %v9252, 120
    %v9257 = vpop.permute.xlu0 %9256
    %9258 = vrot.lane.b32.xlu0 %v9253, 120
    %v9259 = vpop.permute.xlu0 %9258
    %v9262 = vadd.f32 %v9250, %v9257
    %v9263 = vadd.f32 %v9251, %v9259
    %9266 = vrot.lane.b32.xlu0 %v9262, 40
    %v9267 = vpop.permute.xlu0 %9266
    %9268 = vrot.lane.b32.xlu0 %v9263, 40
    %v9269 = vpop.permute.xlu0 %9268
    %9272 = vst.msk [vmem:[#allocation4 + $0x10] sm:$0xff] %vm7537, %v9267
    %9273 = vst.msk [vmem:[#allocation4 + $0x30] sm:$0xff] %vm7537, %v9269
    %v9274 = vld [vmem:[#allocation3 + $0x8] sm:$0xff]
    %v9275 = vld [vmem:[#allocation3 + $0x18] sm:$0xff]
    %v9276 = vmul.f32 %v9274, 0.16129032
    %v9277 = vmul.f32 %v9275, 0.16129032
    %v9278 = vmul.f32 %v9274, 0.83870965
    %v9279 = vmul.f32 %v9275, 0.83870965
    %9282 = vrot.lane.b32.xlu0 %v9278, 120
    %v9283 = vpop.permute.xlu0 %9282
    %9284 = vrot.lane.b32.xlu0 %v9279, 120
    %v9285 = vpop.permute.xlu0 %9284
    %v9288 = vadd.f32 %v9276, %v9283
    %v9289 = vadd.f32 %v9277, %v9285
    %9292 = vrot.lane.b32.xlu0 %v9288, 48
    %v9293 = vpop.permute.xlu0 %9292
    %9294 = vrot.lane.b32.xlu0 %v9289, 48
    %v9295 = vpop.permute.xlu0 %9294
    %9298 = vst.msk [vmem:[#allocation4 + $0x10] sm:$0xff] %vm7550, %v9293
    %9299 = vst.msk [vmem:[#allocation4 + $0x30] sm:$0xff] %vm7550, %v9295
    %v9300 = vld [vmem:[#allocation3 + $0x8] sm:$0xff]
    %v9301 = vld [vmem:[#allocation3 + $0x18] sm:$0xff]
    %v9302 = vmul.f32 %v9300, 0.67741936
    %v9303 = vmul.f32 %v9301, 0.67741936
    %v9304 = vmul.f32 %v9300, 0.32258064
    %v9305 = vmul.f32 %v9301, 0.32258064
    %9308 = vrot.lane.b32.xlu0 %v9304, 120
    %v9309 = vpop.permute.xlu0 %9308
    %9310 = vrot.lane.b32.xlu0 %v9305, 120
    %v9311 = vpop.permute.xlu0 %9310
    %v9314 = vadd.f32 %v9302, %v9309
    %v9315 = vadd.f32 %v9303, %v9311
    %9318 = vrot.lane.b32.xlu0 %v9314, 48
    %v9319 = vpop.permute.xlu0 %9318
    %9320 = vrot.lane.b32.xlu0 %v9315, 48
    %v9321 = vpop.permute.xlu0 %9320
    %9324 = vst.msk [vmem:[#allocation4 + $0x10] sm:$0xff] %vm7563, %v9319
    %9325 = vst.msk [vmem:[#allocation4 + $0x30] sm:$0xff] %vm7563, %v9321
    %v9326 = vld [vmem:[#allocation3 + $0x8] sm:$0xff]
    %v9327 = vld [vmem:[#allocation3 + $0x18] sm:$0xff]
    %v9328 = vmul.f32 %v9326, 0.19354838
    %v9329 = vmul.f32 %v9327, 0.19354838
    %v9330 = vmul.f32 %v9326, 0.8064516
    %v9331 = vmul.f32 %v9327, 0.8064516
    %9334 = vrot.lane.b32.xlu0 %v9330, 120
    %v9335 = vpop.permute.xlu0 %9334
    %9336 = vrot.lane.b32.xlu0 %v9331, 120
    %v9337 = vpop.permute.xlu0 %9336
    %v9340 = vadd.f32 %v9328, %v9335
    %v9341 = vadd.f32 %v9329, %v9337
    %9344 = vrot.lane.b32.xlu0 %v9340, 56
    %v9345 = vpop.permute.xlu0 %9344
    %9346 = vrot.lane.b32.xlu0 %v9341, 56
    %v9347 = vpop.permute.xlu0 %9346
    %9350 = vst.msk [vmem:[#allocation4 + $0x10] sm:$0xff] %vm7576, %v9345
    %9351 = vst.msk [vmem:[#allocation4 + $0x30] sm:$0xff] %vm7576, %v9347
    %v9352 = vld [vmem:[#allocation3 + $0x8] sm:$0xff]
    %v9353 = vld [vmem:[#allocation3 + $0x18] sm:$0xff]
    %v9354 = vmul.f32 %v9352, 0.7096774
    %v9355 = vmul.f32 %v9353, 0.7096774
    %v9356 = vmul.f32 %v9352, 0.29032257
    %v9357 = vmul.f32 %v9353, 0.29032257
    %9360 = vrot.lane.b32.xlu0 %v9356, 120
    %v9361 = vpop.permute.xlu0 %9360
    %9362 = vrot.lane.b32.xlu0 %v9357, 120
    %v9363 = vpop.permute.xlu0 %9362
    %v9366 = vadd.f32 %v9354, %v9361
    %v9367 = vadd.f32 %v9355, %v9363
    %9370 = vrot.lane.b32.xlu0 %v9366, 56
    %v9371 = vpop.permute.xlu0 %9370
    %9372 = vrot.lane.b32.xlu0 %v9367, 56
    %v9373 = vpop.permute.xlu0 %9372
    %9376 = vst.msk [vmem:[#allocation4 + $0x10] sm:$0xff] %vm7589, %v9371
    %9377 = vst.msk [vmem:[#allocation4 + $0x30] sm:$0xff] %vm7589, %v9373
    %v9378 = vld [vmem:[#allocation3 + $0x8] sm:$0xff]
    %v9379 = vld [vmem:[#allocation3 + $0x18] sm:$0xff]
    %v9380 = vmul.f32 %v9378, 0.22580644
    %v9381 = vmul.f32 %v9379, 0.22580644
    %v9382 = vmul.f32 %v9378, 0.7741935
    %v9383 = vmul.f32 %v9379, 0.7741935
    %9386 = vrot.lane.b32.xlu0 %v9382, 120
    %v9387 = vpop.permute.xlu0 %9386
    %9388 = vrot.lane.b32.xlu0 %v9383, 120
    %v9389 = vpop.permute.xlu0 %9388
    %v9392 = vadd.f32 %v9380, %v9387
    %v9393 = vadd.f32 %v9381, %v9389
    %9396 = vrot.lane.b32.xlu0 %v9392, 64
    %v9397 = vpop.permute.xlu0 %9396
    %9398 = vrot.lane.b32.xlu0 %v9393, 64
    %v9399 = vpop.permute.xlu0 %9398
    %9402 = vst.msk [vmem:[#allocation4 + $0x10] sm:$0xff] %vm7602, %v9397
    %9403 = vst.msk [vmem:[#allocation4 + $0x30] sm:$0xff] %vm7602, %v9399
    %v9404 = vld [vmem:[#allocation3 + $0x8] sm:$0xff]
    %v9405 = vld [vmem:[#allocation3 + $0x18] sm:$0xff]
    %v9406 = vmul.f32 %v9404, 0.7419355
    %v9407 = vmul.f32 %v9405, 0.7419355
    %v9408 = vmul.f32 %v9404, 0.2580645
    %v9409 = vmul.f32 %v9405, 0.2580645
    %9412 = vrot.lane.b32.xlu0 %v9408, 120
    %v9413 = vpop.permute.xlu0 %9412
    %9414 = vrot.lane.b32.xlu0 %v9409, 120
    %v9415 = vpop.permute.xlu0 %9414
    %v9418 = vadd.f32 %v9406, %v9413
    %v9419 = vadd.f32 %v9407, %v9415
    %9422 = vrot.lane.b32.xlu0 %v9418, 64
    %v9423 = vpop.permute.xlu0 %9422
    %9424 = vrot.lane.b32.xlu0 %v9419, 64
    %v9425 = vpop.permute.xlu0 %9424
    %9428 = vst.msk [vmem:[#allocation4 + $0x10] sm:$0xff] %vm7615, %v9423
    %9429 = vst.msk [vmem:[#allocation4 + $0x30] sm:$0xff] %vm7615, %v9425
    %v9430 = vld [vmem:[#allocation3 + $0x8] sm:$0xff]
    %v9431 = vld [vmem:[#allocation3 + $0x18] sm:$0xff]
    %v9432 = vmul.f32 %v9430, 0.2580645
    %v9433 = vmul.f32 %v9431, 0.2580645
    %v9434 = vmul.f32 %v9430, 0.7419355
    %v9435 = vmul.f32 %v9431, 0.7419355
    %9438 = vrot.lane.b32.xlu0 %v9434, 120
    %v9439 = vpop.permute.xlu0 %9438
    %9440 = vrot.lane.b32.xlu0 %v9435, 120
    %v9441 = vpop.permute.xlu0 %9440
    %v9444 = vadd.f32 %v9432, %v9439
    %v9445 = vadd.f32 %v9433, %v9441
    %9448 = vrot.lane.b32.xlu0 %v9444, 72
    %v9449 = vpop.permute.xlu0 %9448
    %9450 = vrot.lane.b32.xlu0 %v9445, 72
    %v9451 = vpop.permute.xlu0 %9450
    %9454 = vst.msk [vmem:[#allocation4 + $0x18] sm:$0xff] %vm95, %v9449
    %9455 = vst.msk [vmem:[#allocation4 + $0x38] sm:$0xff] %vm95, %v9451
    %v9456 = vld [vmem:[#allocation3 + $0x8] sm:$0xff]
    %v9457 = vld [vmem:[#allocation3 + $0x18] sm:$0xff]
    %v9458 = vmul.f32 %v9456, 0.7741935
    %v9459 = vmul.f32 %v9457, 0.7741935
    %v9460 = vmul.f32 %v9456, 0.22580644
    %v9461 = vmul.f32 %v9457, 0.22580644
    %9464 = vrot.lane.b32.xlu0 %v9460, 120
    %v9465 = vpop.permute.xlu0 %9464
    %9466 = vrot.lane.b32.xlu0 %v9461, 120
    %v9467 = vpop.permute.xlu0 %9466
    %v9470 = vadd.f32 %v9458, %v9465
    %v9471 = vadd.f32 %v9459, %v9467
    %9474 = vrot.lane.b32.xlu0 %v9470, 72
    %v9475 = vpop.permute.xlu0 %9474
    %9476 = vrot.lane.b32.xlu0 %v9471, 72
    %v9477 = vpop.permute.xlu0 %9476
    %9480 = vst.msk [vmem:[#allocation4 + $0x18] sm:$0xff] %vm7433, %v9475
    %9481 = vst.msk [vmem:[#allocation4 + $0x38] sm:$0xff] %vm7433, %v9477
    %v9482 = vld [vmem:[#allocation3 + $0x8] sm:$0xff]
    %v9483 = vld [vmem:[#allocation3 + $0x18] sm:$0xff]
    %v9484 = vmul.f32 %v9482, 0.29032257
    %v9485 = vmul.f32 %v9483, 0.29032257
    %v9486 = vmul.f32 %v9482, 0.7096774
    %v9487 = vmul.f32 %v9483, 0.7096774
    %9490 = vrot.lane.b32.xlu0 %v9486, 120
    %v9491 = vpop.permute.xlu0 %9490
    %9492 = vrot.lane.b32.xlu0 %v9487, 120
    %v9493 = vpop.permute.xlu0 %9492
    %v9496 = vadd.f32 %v9484, %v9491
    %v9497 = vadd.f32 %v9485, %v9493
    %9500 = vrot.lane.b32.xlu0 %v9496, 80
    %v9501 = vpop.permute.xlu0 %9500
    %9502 = vrot.lane.b32.xlu0 %v9497, 80
    %v9503 = vpop.permute.xlu0 %9502
    %9506 = vst.msk [vmem:[#allocation4 + $0x18] sm:$0xff] %vm7446, %v9501
    %9507 = vst.msk [vmem:[#allocation4 + $0x38] sm:$0xff] %vm7446, %v9503
    %v9508 = vld [vmem:[#allocation3 + $0x8] sm:$0xff]
    %v9509 = vld [vmem:[#allocation3 + $0x18] sm:$0xff]
    %v9510 = vmul.f32 %v9508, 0.8064516
    %v9511 = vmul.f32 %v9509, 0.8064516
    %v9512 = vmul.f32 %v9508, 0.19354838
    %v9513 = vmul.f32 %v9509, 0.19354838
    %9516 = vrot.lane.b32.xlu0 %v9512, 120
    %v9517 = vpop.permute.xlu0 %9516
    %9518 = vrot.lane.b32.xlu0 %v9513, 120
    %v9519 = vpop.permute.xlu0 %9518
    %v9522 = vadd.f32 %v9510, %v9517
    %v9523 = vadd.f32 %v9511, %v9519
    %9526 = vrot.lane.b32.xlu0 %v9522, 80
    %v9527 = vpop.permute.xlu0 %9526
    %9528 = vrot.lane.b32.xlu0 %v9523, 80
    %v9529 = vpop.permute.xlu0 %9528
    %9532 = vst.msk [vmem:[#allocation4 + $0x18] sm:$0xff] %vm7459, %v9527
    %9533 = vst.msk [vmem:[#allocation4 + $0x38] sm:$0xff] %vm7459, %v9529
    %v9534 = vld [vmem:[#allocation3 + $0x8] sm:$0xff]
    %v9535 = vld [vmem:[#allocation3 + $0x18] sm:$0xff]
    %v9536 = vmul.f32 %v9534, 0.32258064
    %v9537 = vmul.f32 %v9535, 0.32258064
    %v9538 = vmul.f32 %v9534, 0.67741936
    %v9539 = vmul.f32 %v9535, 0.67741936
    %9542 = vrot.lane.b32.xlu0 %v9538, 120
    %v9543 = vpop.permute.xlu0 %9542
    %9544 = vrot.lane.b32.xlu0 %v9539, 120
    %v9545 = vpop.permute.xlu0 %9544
    %v9548 = vadd.f32 %v9536, %v9543
    %v9549 = vadd.f32 %v9537, %v9545
    %9552 = vrot.lane.b32.xlu0 %v9548, 88
    %v9553 = vpop.permute.xlu0 %9552
    %9554 = vrot.lane.b32.xlu0 %v9549, 88
    %v9555 = vpop.permute.xlu0 %9554
    %9558 = vst.msk [vmem:[#allocation4 + $0x18] sm:$0xff] %vm7472, %v9553
    %9559 = vst.msk [vmem:[#allocation4 + $0x38] sm:$0xff] %vm7472, %v9555
    %v9560 = vld [vmem:[#allocation3 + $0x8] sm:$0xff]
    %v9561 = vld [vmem:[#allocation3 + $0x18] sm:$0xff]
    %v9562 = vmul.f32 %v9560, 0.83870965
    %v9563 = vmul.f32 %v9561, 0.83870965
    %v9564 = vmul.f32 %v9560, 0.16129032
    %v9565 = vmul.f32 %v9561, 0.16129032
    %9568 = vrot.lane.b32.xlu0 %v9564, 120
    %v9569 = vpop.permute.xlu0 %9568
    %9570 = vrot.lane.b32.xlu0 %v9565, 120
    %v9571 = vpop.permute.xlu0 %9570
    %v9574 = vadd.f32 %v9562, %v9569
    %v9575 = vadd.f32 %v9563, %v9571
    %9578 = vrot.lane.b32.xlu0 %v9574, 88
    %v9579 = vpop.permute.xlu0 %9578
    %9580 = vrot.lane.b32.xlu0 %v9575, 88
    %v9581 = vpop.permute.xlu0 %9580
    %9584 = vst.msk [vmem:[#allocation4 + $0x18] sm:$0xff] %vm7485, %v9579
    %9585 = vst.msk [vmem:[#allocation4 + $0x38] sm:$0xff] %vm7485, %v9581
    %v9586 = vld [vmem:[#allocation3 + $0x8] sm:$0xff]
    %v9587 = vld [vmem:[#allocation3 + $0x18] sm:$0xff]
    %v9588 = vmul.f32 %v9586, 0.3548387
    %v9589 = vmul.f32 %v9587, 0.3548387
    %v9590 = vmul.f32 %v9586, 0.6451613
    %v9591 = vmul.f32 %v9587, 0.6451613
    %9594 = vrot.lane.b32.xlu0 %v9590, 120
    %v9595 = vpop.permute.xlu0 %9594
    %9596 = vrot.lane.b32.xlu0 %v9591, 120
    %v9597 = vpop.permute.xlu0 %9596
    %v9600 = vadd.f32 %v9588, %v9595
    %v9601 = vadd.f32 %v9589, %v9597
    %9604 = vrot.lane.b32.xlu0 %v9600, 96
    %v9605 = vpop.permute.xlu0 %9604
    %9606 = vrot.lane.b32.xlu0 %v9601, 96
    %v9607 = vpop.permute.xlu0 %9606
    %9610 = vst.msk [vmem:[#allocation4 + $0x18] sm:$0xff] %vm7498, %v9605
    %9611 = vst.msk [vmem:[#allocation4 + $0x38] sm:$0xff] %vm7498, %v9607
    %v9612 = vld [vmem:[#allocation3 + $0x8] sm:$0xff]
    %v9613 = vld [vmem:[#allocation3 + $0x18] sm:$0xff]
    %v9614 = vmul.f32 %v9612, 0.87096775
    %v9615 = vmul.f32 %v9613, 0.87096775
    %v9616 = vmul.f32 %v9612, 0.12903225
    %v9617 = vmul.f32 %v9613, 0.12903225
    %9620 = vrot.lane.b32.xlu0 %v9616, 120
    %v9621 = vpop.permute.xlu0 %9620
    %9622 = vrot.lane.b32.xlu0 %v9617, 120
    %v9623 = vpop.permute.xlu0 %9622
    %v9626 = vadd.f32 %v9614, %v9621
    %v9627 = vadd.f32 %v9615, %v9623
    %9630 = vrot.lane.b32.xlu0 %v9626, 96
    %v9631 = vpop.permute.xlu0 %9630
    %9632 = vrot.lane.b32.xlu0 %v9627, 96
    %v9633 = vpop.permute.xlu0 %9632
    %9636 = vst.msk [vmem:[#allocation4 + $0x18] sm:$0xff] %vm7511, %v9631
    %9637 = vst.msk [vmem:[#allocation4 + $0x38] sm:$0xff] %vm7511, %v9633
    %v9638 = vld [vmem:[#allocation3 + $0x8] sm:$0xff]
    %v9639 = vld [vmem:[#allocation3 + $0x18] sm:$0xff]
    %v9640 = vmul.f32 %v9638, 0.38709676
    %v9641 = vmul.f32 %v9639, 0.38709676
    %v9642 = vmul.f32 %v9638, 0.61290324
    %v9643 = vmul.f32 %v9639, 0.61290324
    %9646 = vrot.lane.b32.xlu0 %v9642, 120
    %v9647 = vpop.permute.xlu0 %9646
    %9648 = vrot.lane.b32.xlu0 %v9643, 120
    %v9649 = vpop.permute.xlu0 %9648
    %v9652 = vadd.f32 %v9640, %v9647
    %v9653 = vadd.f32 %v9641, %v9649
    %9656 = vrot.lane.b32.xlu0 %v9652, 104
    %v9657 = vpop.permute.xlu0 %9656
    %9658 = vrot.lane.b32.xlu0 %v9653, 104
    %v9659 = vpop.permute.xlu0 %9658
    %9662 = vst.msk [vmem:[#allocation4 + $0x18] sm:$0xff] %vm7524, %v9657
    %9663 = vst.msk [vmem:[#allocation4 + $0x38] sm:$0xff] %vm7524, %v9659
    %v9664 = vld [vmem:[#allocation3 + $0x8] sm:$0xff]
    %v9665 = vld [vmem:[#allocation3 + $0x18] sm:$0xff]
    %v9666 = vmul.f32 %v9664, 0.9032258
    %v9667 = vmul.f32 %v9665, 0.9032258
    %v9668 = vmul.f32 %v9664, 0.09677419
    %v9669 = vmul.f32 %v9665, 0.09677419
    %9672 = vrot.lane.b32.xlu0 %v9668, 120
    %v9673 = vpop.permute.xlu0 %9672
    %9674 = vrot.lane.b32.xlu0 %v9669, 120
    %v9675 = vpop.permute.xlu0 %9674
    %v9678 = vadd.f32 %v9666, %v9673
    %v9679 = vadd.f32 %v9667, %v9675
    %9682 = vrot.lane.b32.xlu0 %v9678, 104
    %v9683 = vpop.permute.xlu0 %9682
    %9684 = vrot.lane.b32.xlu0 %v9679, 104
    %v9685 = vpop.permute.xlu0 %9684
    %9688 = vst.msk [vmem:[#allocation4 + $0x18] sm:$0xff] %vm7537, %v9683
    %9689 = vst.msk [vmem:[#allocation4 + $0x38] sm:$0xff] %vm7537, %v9685
    %v9690 = vld [vmem:[#allocation3 + $0x8] sm:$0xff]
    %v9691 = vld [vmem:[#allocation3 + $0x18] sm:$0xff]
    %v9692 = vmul.f32 %v9690, 0.41935483
    %v9693 = vmul.f32 %v9691, 0.41935483
    %v9694 = vmul.f32 %v9690, 0.58064514
    %v9695 = vmul.f32 %v9691, 0.58064514
    %9698 = vrot.lane.b32.xlu0 %v9694, 120
    %v9699 = vpop.permute.xlu0 %9698
    %9700 = vrot.lane.b32.xlu0 %v9695, 120
    %v9701 = vpop.permute.xlu0 %9700
    %v9704 = vadd.f32 %v9692, %v9699
    %v9705 = vadd.f32 %v9693, %v9701
    %9708 = vrot.lane.b32.xlu0 %v9704, 112
    %v9709 = vpop.permute.xlu0 %9708
    %9710 = vrot.lane.b32.xlu0 %v9705, 112
    %v9711 = vpop.permute.xlu0 %9710
    %9714 = vst.msk [vmem:[#allocation4 + $0x18] sm:$0xff] %vm7550, %v9709
    %9715 = vst.msk [vmem:[#allocation4 + $0x38] sm:$0xff] %vm7550, %v9711
    %v9716 = vld [vmem:[#allocation3 + $0x8] sm:$0xff]
    %v9717 = vld [vmem:[#allocation3 + $0x18] sm:$0xff]
    %v9718 = vmul.f32 %v9716, 0.9354839
    %v9719 = vmul.f32 %v9717, 0.9354839
    %v9720 = vmul.f32 %v9716, 0.06451613
    %v9721 = vmul.f32 %v9717, 0.06451613
    %9724 = vrot.lane.b32.xlu0 %v9720, 120
    %v9725 = vpop.permute.xlu0 %9724
    %9726 = vrot.lane.b32.xlu0 %v9721, 120
    %v9727 = vpop.permute.xlu0 %9726
    %v9730 = vadd.f32 %v9718, %v9725
    %v9731 = vadd.f32 %v9719, %v9727
    %9734 = vrot.lane.b32.xlu0 %v9730, 112
    %v9735 = vpop.permute.xlu0 %9734
    %9736 = vrot.lane.b32.xlu0 %v9731, 112
    %v9737 = vpop.permute.xlu0 %9736
    %9740 = vst.msk [vmem:[#allocation4 + $0x18] sm:$0xff] %vm7563, %v9735
    %9741 = vst.msk [vmem:[#allocation4 + $0x38] sm:$0xff] %vm7563, %v9737
    %v9742 = vld [vmem:[#allocation3 + $0x8] sm:$0xff]
    %v9743 = vld [vmem:[#allocation3 + $0x18] sm:$0xff]
    %v9744 = vmul.f32 %v9742, 0.4516129
    %v9745 = vmul.f32 %v9743, 0.4516129
    %v9746 = vmul.f32 %v9742, 0.5483871
    %v9747 = vmul.f32 %v9743, 0.5483871
    %9750 = vrot.lane.b32.xlu0 %v9746, 120
    %v9751 = vpop.permute.xlu0 %9750
    %9752 = vrot.lane.b32.xlu0 %v9747, 120
    %v9753 = vpop.permute.xlu0 %9752
    %v9756 = vadd.f32 %v9744, %v9751
    %v9757 = vadd.f32 %v9745, %v9753
    %9760 = vrot.lane.b32.xlu0 %v9756, 120
    %v9761 = vpop.permute.xlu0 %9760
    %9762 = vrot.lane.b32.xlu0 %v9757, 120
    %v9763 = vpop.permute.xlu0 %9762
    %9766 = vst.msk [vmem:[#allocation4 + $0x18] sm:$0xff] %vm7576, %v9761
    %9767 = vst.msk [vmem:[#allocation4 + $0x38] sm:$0xff] %vm7576, %v9763
    %v9768 = vld [vmem:[#allocation3 + $0x8] sm:$0xff]
    %v9769 = vld [vmem:[#allocation3 + $0x18] sm:$0xff]
    %v9770 = vmul.f32 %v9768, 0.9677419
    %v9771 = vmul.f32 %v9769, 0.9677419
    %v9772 = vmul.f32 %v9768, 0.032258064
    %v9773 = vmul.f32 %v9769, 0.032258064
    %9776 = vrot.lane.b32.xlu0 %v9772, 120
    %v9777 = vpop.permute.xlu0 %9776
    %9778 = vrot.lane.b32.xlu0 %v9773, 120
    %v9779 = vpop.permute.xlu0 %9778
    %v9782 = vadd.f32 %v9770, %v9777
    %v9783 = vadd.f32 %v9771, %v9779
    %9786 = vrot.lane.b32.xlu0 %v9782, 120
    %v9787 = vpop.permute.xlu0 %9786
    %9788 = vrot.lane.b32.xlu0 %v9783, 120
    %v9789 = vpop.permute.xlu0 %9788
    %9792 = vst.msk [vmem:[#allocation4 + $0x18] sm:$0xff] %vm7589, %v9787
    %9793 = vst.msk [vmem:[#allocation4 + $0x38] sm:$0xff] %vm7589, %v9789
    %v9794 = vld [vmem:[#allocation3 + $0x8] sm:$0xff]
    %v9795 = vld [vmem:[#allocation3 + $0x18] sm:$0xff]
    %v9796 = vmul.f32 %v9794, 0.48387095
    %v9797 = vmul.f32 %v9795, 0.48387095
    %v9798 = vmul.f32 %v9794, 0.516129
    %v9799 = vmul.f32 %v9795, 0.516129
    %9802 = vrot.lane.b32.xlu0 %v9798, 120
    %v9803 = vpop.permute.xlu0 %9802
    %9804 = vrot.lane.b32.xlu0 %v9799, 120
    %v9805 = vpop.permute.xlu0 %9804
    %v9808 = vadd.f32 %v9796, %v9803
    %v9809 = vadd.f32 %v9797, %v9805
    %9810 = vst.msk [vmem:[#allocation4 + $0x18] sm:$0xff] %vm7602, %v9808
    %9811 = vst.msk [vmem:[#allocation4 + $0x38] sm:$0xff] %vm7602, %v9809
    %v9812 = vld [vmem:[#allocation3 + $0x8] sm:$0xff]
    %v9813 = vld [vmem:[#allocation3 + $0x18] sm:$0xff]
    %9814 = vst.msk [vmem:[#allocation4 + $0x18] sm:$0xff] %vm7615, %v9812
    %9815 = vst.msk [vmem:[#allocation4 + $0x38] sm:$0xff] %vm7615, %v9813
    %v9816 = vld [vmem:[%s7] sm:$0xff]
    %v9817 = vld [vmem:[%s7 + $0x8] sm:$0xff]
    %v9818 = vld [vmem:[%s7 + $0x10] sm:$0xff]
    %v9819 = vld [vmem:[%s7 + $0x18] sm:$0xff]
    %v9820 = vld [vmem:[#allocation4] sm:$0xff]
    %v9821 = vld [vmem:[#allocation4 + $0x8] sm:$0xff]
    %v9822 = vld [vmem:[#allocation4 + $0x10] sm:$0xff]
    %v9823 = vld [vmem:[#allocation4 + $0x18] sm:$0xff]
    %v9824 = vld [vmem:[#allocation4 + $0x20] sm:$0xff]
    %v9825 = vld [vmem:[#allocation4 + $0x28] sm:$0xff]
    %v9826 = vld [vmem:[#allocation4 + $0x30] sm:$0xff]
    %v9827 = vld [vmem:[#allocation4 + $0x38] sm:$0xff]
    %vm9828 = vcmask 130048
    %v9830 = vsel %vm9828, %v9816, 0
    %v9833 = vsel %vm9828, %v9817, 0
    %v9836 = vsel %vm9828, %v9818, 0
    %v9839 = vsel %vm9828, %v9819, 0
    %9841 = vmatprep.subr.mxu0 %v9821
    %9842 = vmatpush1.msra.mxu0 %v9820
    %9843 = vmatprep.subr.mxu0 %v9825
    %9844 = vmatpush1.msra.mxu0 %v9824
    %9845 = vmatprep.subr.mxu0 0.0
    %9846 = vmatpush1.msra.mxu0 0.0
    %9847 = vmatprep.subr.mxu0 0.0
    %9848 = vmatpush1.msra.mxu0 0.0
    %9849 = vmatprep.subr.mxu0 0.0
    %9850 = vmatpush1.msra.mxu0 0.0
    %9851 = vmatprep.subr.mxu0 0.0
    %9852 = vmatpush1.msra.mxu0 0.0
    %9853 = vmatprep.subr.mxu0 0.0
    %9854 = vmatpush1.msra.mxu0 0.0
    %9855 = vmatprep.subr.mxu0 0.0
    %9856 = vmatpush1.msra.mxu0 0.0
    %9857 = vmatprep.subr.mxu0 0.0
    %9858 = vmatpush1.msra.mxu0 0.0
    %9859 = vmatprep.subr.mxu0 0.0
    %9860 = vmatpush1.msra.mxu0 0.0
    %9861 = vmatprep.subr.mxu0 0.0
    %9862 = vmatpush1.msra.mxu0 0.0
    %9863 = vmatprep.subr.mxu0 0.0
    %9864 = vmatpush1.msra.mxu0 0.0
    %9865 = vmatprep.subr.mxu0 0.0
    %9866 = vmatpush1.msra.mxu0 0.0
    %9867 = vmatprep.subr.mxu0 0.0
    %9868 = vmatpush1.msra.mxu0 0.0
    %9869 = vmatprep.subr.mxu0 0.0
    %9870 = vmatpush1.msra.mxu0 0.0
    %9871 = vmatprep.subr.mxu0 0.0
    %9872 = vmatpush1.msra.mxu0 0.0
    %9873 = vmatprep.subr.mxu0 0.0
    %9874 = vmatpush1.msra.mxu0 0.0
    %9875 = vmatprep.subr.mxu0 0.0
    %9876 = vmatpush1.msra.mxu0 0.0
    %9877 = vmatprep.subr.mxu0 0.0
    %9878 = vmatpush1.msra.mxu0 0.0
    %9879 = vmatprep.subr.mxu0 0.0
    %9880 = vmatpush1.msra.mxu0 0.0
    %9881 = vmatprep.subr.mxu0 0.0
    %9882 = vmatpush1.msra.mxu0 0.0
    %9883 = vmatprep.subr.mxu0 0.0
    %9884 = vmatpush1.msra.mxu0 0.0
    %9885 = vmatprep.subr.mxu0 0.0
    %9886 = vmatpush1.msra.mxu0 0.0
    %9887 = vmatprep.subr.mxu0 0.0
    %9888 = vmatpush1.msra.mxu0 0.0
    %9889 = vmatprep.subr.mxu0 0.0
    %9890 = vmatpush1.msra.mxu0 0.0
    %9891 = vmatprep.subr.mxu0 0.0
    %9892 = vmatpush1.msra.mxu0 0.0
    %9893 = vmatprep.subr.mxu0 0.0
    %9894 = vmatpush1.msra.mxu0 0.0
    %9895 = vmatprep.subr.mxu0 0.0
    %9896 = vmatpush1.msra.mxu0 0.0
    %9897 = vmatprep.subr.mxu0 0.0
    %9898 = vmatpush1.msra.mxu0 0.0
    %9899 = vmatprep.subr.mxu0 0.0
    %9900 = vmatpush1.msra.mxu0 0.0
    %9901 = vmatprep.subr.mxu0 0.0
    %9902 = vmatpush1.msra.mxu0 0.0
    %9903 = vmatprep.subr.mxu0 0.0
    %9904 = vmatpush1.msra.mxu0 0.0
    %9905 = vmatprep.mubr.f32.mxu0 0.0
    %9906 = vmatmul.mubr.f32.gmra.mrb[0].mxu0 %v9830
    %v9907 = vpop.f32.mrb[0].mxu0
    %v9908 = vadd.f32 0.0, %v9907
    %v9909 = vpop.f32.mrb[0].mxu0
    %v9910 = vadd.f32 0.0, %v9909
    %9911 = vmatprep.mubr.f32.mxu0 0.0
    %9912 = vmatmul.mubr.f32.gmra.mrb[0].mxu0 %v9833
    %v9913 = vpop.f32.mrb[0].mxu0
    %v9914 = vadd.f32 0.0, %v9913
    %v9915 = vpop.f32.mrb[0].mxu0
    %v9916 = vadd.f32 0.0, %v9915
    %9917 = vmatprep.mubr.f32.mxu0 0.0
    %9918 = vmatmul.mubr.f32.gmra.mrb[0].mxu0 %v9836
    %v9919 = vpop.f32.mrb[0].mxu0
    %v9920 = vadd.f32 0.0, %v9919
    %v9921 = vpop.f32.mrb[0].mxu0
    %v9922 = vadd.f32 0.0, %v9921
    %9923 = vmatprep.mubr.f32.mxu0 0.0
    %9924 = vmatmul.mubr.f32.gmra.mrb[0].mxu0 %v9839
    %v9925 = vpop.f32.mrb[0].mxu0
    %v9926 = vadd.f32 0.0, %v9925
    %v9927 = vpop.f32.mrb[0].mxu0
    %v9928 = vadd.f32 0.0, %v9927
    %9929 = vdwg.mxu0
    %9930 = vmatprep.subr.mxu0 %v9823
    %9931 = vmatpush1.msra.mxu0 %v9822
    %9932 = vmatprep.subr.mxu0 %v9827
    %9933 = vmatpush1.msra.mxu0 %v9826
    %9934 = vmatprep.subr.mxu0 0.0
    %9935 = vmatpush1.msra.mxu0 0.0
    %9936 = vmatprep.subr.mxu0 0.0
    %9937 = vmatpush1.msra.mxu0 0.0
    %9938 = vmatprep.subr.mxu0 0.0
    %9939 = vmatpush1.msra.mxu0 0.0
    %9940 = vmatprep.subr.mxu0 0.0
    %9941 = vmatpush1.msra.mxu0 0.0
    %9942 = vmatprep.subr.mxu0 0.0
    %9943 = vmatpush1.msra.mxu0 0.0
    %9944 = vmatprep.subr.mxu0 0.0
    %9945 = vmatpush1.msra.mxu0 0.0
    %9946 = vmatprep.subr.mxu0 0.0
    %9947 = vmatpush1.msra.mxu0 0.0
    %9948 = vmatprep.subr.mxu0 0.0
    %9949 = vmatpush1.msra.mxu0 0.0
    %9950 = vmatprep.subr.mxu0 0.0
    %9951 = vmatpush1.msra.mxu0 0.0
    %9952 = vmatprep.subr.mxu0 0.0
    %9953 = vmatpush1.msra.mxu0 0.0
    %9954 = vmatprep.subr.mxu0 0.0
    %9955 = vmatpush1.msra.mxu0 0.0
    %9956 = vmatprep.subr.mxu0 0.0
    %9957 = vmatpush1.msra.mxu0 0.0
    %9958 = vmatprep.subr.mxu0 0.0
    %9959 = vmatpush1.msra.mxu0 0.0
    %9960 = vmatprep.subr.mxu0 0.0
    %9961 = vmatpush1.msra.mxu0 0.0
    %9962 = vmatprep.subr.mxu0 0.0
    %9963 = vmatpush1.msra.mxu0 0.0
    %9964 = vmatprep.subr.mxu0 0.0
    %9965 = vmatpush1.msra.mxu0 0.0
    %9966 = vmatprep.subr.mxu0 0.0
    %9967 = vmatpush1.msra.mxu0 0.0
    %9968 = vmatprep.subr.mxu0 0.0
    %9969 = vmatpush1.msra.mxu0 0.0
    %9970 = vmatprep.subr.mxu0 0.0
    %9971 = vmatpush1.msra.mxu0 0.0
    %9972 = vmatprep.subr.mxu0 0.0
    %9973 = vmatpush1.msra.mxu0 0.0
    %9974 = vmatprep.subr.mxu0 0.0
    %9975 = vmatpush1.msra.mxu0 0.0
    %9976 = vmatprep.subr.mxu0 0.0
    %9977 = vmatpush1.msra.mxu0 0.0
    %9978 = vmatprep.subr.mxu0 0.0
    %9979 = vmatpush1.msra.mxu0 0.0
    %9980 = vmatprep.subr.mxu0 0.0
    %9981 = vmatpush1.msra.mxu0 0.0
    %9982 = vmatprep.subr.mxu0 0.0
    %9983 = vmatpush1.msra.mxu0 0.0
    %9984 = vmatprep.subr.mxu0 0.0
    %9985 = vmatpush1.msra.mxu0 0.0
    %9986 = vmatprep.subr.mxu0 0.0
    %9987 = vmatpush1.msra.mxu0 0.0
    %9988 = vmatprep.subr.mxu0 0.0
    %9989 = vmatpush1.msra.mxu0 0.0
    %9990 = vmatprep.subr.mxu0 0.0
    %9991 = vmatpush1.msra.mxu0 0.0
    %9992 = vmatprep.subr.mxu0 0.0
    %9993 = vmatpush1.msra.mxu0 0.0
    %9994 = vmatprep.mubr.f32.mxu0 0.0
    %9995 = vmatmul.mubr.f32.gmra.mrb[0].mxu0 %v9830
    %v9996 = vpop.f32.mrb[0].mxu0
    %v9997 = vadd.f32 0.0, %v9996
    %v9998 = vpop.f32.mrb[0].mxu0
    %v9999 = vadd.f32 0.0, %v9998
    %10000 = vmatprep.mubr.f32.mxu0 0.0
    %10001 = vmatmul.mubr.f32.gmra.mrb[0].mxu0 %v9833
    %v10002 = vpop.f32.mrb[0].mxu0
    %v10003 = vadd.f32 0.0, %v10002
    %v10004 = vpop.f32.mrb[0].mxu0
    %v10005 = vadd.f32 0.0, %v10004
    %10006 = vmatprep.mubr.f32.mxu0 0.0
    %10007 = vmatmul.mubr.f32.gmra.mrb[0].mxu0 %v9836
    %v10008 = vpop.f32.mrb[0].mxu0
    %v10009 = vadd.f32 0.0, %v10008
    %v10010 = vpop.f32.mrb[0].mxu0
    %v10011 = vadd.f32 0.0, %v10010
    %10012 = vmatprep.mubr.f32.mxu0 0.0
    %10013 = vmatmul.mubr.f32.gmra.mrb[0].mxu0 %v9839
    %v10014 = vpop.f32.mrb[0].mxu0
    %v10015 = vadd.f32 0.0, %v10014
    %v10016 = vpop.f32.mrb[0].mxu0
    %v10017 = vadd.f32 0.0, %v10016
    %10018 = vdwg.mxu0
    %10019 = vst [vmem:[#allocation5] sm:$0xff] %v9908
    %10020 = vst [vmem:[#allocation5 + $0x8] sm:$0xff] %v9910
    %10021 = vst [vmem:[#allocation5 + $0x10] sm:$0xff] %v9997
    %10022 = vst [vmem:[#allocation5 + $0x18] sm:$0xff] %v9999
    %10023 = vst [vmem:[#allocation5 + $0x20] sm:$0xff] %v9914
    %10024 = vst [vmem:[#allocation5 + $0x28] sm:$0xff] %v9916
    %10025 = vst [vmem:[#allocation5 + $0x30] sm:$0xff] %v10003
    %10026 = vst [vmem:[#allocation5 + $0x38] sm:$0xff] %v10005
    %10027 = vst [vmem:[#allocation5 + $0x40] sm:$0xff] %v9920
    %10028 = vst [vmem:[#allocation5 + $0x48] sm:$0xff] %v9922
    %10029 = vst [vmem:[#allocation5 + $0x50] sm:$0xff] %v10009
    %10030 = vst [vmem:[#allocation5 + $0x58] sm:$0xff] %v10011
    %10031 = vst [vmem:[#allocation5 + $0x60] sm:$0xff] %v9926
    %10032 = vst [vmem:[#allocation5 + $0x68] sm:$0xff] %v9928
    %10033 = vst [vmem:[#allocation5 + $0x70] sm:$0xff] %v10015
    %10034 = vst [vmem:[#allocation5 + $0x78] sm:$0xff] %v10017
    // Predicated region
    $region34: #{tpu_custom_call.1} parent=1 // pred_check
      _
    $region35: #{tpu_custom_call.1} parent=1 // pred_check_branch
      %10036 = sbr.rel (0) target = $region37
    $region36: #{tpu_custom_call.1} parent=1 // pred_region
      %s10038 = ssub.s32 2048, 2048
      %10039 = vsyncadd [#allocation6], %s10038
      %s10040 = sshll.u32 [#allocation5], 4
      %s10041 = int_to_ptr.vmem [resolvable:$true] %s10040
      %10046 = dma.vmem_to_hbm [thread:$0]  %s10041, 2048, %s8, [#allocation6], 512, 512, 32
    $region37: #{tpu_custom_call.1} parent=1 // pred_fallthru
      _
    // Predicated region
    $region38: #{tpu_custom_call.1} parent=1 // pred_check
      _
    $region39: #{tpu_custom_call.1} parent=1 // pred_check_branch
      %10048 = sbr.rel (0) target = $region41
    $region40: #{tpu_custom_call.1} parent=1 // pred_region
      %10049 = dma.done [#allocation6], 2048
    $region41: #{tpu_custom_call.1} parent=1 // pred_fallthru
      _
    %10050 = vsyncpa [#allocation6], 1

</llo_original>
